<compile_context>
chip_gen: v6e
topology: v6e:2x2x1
jax: 0.10.0
libtpu: 0.0.40
codegen_flags: <defaults>
</compile_context>

<pallas_src>
import functools

import jax
import jax.numpy as jnp
from jax.experimental import pallas as pl
from jax.experimental.pallas import tpu as pltpu

EPS = 1e-5
_TAPS = [(dy, dx) for dy in range(3) for dx in range(3)]
# For output-row parity a (0/1) of conv(upsample2x(h)), the padded low-res row
# offsets touched are _PHASE_OFFS[a]; _PHASE_GROUPS[a] maps each offset to the
# set of original 3x3 taps (dy) that collapse onto it.  Same for columns.
_PHASE_OFFS = ((0, 1), (1, 2))
_PHASE_GROUPS = ({0: (0,), 1: (1, 2)}, {1: (0, 1), 2: (2,)})

_VMEM_LIMIT = 32 * 1024 * 1024


# ---------------------------------------------------------------------------
# Kernel 1: conv3x3 (pad 1) + per-sample BN1 partial statistics
# ---------------------------------------------------------------------------
def _conv1_kernel(x_ref, w1_ref, y1_ref, st_ref, xpad_ref, pat_ref,
                  *, H, W, Cin, Cmid):
    HW = H * W
    # Zero ONLY the 1-px halo ring; fill the interior from the input tile.
    zrow = jnp.zeros((1, W + 2, Cin), jnp.float32)
    zcol = jnp.zeros((H, 1, Cin), jnp.float32)
    xpad_ref[0:1, :, :] = zrow
    xpad_ref[H + 1:H + 2, :, :] = zrow
    xpad_ref[1:H + 1, 0:1, :] = zcol
    xpad_ref[1:H + 1, W + 1:W + 2, :] = zcol
    xpad_ref[1:H + 1, 1:W + 1, :] = x_ref[0]

    # im2col: one (HW, 9*Cin) @ (9*Cin, Cmid) MXU matmul instead of 9 K=Cin ones.
    for t, (dy, dx) in enumerate(_TAPS):
        pat_ref[:, t * Cin:(t + 1) * Cin] = (
            xpad_ref[dy:dy + H, dx:dx + W, :].reshape(HW, Cin))
    y1 = jnp.dot(pat_ref[...], w1_ref[...], preferred_element_type=jnp.float32)
    # NOTE: the conv bias is intentionally omitted -- it is exactly cancelled
    # by the training-mode BatchNorm mean subtraction that follows.
    y1_ref[0] = y1.reshape(H, W, Cmid)
    st_ref[0, 0:1, :] = jnp.sum(y1, axis=0, keepdims=True)
    st_ref[0, 1:2, :] = jnp.sum(y1 * y1, axis=0, keepdims=True)


# ---------------------------------------------------------------------------
# Kernel 2: BN1 affine + SiLU + fused nearest-2x upsample + conv3x3 (4 phases)
#           + per-sample BN2 partial statistics
# ---------------------------------------------------------------------------
def _upconv2_kernel(y1_ref, sc_ref, sh_ref, w2p_ref, y2_ref, st_ref,
                    hpad_ref, pat_ref, *, H, W, Cmid, Cout):
    HW = H * W
    h = y1_ref[0] * sc_ref[...] + sh_ref[...]
    h = h * jax.nn.sigmoid(h)                       # SiLU

    zrow = jnp.zeros((1, W + 2, Cmid), jnp.float32)
    zcol = jnp.zeros((H, 1, Cmid), jnp.float32)
    hpad_ref[0:1, :, :] = zrow
    hpad_ref[H + 1:H + 2, :, :] = zrow
    hpad_ref[1:H + 1, 0:1, :] = zcol
    hpad_ref[1:H + 1, W + 1:W + 2, :] = zcol
    hpad_ref[1:H + 1, 1:W + 1, :] = h

    s = jnp.zeros((1, Cout), jnp.float32)
    ss = jnp.zeros((1, Cout), jnp.float32)
    # Sub-pixel decomposition: output pixel (2i+a, 2j+b) of conv(upsample(h))
    # is a 2x2 conv over padded h with phase-combined weights -> no upsampled
    # intermediate, one (HW, 4*Cmid) @ (4*Cmid, Cout) matmul per phase.
    for a in (0, 1):
        for b in (0, 1):
            p = 2 * a + b
            taps = [(ry, rx) for ry in _PHASE_OFFS[a] for rx in _PHASE_OFFS[b]]
            for t, (ry, rx) in enumerate(taps):
                pat_ref[:, t * Cmid:(t + 1) * Cmid] = (
                    hpad_ref[ry:ry + H, rx:rx + W, :].reshape(HW, Cmid))
            o = jnp.dot(pat_ref[...], w2p_ref[p],
                        preferred_element_type=jnp.float32)     # (HW, Cout)
            y2_ref[p] = o.reshape(H, W, Cout)
            s = s + jnp.sum(o, axis=0, keepdims=True)
            ss = ss + jnp.sum(o * o, axis=0, keepdims=True)
    st_ref[0, 0:1, :] = s
    st_ref[0, 1:2, :] = ss


# ---------------------------------------------------------------------------
# Kernel 3: BN2 affine + identity path (1x1 conv applied before the upsample,
#           i.e. the same value added to all 4 phases) + residual add
# ---------------------------------------------------------------------------
def _bn2_add_identity_kernel(y2_ref, x_ref, sc_ref, sh_ref, wid_ref, bid_ref,
                             out_ref, *, H, W, Cin, Cout):
    HW = H * W
    idv = jnp.dot(x_ref[0].reshape(HW, Cin), wid_ref[...],
                  preferred_element_type=jnp.float32) + bid_ref[...]
    idv = idv.reshape(H, W, Cout)
    sc = sc_ref[...]
    sh = sh_ref[...]
    for p in range(4):
        out_ref[p] = y2_ref[p] * sc + sh + idv


# ---------------------------------------------------------------------------
# Wrapper
# ---------------------------------------------------------------------------
def _phase_weights(w2_oihw):
    """Pre-combine the 3x3 conv2 weights into 4 per-phase (4*Cmid, Cout)
    im2col matrices for the fused upsample+conv decomposition."""
    w2t = jnp.transpose(w2_oihw, (2, 3, 1, 0))        # (3, 3, Cmid, Cout)
    phases = []
    for a in (0, 1):
        for b in (0, 1):
            blocks = []
            for ry in _PHASE_OFFS[a]:
                for rx in _PHASE_OFFS[b]:
                    wsum = 0.0
                    for dy in _PHASE_GROUPS[a][ry]:
                        for dx in _PHASE_GROUPS[b][rx]:
                            wsum = wsum + w2t[dy, dx]
                    blocks.append(wsum)
            phases.append(jnp.concatenate(blocks, axis=0))   # (4*Cmid, Cout)
    return jnp.stack(phases)                                  # (4, 4*Cmid, Cout)


def res_block_up_forward(x_nchw, params, n_in, n_mid, n_out):
    """x_nchw: (N, n_in, H, W) float32. Returns (N, n_out, 2H, 2W) float32."""
    N, C_in, H, W = x_nchw.shape
    assert C_in == n_in

    # Single layout conversion at the model boundary (kernels run NHWC).
    x = jnp.transpose(x_nchw, (0, 2, 3, 1))                    # (N, H, W, Cin)

    # Parameter repacking (tiny, weight-sized).
    w1 = jnp.transpose(params["w1"], (2, 3, 1, 0)).reshape(9 * n_in, n_mid)
    w2p = _phase_weights(params["w2"])                         # (4, 4*Cmid, Cout)
    wid = jnp.transpose(params["wid"][:, :, 0, 0], (1, 0))     # (Cin, Cout)
    bid = params["bid"].reshape(1, n_out)

    cparams = pltpu.CompilerParams(dimension_semantics=("parallel",),
                                   vmem_limit_bytes=_VMEM_LIMIT)

    # -------- kernel 1: conv1 + BN1 partial stats ---------------------------
    k1 = functools.partial(_conv1_kernel, H=H, W=W, Cin=n_in, Cmid=n_mid)
    y1, st1 = pl.pallas_call(
        k1,
        grid=(N,),
        in_specs=[
            pl.BlockSpec((1, H, W, n_in), lambda n: (n, 0, 0, 0)),
            pl.BlockSpec((9 * n_in, n_mid), lambda n: (0, 0)),
        ],
        out_specs=[
            pl.BlockSpec((1, H, W, n_mid), lambda n: (n, 0, 0, 0)),
            pl.BlockSpec((1, 2, n_mid), lambda n: (n, 0, 0)),
        ],
        out_shape=[
            jax.ShapeDtypeStruct((N, H, W, n_mid), jnp.float32),
            jax.ShapeDtypeStruct((N, 2, n_mid), jnp.float32),
        ],
        scratch_shapes=[
            pltpu.VMEM((H + 2, W + 2, n_in), jnp.float32),
            pltpu.VMEM((H * W, 9 * n_in), jnp.float32),
        ],
        compiler_params=cparams,
        cost_estimate=pl.CostEstimate(
            flops=2 * N * H * W * 9 * n_in * n_mid,
            transcendentals=0,
            bytes_accessed=4 * (N * H * W * (n_in + n_mid)
                                + 9 * n_in * n_mid + N * 2 * n_mid)),
    )(x, w1)

    # BN1 finalize: global batch statistics -> per-channel affine (tiny XLA).
    cnt1 = N * H * W
    mean1 = jnp.sum(st1[:, 0, :], axis=0) / cnt1
    var1 = jnp.sum(st1[:, 1, :], axis=0) / cnt1 - mean1 * mean1
    inv1 = params["g1"] * jax.lax.rsqrt(var1 + EPS)
    scale1 = inv1.reshape(1, n_mid)
    shift1 = (params["be1"] - mean1 * inv1).reshape(1, n_mid)

    # -------- kernel 2: BN1 + SiLU + fused upsample+conv2 + BN2 stats -------
    k2 = functools.partial(_upconv2_kernel, H=H, W=W, Cmid=n_mid, Cout=n_out)
    y2p, st2 = pl.pallas_call(
        k2,
        grid=(N,),
        in_specs=[
            pl.BlockSpec((1, H, W, n_mid), lambda n: (n, 0, 0, 0)),
            pl.BlockSpec((1, n_mid), lambda n: (0, 0)),
            pl.BlockSpec((1, n_mid), lambda n: (0, 0)),
            pl.BlockSpec((4, 4 * n_mid, n_out), lambda n: (0, 0, 0)),
        ],
        out_specs=[
            pl.BlockSpec((4, H, W, n_out), lambda n: (n, 0, 0, 0)),
            pl.BlockSpec((1, 2, n_out), lambda n: (n, 0, 0)),
        ],
        out_shape=[
            jax.ShapeDtypeStruct((4 * N, H, W, n_out), jnp.float32),
            jax.ShapeDtypeStruct((N, 2, n_out), jnp.float32),
        ],
        scratch_shapes=[
            pltpu.VMEM((H + 2, W + 2, n_mid), jnp.float32),
            pltpu.VMEM((H * W, 4 * n_mid), jnp.float32),
        ],
        compiler_params=cparams,
        cost_estimate=pl.CostEstimate(
            flops=2 * N * 4 * H * W * 4 * n_mid * n_out + 8 * N * H * W * n_mid,
            transcendentals=N * H * W * n_mid,
            bytes_accessed=4 * (N * H * W * n_mid + 4 * N * H * W * n_out
                                + 16 * n_mid * n_out + N * 2 * n_out)),
    )(y1, scale1, shift1, w2p)

    cnt2 = N * 4 * H * W
    mean2 = jnp.sum(st2[:, 0, :], axis=0) / cnt2
    var2 = jnp.sum(st2[:, 1, :], axis=0) / cnt2 - mean2 * mean2
    inv2 = params["g2"] * jax.lax.rsqrt(var2 + EPS)
    scale2 = inv2.reshape(1, n_out)
    shift2 = (params["be2"] - mean2 * inv2).reshape(1, n_out)

    # -------- kernel 3: BN2 affine + identity 1x1 conv + residual add -------
    k3 = functools.partial(_bn2_add_identity_kernel, H=H, W=W,
                           Cin=n_in, Cout=n_out)
    outp = pl.pallas_call(
        k3,
        grid=(N,),
        in_specs=[
            pl.BlockSpec((4, H, W, n_out), lambda n: (n, 0, 0, 0)),
            pl.BlockSpec((1, H, W, n_in), lambda n: (n, 0, 0, 0)),
            pl.BlockSpec((1, n_out), lambda n: (0, 0)),
            pl.BlockSpec((1, n_out), lambda n: (0, 0)),
            pl.BlockSpec((n_in, n_out), lambda n: (0, 0)),
            pl.BlockSpec((1, n_out), lambda n: (0, 0)),
        ],
        out_specs=pl.BlockSpec((4, H, W, n_out), lambda n: (n, 0, 0, 0)),
        out_shape=jax.ShapeDtypeStruct((4 * N, H, W, n_out), jnp.float32),
        compiler_params=cparams,
        cost_estimate=pl.CostEstimate(
            flops=2 * N * H * W * n_in * n_out + 12 * N * H * W * n_out,
            transcendentals=0,
            bytes_accessed=4 * (8 * N * H * W * n_out + N * H * W * n_in
                                + n_in * n_out)),
    )(y2p, x, scale2, shift2, wid, bid)

    # De-interleave the 4 sub-pixel phases and convert back to NCHW in one XLA
    # pass (this replaces the NHWC->NCHW transpose that is needed anyway).
    out = outp.reshape(N, 2, 2, H, W, n_out)
    out = jnp.transpose(out, (0, 5, 3, 1, 4, 2)).reshape(N, n_out, 2 * H, 2 * W)
    return out


# ---------------------------------------------------------------------------
# Parameters + pure-JAX reference (mirrors the PyTorch module, NCHW / OIHW)
# ---------------------------------------------------------------------------
def init_params(key, n_in, n_mid, n_out):
    ks = jax.random.split(key, 10)
    return {
        "w1": 0.1 * jax.random.normal(ks[0], (n_mid, n_in, 3, 3), jnp.float32),
        "b1": 0.1 * jax.random.normal(ks[1], (n_mid,), jnp.float32),
        "g1": 1.0 + 0.1 * jax.random.normal(ks[2], (n_mid,), jnp.float32),
        "be1": 0.1 * jax.random.normal(ks[3], (n_mid,), jnp.float32),
        "w2": 0.1 * jax.random.normal(ks[4], (n_out, n_mid, 3, 3), jnp.float32),
        "b2": 0.1 * jax.random.normal(ks[5], (n_out,), jnp.float32),
        "g2": 1.0 + 0.1 * jax.random.normal(ks[6], (n_out,), jnp.float32),
        "be2": 0.1 * jax.random.normal(ks[7], (n_out,), jnp.float32),
        "wid": 0.1 * jax.random.normal(ks[8], (n_out, n_in, 1, 1), jnp.float32),
        "bid": 0.1 * jax.random.normal(ks[9], (n_out,), jnp.float32),
    }


def ref_forward(x, params):
    def conv(x, w, b, pad):
        y = jax.lax.conv_general_dilated(
            x, w, window_strides=(1, 1), padding=[(pad, pad), (pad, pad)],
            dimension_numbers=("NCHW", "OIHW", "NCHW"))
        return y + b[None, :, None, None]

    def bn(x, g, be):
        m = jnp.mean(x, axis=(0, 2, 3), keepdims=True)
        v = jnp.mean((x - m) ** 2, axis=(0, 2, 3), keepdims=True)
        return (x - m) * jax.lax.rsqrt(v + EPS) * g[None, :, None, None] \
            + be[None, :, None, None]

    def up2(x):     # nn.Upsample(scale_factor=2), default mode='nearest'
        return jnp.repeat(jnp.repeat(x, 2, axis=2), 2, axis=3)

    identity = conv(up2(x), params["wid"], params["bid"], 0)
    h = conv(x, params["w1"], params["b1"], 1)
    h = bn(h, params["g1"], params["be1"])
    h = h * jax.nn.sigmoid(h)
    h = up2(h)
    h = conv(h, params["w2"], params["b2"], 1)
    h = bn(h, params["g2"], params["be2"])
    return h + identity


if __name__ == "__main__":
    N, C_in, H, W = 2, 4, 16, 16
    C_mid, C_out = 8, 16

    key = jax.random.PRNGKey(0)
    kx, kp = jax.random.split(key)
    x = jax.random.normal(kx, (N, C_in, H, W), jnp.float32)
    params = init_params(kp, C_in, C_mid, C_out)

    fwd = jax.jit(lambda xx, pp: res_block_up_forward(xx, pp, C_in, C_mid, C_out))
    out = jax.block_until_ready(fwd(x, params))
    assert out.shape == (N, C_out, 2 * H, 2 * W)

    ref = ref_forward(x, params)
    max_err = float(jnp.max(jnp.abs(out - ref)))
    assert max_err < 1e-3, f"mismatch vs reference: {max_err}"

    print("KERNEL_OK")
</pallas_src>

<mosaic_0001>
module attributes {stable_mosaic.version = 11 : i64} {
  func.func @_conv1_kernel(%arg0: i32, %arg1: memref<1x16x16x4xf32, #tpu.memory_space<vmem>>, %arg2: memref<36x8xf32, #tpu.memory_space<vmem>>, %arg3: memref<1x16x16x8xf32, #tpu.memory_space<vmem>>, %arg4: memref<1x2x8xf32, #tpu.memory_space<vmem>>, %arg5: memref<18x18x4xf32, #tpu.memory_space<vmem>>, %arg6: memref<256x36xf32, #tpu.memory_space<vmem>>) attributes {dimension_semantics = [#tpu.dimension_semantics<parallel>], iteration_bounds = array<i64: 2>, scalar_prefetch = 0 : i64, scratch_operands = 2 : i64, tpu.core_type = #tpu.core_type<tc>, window_params = [{transform_indices = @transform_0, window_bounds = array<i64: 1, 16, 16, 4>}, {pipeline_mode = #tpu.pipeline_mode<synchronous>, transform_indices = @transform_1, window_bounds = array<i64: 36, 8>}, {transform_indices = @transform_2, window_bounds = array<i64: 1, 16, 16, 8>}, {transform_indices = @transform_3, window_bounds = array<i64: 1, 2, 8>}]} {
    %cst = arith.constant 0.000000e+00 : f32
    %0 = vector.broadcast %cst : f32 to vector<1x18x4xf32>
    %cst_0 = arith.constant 0.000000e+00 : f32
    %1 = vector.broadcast %cst_0 : f32 to vector<16x1x4xf32>
    %c0 = arith.constant 0 : index
    %c0_1 = arith.constant 0 : index
    %c0_2 = arith.constant 0 : index
    %2 = vector.load %arg5[%c0, %c0_1, %c0_2] : memref<18x18x4xf32, #tpu.memory_space<vmem>>, vector<1x18x4xf32>
    tpu.vector_store %arg5[%c0, %c0_1, %c0_2], %0 {strides = array<i32>} : memref<18x18x4xf32, #tpu.memory_space<vmem>>, vector<1x18x4xf32>,
    %c17 = arith.constant 17 : index
    %c0_3 = arith.constant 0 : index
    %c0_4 = arith.constant 0 : index
    %3 = vector.load %arg5[%c17, %c0_3, %c0_4] : memref<18x18x4xf32, #tpu.memory_space<vmem>>, vector<1x18x4xf32>
    tpu.vector_store %arg5[%c17, %c0_3, %c0_4], %0 {strides = array<i32>} : memref<18x18x4xf32, #tpu.memory_space<vmem>>, vector<1x18x4xf32>,
    %c1 = arith.constant 1 : index
    %c0_5 = arith.constant 0 : index
    %c0_6 = arith.constant 0 : index
    %4 = vector.load %arg5[%c1, %c0_5, %c0_6] : memref<18x18x4xf32, #tpu.memory_space<vmem>>, vector<16x1x4xf32>
    tpu.vector_store %arg5[%c1, %c0_5, %c0_6], %1 {strides = array<i32>} : memref<18x18x4xf32, #tpu.memory_space<vmem>>, vector<16x1x4xf32>,
    %c1_7 = arith.constant 1 : index
    %c17_8 = arith.constant 17 : index
    %c0_9 = arith.constant 0 : index
    %5 = vector.load %arg5[%c1_7, %c17_8, %c0_9] : memref<18x18x4xf32, #tpu.memory_space<vmem>>, vector<16x1x4xf32>
    tpu.vector_store %arg5[%c1_7, %c17_8, %c0_9], %1 {strides = array<i32>} : memref<18x18x4xf32, #tpu.memory_space<vmem>>, vector<16x1x4xf32>,
    %c0_10 = arith.constant 0 : index
    %c0_11 = arith.constant 0 : index
    %c0_12 = arith.constant 0 : index
    %c0_13 = arith.constant 0 : index
    %6 = vector.load %arg1[%c0_10, %c0_11, %c0_12, %c0_13] : memref<1x16x16x4xf32, #tpu.memory_space<vmem>>, vector<1x16x16x4xf32>
    %7 = vector.shape_cast %6 : vector<1x16x16x4xf32> to vector<16x16x4xf32>
    %c1_14 = arith.constant 1 : index
    %c1_15 = arith.constant 1 : index
    %c0_16 = arith.constant 0 : index
    %8 = vector.load %arg5[%c1_14, %c1_15, %c0_16] : memref<18x18x4xf32, #tpu.memory_space<vmem>>, vector<16x16x4xf32>
    tpu.vector_store %arg5[%c1_14, %c1_15, %c0_16], %7 {strides = array<i32>} : memref<18x18x4xf32, #tpu.memory_space<vmem>>, vector<16x16x4xf32>,
    %c0_17 = arith.constant 0 : index
    %c0_18 = arith.constant 0 : index
    %c0_19 = arith.constant 0 : index
    %9 = vector.load %arg5[%c0_17, %c0_18, %c0_19] : memref<18x18x4xf32, #tpu.memory_space<vmem>>, vector<16x16x4xf32>
    %10 = vector.shape_cast %9 : vector<16x16x4xf32> to vector<256x4xf32>
    %c0_20 = arith.constant 0 : index
    %c0_21 = arith.constant 0 : index
    %11 = vector.load %arg6[%c0_20, %c0_21] : memref<256x36xf32, #tpu.memory_space<vmem>>, vector<256x4xf32>
    tpu.vector_store %arg6[%c0_20, %c0_21], %10 {strides = array<i32>} : memref<256x36xf32, #tpu.memory_space<vmem>>, vector<256x4xf32>,
    %c0_22 = arith.constant 0 : index
    %c1_23 = arith.constant 1 : index
    %c0_24 = arith.constant 0 : index
    %12 = vector.load %arg5[%c0_22, %c1_23, %c0_24] : memref<18x18x4xf32, #tpu.memory_space<vmem>>, vector<16x16x4xf32>
    %13 = vector.shape_cast %12 : vector<16x16x4xf32> to vector<256x4xf32>
    %c0_25 = arith.constant 0 : index
    %c4 = arith.constant 4 : index
    %14 = vector.load %arg6[%c0_25, %c4] : memref<256x36xf32, #tpu.memory_space<vmem>>, vector<256x4xf32>
    tpu.vector_store %arg6[%c0_25, %c4], %13 {strides = array<i32>} : memref<256x36xf32, #tpu.memory_space<vmem>>, vector<256x4xf32>,
    %c0_26 = arith.constant 0 : index
    %c2 = arith.constant 2 : index
    %c0_27 = arith.constant 0 : index
    %15 = vector.load %arg5[%c0_26, %c2, %c0_27] : memref<18x18x4xf32, #tpu.memory_space<vmem>>, vector<16x16x4xf32>
    %16 = vector.shape_cast %15 : vector<16x16x4xf32> to vector<256x4xf32>
    %c0_28 = arith.constant 0 : index
    %c8 = arith.constant 8 : index
    %17 = vector.load %arg6[%c0_28, %c8] : memref<256x36xf32, #tpu.memory_space<vmem>>, vector<256x4xf32>
    tpu.vector_store %arg6[%c0_28, %c8], %16 {strides = array<i32>} : memref<256x36xf32, #tpu.memory_space<vmem>>, vector<256x4xf32>,
    %c1_29 = arith.constant 1 : index
    %c0_30 = arith.constant 0 : index
    %c0_31 = arith.constant 0 : index
    %18 = vector.load %arg5[%c1_29, %c0_30, %c0_31] : memref<18x18x4xf32, #tpu.memory_space<vmem>>, vector<16x16x4xf32>
    %19 = vector.shape_cast %18 : vector<16x16x4xf32> to vector<256x4xf32>
    %c0_32 = arith.constant 0 : index
    %c12 = arith.constant 12 : index
    %20 = vector.load %arg6[%c0_32, %c12] : memref<256x36xf32, #tpu.memory_space<vmem>>, vector<256x4xf32>
    tpu.vector_store %arg6[%c0_32, %c12], %19 {strides = array<i32>} : memref<256x36xf32, #tpu.memory_space<vmem>>, vector<256x4xf32>,
    %c1_33 = arith.constant 1 : index
    %c1_34 = arith.constant 1 : index
    %c0_35 = arith.constant 0 : index
    %21 = vector.load %arg5[%c1_33, %c1_34, %c0_35] : memref<18x18x4xf32, #tpu.memory_space<vmem>>, vector<16x16x4xf32>
    %22 = vector.shape_cast %21 : vector<16x16x4xf32> to vector<256x4xf32>
    %c0_36 = arith.constant 0 : index
    %c16 = arith.constant 16 : index
    %23 = vector.load %arg6[%c0_36, %c16] : memref<256x36xf32, #tpu.memory_space<vmem>>, vector<256x4xf32>
    tpu.vector_store %arg6[%c0_36, %c16], %22 {strides = array<i32>} : memref<256x36xf32, #tpu.memory_space<vmem>>, vector<256x4xf32>,
    %c1_37 = arith.constant 1 : index
    %c2_38 = arith.constant 2 : index
    %c0_39 = arith.constant 0 : index
    %24 = vector.load %arg5[%c1_37, %c2_38, %c0_39] : memref<18x18x4xf32, #tpu.memory_space<vmem>>, vector<16x16x4xf32>
    %25 = vector.shape_cast %24 : vector<16x16x4xf32> to vector<256x4xf32>
    %c0_40 = arith.constant 0 : index
    %c20 = arith.constant 20 : index
    %26 = vector.load %arg6[%c0_40, %c20] : memref<256x36xf32, #tpu.memory_space<vmem>>, vector<256x4xf32>
    tpu.vector_store %arg6[%c0_40, %c20], %25 {strides = array<i32>} : memref<256x36xf32, #tpu.memory_space<vmem>>, vector<256x4xf32>,
    %c2_41 = arith.constant 2 : index
    %c0_42 = arith.constant 0 : index
    %c0_43 = arith.constant 0 : index
    %27 = vector.load %arg5[%c2_41, %c0_42, %c0_43] : memref<18x18x4xf32, #tpu.memory_space<vmem>>, vector<16x16x4xf32>
    %28 = vector.shape_cast %27 : vector<16x16x4xf32> to vector<256x4xf32>
    %c0_44 = arith.constant 0 : index
    %c24 = arith.constant 24 : index
    %29 = vector.load %arg6[%c0_44, %c24] : memref<256x36xf32, #tpu.memory_space<vmem>>, vector<256x4xf32>
    tpu.vector_store %arg6[%c0_44, %c24], %28 {strides = array<i32>} : memref<256x36xf32, #tpu.memory_space<vmem>>, vector<256x4xf32>,
    %c2_45 = arith.constant 2 : index
    %c1_46 = arith.constant 1 : index
    %c0_47 = arith.constant 0 : index
    %30 = vector.load %arg5[%c2_45, %c1_46, %c0_47] : memref<18x18x4xf32, #tpu.memory_space<vmem>>, vector<16x16x4xf32>
    %31 = vector.shape_cast %30 : vector<16x16x4xf32> to vector<256x4xf32>
    %c0_48 = arith.constant 0 : index
    %c28 = arith.constant 28 : index
    %32 = vector.load %arg6[%c0_48, %c28] : memref<256x36xf32, #tpu.memory_space<vmem>>, vector<256x4xf32>
    tpu.vector_store %arg6[%c0_48, %c28], %31 {strides = array<i32>} : memref<256x36xf32, #tpu.memory_space<vmem>>, vector<256x4xf32>,
    %c2_49 = arith.constant 2 : index
    %c2_50 = arith.constant 2 : index
    %c0_51 = arith.constant 0 : index
    %33 = vector.load %arg5[%c2_49, %c2_50, %c0_51] : memref<18x18x4xf32, #tpu.memory_space<vmem>>, vector<16x16x4xf32>
    %34 = vector.shape_cast %33 : vector<16x16x4xf32> to vector<256x4xf32>
    %c0_52 = arith.constant 0 : index
    %c32 = arith.constant 32 : index
    %35 = vector.load %arg6[%c0_52, %c32] : memref<256x36xf32, #tpu.memory_space<vmem>>, vector<256x4xf32>
    tpu.vector_store %arg6[%c0_52, %c32], %34 {strides = array<i32>} : memref<256x36xf32, #tpu.memory_space<vmem>>, vector<256x4xf32>,
    %c0_53 = arith.constant 0 : index
    %c0_54 = arith.constant 0 : index
    %36 = vector.load %arg6[%c0_53, %c0_54] : memref<256x36xf32, #tpu.memory_space<vmem>>, vector<256x36xf32>
    %c0_55 = arith.constant 0 : index
    %c0_56 = arith.constant 0 : index
    %37 = vector.load %arg2[%c0_55, %c0_56] : memref<36x8xf32, #tpu.memory_space<vmem>>, vector<36x8xf32>
    %cst_57 = arith.constant dense<0.000000e+00> : vector<256x8xf32>
    %38 = tpu.matmul %36, %37, %cst_57 {dimension_numbers = #tpu.dot_dimension_numbers<[1], [0], [0], [1], [0, 0, 1, 1], [], []>} : vector<256x36xf32>, vector<36x8xf32>, vector<256x8xf32> -> vector<256x8xf32>
    %39 = vector.shape_cast %38 : vector<256x8xf32> to vector<16x16x8xf32>
    %c0_58 = arith.constant 0 : index
    %c0_59 = arith.constant 0 : index
    %c0_60 = arith.constant 0 : index
    %c0_61 = arith.constant 0 : index
    %40 = vector.load %arg3[%c0_58, %c0_59, %c0_60, %c0_61] : memref<1x16x16x8xf32, #tpu.memory_space<vmem>>, vector<1x16x16x8xf32>
    %41 = vector.shape_cast %40 : vector<1x16x16x8xf32> to vector<16x16x8xf32>
    %42 = vector.shape_cast %39 : vector<16x16x8xf32> to vector<1x16x16x8xf32>
    tpu.vector_store %arg3[%c0_58, %c0_59, %c0_60, %c0_61], %42 {strides = array<i32>} : memref<1x16x16x8xf32, #tpu.memory_space<vmem>>, vector<1x16x16x8xf32>,
    %cst_62 = arith.constant dense<0.000000e+00> : vector<8xf32>
    %43 = vector.multi_reduction <add>, %38, %cst_62 [0] : vector<256x8xf32> to vector<8xf32>
    %44 = vector.shape_cast %43 : vector<8xf32> to vector<1x8xf32>
    %c0_63 = arith.constant 0 : index
    %c0_64 = arith.constant 0 : index
    %c0_65 = arith.constant 0 : index
    %45 = vector.load %arg4[%c0_63, %c0_64, %c0_65] : memref<1x2x8xf32, #tpu.memory_space<vmem>>, vector<1x1x8xf32>
    %46 = vector.shape_cast %45 : vector<1x1x8xf32> to vector<1x8xf32>
    %47 = vector.shape_cast %44 : vector<1x8xf32> to vector<1x1x8xf32>
    tpu.vector_store %arg4[%c0_63, %c0_64, %c0_65], %47 {strides = array<i32>} : memref<1x2x8xf32, #tpu.memory_space<vmem>>, vector<1x1x8xf32>,
    %48 = arith.mulf %38, %38 : vector<256x8xf32>
    %cst_66 = arith.constant dense<0.000000e+00> : vector<8xf32>
    %49 = vector.multi_reduction <add>, %48, %cst_66 [0] : vector<256x8xf32> to vector<8xf32>
    %50 = vector.shape_cast %49 : vector<8xf32> to vector<1x8xf32>
    %c0_67 = arith.constant 0 : index
    %c1_68 = arith.constant 1 : index
    %c0_69 = arith.constant 0 : index
    %51 = vector.load %arg4[%c0_67, %c1_68, %c0_69] : memref<1x2x8xf32, #tpu.memory_space<vmem>>, vector<1x1x8xf32>
    %52 = vector.shape_cast %51 : vector<1x1x8xf32> to vector<1x8xf32>
    %53 = vector.shape_cast %50 : vector<1x8xf32> to vector<1x1x8xf32>
    tpu.vector_store %arg4[%c0_67, %c1_68, %c0_69], %53 {strides = array<i32>} : memref<1x2x8xf32, #tpu.memory_space<vmem>>, vector<1x1x8xf32>,
    return
  }
  func.func @transform_0(%arg0: i32) -> (i32, i32, i32, i32) {
    %c0_i32 = arith.constant 0 : i32
    %c0_i32_0 = arith.constant 0 : i32
    %c0_i32_1 = arith.constant 0 : i32
    %c0_i32_2 = arith.constant 0 : i32
    return %arg0, %c0_i32, %c0_i32_0, %c0_i32_1 : i32, i32, i32, i32
  }
  func.func @transform_1(%arg0: i32) -> (i32, i32) {
    %c0_i32 = arith.constant 0 : i32
    %c0_i32_0 = arith.constant 0 : i32
    %c0_i32_1 = arith.constant 0 : i32
    return %c0_i32, %c0_i32_0 : i32, i32
  }
  func.func @transform_2(%arg0: i32) -> (i32, i32, i32, i32) {
    %c0_i32 = arith.constant 0 : i32
    %c0_i32_0 = arith.constant 0 : i32
    %c0_i32_1 = arith.constant 0 : i32
    %c0_i32_2 = arith.constant 0 : i32
    return %arg0, %c0_i32, %c0_i32_0, %c0_i32_1 : i32, i32, i32, i32
  }
  func.func @transform_3(%arg0: i32) -> (i32, i32, i32) {
    %c0_i32 = arith.constant 0 : i32
    %c0_i32_0 = arith.constant 0 : i32
    %c0_i32_1 = arith.constant 0 : i32
    return %arg0, %c0_i32, %c0_i32_0 : i32, i32, i32
  }
}

module attributes {stable_mosaic.version = 11 : i64} {
  func.func @_upconv2_kernel(%arg0: i32, %arg1: memref<1x16x16x8xf32, #tpu.memory_space<vmem>>, %arg2: memref<1x8xf32, #tpu.memory_space<vmem>>, %arg3: memref<1x8xf32, #tpu.memory_space<vmem>>, %arg4: memref<4x32x16xf32, #tpu.memory_space<vmem>>, %arg5: memref<4x16x16x16xf32, #tpu.memory_space<vmem>>, %arg6: memref<1x2x16xf32, #tpu.memory_space<vmem>>, %arg7: memref<18x18x8xf32, #tpu.memory_space<vmem>>, %arg8: memref<256x32xf32, #tpu.memory_space<vmem>>) attributes {dimension_semantics = [#tpu.dimension_semantics<parallel>], iteration_bounds = array<i64: 2>, scalar_prefetch = 0 : i64, scratch_operands = 2 : i64, tpu.core_type = #tpu.core_type<tc>, window_params = [{transform_indices = @transform_0, window_bounds = array<i64: 1, 16, 16, 8>}, {pipeline_mode = #tpu.pipeline_mode<synchronous>, transform_indices = @transform_1, window_bounds = array<i64: 1, 8>}, {pipeline_mode = #tpu.pipeline_mode<synchronous>, transform_indices = @transform_2, window_bounds = array<i64: 1, 8>}, {pipeline_mode = #tpu.pipeline_mode<synchronous>, transform_indices = @transform_3, window_bounds = array<i64: 4, 32, 16>}, {transform_indices = @transform_4, window_bounds = array<i64: 4, 16, 16, 16>}, {transform_indices = @transform_5, window_bounds = array<i64: 1, 2, 16>}]} {
    %c0 = arith.constant 0 : index
    %c0_0 = arith.constant 0 : index
    %c0_1 = arith.constant 0 : index
    %c0_2 = arith.constant 0 : index
    %0 = vector.load %arg1[%c0, %c0_0, %c0_1, %c0_2] : memref<1x16x16x8xf32, #tpu.memory_space<vmem>>, vector<1x16x16x8xf32>
    %1 = vector.shape_cast %0 : vector<1x16x16x8xf32> to vector<16x16x8xf32>
    %c0_3 = arith.constant 0 : index
    %c0_4 = arith.constant 0 : index
    %2 = vector.load %arg2[%c0_3, %c0_4] : memref<1x8xf32, #tpu.memory_space<vmem>>, vector<1x8xf32>
    %3 = vector.shape_cast %2 : vector<1x8xf32> to vector<1x1x8xf32>
    %4 = vector.broadcast %3 : vector<1x1x8xf32> to vector<16x16x8xf32>
    %5 = arith.mulf %1, %4 : vector<16x16x8xf32>
    %c0_5 = arith.constant 0 : index
    %c0_6 = arith.constant 0 : index
    %6 = vector.load %arg3[%c0_5, %c0_6] : memref<1x8xf32, #tpu.memory_space<vmem>>, vector<1x8xf32>
    %7 = vector.shape_cast %6 : vector<1x8xf32> to vector<1x1x8xf32>
    %8 = vector.broadcast %7 : vector<1x1x8xf32> to vector<16x16x8xf32>
    %9 = arith.addf %5, %8 : vector<16x16x8xf32>
    %10 = arith.negf %9 : vector<16x16x8xf32>
    %11 = math.exp %10 : vector<16x16x8xf32>
    %cst = arith.constant 1.000000e+00 : f32
    %12 = vector.broadcast %cst : f32 to vector<16x16x8xf32>
    %13 = arith.addf %12, %11 : vector<16x16x8xf32>
    %14 = arith.divf %12, %13 : vector<16x16x8xf32>
    %15 = arith.mulf %9, %14 : vector<16x16x8xf32>
    %cst_7 = arith.constant 0.000000e+00 : f32
    %16 = vector.broadcast %cst_7 : f32 to vector<1x18x8xf32>
    %cst_8 = arith.constant 0.000000e+00 : f32
    %17 = vector.broadcast %cst_8 : f32 to vector<16x1x8xf32>
    %c0_9 = arith.constant 0 : index
    %c0_10 = arith.constant 0 : index
    %c0_11 = arith.constant 0 : index
    %18 = vector.load %arg7[%c0_9, %c0_10, %c0_11] : memref<18x18x8xf32, #tpu.memory_space<vmem>>, vector<1x18x8xf32>
    tpu.vector_store %arg7[%c0_9, %c0_10, %c0_11], %16 {strides = array<i32>} : memref<18x18x8xf32, #tpu.memory_space<vmem>>, vector<1x18x8xf32>,
    %c17 = arith.constant 17 : index
    %c0_12 = arith.constant 0 : index
    %c0_13 = arith.constant 0 : index
    %19 = vector.load %arg7[%c17, %c0_12, %c0_13] : memref<18x18x8xf32, #tpu.memory_space<vmem>>, vector<1x18x8xf32>
    tpu.vector_store %arg7[%c17, %c0_12, %c0_13], %16 {strides = array<i32>} : memref<18x18x8xf32, #tpu.memory_space<vmem>>, vector<1x18x8xf32>,
    %c1 = arith.constant 1 : index
    %c0_14 = arith.constant 0 : index
    %c0_15 = arith.constant 0 : index
    %20 = vector.load %arg7[%c1, %c0_14, %c0_15] : memref<18x18x8xf32, #tpu.memory_space<vmem>>, vector<16x1x8xf32>
    tpu.vector_store %arg7[%c1, %c0_14, %c0_15], %17 {strides = array<i32>} : memref<18x18x8xf32, #tpu.memory_space<vmem>>, vector<16x1x8xf32>,
    %c1_16 = arith.constant 1 : index
    %c17_17 = arith.constant 17 : index
    %c0_18 = arith.constant 0 : index
    %21 = vector.load %arg7[%c1_16, %c17_17, %c0_18] : memref<18x18x8xf32, #tpu.memory_space<vmem>>, vector<16x1x8xf32>
    tpu.vector_store %arg7[%c1_16, %c17_17, %c0_18], %17 {strides = array<i32>} : memref<18x18x8xf32, #tpu.memory_space<vmem>>, vector<16x1x8xf32>,
    %c1_19 = arith.constant 1 : index
    %c1_20 = arith.constant 1 : index
    %c0_21 = arith.constant 0 : index
    %22 = vector.load %arg7[%c1_19, %c1_20, %c0_21] : memref<18x18x8xf32, #tpu.memory_space<vmem>>, vector<16x16x8xf32>
    tpu.vector_store %arg7[%c1_19, %c1_20, %c0_21], %15 {strides = array<i32>} : memref<18x18x8xf32, #tpu.memory_space<vmem>>, vector<16x16x8xf32>,
    %cst_22 = arith.constant 0.000000e+00 : f32
    %23 = vector.broadcast %cst_22 : f32 to vector<1x16xf32>
    %cst_23 = arith.constant 0.000000e+00 : f32
    %24 = vector.broadcast %cst_23 : f32 to vector<1x16xf32>
    %c0_24 = arith.constant 0 : index
    %c0_25 = arith.constant 0 : index
    %c0_26 = arith.constant 0 : index
    %25 = vector.load %arg7[%c0_24, %c0_25, %c0_26] : memref<18x18x8xf32, #tpu.memory_space<vmem>>, vector<16x16x8xf32>
    %26 = vector.shape_cast %25 : vector<16x16x8xf32> to vector<256x8xf32>
    %c0_27 = arith.constant 0 : index
    %c0_28 = arith.constant 0 : index
    %27 = vector.load %arg8[%c0_27, %c0_28] : memref<256x32xf32, #tpu.memory_space<vmem>>, vector<256x8xf32>
    tpu.vector_store %arg8[%c0_27, %c0_28], %26 {strides = array<i32>} : memref<256x32xf32, #tpu.memory_space<vmem>>, vector<256x8xf32>,
    %c0_29 = arith.constant 0 : index
    %c1_30 = arith.constant 1 : index
    %c0_31 = arith.constant 0 : index
    %28 = vector.load %arg7[%c0_29, %c1_30, %c0_31] : memref<18x18x8xf32, #tpu.memory_space<vmem>>, vector<16x16x8xf32>
    %29 = vector.shape_cast %28 : vector<16x16x8xf32> to vector<256x8xf32>
    %c0_32 = arith.constant 0 : index
    %c8 = arith.constant 8 : index
    %30 = vector.load %arg8[%c0_32, %c8] : memref<256x32xf32, #tpu.memory_space<vmem>>, vector<256x8xf32>
    tpu.vector_store %arg8[%c0_32, %c8], %29 {strides = array<i32>} : memref<256x32xf32, #tpu.memory_space<vmem>>, vector<256x8xf32>,
    %c1_33 = arith.constant 1 : index
    %c0_34 = arith.constant 0 : index
    %c0_35 = arith.constant 0 : index
    %31 = vector.load %arg7[%c1_33, %c0_34, %c0_35] : memref<18x18x8xf32, #tpu.memory_space<vmem>>, vector<16x16x8xf32>
    %32 = vector.shape_cast %31 : vector<16x16x8xf32> to vector<256x8xf32>
    %c0_36 = arith.constant 0 : index
    %c16 = arith.constant 16 : index
    %33 = vector.load %arg8[%c0_36, %c16] : memref<256x32xf32, #tpu.memory_space<vmem>>, vector<256x8xf32>
    tpu.vector_store %arg8[%c0_36, %c16], %32 {strides = array<i32>} : memref<256x32xf32, #tpu.memory_space<vmem>>, vector<256x8xf32>,
    %c1_37 = arith.constant 1 : index
    %c1_38 = arith.constant 1 : index
    %c0_39 = arith.constant 0 : index
    %34 = vector.load %arg7[%c1_37, %c1_38, %c0_39] : memref<18x18x8xf32, #tpu.memory_space<vmem>>, vector<16x16x8xf32>
    %35 = vector.shape_cast %34 : vector<16x16x8xf32> to vector<256x8xf32>
    %c0_40 = arith.constant 0 : index
    %c24 = arith.constant 24 : index
    %36 = vector.load %arg8[%c0_40, %c24] : memref<256x32xf32, #tpu.memory_space<vmem>>, vector<256x8xf32>
    tpu.vector_store %arg8[%c0_40, %c24], %35 {strides = array<i32>} : memref<256x32xf32, #tpu.memory_space<vmem>>, vector<256x8xf32>,
    %c0_41 = arith.constant 0 : index
    %c0_42 = arith.constant 0 : index
    %37 = vector.load %arg8[%c0_41, %c0_42] : memref<256x32xf32, #tpu.memory_space<vmem>>, vector<256x32xf32>
    %c0_43 = arith.constant 0 : index
    %c0_44 = arith.constant 0 : index
    %c0_45 = arith.constant 0 : index
    %38 = vector.load %arg4[%c0_43, %c0_44, %c0_45] : memref<4x32x16xf32, #tpu.memory_space<vmem>>, vector<1x32x16xf32>
    %39 = vector.shape_cast %38 : vector<1x32x16xf32> to vector<32x16xf32>
    %cst_46 = arith.constant dense<0.000000e+00> : vector<256x16xf32>
    %40 = tpu.matmul %37, %39, %cst_46 {dimension_numbers = #tpu.dot_dimension_numbers<[1], [0], [0], [1], [0, 0, 1, 1], [], []>} : vector<256x32xf32>, vector<32x16xf32>, vector<256x16xf32> -> vector<256x16xf32>
    %41 = vector.shape_cast %40 : vector<256x16xf32> to vector<16x16x16xf32>
    %c0_47 = arith.constant 0 : index
    %c0_48 = arith.constant 0 : index
    %c0_49 = arith.constant 0 : index
    %c0_50 = arith.constant 0 : index
    %42 = vector.load %arg5[%c0_47, %c0_48, %c0_49, %c0_50] : memref<4x16x16x16xf32, #tpu.memory_space<vmem>>, vector<1x16x16x16xf32>
    %43 = vector.shape_cast %42 : vector<1x16x16x16xf32> to vector<16x16x16xf32>
    %44 = vector.shape_cast %41 : vector<16x16x16xf32> to vector<1x16x16x16xf32>
    tpu.vector_store %arg5[%c0_47, %c0_48, %c0_49, %c0_50], %44 {strides = array<i32>} : memref<4x16x16x16xf32, #tpu.memory_space<vmem>>, vector<1x16x16x16xf32>,
    %cst_51 = arith.constant dense<0.000000e+00> : vector<16xf32>
    %45 = vector.multi_reduction <add>, %40, %cst_51 [0] : vector<256x16xf32> to vector<16xf32>
    %46 = vector.shape_cast %45 : vector<16xf32> to vector<1x16xf32>
    %47 = arith.addf %23, %46 : vector<1x16xf32>
    %48 = arith.mulf %40, %40 : vector<256x16xf32>
    %cst_52 = arith.constant dense<0.000000e+00> : vector<16xf32>
    %49 = vector.multi_reduction <add>, %48, %cst_52 [0] : vector<256x16xf32> to vector<16xf32>
    %50 = vector.shape_cast %49 : vector<16xf32> to vector<1x16xf32>
    %51 = arith.addf %24, %50 : vector<1x16xf32>
    %c0_53 = arith.constant 0 : index
    %c1_54 = arith.constant 1 : index
    %c0_55 = arith.constant 0 : index
    %52 = vector.load %arg7[%c0_53, %c1_54, %c0_55] : memref<18x18x8xf32, #tpu.memory_space<vmem>>, vector<16x16x8xf32>
    %53 = vector.shape_cast %52 : vector<16x16x8xf32> to vector<256x8xf32>
    %c0_56 = arith.constant 0 : index
    %c0_57 = arith.constant 0 : index
    %54 = vector.load %arg8[%c0_56, %c0_57] : memref<256x32xf32, #tpu.memory_space<vmem>>, vector<256x8xf32>
    tpu.vector_store %arg8[%c0_56, %c0_57], %53 {strides = array<i32>} : memref<256x32xf32, #tpu.memory_space<vmem>>, vector<256x8xf32>,
    %c0_58 = arith.constant 0 : index
    %c2 = arith.constant 2 : index
    %c0_59 = arith.constant 0 : index
    %55 = vector.load %arg7[%c0_58, %c2, %c0_59] : memref<18x18x8xf32, #tpu.memory_space<vmem>>, vector<16x16x8xf32>
    %56 = vector.shape_cast %55 : vector<16x16x8xf32> to vector<256x8xf32>
    %c0_60 = arith.constant 0 : index
    %c8_61 = arith.constant 8 : index
    %57 = vector.load %arg8[%c0_60, %c8_61] : memref<256x32xf32, #tpu.memory_space<vmem>>, vector<256x8xf32>
    tpu.vector_store %arg8[%c0_60, %c8_61], %56 {strides = array<i32>} : memref<256x32xf32, #tpu.memory_space<vmem>>, vector<256x8xf32>,
    %c1_62 = arith.constant 1 : index
    %c1_63 = arith.constant 1 : index
    %c0_64 = arith.constant 0 : index
    %58 = vector.load %arg7[%c1_62, %c1_63, %c0_64] : memref<18x18x8xf32, #tpu.memory_space<vmem>>, vector<16x16x8xf32>
    %59 = vector.shape_cast %58 : vector<16x16x8xf32> to vector<256x8xf32>
    %c0_65 = arith.constant 0 : index
    %c16_66 = arith.constant 16 : index
    %60 = vector.load %arg8[%c0_65, %c16_66] : memref<256x32xf32, #tpu.memory_space<vmem>>, vector<256x8xf32>
    tpu.vector_store %arg8[%c0_65, %c16_66], %59 {strides = array<i32>} : memref<256x32xf32, #tpu.memory_space<vmem>>, vector<256x8xf32>,
    %c1_67 = arith.constant 1 : index
    %c2_68 = arith.constant 2 : index
    %c0_69 = arith.constant 0 : index
    %61 = vector.load %arg7[%c1_67, %c2_68, %c0_69] : memref<18x18x8xf32, #tpu.memory_space<vmem>>, vector<16x16x8xf32>
    %62 = vector.shape_cast %61 : vector<16x16x8xf32> to vector<256x8xf32>
    %c0_70 = arith.constant 0 : index
    %c24_71 = arith.constant 24 : index
    %63 = vector.load %arg8[%c0_70, %c24_71] : memref<256x32xf32, #tpu.memory_space<vmem>>, vector<256x8xf32>
    tpu.vector_store %arg8[%c0_70, %c24_71], %62 {strides = array<i32>} : memref<256x32xf32, #tpu.memory_space<vmem>>, vector<256x8xf32>,
    %c0_72 = arith.constant 0 : index
    %c0_73 = arith.constant 0 : index
    %64 = vector.load %arg8[%c0_72, %c0_73] : memref<256x32xf32, #tpu.memory_space<vmem>>, vector<256x32xf32>
    %c1_74 = arith.constant 1 : index
    %c0_75 = arith.constant 0 : index
    %c0_76 = arith.constant 0 : index
    %65 = vector.load %arg4[%c1_74, %c0_75, %c0_76] : memref<4x32x16xf32, #tpu.memory_space<vmem>>, vector<1x32x16xf32>
    %66 = vector.shape_cast %65 : vector<1x32x16xf32> to vector<32x16xf32>
    %cst_77 = arith.constant dense<0.000000e+00> : vector<256x16xf32>
    %67 = tpu.matmul %64, %66, %cst_77 {dimension_numbers = #tpu.dot_dimension_numbers<[1], [0], [0], [1], [0, 0, 1, 1], [], []>} : vector<256x32xf32>, vector<32x16xf32>, vector<256x16xf32> -> vector<256x16xf32>
    %68 = vector.shape_cast %67 : vector<256x16xf32> to vector<16x16x16xf32>
    %c1_78 = arith.constant 1 : index
    %c0_79 = arith.constant 0 : index
    %c0_80 = arith.constant 0 : index
    %c0_81 = arith.constant 0 : index
    %69 = vector.load %arg5[%c1_78, %c0_79, %c0_80, %c0_81] : memref<4x16x16x16xf32, #tpu.memory_space<vmem>>, vector<1x16x16x16xf32>
    %70 = vector.shape_cast %69 : vector<1x16x16x16xf32> to vector<16x16x16xf32>
    %71 = vector.shape_cast %68 : vector<16x16x16xf32> to vector<1x16x16x16xf32>
    tpu.vector_store %arg5[%c1_78, %c0_79, %c0_80, %c0_81], %71 {strides = array<i32>} : memref<4x16x16x16xf32, #tpu.memory_space<vmem>>, vector<1x16x16x16xf32>,
    %cst_82 = arith.constant dense<0.000000e+00> : vector<16xf32>
    %72 = vector.multi_reduction <add>, %67, %cst_82 [0] : vector<256x16xf32> to vector<16xf32>
    %73 = vector.shape_cast %72 : vector<16xf32> to vector<1x16xf32>
    %74 = arith.addf %47, %73 : vector<1x16xf32>
    %75 = arith.mulf %67, %67 : vector<256x16xf32>
    %cst_83 = arith.constant dense<0.000000e+00> : vector<16xf32>
    %76 = vector.multi_reduction <add>, %75, %cst_83 [0] : vector<256x16xf32> to vector<16xf32>
    %77 = vector.shape_cast %76 : vector<16xf32> to vector<1x16xf32>
    %78 = arith.addf %51, %77 : vector<1x16xf32>
    %c1_84 = arith.constant 1 : index
    %c0_85 = arith.constant 0 : index
    %c0_86 = arith.constant 0 : index
    %79 = vector.load %arg7[%c1_84, %c0_85, %c0_86] : memref<18x18x8xf32, #tpu.memory_space<vmem>>, vector<16x16x8xf32>
    %80 = vector.shape_cast %79 : vector<16x16x8xf32> to vector<256x8xf32>
    %c0_87 = arith.constant 0 : index
    %c0_88 = arith.constant 0 : index
    %81 = vector.load %arg8[%c0_87, %c0_88] : memref<256x32xf32, #tpu.memory_space<vmem>>, vector<256x8xf32>
    tpu.vector_store %arg8[%c0_87, %c0_88], %80 {strides = array<i32>} : memref<256x32xf32, #tpu.memory_space<vmem>>, vector<256x8xf32>,
    %c1_89 = arith.constant 1 : index
    %c1_90 = arith.constant 1 : index
    %c0_91 = arith.constant 0 : index
    %82 = vector.load %arg7[%c1_89, %c1_90, %c0_91] : memref<18x18x8xf32, #tpu.memory_space<vmem>>, vector<16x16x8xf32>
    %83 = vector.shape_cast %82 : vector<16x16x8xf32> to vector<256x8xf32>
    %c0_92 = arith.constant 0 : index
    %c8_93 = arith.constant 8 : index
    %84 = vector.load %arg8[%c0_92, %c8_93] : memref<256x32xf32, #tpu.memory_space<vmem>>, vector<256x8xf32>
    tpu.vector_store %arg8[%c0_92, %c8_93], %83 {strides = array<i32>} : memref<256x32xf32, #tpu.memory_space<vmem>>, vector<256x8xf32>,
    %c2_94 = arith.constant 2 : index
    %c0_95 = arith.constant 0 : index
    %c0_96 = arith.constant 0 : index
    %85 = vector.load %arg7[%c2_94, %c0_95, %c0_96] : memref<18x18x8xf32, #tpu.memory_space<vmem>>, vector<16x16x8xf32>
    %86 = vector.shape_cast %85 : vector<16x16x8xf32> to vector<256x8xf32>
    %c0_97 = arith.constant 0 : index
    %c16_98 = arith.constant 16 : index
    %87 = vector.load %arg8[%c0_97, %c16_98] : memref<256x32xf32, #tpu.memory_space<vmem>>, vector<256x8xf32>
    tpu.vector_store %arg8[%c0_97, %c16_98], %86 {strides = array<i32>} : memref<256x32xf32, #tpu.memory_space<vmem>>, vector<256x8xf32>,
    %c2_99 = arith.constant 2 : index
    %c1_100 = arith.constant 1 : index
    %c0_101 = arith.constant 0 : index
    %88 = vector.load %arg7[%c2_99, %c1_100, %c0_101] : memref<18x18x8xf32, #tpu.memory_space<vmem>>, vector<16x16x8xf32>
    %89 = vector.shape_cast %88 : vector<16x16x8xf32> to vector<256x8xf32>
    %c0_102 = arith.constant 0 : index
    %c24_103 = arith.constant 24 : index
    %90 = vector.load %arg8[%c0_102, %c24_103] : memref<256x32xf32, #tpu.memory_space<vmem>>, vector<256x8xf32>
    tpu.vector_store %arg8[%c0_102, %c24_103], %89 {strides = array<i32>} : memref<256x32xf32, #tpu.memory_space<vmem>>, vector<256x8xf32>,
    %c0_104 = arith.constant 0 : index
    %c0_105 = arith.constant 0 : index
    %91 = vector.load %arg8[%c0_104, %c0_105] : memref<256x32xf32, #tpu.memory_space<vmem>>, vector<256x32xf32>
    %c2_106 = arith.constant 2 : index
    %c0_107 = arith.constant 0 : index
    %c0_108 = arith.constant 0 : index
    %92 = vector.load %arg4[%c2_106, %c0_107, %c0_108] : memref<4x32x16xf32, #tpu.memory_space<vmem>>, vector<1x32x16xf32>
    %93 = vector.shape_cast %92 : vector<1x32x16xf32> to vector<32x16xf32>
    %cst_109 = arith.constant dense<0.000000e+00> : vector<256x16xf32>
    %94 = tpu.matmul %91, %93, %cst_109 {dimension_numbers = #tpu.dot_dimension_numbers<[1], [0], [0], [1], [0, 0, 1, 1], [], []>} : vector<256x32xf32>, vector<32x16xf32>, vector<256x16xf32> -> vector<256x16xf32>
    %95 = vector.shape_cast %94 : vector<256x16xf32> to vector<16x16x16xf32>
    %c2_110 = arith.constant 2 : index
    %c0_111 = arith.constant 0 : index
    %c0_112 = arith.constant 0 : index
    %c0_113 = arith.constant 0 : index
    %96 = vector.load %arg5[%c2_110, %c0_111, %c0_112, %c0_113] : memref<4x16x16x16xf32, #tpu.memory_space<vmem>>, vector<1x16x16x16xf32>
    %97 = vector.shape_cast %96 : vector<1x16x16x16xf32> to vector<16x16x16xf32>
    %98 = vector.shape_cast %95 : vector<16x16x16xf32> to vector<1x16x16x16xf32>
    tpu.vector_store %arg5[%c2_110, %c0_111, %c0_112, %c0_113], %98 {strides = array<i32>} : memref<4x16x16x16xf32, #tpu.memory_space<vmem>>, vector<1x16x16x16xf32>,
    %cst_114 = arith.constant dense<0.000000e+00> : vector<16xf32>
    %99 = vector.multi_reduction <add>, %94, %cst_114 [0] : vector<256x16xf32> to vector<16xf32>
    %100 = vector.shape_cast %99 : vector<16xf32> to vector<1x16xf32>
    %101 = arith.addf %74, %100 : vector<1x16xf32>
    %102 = arith.mulf %94, %94 : vector<256x16xf32>
    %cst_115 = arith.constant dense<0.000000e+00> : vector<16xf32>
    %103 = vector.multi_reduction <add>, %102, %cst_115 [0] : vector<256x16xf32> to vector<16xf32>
    %104 = vector.shape_cast %103 : vector<16xf32> to vector<1x16xf32>
    %105 = arith.addf %78, %104 : vector<1x16xf32>
    %c1_116 = arith.constant 1 : index
    %c1_117 = arith.constant 1 : index
    %c0_118 = arith.constant 0 : index
    %106 = vector.load %arg7[%c1_116, %c1_117, %c0_118] : memref<18x18x8xf32, #tpu.memory_space<vmem>>, vector<16x16x8xf32>
    %107 = vector.shape_cast %106 : vector<16x16x8xf32> to vector<256x8xf32>
    %c0_119 = arith.constant 0 : index
    %c0_120 = arith.constant 0 : index
    %108 = vector.load %arg8[%c0_119, %c0_120] : memref<256x32xf32, #tpu.memory_space<vmem>>, vector<256x8xf32>
    tpu.vector_store %arg8[%c0_119, %c0_120], %107 {strides = array<i32>} : memref<256x32xf32, #tpu.memory_space<vmem>>, vector<256x8xf32>,
    %c1_121 = arith.constant 1 : index
    %c2_122 = arith.constant 2 : index
    %c0_123 = arith.constant 0 : index
    %109 = vector.load %arg7[%c1_121, %c2_122, %c0_123] : memref<18x18x8xf32, #tpu.memory_space<vmem>>, vector<16x16x8xf32>
    %110 = vector.shape_cast %109 : vector<16x16x8xf32> to vector<256x8xf32>
    %c0_124 = arith.constant 0 : index
    %c8_125 = arith.constant 8 : index
    %111 = vector.load %arg8[%c0_124, %c8_125] : memref<256x32xf32, #tpu.memory_space<vmem>>, vector<256x8xf32>
    tpu.vector_store %arg8[%c0_124, %c8_125], %110 {strides = array<i32>} : memref<256x32xf32, #tpu.memory_space<vmem>>, vector<256x8xf32>,
    %c2_126 = arith.constant 2 : index
    %c1_127 = arith.constant 1 : index
    %c0_128 = arith.constant 0 : index
    %112 = vector.load %arg7[%c2_126, %c1_127, %c0_128] : memref<18x18x8xf32, #tpu.memory_space<vmem>>, vector<16x16x8xf32>
    %113 = vector.shape_cast %112 : vector<16x16x8xf32> to vector<256x8xf32>
    %c0_129 = arith.constant 0 : index
    %c16_130 = arith.constant 16 : index
    %114 = vector.load %arg8[%c0_129, %c16_130] : memref<256x32xf32, #tpu.memory_space<vmem>>, vector<256x8xf32>
    tpu.vector_store %arg8[%c0_129, %c16_130], %113 {strides = array<i32>} : memref<256x32xf32, #tpu.memory_space<vmem>>, vector<256x8xf32>,
    %c2_131 = arith.constant 2 : index
    %c2_132 = arith.constant 2 : index
    %c0_133 = arith.constant 0 : index
    %115 = vector.load %arg7[%c2_131, %c2_132, %c0_133] : memref<18x18x8xf32, #tpu.memory_space<vmem>>, vector<16x16x8xf32>
    %116 = vector.shape_cast %115 : vector<16x16x8xf32> to vector<256x8xf32>
    %c0_134 = arith.constant 0 : index
    %c24_135 = arith.constant 24 : index
    %117 = vector.load %arg8[%c0_134, %c24_135] : memref<256x32xf32, #tpu.memory_space<vmem>>, vector<256x8xf32>
    tpu.vector_store %arg8[%c0_134, %c24_135], %116 {strides = array<i32>} : memref<256x32xf32, #tpu.memory_space<vmem>>, vector<256x8xf32>,
    %c0_136 = arith.constant 0 : index
    %c0_137 = arith.constant 0 : index
    %118 = vector.load %arg8[%c0_136, %c0_137] : memref<256x32xf32, #tpu.memory_space<vmem>>, vector<256x32xf32>
    %c3 = arith.constant 3 : index
    %c0_138 = arith.constant 0 : index
    %c0_139 = arith.constant 0 : index
    %119 = vector.load %arg4[%c3, %c0_138, %c0_139] : memref<4x32x16xf32, #tpu.memory_space<vmem>>, vector<1x32x16xf32>
    %120 = vector.shape_cast %119 : vector<1x32x16xf32> to vector<32x16xf32>
    %cst_140 = arith.constant dense<0.000000e+00> : vector<256x16xf32>
    %121 = tpu.matmul %118, %120, %cst_140 {dimension_numbers = #tpu.dot_dimension_numbers<[1], [0], [0], [1], [0, 0, 1, 1], [], []>} : vector<256x32xf32>, vector<32x16xf32>, vector<256x16xf32> -> vector<256x16xf32>
    %122 = vector.shape_cast %121 : vector<256x16xf32> to vector<16x16x16xf32>
    %c3_141 = arith.constant 3 : index
    %c0_142 = arith.constant 0 : index
    %c0_143 = arith.constant 0 : index
    %c0_144 = arith.constant 0 : index
    %123 = vector.load %arg5[%c3_141, %c0_142, %c0_143, %c0_144] : memref<4x16x16x16xf32, #tpu.memory_space<vmem>>, vector<1x16x16x16xf32>
    %124 = vector.shape_cast %123 : vector<1x16x16x16xf32> to vector<16x16x16xf32>
    %125 = vector.shape_cast %122 : vector<16x16x16xf32> to vector<1x16x16x16xf32>
    tpu.vector_store %arg5[%c3_141, %c0_142, %c0_143, %c0_144], %125 {strides = array<i32>} : memref<4x16x16x16xf32, #tpu.memory_space<vmem>>, vector<1x16x16x16xf32>,
    %cst_145 = arith.constant dense<0.000000e+00> : vector<16xf32>
    %126 = vector.multi_reduction <add>, %121, %cst_145 [0] : vector<256x16xf32> to vector<16xf32>
    %127 = vector.shape_cast %126 : vector<16xf32> to vector<1x16xf32>
    %128 = arith.addf %101, %127 : vector<1x16xf32>
    %129 = arith.mulf %121, %121 : vector<256x16xf32>
    %cst_146 = arith.constant dense<0.000000e+00> : vector<16xf32>
    %130 = vector.multi_reduction <add>, %129, %cst_146 [0] : vector<256x16xf32> to vector<16xf32>
    %131 = vector.shape_cast %130 : vector<16xf32> to vector<1x16xf32>
    %132 = arith.addf %105, %131 : vector<1x16xf32>
    %c0_147 = arith.constant 0 : index
    %c0_148 = arith.constant 0 : index
    %c0_149 = arith.constant 0 : index
    %133 = vector.load %arg6[%c0_147, %c0_148, %c0_149] : memref<1x2x16xf32, #tpu.memory_space<vmem>>, vector<1x1x16xf32>
    %134 = vector.shape_cast %133 : vector<1x1x16xf32> to vector<1x16xf32>
    %135 = vector.shape_cast %128 : vector<1x16xf32> to vector<1x1x16xf32>
    tpu.vector_store %arg6[%c0_147, %c0_148, %c0_149], %135 {strides = array<i32>} : memref<1x2x16xf32, #tpu.memory_space<vmem>>, vector<1x1x16xf32>,
    %c0_150 = arith.constant 0 : index
    %c1_151 = arith.constant 1 : index
    %c0_152 = arith.constant 0 : index
    %136 = vector.load %arg6[%c0_150, %c1_151, %c0_152] : memref<1x2x16xf32, #tpu.memory_space<vmem>>, vector<1x1x16xf32>
    %137 = vector.shape_cast %136 : vector<1x1x16xf32> to vector<1x16xf32>
    %138 = vector.shape_cast %132 : vector<1x16xf32> to vector<1x1x16xf32>
    tpu.vector_store %arg6[%c0_150, %c1_151, %c0_152], %138 {strides = array<i32>} : memref<1x2x16xf32, #tpu.memory_space<vmem>>, vector<1x1x16xf32>,
    return
  }
  func.func @transform_0(%arg0: i32) -> (i32, i32, i32, i32) {
    %c0_i32 = arith.constant 0 : i32
    %c0_i32_0 = arith.constant 0 : i32
    %c0_i32_1 = arith.constant 0 : i32
    %c0_i32_2 = arith.constant 0 : i32
    return %arg0, %c0_i32, %c0_i32_0, %c0_i32_1 : i32, i32, i32, i32
  }
  func.func @transform_1(%arg0: i32) -> (i32, i32) {
    %c0_i32 = arith.constant 0 : i32
    %c0_i32_0 = arith.constant 0 : i32
    %c0_i32_1 = arith.constant 0 : i32
    return %c0_i32, %c0_i32_0 : i32, i32
  }
  func.func @transform_2(%arg0: i32) -> (i32, i32) {
    %c0_i32 = arith.constant 0 : i32
    %c0_i32_0 = arith.constant 0 : i32
    %c0_i32_1 = arith.constant 0 : i32
    return %c0_i32, %c0_i32_0 : i32, i32
  }
  func.func @transform_3(%arg0: i32) -> (i32, i32, i32) {
    %c0_i32 = arith.constant 0 : i32
    %c0_i32_0 = arith.constant 0 : i32
    %c0_i32_1 = arith.constant 0 : i32
    %c0_i32_2 = arith.constant 0 : i32
    return %c0_i32, %c0_i32_0, %c0_i32_1 : i32, i32, i32
  }
  func.func @transform_4(%arg0: i32) -> (i32, i32, i32, i32) {
    %c0_i32 = arith.constant 0 : i32
    %c0_i32_0 = arith.constant 0 : i32
    %c0_i32_1 = arith.constant 0 : i32
    %c0_i32_2 = arith.constant 0 : i32
    return %arg0, %c0_i32, %c0_i32_0, %c0_i32_1 : i32, i32, i32, i32
  }
  func.func @transform_5(%arg0: i32) -> (i32, i32, i32) {
    %c0_i32 = arith.constant 0 : i32
    %c0_i32_0 = arith.constant 0 : i32
    %c0_i32_1 = arith.constant 0 : i32
    return %arg0, %c0_i32, %c0_i32_0 : i32, i32, i32
  }
}

module attributes {stable_mosaic.version = 11 : i64} {
  func.func @_bn2_add_identity_kernel(%arg0: i32, %arg1: memref<4x16x16x16xf32, #tpu.memory_space<vmem>>, %arg2: memref<1x16x16x4xf32, #tpu.memory_space<vmem>>, %arg3: memref<1x16xf32, #tpu.memory_space<vmem>>, %arg4: memref<1x16xf32, #tpu.memory_space<vmem>>, %arg5: memref<4x16xf32, #tpu.memory_space<vmem>>, %arg6: memref<1x16xf32, #tpu.memory_space<vmem>>, %arg7: memref<4x16x16x16xf32, #tpu.memory_space<vmem>>) attributes {dimension_semantics = [#tpu.dimension_semantics<parallel>], iteration_bounds = array<i64: 2>, scalar_prefetch = 0 : i64, scratch_operands = 0 : i64, tpu.core_type = #tpu.core_type<tc>, window_params = [{transform_indices = @transform_0, window_bounds = array<i64: 4, 16, 16, 16>}, {transform_indices = @transform_1, window_bounds = array<i64: 1, 16, 16, 4>}, {pipeline_mode = #tpu.pipeline_mode<synchronous>, transform_indices = @transform_2, window_bounds = array<i64: 1, 16>}, {pipeline_mode = #tpu.pipeline_mode<synchronous>, transform_indices = @transform_3, window_bounds = array<i64: 1, 16>}, {pipeline_mode = #tpu.pipeline_mode<synchronous>, transform_indices = @transform_4, window_bounds = array<i64: 4, 16>}, {pipeline_mode = #tpu.pipeline_mode<synchronous>, transform_indices = @transform_5, window_bounds = array<i64: 1, 16>}, {transform_indices = @transform_6, window_bounds = array<i64: 4, 16, 16, 16>}]} {
    %c0 = arith.constant 0 : index
    %c0_0 = arith.constant 0 : index
    %c0_1 = arith.constant 0 : index
    %c0_2 = arith.constant 0 : index
    %0 = vector.load %arg2[%c0, %c0_0, %c0_1, %c0_2] : memref<1x16x16x4xf32, #tpu.memory_space<vmem>>, vector<1x16x16x4xf32>
    %1 = vector.shape_cast %0 : vector<1x16x16x4xf32> to vector<16x16x4xf32>
    %2 = vector.shape_cast %1 : vector<16x16x4xf32> to vector<256x4xf32>
    %c0_3 = arith.constant 0 : index
    %c0_4 = arith.constant 0 : index
    %3 = vector.load %arg5[%c0_3, %c0_4] : memref<4x16xf32, #tpu.memory_space<vmem>>, vector<4x16xf32>
    %cst = arith.constant dense<0.000000e+00> : vector<256x16xf32>
    %4 = tpu.matmul %2, %3, %cst {dimension_numbers = #tpu.dot_dimension_numbers<[1], [0], [0], [1], [0, 0, 1, 1], [], []>} : vector<256x4xf32>, vector<4x16xf32>, vector<256x16xf32> -> vector<256x16xf32>
    %c0_5 = arith.constant 0 : index
    %c0_6 = arith.constant 0 : index
    %5 = vector.load %arg6[%c0_5, %c0_6] : memref<1x16xf32, #tpu.memory_space<vmem>>, vector<1x16xf32>
    %6 = vector.broadcast %5 : vector<1x16xf32> to vector<256x16xf32>
    %7 = arith.addf %4, %6 : vector<256x16xf32>
    %8 = vector.shape_cast %7 : vector<256x16xf32> to vector<16x16x16xf32>
    %c0_7 = arith.constant 0 : index
    %c0_8 = arith.constant 0 : index
    %9 = vector.load %arg3[%c0_7, %c0_8] : memref<1x16xf32, #tpu.memory_space<vmem>>, vector<1x16xf32>
    %c0_9 = arith.constant 0 : index
    %c0_10 = arith.constant 0 : index
    %10 = vector.load %arg4[%c0_9, %c0_10] : memref<1x16xf32, #tpu.memory_space<vmem>>, vector<1x16xf32>
    %c0_11 = arith.constant 0 : index
    %c0_12 = arith.constant 0 : index
    %c0_13 = arith.constant 0 : index
    %c0_14 = arith.constant 0 : index
    %11 = vector.load %arg1[%c0_11, %c0_12, %c0_13, %c0_14] : memref<4x16x16x16xf32, #tpu.memory_space<vmem>>, vector<1x16x16x16xf32>
    %12 = vector.shape_cast %11 : vector<1x16x16x16xf32> to vector<16x16x16xf32>
    %13 = vector.shape_cast %9 : vector<1x16xf32> to vector<1x1x16xf32>
    %14 = vector.broadcast %13 : vector<1x1x16xf32> to vector<16x16x16xf32>
    %15 = arith.mulf %12, %14 : vector<16x16x16xf32>
    %16 = vector.shape_cast %10 : vector<1x16xf32> to vector<1x1x16xf32>
    %17 = vector.broadcast %16 : vector<1x1x16xf32> to vector<16x16x16xf32>
    %18 = arith.addf %15, %17 : vector<16x16x16xf32>
    %19 = arith.addf %18, %8 : vector<16x16x16xf32>
    %c0_15 = arith.constant 0 : index
    %c0_16 = arith.constant 0 : index
    %c0_17 = arith.constant 0 : index
    %c0_18 = arith.constant 0 : index
    %20 = vector.load %arg7[%c0_15, %c0_16, %c0_17, %c0_18] : memref<4x16x16x16xf32, #tpu.memory_space<vmem>>, vector<1x16x16x16xf32>
    %21 = vector.shape_cast %20 : vector<1x16x16x16xf32> to vector<16x16x16xf32>
    %22 = vector.shape_cast %19 : vector<16x16x16xf32> to vector<1x16x16x16xf32>
    tpu.vector_store %arg7[%c0_15, %c0_16, %c0_17, %c0_18], %22 {strides = array<i32>} : memref<4x16x16x16xf32, #tpu.memory_space<vmem>>, vector<1x16x16x16xf32>,
    %c1 = arith.constant 1 : index
    %c0_19 = arith.constant 0 : index
    %c0_20 = arith.constant 0 : index
    %c0_21 = arith.constant 0 : index
    %23 = vector.load %arg1[%c1, %c0_19, %c0_20, %c0_21] : memref<4x16x16x16xf32, #tpu.memory_space<vmem>>, vector<1x16x16x16xf32>
    %24 = vector.shape_cast %23 : vector<1x16x16x16xf32> to vector<16x16x16xf32>
    %25 = vector.shape_cast %9 : vector<1x16xf32> to vector<1x1x16xf32>
    %26 = vector.broadcast %25 : vector<1x1x16xf32> to vector<16x16x16xf32>
    %27 = arith.mulf %24, %26 : vector<16x16x16xf32>
    %28 = vector.shape_cast %10 : vector<1x16xf32> to vector<1x1x16xf32>
    %29 = vector.broadcast %28 : vector<1x1x16xf32> to vector<16x16x16xf32>
    %30 = arith.addf %27, %29 : vector<16x16x16xf32>
    %31 = arith.addf %30, %8 : vector<16x16x16xf32>
    %c1_22 = arith.constant 1 : index
    %c0_23 = arith.constant 0 : index
    %c0_24 = arith.constant 0 : index
    %c0_25 = arith.constant 0 : index
    %32 = vector.load %arg7[%c1_22, %c0_23, %c0_24, %c0_25] : memref<4x16x16x16xf32, #tpu.memory_space<vmem>>, vector<1x16x16x16xf32>
    %33 = vector.shape_cast %32 : vector<1x16x16x16xf32> to vector<16x16x16xf32>
    %34 = vector.shape_cast %31 : vector<16x16x16xf32> to vector<1x16x16x16xf32>
    tpu.vector_store %arg7[%c1_22, %c0_23, %c0_24, %c0_25], %34 {strides = array<i32>} : memref<4x16x16x16xf32, #tpu.memory_space<vmem>>, vector<1x16x16x16xf32>,
    %c2 = arith.constant 2 : index
    %c0_26 = arith.constant 0 : index
    %c0_27 = arith.constant 0 : index
    %c0_28 = arith.constant 0 : index
    %35 = vector.load %arg1[%c2, %c0_26, %c0_27, %c0_28] : memref<4x16x16x16xf32, #tpu.memory_space<vmem>>, vector<1x16x16x16xf32>
    %36 = vector.shape_cast %35 : vector<1x16x16x16xf32> to vector<16x16x16xf32>
    %37 = vector.shape_cast %9 : vector<1x16xf32> to vector<1x1x16xf32>
    %38 = vector.broadcast %37 : vector<1x1x16xf32> to vector<16x16x16xf32>
    %39 = arith.mulf %36, %38 : vector<16x16x16xf32>
    %40 = vector.shape_cast %10 : vector<1x16xf32> to vector<1x1x16xf32>
    %41 = vector.broadcast %40 : vector<1x1x16xf32> to vector<16x16x16xf32>
    %42 = arith.addf %39, %41 : vector<16x16x16xf32>
    %43 = arith.addf %42, %8 : vector<16x16x16xf32>
    %c2_29 = arith.constant 2 : index
    %c0_30 = arith.constant 0 : index
    %c0_31 = arith.constant 0 : index
    %c0_32 = arith.constant 0 : index
    %44 = vector.load %arg7[%c2_29, %c0_30, %c0_31, %c0_32] : memref<4x16x16x16xf32, #tpu.memory_space<vmem>>, vector<1x16x16x16xf32>
    %45 = vector.shape_cast %44 : vector<1x16x16x16xf32> to vector<16x16x16xf32>
    %46 = vector.shape_cast %43 : vector<16x16x16xf32> to vector<1x16x16x16xf32>
    tpu.vector_store %arg7[%c2_29, %c0_30, %c0_31, %c0_32], %46 {strides = array<i32>} : memref<4x16x16x16xf32, #tpu.memory_space<vmem>>, vector<1x16x16x16xf32>,
    %c3 = arith.constant 3 : index
    %c0_33 = arith.constant 0 : index
    %c0_34 = arith.constant 0 : index
    %c0_35 = arith.constant 0 : index
    %47 = vector.load %arg1[%c3, %c0_33, %c0_34, %c0_35] : memref<4x16x16x16xf32, #tpu.memory_space<vmem>>, vector<1x16x16x16xf32>
    %48 = vector.shape_cast %47 : vector<1x16x16x16xf32> to vector<16x16x16xf32>
    %49 = vector.shape_cast %9 : vector<1x16xf32> to vector<1x1x16xf32>
    %50 = vector.broadcast %49 : vector<1x1x16xf32> to vector<16x16x16xf32>
    %51 = arith.mulf %48, %50 : vector<16x16x16xf32>
    %52 = vector.shape_cast %10 : vector<1x16xf32> to vector<1x1x16xf32>
    %53 = vector.broadcast %52 : vector<1x1x16xf32> to vector<16x16x16xf32>
    %54 = arith.addf %51, %53 : vector<16x16x16xf32>
    %55 = arith.addf %54, %8 : vector<16x16x16xf32>
    %c3_36 = arith.constant 3 : index
    %c0_37 = arith.constant 0 : index
    %c0_38 = arith.constant 0 : index
    %c0_39 = arith.constant 0 : index
    %56 = vector.load %arg7[%c3_36, %c0_37, %c0_38, %c0_39] : memref<4x16x16x16xf32, #tpu.memory_space<vmem>>, vector<1x16x16x16xf32>
    %57 = vector.shape_cast %56 : vector<1x16x16x16xf32> to vector<16x16x16xf32>
    %58 = vector.shape_cast %55 : vector<16x16x16xf32> to vector<1x16x16x16xf32>
    tpu.vector_store %arg7[%c3_36, %c0_37, %c0_38, %c0_39], %58 {strides = array<i32>} : memref<4x16x16x16xf32, #tpu.memory_space<vmem>>, vector<1x16x16x16xf32>,
    return
  }
  func.func @transform_0(%arg0: i32) -> (i32, i32, i32, i32) {
    %c0_i32 = arith.constant 0 : i32
    %c0_i32_0 = arith.constant 0 : i32
    %c0_i32_1 = arith.constant 0 : i32
    %c0_i32_2 = arith.constant 0 : i32
    return %arg0, %c0_i32, %c0_i32_0, %c0_i32_1 : i32, i32, i32, i32
  }
  func.func @transform_1(%arg0: i32) -> (i32, i32, i32, i32) {
    %c0_i32 = arith.constant 0 : i32
    %c0_i32_0 = arith.constant 0 : i32
    %c0_i32_1 = arith.constant 0 : i32
    %c0_i32_2 = arith.constant 0 : i32
    return %arg0, %c0_i32, %c0_i32_0, %c0_i32_1 : i32, i32, i32, i32
  }
  func.func @transform_2(%arg0: i32) -> (i32, i32) {
    %c0_i32 = arith.constant 0 : i32
    %c0_i32_0 = arith.constant 0 : i32
    %c0_i32_1 = arith.constant 0 : i32
    return %c0_i32, %c0_i32_0 : i32, i32
  }
  func.func @transform_3(%arg0: i32) -> (i32, i32) {
    %c0_i32 = arith.constant 0 : i32
    %c0_i32_0 = arith.constant 0 : i32
    %c0_i32_1 = arith.constant 0 : i32
    return %c0_i32, %c0_i32_0 : i32, i32
  }
  func.func @transform_4(%arg0: i32) -> (i32, i32) {
    %c0_i32 = arith.constant 0 : i32
    %c0_i32_0 = arith.constant 0 : i32
    %c0_i32_1 = arith.constant 0 : i32
    return %c0_i32, %c0_i32_0 : i32, i32
  }
  func.func @transform_5(%arg0: i32) -> (i32, i32) {
    %c0_i32 = arith.constant 0 : i32
    %c0_i32_0 = arith.constant 0 : i32
    %c0_i32_1 = arith.constant 0 : i32
    return %c0_i32, %c0_i32_0 : i32, i32
  }
  func.func @transform_6(%arg0: i32) -> (i32, i32, i32, i32) {
    %c0_i32 = arith.constant 0 : i32
    %c0_i32_0 = arith.constant 0 : i32
    %c0_i32_1 = arith.constant 0 : i32
    %c0_i32_2 = arith.constant 0 : i32
    return %arg0, %c0_i32, %c0_i32_0, %c0_i32_1 : i32, i32, i32, i32
  }
}

</mosaic_0001>

<llo_original>
// kernel: _lambda_.5
$region0: #{_lambda_.5}
  #allocation0 [shape = 'u32[]', space=smem, size = 0x4, offset = 0x4, fixed_abs, tag = 'smem constant byte address 0x4 - core index']
  #allocation1 [shape = 'u32[144,128]{1,0:T(1,128)}', space=vmem, size = 0x12000, scoped, tag = 'internal scratch']
  %s0 = inlined_call_operand.vmem [shape: f32[8,16,16,16], index: 0, kind: input, shape index: {}]
  %s1 = inlined_call_operand.vmem [shape: f32[2,16,16,4], index: 1, kind: input, shape index: {}]
  %s2 = inlined_call_operand.vmem [shape: f32[1,16], index: 2, kind: input, shape index: {}]
  %s3 = inlined_call_operand.vmem [shape: f32[1,16], index: 3, kind: input, shape index: {}]
  %s4 = inlined_call_operand.vmem [shape: f32[4,16], index: 4, kind: input, shape index: {}]
  %s5 = inlined_call_operand.vmem [shape: f32[1,16], index: 5, kind: input, shape index: {}]
  %s6 = inlined_call_operand.vmem [shape: f32[8,16,16,16], index: 6, kind: output, shape index: {}]
  %s7 = sld [smem:[#allocation0]]
  $region57: #{_lambda_.5} parent=0
    _
  %s9 = ssub.s32 1, %s7
  %s10 = scalar_select 0, %s9, %s7
  loop: start=0, step=1, limit=4
  $region2: #{_lambda_.5} parent=0 // loop_pre_header
    _
  $region3: #{_lambda_.5} parent=0 // loop_header
    %s12 = sphi 0, %s16
    %p13 = scmp.ge.s32.totalorder %s12, 4
    %s22 = sphi 0, %s24
    %s25 = sphi 0, %s22
    %s26 = sphi 0, %s25
    %s42 = sphi 0, %s26
    %s48 = sphi 0, %s50
    %s51 = sphi 0, %s48
    %s52 = sphi 0, %s51
    %s68 = sphi 0, %s52
    %s72 = sphi 0, %s72
    %s74 = sphi 0, %s72
    %s75 = sphi 0, %s74
    %s89 = sphi 0, %s75
    %s93 = sphi 0, %s93
    %s95 = sphi 0, %s93
    %s96 = sphi 0, %s95
    %s110 = sphi 0, %s96
    %s114 = sphi 0, %s114
    %s116 = sphi 0, %s114
    %s117 = sphi 0, %s116
    %s131 = sphi 0, %s117
    %s135 = sphi 0, %s135
    %s137 = sphi 0, %s135
    %s138 = sphi 0, %s137
    %s152 = sphi 0, %s138
    %s158 = sphi 0, %s160
    %s161 = sphi 0, %s158
    %s162 = sphi 0, %s161
    %s178 = sphi 0, %s162
  $region4: #{_lambda_.5} parent=0 // loop_header_branch
    %15 = sbr.rel (%p13) target = $region8
  $region5: #{_lambda_.5} parent=0 // loop_body
    %s17 = ssub.s32 %s12, 1
    %s18 = ssub.s32 %s12, 2
    %s19 = sadd.s32 %s12, 1
    %s20 = ssub.s32 %s12, %s19
    %p21 = scmp.eq.s32.totalorder %s20, 0
    %s23 = sadd.s32 %s22, 1
    %s24 = scalar_select %p21, %s22, %s23
    %p27 = pneg %p21
    %p28 = scmp.eq.s32.totalorder %s12, 1
    %p29 = por %p27, %p28
    %p30 = scmp.ne.s32.totalorder %s22, %s25
    %p31 = scmp.eq.s32.totalorder %s12, 0
    %p32 = por %p30, %p31
    %p33 = scmp.ne.s32.totalorder %s22, %s25
    %p34 = scmp.eq.s32.totalorder %s17, 1
    %p35 = por %p33, %p34
    %p36 = scmp.ne.s32.totalorder %s25, %s26
    %p37 = scmp.eq.s32.totalorder %s17, 0
    %p38 = por %p36, %p37
    %p39 = scmp.ne.s32.totalorder %s25, %s26
    %p40 = scmp.eq.s32.totalorder %s18, 1
    %p41 = por %p39, %p40
    %p43 = scmp.ne.s32.totalorder %s26, %s42
    %p44 = scmp.eq.s32.totalorder %s18, 0
    %p45 = por %p43, %p44
    %s46 = ssub.s32 %s12, %s19
    %p47 = scmp.eq.s32.totalorder %s46, 0
    %s49 = sadd.s32 %s48, 1
    %s50 = scalar_select %p47, %s48, %s49
    %p53 = pneg %p47
    %p54 = scmp.eq.s32.totalorder %s12, 1
    %p55 = por %p53, %p54
    %p56 = scmp.ne.s32.totalorder %s48, %s51
    %p57 = scmp.eq.s32.totalorder %s12, 0
    %p58 = por %p56, %p57
    %p59 = scmp.ne.s32.totalorder %s48, %s51
    %p60 = scmp.eq.s32.totalorder %s17, 1
    %p61 = por %p59, %p60
    %p62 = scmp.ne.s32.totalorder %s51, %s52
    %p63 = scmp.eq.s32.totalorder %s17, 0
    %p64 = por %p62, %p63
    %p65 = scmp.ne.s32.totalorder %s51, %s52
    %p66 = scmp.eq.s32.totalorder %s18, 1
    %p67 = por %p65, %p66
    %p69 = scmp.ne.s32.totalorder %s52, %s68
    %p70 = scmp.eq.s32.totalorder %s18, 0
    %p71 = por %p69, %p70
    %s73 = sadd.s32 %s72, 1
    %p76 = scmp.eq.s32.totalorder %s12, 1
    %p77 = scmp.ne.s32.totalorder %s72, %s74
    %p78 = scmp.eq.s32.totalorder %s12, 0
    %p79 = por %p77, %p78
    %p80 = scmp.ne.s32.totalorder %s72, %s74
    %p81 = scmp.eq.s32.totalorder %s17, 1
    %p82 = por %p80, %p81
    %p83 = scmp.ne.s32.totalorder %s74, %s75
    %p84 = scmp.eq.s32.totalorder %s17, 0
    %p85 = por %p83, %p84
    %p86 = scmp.ne.s32.totalorder %s74, %s75
    %p87 = scmp.eq.s32.totalorder %s18, 1
    %p88 = por %p86, %p87
    %p90 = scmp.ne.s32.totalorder %s75, %s89
    %p91 = scmp.eq.s32.totalorder %s18, 0
    %p92 = por %p90, %p91
    %s94 = sadd.s32 %s93, 1
    %p97 = scmp.eq.s32.totalorder %s12, 1
    %p98 = scmp.ne.s32.totalorder %s93, %s95
    %p99 = scmp.eq.s32.totalorder %s12, 0
    %p100 = por %p98, %p99
    %p101 = scmp.ne.s32.totalorder %s93, %s95
    %p102 = scmp.eq.s32.totalorder %s17, 1
    %p103 = por %p101, %p102
    %p104 = scmp.ne.s32.totalorder %s95, %s96
    %p105 = scmp.eq.s32.totalorder %s17, 0
    %p106 = por %p104, %p105
    %p107 = scmp.ne.s32.totalorder %s95, %s96
    %p108 = scmp.eq.s32.totalorder %s18, 1
    %p109 = por %p107, %p108
    %p111 = scmp.ne.s32.totalorder %s96, %s110
    %p112 = scmp.eq.s32.totalorder %s18, 0
    %p113 = por %p111, %p112
    %s115 = sadd.s32 %s114, 1
    %p118 = scmp.eq.s32.totalorder %s12, 1
    %p119 = scmp.ne.s32.totalorder %s114, %s116
    %p120 = scmp.eq.s32.totalorder %s12, 0
    %p121 = por %p119, %p120
    %p122 = scmp.ne.s32.totalorder %s114, %s116
    %p123 = scmp.eq.s32.totalorder %s17, 1
    %p124 = por %p122, %p123
    %p125 = scmp.ne.s32.totalorder %s116, %s117
    %p126 = scmp.eq.s32.totalorder %s17, 0
    %p127 = por %p125, %p126
    %p128 = scmp.ne.s32.totalorder %s116, %s117
    %p129 = scmp.eq.s32.totalorder %s18, 1
    %p130 = por %p128, %p129
    %p132 = scmp.ne.s32.totalorder %s117, %s131
    %p133 = scmp.eq.s32.totalorder %s18, 0
    %p134 = por %p132, %p133
    %s136 = sadd.s32 %s135, 1
    %p139 = scmp.eq.s32.totalorder %s12, 1
    %p140 = scmp.ne.s32.totalorder %s135, %s137
    %p141 = scmp.eq.s32.totalorder %s12, 0
    %p142 = por %p140, %p141
    %p143 = scmp.ne.s32.totalorder %s135, %s137
    %p144 = scmp.eq.s32.totalorder %s17, 1
    %p145 = por %p143, %p144
    %p146 = scmp.ne.s32.totalorder %s137, %s138
    %p147 = scmp.eq.s32.totalorder %s17, 0
    %p148 = por %p146, %p147
    %p149 = scmp.ne.s32.totalorder %s137, %s138
    %p150 = scmp.eq.s32.totalorder %s18, 1
    %p151 = por %p149, %p150
    %p153 = scmp.ne.s32.totalorder %s138, %s152
    %p154 = scmp.eq.s32.totalorder %s18, 0
    %p155 = por %p153, %p154
    %s156 = ssub.s32 %s12, %s19
    %p157 = scmp.eq.s32.totalorder %s156, 0
    %s159 = sadd.s32 %s158, 1
    %s160 = scalar_select %p157, %s158, %s159
    %p163 = pneg %p157
    %p164 = scmp.eq.s32.totalorder %s12, 1
    %p165 = por %p163, %p164
    %p166 = scmp.ne.s32.totalorder %s158, %s161
    %p167 = scmp.eq.s32.totalorder %s12, 0
    %p168 = por %p166, %p167
    %p169 = scmp.ne.s32.totalorder %s158, %s161
    %p170 = scmp.eq.s32.totalorder %s17, 1
    %p171 = por %p169, %p170
    %p172 = scmp.ne.s32.totalorder %s161, %s162
    %p173 = scmp.eq.s32.totalorder %s17, 0
    %p174 = por %p172, %p173
    %p175 = scmp.ne.s32.totalorder %s161, %s162
    %p176 = scmp.eq.s32.totalorder %s18, 1
    %p177 = por %p175, %p176
    %p179 = scmp.ne.s32.totalorder %s162, %s178
    %p180 = scmp.eq.s32.totalorder %s18, 0
    %p181 = por %p179, %p180
    %p182 = scmp.le.s32.totalorder 1, %s12
    %p183 = scmp.lt.s32.totalorder %s12, 3
    %p184 = pnand %p182, %p183
    %p185 = pneg %p184
    // Predicated region
    $region9: #{_lambda_.5} parent=5 // pred_check
      _
    $region10: #{_lambda_.5} parent=5 // pred_check_branch
      %187 = sbr.rel (%p184) target = $region12
    $region11: #{_lambda_.5} parent=5 // pred_region
      %s188 = ssub.s32 %s12, 1
      // Predicated region
      $region13: #{_lambda_.5} parent=11 // pred_check
        %p189 = pneg %p85
      $region14: #{_lambda_.5} parent=11 // pred_check_branch
        %191 = sbr.rel (%p189) target = $region16
      $region15: #{_lambda_.5} parent=11 // pred_region
        _
      $region16: #{_lambda_.5} parent=11 // pred_fallthru
        _
      // Predicated region
      $region17: #{_lambda_.5} parent=11 // pred_check
        %p192 = pneg %p106
      $region18: #{_lambda_.5} parent=11 // pred_check_branch
        %194 = sbr.rel (%p192) target = $region20
      $region19: #{_lambda_.5} parent=11 // pred_region
        _
      $region20: #{_lambda_.5} parent=11 // pred_fallthru
        _
      // Predicated region
      $region21: #{_lambda_.5} parent=11 // pred_check
        %p195 = pneg %p127
      $region22: #{_lambda_.5} parent=11 // pred_check_branch
        %197 = sbr.rel (%p195) target = $region24
      $region23: #{_lambda_.5} parent=11 // pred_region
        _
      $region24: #{_lambda_.5} parent=11 // pred_fallthru
        _
      // Predicated region
      $region25: #{_lambda_.5} parent=11 // pred_check
        %p198 = pneg %p148
      $region26: #{_lambda_.5} parent=11 // pred_check_branch
        %200 = sbr.rel (%p198) target = $region28
      $region27: #{_lambda_.5} parent=11 // pred_region
        _
      $region28: #{_lambda_.5} parent=11 // pred_fallthru
        _
    $region12: #{_lambda_.5} parent=5 // pred_fallthru
      _
    %p201 = scmp.lt.s32.totalorder %s12, 2
    // Predicated region
    $region29: #{_lambda_.5} parent=5 // pred_check
      %p202 = pneg %p201
    $region30: #{_lambda_.5} parent=5 // pred_check_branch
      %204 = sbr.rel (%p202) target = $region32
    $region31: #{_lambda_.5} parent=5 // pred_region
      // Predicated region
      $region33: #{_lambda_.5} parent=31 // pred_check
        %p205 = pneg %p32
      $region34: #{_lambda_.5} parent=31 // pred_check_branch
        %207 = sbr.rel (%p205) target = $region36
      $region35: #{_lambda_.5} parent=31 // pred_region
        %s208 = smul.u32 4, %s12
        %p209 = scmp.lt.s32.totalorder %s208, 7
        %s210 = scalar_select %p209, %s208, 7
        %s211 = smul.addr %s210, 32
        %s212 = smul.addr %s211, 8
        %s213 = scalar_lea.vmem %s0, %s212
        %s214 = smul.u32 4, %s12
      $region36: #{_lambda_.5} parent=31 // pred_fallthru
        _
      // Predicated region
      $region37: #{_lambda_.5} parent=31 // pred_check
        %p215 = pneg %p58
      $region38: #{_lambda_.5} parent=31 // pred_check_branch
        %217 = sbr.rel (%p215) target = $region40
      $region39: #{_lambda_.5} parent=31 // pred_region
        %p218 = scmp.lt.s32.totalorder %s12, 1
        %s219 = scalar_select %p218, %s12, 1
        %s220 = smul.addr %s219, 32
        %s221 = smul.addr %s220, 8
        %s222 = scalar_lea.vmem %s1, %s221
      $region40: #{_lambda_.5} parent=31 // pred_fallthru
        _
    $region32: #{_lambda_.5} parent=5 // pred_fallthru
      _
    %p223 = scmp.le.s32.totalorder 1, %s12
    %p224 = scmp.lt.s32.totalorder %s12, 3
    %p225 = pnand %p223, %p224
    %p226 = pneg %p225
    // Predicated region
    $region41: #{_lambda_.5} parent=5 // pred_check
      _
    $region42: #{_lambda_.5} parent=5 // pred_check_branch
      %228 = sbr.rel (%p225) target = $region44
    $region43: #{_lambda_.5} parent=5 // pred_region
      %s229 = ssub.s32 %s12, 1
      %s230 = smul.u32 4, %s17
      %p231 = scmp.lt.s32.totalorder %s230, 7
      %s232 = scalar_select %p231, %s230, 7
      %s233 = smul.addr %s232, 32
      %s234 = smul.addr %s233, 8
      %s235 = scalar_lea.vmem %s0, %s234
      %p236 = pneg %p38
      %p237 = pneg %p35
      %p238 = scmp.lt.s32.totalorder %s17, 1
      %s239 = scalar_select %p238, %s17, 1
      %s240 = smul.addr %s239, 32
      %s241 = smul.addr %s240, 8
      %s242 = scalar_lea.vmem %s1, %s241
      %p243 = pneg %p64
      %p244 = pneg %p61
      %p245 = pneg %p85
      %p246 = pneg %p82
      %p247 = pneg %p106
      %p248 = pneg %p103
      %p249 = pneg %p127
      %p250 = pneg %p124
      %p251 = pneg %p148
      %p252 = pneg %p145
      %p253 = pneg %p174
      %p254 = pneg %p171
      %s255 = smul.u32 4, %s17
      %p256 = scmp.lt.s32.totalorder %s255, 7
      %s257 = scalar_select %p256, %s255, 7
      %s258 = smul.addr %s257, 32
      %s259 = smul.addr %s258, 8
      %s260 = scalar_lea.vmem %s6, %s259
      %s261 = smul.u32 4, %s17
      %p262 = scmp.lt.s32.totalorder %s261, 7
      %s263 = scalar_select %p262, %s261, 7
      %s264 = smul.addr %s263, 32
      %s265 = smul.addr %s264, 8
      %s266 = scalar_lea.vmem %s0, %s265
      %s267 = smul.u32 4, %s17
      %p268 = scmp.lt.s32.totalorder %s17, 1
      %s269 = scalar_select %p268, %s17, 1
      %s270 = smul.addr %s269, 32
      %s271 = smul.addr %s270, 8
      %s272 = scalar_lea.vmem %s1, %s271
      %s273 = smul.u32 4, %s17
      %p274 = scmp.lt.s32.totalorder %s273, 7
      %s275 = scalar_select %p274, %s273, 7
      %s276 = smul.addr %s275, 32
      %s277 = smul.addr %s276, 8
      %s278 = scalar_lea.vmem %s6, %s277
      %s279 = smul.u32 4, %s17
      %v280 = vld [vmem:[%s272] sm:$0xff]
      %v281 = vld [vmem:[%s272 + $0x8] sm:$0xff]
      %v282 = vld [vmem:[%s272 + $0x10] sm:$0xff]
      %v283 = vld [vmem:[%s272 + $0x18] sm:$0xff]
      %v284 = vld [vmem:[%s272 + $0x20] sm:$0xff]
      %v285 = vld [vmem:[%s272 + $0x28] sm:$0xff]
      %v286 = vld [vmem:[%s272 + $0x30] sm:$0xff]
      %v287 = vld [vmem:[%s272 + $0x38] sm:$0xff]
      %v288 = vld [vmem:[%s272 + $0x40] sm:$0xff]
      %v289 = vld [vmem:[%s272 + $0x48] sm:$0xff]
      %v290 = vld [vmem:[%s272 + $0x50] sm:$0xff]
      %v291 = vld [vmem:[%s272 + $0x58] sm:$0xff]
      %v292 = vld [vmem:[%s272 + $0x60] sm:$0xff]
      %v293 = vld [vmem:[%s272 + $0x68] sm:$0xff]
      %v294 = vld [vmem:[%s272 + $0x70] sm:$0xff]
      %v295 = vld [vmem:[%s272 + $0x78] sm:$0xff]
      %v296 = vld [vmem:[%s272 + $0x80] sm:$0xff]
      %v297 = vld [vmem:[%s272 + $0x88] sm:$0xff]
      %v298 = vld [vmem:[%s272 + $0x90] sm:$0xff]
      %v299 = vld [vmem:[%s272 + $0x98] sm:$0xff]
      %v300 = vld [vmem:[%s272 + $0xa0] sm:$0xff]
      %v301 = vld [vmem:[%s272 + $0xa8] sm:$0xff]
      %v302 = vld [vmem:[%s272 + $0xb0] sm:$0xff]
      %v303 = vld [vmem:[%s272 + $0xb8] sm:$0xff]
      %v304 = vld [vmem:[%s272 + $0xc0] sm:$0xff]
      %v305 = vld [vmem:[%s272 + $0xc8] sm:$0xff]
      %v306 = vld [vmem:[%s272 + $0xd0] sm:$0xff]
      %v307 = vld [vmem:[%s272 + $0xd8] sm:$0xff]
      %v308 = vld [vmem:[%s272 + $0xe0] sm:$0xff]
      %v309 = vld [vmem:[%s272 + $0xe8] sm:$0xff]
      %v310 = vld [vmem:[%s272 + $0xf0] sm:$0xff]
      %v311 = vld [vmem:[%s272 + $0xf8] sm:$0xff]
      %v312 = vld [vmem:[%s4] sm:$0xf]
      %v313 = vld [vmem:[%s5] sm:$0x1]
      %v315 = vlaneseq
      %v316 = vshrl.u32 %v315, 7
      %v317 = vsub.s32 0, %v316
      %v318 = vrot.slane %v313, %v317
      %vm320 = vcmask 31744
      %v322 = vsel %vm320, %v280, 0
      %v325 = vsel %vm320, %v281, 0
      %v328 = vsel %vm320, %v282, 0
      %v331 = vsel %vm320, %v283, 0
      %v334 = vsel %vm320, %v284, 0
      %v337 = vsel %vm320, %v285, 0
      %v340 = vsel %vm320, %v286, 0
      %v343 = vsel %vm320, %v287, 0
      %v346 = vsel %vm320, %v288, 0
      %v349 = vsel %vm320, %v289, 0
      %v352 = vsel %vm320, %v290, 0
      %v355 = vsel %vm320, %v291, 0
      %v358 = vsel %vm320, %v292, 0
      %v361 = vsel %vm320, %v293, 0
      %v364 = vsel %vm320, %v294, 0
      %v367 = vsel %vm320, %v295, 0
      %v370 = vsel %vm320, %v296, 0
      %v373 = vsel %vm320, %v297, 0
      %v376 = vsel %vm320, %v298, 0
      %v379 = vsel %vm320, %v299, 0
      %v382 = vsel %vm320, %v300, 0
      %v385 = vsel %vm320, %v301, 0
      %v388 = vsel %vm320, %v302, 0
      %v391 = vsel %vm320, %v303, 0
      %v394 = vsel %vm320, %v304, 0
      %v397 = vsel %vm320, %v305, 0
      %v400 = vsel %vm320, %v306, 0
      %v403 = vsel %vm320, %v307, 0
      %v406 = vsel %vm320, %v308, 0
      %v409 = vsel %vm320, %v309, 0
      %v412 = vsel %vm320, %v310, 0
      %v415 = vsel %vm320, %v311, 0
      %vm417 = vcmask 1043456
      %v419 = vsel %vm417, %v312, 0
      %421 = vmatprep.subr.mxu0 0.0
      %422 = vmatpush1.msra.mxu0 0.0
      %423 = vmatprep.subr.mxu0 0.0
      %424 = vmatpush1.msra.mxu0 0.0
      %425 = vmatprep.subr.mxu0 0.0
      %426 = vmatpush1.msra.mxu0 0.0
      %427 = vmatprep.subr.mxu0 0.0
      %428 = vmatpush1.msra.mxu0 0.0
      %429 = vmatprep.subr.mxu0 0.0
      %430 = vmatpush1.msra.mxu0 0.0
      %431 = vmatprep.subr.mxu0 0.0
      %432 = vmatpush1.msra.mxu0 0.0
      %433 = vmatprep.subr.mxu0 0.0
      %434 = vmatpush1.msra.mxu0 0.0
      %435 = vmatprep.subr.mxu0 0.0
      %436 = vmatpush1.msra.mxu0 0.0
      %437 = vmatprep.subr.mxu0 0.0
      %438 = vmatpush1.msra.mxu0 0.0
      %439 = vmatprep.subr.mxu0 0.0
      %440 = vmatpush1.msra.mxu0 0.0
      %441 = vmatprep.subr.mxu0 0.0
      %442 = vmatpush1.msra.mxu0 0.0
      %443 = vmatprep.subr.mxu0 0.0
      %444 = vmatpush1.msra.mxu0 0.0
      %445 = vmatprep.subr.mxu0 0.0
      %446 = vmatpush1.msra.mxu0 0.0
      %447 = vmatprep.subr.mxu0 0.0
      %448 = vmatpush1.msra.mxu0 0.0
      %449 = vmatprep.subr.mxu0 0.0
      %450 = vmatpush1.msra.mxu0 0.0
      %451 = vmatprep.subr.mxu0 0.0
      %452 = vmatpush1.msra.mxu0 %v419
      %453 = vmatprep.subr.mxu0 0.0
      %454 = vmatpush2.msra.mxu0 0.0
      %455 = vmatprep.subr.mxu0 0.0
      %456 = vmatpush2.msra.mxu0 0.0
      %457 = vmatprep.subr.mxu0 0.0
      %458 = vmatpush2.msra.mxu0 0.0
      %459 = vmatprep.subr.mxu0 0.0
      %460 = vmatpush2.msra.mxu0 0.0
      %461 = vmatprep.subr.mxu0 0.0
      %462 = vmatpush2.msra.mxu0 0.0
      %463 = vmatprep.subr.mxu0 0.0
      %464 = vmatpush2.msra.mxu0 0.0
      %465 = vmatprep.subr.mxu0 0.0
      %466 = vmatpush2.msra.mxu0 0.0
      %467 = vmatprep.subr.mxu0 0.0
      %468 = vmatpush2.msra.mxu0 0.0
      %469 = vmatprep.subr.mxu0 0.0
      %470 = vmatpush2.msra.mxu0 0.0
      %471 = vmatprep.subr.mxu0 0.0
      %472 = vmatpush2.msra.mxu0 0.0
      %473 = vmatprep.subr.mxu0 0.0
      %474 = vmatpush2.msra.mxu0 0.0
      %475 = vmatprep.subr.mxu0 0.0
      %476 = vmatpush2.msra.mxu0 0.0
      %477 = vmatprep.subr.mxu0 0.0
      %478 = vmatpush2.msra.mxu0 0.0
      %479 = vmatprep.subr.mxu0 0.0
      %480 = vmatpush2.msra.mxu0 0.0
      %481 = vmatprep.subr.mxu0 0.0
      %482 = vmatpush2.msra.mxu0 0.0
      %483 = vmatprep.subr.mxu0 0.0
      %484 = vmatpush2.msra.mxu0 0.0
      %485 = vmatprep.mubr.f32.mxu0 0.0
      %486 = vmatmul.mubr.f32.gmra.mxu0 %v322
      %v487 = vpop.f32.mrf.mxu0
      %v488 = vadd.f32 %v318, %v487
      %v489 = vpop.f32.mrf.mxu0
      %490 = vmatprep.mubr.f32.mxu0 0.0
      %491 = vmatmul.mubr.f32.gmra.mxu0 %v325
      %v492 = vpop.f32.mrf.mxu0
      %v493 = vadd.f32 %v318, %v492
      %v494 = vpop.f32.mrf.mxu0
      %495 = vmatprep.mubr.f32.mxu0 0.0
      %496 = vmatmul.mubr.f32.gmra.mxu0 %v328
      %v497 = vpop.f32.mrf.mxu0
      %v498 = vadd.f32 %v318, %v497
      %v499 = vpop.f32.mrf.mxu0
      %500 = vmatprep.mubr.f32.mxu0 0.0
      %501 = vmatmul.mubr.f32.gmra.mxu0 %v331
      %v502 = vpop.f32.mrf.mxu0
      %v503 = vadd.f32 %v318, %v502
      %v504 = vpop.f32.mrf.mxu0
      %505 = vmatprep.mubr.f32.mxu0 0.0
      %506 = vmatmul.mubr.f32.gmra.mxu0 %v334
      %v507 = vpop.f32.mrf.mxu0
      %v508 = vadd.f32 %v318, %v507
      %v509 = vpop.f32.mrf.mxu0
      %510 = vmatprep.mubr.f32.mxu0 0.0
      %511 = vmatmul.mubr.f32.gmra.mxu0 %v337
      %v512 = vpop.f32.mrf.mxu0
      %v513 = vadd.f32 %v318, %v512
      %v514 = vpop.f32.mrf.mxu0
      %515 = vmatprep.mubr.f32.mxu0 0.0
      %516 = vmatmul.mubr.f32.gmra.mxu0 %v340
      %v517 = vpop.f32.mrf.mxu0
      %v518 = vadd.f32 %v318, %v517
      %v519 = vpop.f32.mrf.mxu0
      %520 = vmatprep.mubr.f32.mxu0 0.0
      %521 = vmatmul.mubr.f32.gmra.mxu0 %v343
      %v522 = vpop.f32.mrf.mxu0
      %v523 = vadd.f32 %v318, %v522
      %v524 = vpop.f32.mrf.mxu0
      %525 = vmatprep.mubr.f32.mxu0 0.0
      %526 = vmatmul.mubr.f32.gmra.mxu0 %v346
      %v527 = vpop.f32.mrf.mxu0
      %v528 = vadd.f32 %v318, %v527
      %v529 = vpop.f32.mrf.mxu0
      %530 = vmatprep.mubr.f32.mxu0 0.0
      %531 = vmatmul.mubr.f32.gmra.mxu0 %v349
      %v532 = vpop.f32.mrf.mxu0
      %v533 = vadd.f32 %v318, %v532
      %v534 = vpop.f32.mrf.mxu0
      %535 = vmatprep.mubr.f32.mxu0 0.0
      %536 = vmatmul.mubr.f32.gmra.mxu0 %v352
      %v537 = vpop.f32.mrf.mxu0
      %v538 = vadd.f32 %v318, %v537
      %v539 = vpop.f32.mrf.mxu0
      %540 = vmatprep.mubr.f32.mxu0 0.0
      %541 = vmatmul.mubr.f32.gmra.mxu0 %v355
      %v542 = vpop.f32.mrf.mxu0
      %v543 = vadd.f32 %v318, %v542
      %v544 = vpop.f32.mrf.mxu0
      %545 = vmatprep.mubr.f32.mxu0 0.0
      %546 = vmatmul.mubr.f32.gmra.mxu0 %v358
      %v547 = vpop.f32.mrf.mxu0
      %v548 = vadd.f32 %v318, %v547
      %v549 = vpop.f32.mrf.mxu0
      %550 = vmatprep.mubr.f32.mxu0 0.0
      %551 = vmatmul.mubr.f32.gmra.mxu0 %v361
      %v552 = vpop.f32.mrf.mxu0
      %v553 = vadd.f32 %v318, %v552
      %v554 = vpop.f32.mrf.mxu0
      %555 = vmatprep.mubr.f32.mxu0 0.0
      %556 = vmatmul.mubr.f32.gmra.mxu0 %v364
      %v557 = vpop.f32.mrf.mxu0
      %v558 = vadd.f32 %v318, %v557
      %v559 = vpop.f32.mrf.mxu0
      %560 = vmatprep.mubr.f32.mxu0 0.0
      %561 = vmatmul.mubr.f32.gmra.mxu0 %v367
      %v562 = vpop.f32.mrf.mxu0
      %v563 = vadd.f32 %v318, %v562
      %v564 = vpop.f32.mrf.mxu0
      %565 = vmatprep.mubr.f32.mxu0 0.0
      %566 = vmatmul.mubr.f32.gmra.mxu0 %v370
      %v567 = vpop.f32.mrf.mxu0
      %v568 = vadd.f32 %v318, %v567
      %v569 = vpop.f32.mrf.mxu0
      %570 = vmatprep.mubr.f32.mxu0 0.0
      %571 = vmatmul.mubr.f32.gmra.mxu0 %v373
      %v572 = vpop.f32.mrf.mxu0
      %v573 = vadd.f32 %v318, %v572
      %v574 = vpop.f32.mrf.mxu0
      %575 = vmatprep.mubr.f32.mxu0 0.0
      %576 = vmatmul.mubr.f32.gmra.mxu0 %v376
      %v577 = vpop.f32.mrf.mxu0
      %v578 = vadd.f32 %v318, %v577
      %v579 = vpop.f32.mrf.mxu0
      %580 = vmatprep.mubr.f32.mxu0 0.0
      %581 = vmatmul.mubr.f32.gmra.mxu0 %v379
      %v582 = vpop.f32.mrf.mxu0
      %v583 = vadd.f32 %v318, %v582
      %v584 = vpop.f32.mrf.mxu0
      %585 = vmatprep.mubr.f32.mxu0 0.0
      %586 = vmatmul.mubr.f32.gmra.mxu0 %v382
      %v587 = vpop.f32.mrf.mxu0
      %v588 = vadd.f32 %v318, %v587
      %v589 = vpop.f32.mrf.mxu0
      %590 = vmatprep.mubr.f32.mxu0 0.0
      %591 = vmatmul.mubr.f32.gmra.mxu0 %v385
      %v592 = vpop.f32.mrf.mxu0
      %v593 = vadd.f32 %v318, %v592
      %v594 = vpop.f32.mrf.mxu0
      %595 = vmatprep.mubr.f32.mxu0 0.0
      %596 = vmatmul.mubr.f32.gmra.mxu0 %v388
      %v597 = vpop.f32.mrf.mxu0
      %v598 = vadd.f32 %v318, %v597
      %v599 = vpop.f32.mrf.mxu0
      %600 = vmatprep.mubr.f32.mxu0 0.0
      %601 = vmatmul.mubr.f32.gmra.mxu0 %v391
      %v602 = vpop.f32.mrf.mxu0
      %v603 = vadd.f32 %v318, %v602
      %v604 = vpop.f32.mrf.mxu0
      %605 = vmatprep.mubr.f32.mxu0 0.0
      %606 = vmatmul.mubr.f32.gmra.mxu0 %v394
      %v607 = vpop.f32.mrf.mxu0
      %v608 = vadd.f32 %v318, %v607
      %v609 = vpop.f32.mrf.mxu0
      %610 = vmatprep.mubr.f32.mxu0 0.0
      %611 = vmatmul.mubr.f32.gmra.mxu0 %v397
      %v612 = vpop.f32.mrf.mxu0
      %v613 = vadd.f32 %v318, %v612
      %v614 = vpop.f32.mrf.mxu0
      %615 = vmatprep.mubr.f32.mxu0 0.0
      %616 = vmatmul.mubr.f32.gmra.mxu0 %v400
      %v617 = vpop.f32.mrf.mxu0
      %v618 = vadd.f32 %v318, %v617
      %v619 = vpop.f32.mrf.mxu0
      %620 = vmatprep.mubr.f32.mxu0 0.0
      %621 = vmatmul.mubr.f32.gmra.mxu0 %v403
      %v622 = vpop.f32.mrf.mxu0
      %v623 = vadd.f32 %v318, %v622
      %v624 = vpop.f32.mrf.mxu0
      %625 = vmatprep.mubr.f32.mxu0 0.0
      %626 = vmatmul.mubr.f32.gmra.mxu0 %v406
      %v627 = vpop.f32.mrf.mxu0
      %v628 = vadd.f32 %v318, %v627
      %v629 = vpop.f32.mrf.mxu0
      %630 = vmatprep.mubr.f32.mxu0 0.0
      %631 = vmatmul.mubr.f32.gmra.mxu0 %v409
      %v632 = vpop.f32.mrf.mxu0
      %v633 = vadd.f32 %v318, %v632
      %v634 = vpop.f32.mrf.mxu0
      %635 = vmatprep.mubr.f32.mxu0 0.0
      %636 = vmatmul.mubr.f32.gmra.mxu0 %v412
      %v637 = vpop.f32.mrf.mxu0
      %v638 = vadd.f32 %v318, %v637
      %v639 = vpop.f32.mrf.mxu0
      %640 = vmatprep.mubr.f32.mxu0 0.0
      %641 = vmatmul.mubr.f32.gmra.mxu0 %v415
      %v642 = vpop.f32.mrf.mxu0
      %v643 = vadd.f32 %v318, %v642
      %v644 = vpop.f32.mrf.mxu0
      %645 = vdwg.mxu0
      %v646 = vld [vmem:[%s2] sm:$0x1]
      %v647 = vld [vmem:[%s3] sm:$0x1]
      %v648 = vld [vmem:[%s266] sm:$0xff]
      %v649 = vld [vmem:[%s266 + $0x8] sm:$0xff]
      %v650 = vld [vmem:[%s266 + $0x10] sm:$0xff]
      %v651 = vld [vmem:[%s266 + $0x18] sm:$0xff]
      %v652 = vld [vmem:[%s266 + $0x20] sm:$0xff]
      %v653 = vld [vmem:[%s266 + $0x28] sm:$0xff]
      %v654 = vld [vmem:[%s266 + $0x30] sm:$0xff]
      %v655 = vld [vmem:[%s266 + $0x38] sm:$0xff]
      %v656 = vld [vmem:[%s266 + $0x40] sm:$0xff]
      %v657 = vld [vmem:[%s266 + $0x48] sm:$0xff]
      %v658 = vld [vmem:[%s266 + $0x50] sm:$0xff]
      %v659 = vld [vmem:[%s266 + $0x58] sm:$0xff]
      %v660 = vld [vmem:[%s266 + $0x60] sm:$0xff]
      %v661 = vld [vmem:[%s266 + $0x68] sm:$0xff]
      %v662 = vld [vmem:[%s266 + $0x70] sm:$0xff]
      %v663 = vld [vmem:[%s266 + $0x78] sm:$0xff]
      %v664 = vld [vmem:[%s266 + $0x80] sm:$0xff]
      %v665 = vld [vmem:[%s266 + $0x88] sm:$0xff]
      %v666 = vld [vmem:[%s266 + $0x90] sm:$0xff]
      %v667 = vld [vmem:[%s266 + $0x98] sm:$0xff]
      %v668 = vld [vmem:[%s266 + $0xa0] sm:$0xff]
      %v669 = vld [vmem:[%s266 + $0xa8] sm:$0xff]
      %v670 = vld [vmem:[%s266 + $0xb0] sm:$0xff]
      %v671 = vld [vmem:[%s266 + $0xb8] sm:$0xff]
      %v672 = vld [vmem:[%s266 + $0xc0] sm:$0xff]
      %v673 = vld [vmem:[%s266 + $0xc8] sm:$0xff]
      %v674 = vld [vmem:[%s266 + $0xd0] sm:$0xff]
      %v675 = vld [vmem:[%s266 + $0xd8] sm:$0xff]
      %v676 = vld [vmem:[%s266 + $0xe0] sm:$0xff]
      %v677 = vld [vmem:[%s266 + $0xe8] sm:$0xff]
      %v678 = vld [vmem:[%s266 + $0xf0] sm:$0xff]
      %v679 = vld [vmem:[%s266 + $0xf8] sm:$0xff]
      %v681 = vlaneseq
      %v682 = vshrl.u32 %v681, 7
      %v683 = vsub.s32 0, %v682
      %v684 = vrot.slane %v646, %v683
      %v686 = vmul.f32 %v648, %v684
      %v687 = vmul.f32 %v649, %v684
      %v688 = vmul.f32 %v650, %v684
      %v689 = vmul.f32 %v651, %v684
      %v690 = vmul.f32 %v652, %v684
      %v691 = vmul.f32 %v653, %v684
      %v692 = vmul.f32 %v654, %v684
      %v693 = vmul.f32 %v655, %v684
      %v694 = vmul.f32 %v656, %v684
      %v695 = vmul.f32 %v657, %v684
      %v696 = vmul.f32 %v658, %v684
      %v697 = vmul.f32 %v659, %v684
      %v698 = vmul.f32 %v660, %v684
      %v699 = vmul.f32 %v661, %v684
      %v700 = vmul.f32 %v662, %v684
      %v701 = vmul.f32 %v663, %v684
      %v702 = vmul.f32 %v664, %v684
      %v703 = vmul.f32 %v665, %v684
      %v704 = vmul.f32 %v666, %v684
      %v705 = vmul.f32 %v667, %v684
      %v706 = vmul.f32 %v668, %v684
      %v707 = vmul.f32 %v669, %v684
      %v708 = vmul.f32 %v670, %v684
      %v709 = vmul.f32 %v671, %v684
      %v710 = vmul.f32 %v672, %v684
      %v711 = vmul.f32 %v673, %v684
      %v712 = vmul.f32 %v674, %v684
      %v713 = vmul.f32 %v675, %v684
      %v714 = vmul.f32 %v676, %v684
      %v715 = vmul.f32 %v677, %v684
      %v716 = vmul.f32 %v678, %v684
      %v717 = vmul.f32 %v679, %v684
      %v719 = vlaneseq
      %v720 = vshrl.u32 %v719, 7
      %v721 = vsub.s32 0, %v720
      %v722 = vrot.slane %v647, %v721
      %v724 = vadd.f32 %v686, %v722
      %v725 = vadd.f32 %v687, %v722
      %v726 = vadd.f32 %v688, %v722
      %v727 = vadd.f32 %v689, %v722
      %v728 = vadd.f32 %v690, %v722
      %v729 = vadd.f32 %v691, %v722
      %v730 = vadd.f32 %v692, %v722
      %v731 = vadd.f32 %v693, %v722
      %v732 = vadd.f32 %v694, %v722
      %v733 = vadd.f32 %v695, %v722
      %v734 = vadd.f32 %v696, %v722
      %v735 = vadd.f32 %v697, %v722
      %v736 = vadd.f32 %v698, %v722
      %v737 = vadd.f32 %v699, %v722
      %v738 = vadd.f32 %v700, %v722
      %v739 = vadd.f32 %v701, %v722
      %v740 = vadd.f32 %v702, %v722
      %v741 = vadd.f32 %v703, %v722
      %v742 = vadd.f32 %v704, %v722
      %v743 = vadd.f32 %v705, %v722
      %v744 = vadd.f32 %v706, %v722
      %v745 = vadd.f32 %v707, %v722
      %v746 = vadd.f32 %v708, %v722
      %v747 = vadd.f32 %v709, %v722
      %v748 = vadd.f32 %v710, %v722
      %v749 = vadd.f32 %v711, %v722
      %v750 = vadd.f32 %v712, %v722
      %v751 = vadd.f32 %v713, %v722
      %v752 = vadd.f32 %v714, %v722
      %v753 = vadd.f32 %v715, %v722
      %v754 = vadd.f32 %v716, %v722
      %v755 = vadd.f32 %v717, %v722
      %v756 = vadd.f32 %v724, %v488
      %v757 = vadd.f32 %v725, %v493
      %v758 = vadd.f32 %v726, %v498
      %v759 = vadd.f32 %v727, %v503
      %v760 = vadd.f32 %v728, %v508
      %v761 = vadd.f32 %v729, %v513
      %v762 = vadd.f32 %v730, %v518
      %v763 = vadd.f32 %v731, %v523
      %v764 = vadd.f32 %v732, %v528
      %v765 = vadd.f32 %v733, %v533
      %v766 = vadd.f32 %v734, %v538
      %v767 = vadd.f32 %v735, %v543
      %v768 = vadd.f32 %v736, %v548
      %v769 = vadd.f32 %v737, %v553
      %v770 = vadd.f32 %v738, %v558
      %v771 = vadd.f32 %v739, %v563
      %v772 = vadd.f32 %v740, %v568
      %v773 = vadd.f32 %v741, %v573
      %v774 = vadd.f32 %v742, %v578
      %v775 = vadd.f32 %v743, %v583
      %v776 = vadd.f32 %v744, %v588
      %v777 = vadd.f32 %v745, %v593
      %v778 = vadd.f32 %v746, %v598
      %v779 = vadd.f32 %v747, %v603
      %v780 = vadd.f32 %v748, %v608
      %v781 = vadd.f32 %v749, %v613
      %v782 = vadd.f32 %v750, %v618
      %v783 = vadd.f32 %v751, %v623
      %v784 = vadd.f32 %v752, %v628
      %v785 = vadd.f32 %v753, %v633
      %v786 = vadd.f32 %v754, %v638
      %v787 = vadd.f32 %v755, %v643
      %vm788 = vcmask 130048
      %789 = vst.msk [vmem:[%s278] sm:$0xff] %vm788, %v756
      %790 = vst.msk [vmem:[%s278 + $0x8] sm:$0xff] %vm788, %v757
      %791 = vst.msk [vmem:[%s278 + $0x10] sm:$0xff] %vm788, %v758
      %792 = vst.msk [vmem:[%s278 + $0x18] sm:$0xff] %vm788, %v759
      %793 = vst.msk [vmem:[%s278 + $0x20] sm:$0xff] %vm788, %v760
      %794 = vst.msk [vmem:[%s278 + $0x28] sm:$0xff] %vm788, %v761
      %795 = vst.msk [vmem:[%s278 + $0x30] sm:$0xff] %vm788, %v762
      %796 = vst.msk [vmem:[%s278 + $0x38] sm:$0xff] %vm788, %v763
      %797 = vst.msk [vmem:[%s278 + $0x40] sm:$0xff] %vm788, %v764
      %798 = vst.msk [vmem:[%s278 + $0x48] sm:$0xff] %vm788, %v765
      %799 = vst.msk [vmem:[%s278 + $0x50] sm:$0xff] %vm788, %v766
      %800 = vst.msk [vmem:[%s278 + $0x58] sm:$0xff] %vm788, %v767
      %801 = vst.msk [vmem:[%s278 + $0x60] sm:$0xff] %vm788, %v768
      %802 = vst.msk [vmem:[%s278 + $0x68] sm:$0xff] %vm788, %v769
      %803 = vst.msk [vmem:[%s278 + $0x70] sm:$0xff] %vm788, %v770
      %804 = vst.msk [vmem:[%s278 + $0x78] sm:$0xff] %vm788, %v771
      %805 = vst.msk [vmem:[%s278 + $0x80] sm:$0xff] %vm788, %v772
      %806 = vst.msk [vmem:[%s278 + $0x88] sm:$0xff] %vm788, %v773
      %807 = vst.msk [vmem:[%s278 + $0x90] sm:$0xff] %vm788, %v774
      %808 = vst.msk [vmem:[%s278 + $0x98] sm:$0xff] %vm788, %v775
      %809 = vst.msk [vmem:[%s278 + $0xa0] sm:$0xff] %vm788, %v776
      %810 = vst.msk [vmem:[%s278 + $0xa8] sm:$0xff] %vm788, %v777
      %811 = vst.msk [vmem:[%s278 + $0xb0] sm:$0xff] %vm788, %v778
      %812 = vst.msk [vmem:[%s278 + $0xb8] sm:$0xff] %vm788, %v779
      %813 = vst.msk [vmem:[%s278 + $0xc0] sm:$0xff] %vm788, %v780
      %814 = vst.msk [vmem:[%s278 + $0xc8] sm:$0xff] %vm788, %v781
      %815 = vst.msk [vmem:[%s278 + $0xd0] sm:$0xff] %vm788, %v782
      %816 = vst.msk [vmem:[%s278 + $0xd8] sm:$0xff] %vm788, %v783
      %817 = vst.msk [vmem:[%s278 + $0xe0] sm:$0xff] %vm788, %v784
      %818 = vst.msk [vmem:[%s278 + $0xe8] sm:$0xff] %vm788, %v785
      %819 = vst.msk [vmem:[%s278 + $0xf0] sm:$0xff] %vm788, %v786
      %820 = vst.msk [vmem:[%s278 + $0xf8] sm:$0xff] %vm788, %v787
      %s821 = scalar_lea.vmem %s266, 256
      %v822 = vld [vmem:[%s821] sm:$0xff]
      %v823 = vld [vmem:[%s821 + $0x8] sm:$0xff]
      %v824 = vld [vmem:[%s821 + $0x10] sm:$0xff]
      %v825 = vld [vmem:[%s821 + $0x18] sm:$0xff]
      %v826 = vld [vmem:[%s821 + $0x20] sm:$0xff]
      %v827 = vld [vmem:[%s821 + $0x28] sm:$0xff]
      %v828 = vld [vmem:[%s821 + $0x30] sm:$0xff]
      %v829 = vld [vmem:[%s821 + $0x38] sm:$0xff]
      %v830 = vld [vmem:[%s821 + $0x40] sm:$0xff]
      %v831 = vld [vmem:[%s821 + $0x48] sm:$0xff]
      %v832 = vld [vmem:[%s821 + $0x50] sm:$0xff]
      %v833 = vld [vmem:[%s821 + $0x58] sm:$0xff]
      %v834 = vld [vmem:[%s821 + $0x60] sm:$0xff]
      %v835 = vld [vmem:[%s821 + $0x68] sm:$0xff]
      %v836 = vld [vmem:[%s821 + $0x70] sm:$0xff]
      %v837 = vld [vmem:[%s821 + $0x78] sm:$0xff]
      %v838 = vld [vmem:[%s821 + $0x80] sm:$0xff]
      %v839 = vld [vmem:[%s821 + $0x88] sm:$0xff]
      %v840 = vld [vmem:[%s821 + $0x90] sm:$0xff]
      %v841 = vld [vmem:[%s821 + $0x98] sm:$0xff]
      %v842 = vld [vmem:[%s821 + $0xa0] sm:$0xff]
      %v843 = vld [vmem:[%s821 + $0xa8] sm:$0xff]
      %v844 = vld [vmem:[%s821 + $0xb0] sm:$0xff]
      %v845 = vld [vmem:[%s821 + $0xb8] sm:$0xff]
      %v846 = vld [vmem:[%s821 + $0xc0] sm:$0xff]
      %v847 = vld [vmem:[%s821 + $0xc8] sm:$0xff]
      %v848 = vld [vmem:[%s821 + $0xd0] sm:$0xff]
      %v849 = vld [vmem:[%s821 + $0xd8] sm:$0xff]
      %v850 = vld [vmem:[%s821 + $0xe0] sm:$0xff]
      %v851 = vld [vmem:[%s821 + $0xe8] sm:$0xff]
      %v852 = vld [vmem:[%s821 + $0xf0] sm:$0xff]
      %v853 = vld [vmem:[%s821 + $0xf8] sm:$0xff]
      %v854 = vmul.f32 %v822, %v684
      %v855 = vmul.f32 %v823, %v684
      %v856 = vmul.f32 %v824, %v684
      %v857 = vmul.f32 %v825, %v684
      %v858 = vmul.f32 %v826, %v684
      %v859 = vmul.f32 %v827, %v684
      %v860 = vmul.f32 %v828, %v684
      %v861 = vmul.f32 %v829, %v684
      %v862 = vmul.f32 %v830, %v684
      %v863 = vmul.f32 %v831, %v684
      %v864 = vmul.f32 %v832, %v684
      %v865 = vmul.f32 %v833, %v684
      %v866 = vmul.f32 %v834, %v684
      %v867 = vmul.f32 %v835, %v684
      %v868 = vmul.f32 %v836, %v684
      %v869 = vmul.f32 %v837, %v684
      %v870 = vmul.f32 %v838, %v684
      %v871 = vmul.f32 %v839, %v684
      %v872 = vmul.f32 %v840, %v684
      %v873 = vmul.f32 %v841, %v684
      %v874 = vmul.f32 %v842, %v684
      %v875 = vmul.f32 %v843, %v684
      %v876 = vmul.f32 %v844, %v684
      %v877 = vmul.f32 %v845, %v684
      %v878 = vmul.f32 %v846, %v684
      %v879 = vmul.f32 %v847, %v684
      %v880 = vmul.f32 %v848, %v684
      %v881 = vmul.f32 %v849, %v684
      %v882 = vmul.f32 %v850, %v684
      %v883 = vmul.f32 %v851, %v684
      %v884 = vmul.f32 %v852, %v684
      %v885 = vmul.f32 %v853, %v684
      %v886 = vadd.f32 %v854, %v722
      %v887 = vadd.f32 %v855, %v722
      %v888 = vadd.f32 %v856, %v722
      %v889 = vadd.f32 %v857, %v722
      %v890 = vadd.f32 %v858, %v722
      %v891 = vadd.f32 %v859, %v722
      %v892 = vadd.f32 %v860, %v722
      %v893 = vadd.f32 %v861, %v722
      %v894 = vadd.f32 %v862, %v722
      %v895 = vadd.f32 %v863, %v722
      %v896 = vadd.f32 %v864, %v722
      %v897 = vadd.f32 %v865, %v722
      %v898 = vadd.f32 %v866, %v722
      %v899 = vadd.f32 %v867, %v722
      %v900 = vadd.f32 %v868, %v722
      %v901 = vadd.f32 %v869, %v722
      %v902 = vadd.f32 %v870, %v722
      %v903 = vadd.f32 %v871, %v722
      %v904 = vadd.f32 %v872, %v722
      %v905 = vadd.f32 %v873, %v722
      %v906 = vadd.f32 %v874, %v722
      %v907 = vadd.f32 %v875, %v722
      %v908 = vadd.f32 %v876, %v722
      %v909 = vadd.f32 %v877, %v722
      %v910 = vadd.f32 %v878, %v722
      %v911 = vadd.f32 %v879, %v722
      %v912 = vadd.f32 %v880, %v722
      %v913 = vadd.f32 %v881, %v722
      %v914 = vadd.f32 %v882, %v722
      %v915 = vadd.f32 %v883, %v722
      %v916 = vadd.f32 %v884, %v722
      %v917 = vadd.f32 %v885, %v722
      %v918 = vadd.f32 %v886, %v488
      %v919 = vadd.f32 %v887, %v493
      %v920 = vadd.f32 %v888, %v498
      %v921 = vadd.f32 %v889, %v503
      %v922 = vadd.f32 %v890, %v508
      %v923 = vadd.f32 %v891, %v513
      %v924 = vadd.f32 %v892, %v518
      %v925 = vadd.f32 %v893, %v523
      %v926 = vadd.f32 %v894, %v528
      %v927 = vadd.f32 %v895, %v533
      %v928 = vadd.f32 %v896, %v538
      %v929 = vadd.f32 %v897, %v543
      %v930 = vadd.f32 %v898, %v548
      %v931 = vadd.f32 %v899, %v553
      %v932 = vadd.f32 %v900, %v558
      %v933 = vadd.f32 %v901, %v563
      %v934 = vadd.f32 %v902, %v568
      %v935 = vadd.f32 %v903, %v573
      %v936 = vadd.f32 %v904, %v578
      %v937 = vadd.f32 %v905, %v583
      %v938 = vadd.f32 %v906, %v588
      %v939 = vadd.f32 %v907, %v593
      %v940 = vadd.f32 %v908, %v598
      %v941 = vadd.f32 %v909, %v603
      %v942 = vadd.f32 %v910, %v608
      %v943 = vadd.f32 %v911, %v613
      %v944 = vadd.f32 %v912, %v618
      %v945 = vadd.f32 %v913, %v623
      %v946 = vadd.f32 %v914, %v628
      %v947 = vadd.f32 %v915, %v633
      %v948 = vadd.f32 %v916, %v638
      %v949 = vadd.f32 %v917, %v643
      %s950 = scalar_lea.vmem %s278, 256
      %951 = vst.msk [vmem:[%s950] sm:$0xff] %vm788, %v918
      %952 = vst.msk [vmem:[%s950 + $0x8] sm:$0xff] %vm788, %v919
      %953 = vst.msk [vmem:[%s950 + $0x10] sm:$0xff] %vm788, %v920
      %954 = vst.msk [vmem:[%s950 + $0x18] sm:$0xff] %vm788, %v921
      %955 = vst.msk [vmem:[%s950 + $0x20] sm:$0xff] %vm788, %v922
      %956 = vst.msk [vmem:[%s950 + $0x28] sm:$0xff] %vm788, %v923
      %957 = vst.msk [vmem:[%s950 + $0x30] sm:$0xff] %vm788, %v924
      %958 = vst.msk [vmem:[%s950 + $0x38] sm:$0xff] %vm788, %v925
      %959 = vst.msk [vmem:[%s950 + $0x40] sm:$0xff] %vm788, %v926
      %960 = vst.msk [vmem:[%s950 + $0x48] sm:$0xff] %vm788, %v927
      %961 = vst.msk [vmem:[%s950 + $0x50] sm:$0xff] %vm788, %v928
      %962 = vst.msk [vmem:[%s950 + $0x58] sm:$0xff] %vm788, %v929
      %963 = vst.msk [vmem:[%s950 + $0x60] sm:$0xff] %vm788, %v930
      %964 = vst.msk [vmem:[%s950 + $0x68] sm:$0xff] %vm788, %v931
      %965 = vst.msk [vmem:[%s950 + $0x70] sm:$0xff] %vm788, %v932
      %966 = vst.msk [vmem:[%s950 + $0x78] sm:$0xff] %vm788, %v933
      %967 = vst.msk [vmem:[%s950 + $0x80] sm:$0xff] %vm788, %v934
      %968 = vst.msk [vmem:[%s950 + $0x88] sm:$0xff] %vm788, %v935
      %969 = vst.msk [vmem:[%s950 + $0x90] sm:$0xff] %vm788, %v936
      %970 = vst.msk [vmem:[%s950 + $0x98] sm:$0xff] %vm788, %v937
      %971 = vst.msk [vmem:[%s950 + $0xa0] sm:$0xff] %vm788, %v938
      %972 = vst.msk [vmem:[%s950 + $0xa8] sm:$0xff] %vm788, %v939
      %973 = vst.msk [vmem:[%s950 + $0xb0] sm:$0xff] %vm788, %v940
      %974 = vst.msk [vmem:[%s950 + $0xb8] sm:$0xff] %vm788, %v941
      %975 = vst.msk [vmem:[%s950 + $0xc0] sm:$0xff] %vm788, %v942
      %976 = vst.msk [vmem:[%s950 + $0xc8] sm:$0xff] %vm788, %v943
      %977 = vst.msk [vmem:[%s950 + $0xd0] sm:$0xff] %vm788, %v944
      %978 = vst.msk [vmem:[%s950 + $0xd8] sm:$0xff] %vm788, %v945
      %979 = vst.msk [vmem:[%s950 + $0xe0] sm:$0xff] %vm788, %v946
      %980 = vst.msk [vmem:[%s950 + $0xe8] sm:$0xff] %vm788, %v947
      %981 = vst.msk [vmem:[%s950 + $0xf0] sm:$0xff] %vm788, %v948
      %982 = vst.msk [vmem:[%s950 + $0xf8] sm:$0xff] %vm788, %v949
      %s983 = scalar_lea.vmem %s266, 512
      %v984 = vld [vmem:[%s983] sm:$0xff]
      %v985 = vld [vmem:[%s983 + $0x8] sm:$0xff]
      %v986 = vld [vmem:[%s983 + $0x10] sm:$0xff]
      %v987 = vld [vmem:[%s983 + $0x18] sm:$0xff]
      %v988 = vld [vmem:[%s983 + $0x20] sm:$0xff]
      %v989 = vld [vmem:[%s983 + $0x28] sm:$0xff]
      %v990 = vld [vmem:[%s983 + $0x30] sm:$0xff]
      %v991 = vld [vmem:[%s983 + $0x38] sm:$0xff]
      %v992 = vld [vmem:[%s983 + $0x40] sm:$0xff]
      %v993 = vld [vmem:[%s983 + $0x48] sm:$0xff]
      %v994 = vld [vmem:[%s983 + $0x50] sm:$0xff]
      %v995 = vld [vmem:[%s983 + $0x58] sm:$0xff]
      %v996 = vld [vmem:[%s983 + $0x60] sm:$0xff]
      %v997 = vld [vmem:[%s983 + $0x68] sm:$0xff]
      %v998 = vld [vmem:[%s983 + $0x70] sm:$0xff]
      %v999 = vld [vmem:[%s983 + $0x78] sm:$0xff]
      %v1000 = vld [vmem:[%s983 + $0x80] sm:$0xff]
      %v1001 = vld [vmem:[%s983 + $0x88] sm:$0xff]
      %v1002 = vld [vmem:[%s983 + $0x90] sm:$0xff]
      %v1003 = vld [vmem:[%s983 + $0x98] sm:$0xff]
      %v1004 = vld [vmem:[%s983 + $0xa0] sm:$0xff]
      %v1005 = vld [vmem:[%s983 + $0xa8] sm:$0xff]
      %v1006 = vld [vmem:[%s983 + $0xb0] sm:$0xff]
      %v1007 = vld [vmem:[%s983 + $0xb8] sm:$0xff]
      %v1008 = vld [vmem:[%s983 + $0xc0] sm:$0xff]
      %v1009 = vld [vmem:[%s983 + $0xc8] sm:$0xff]
      %v1010 = vld [vmem:[%s983 + $0xd0] sm:$0xff]
      %v1011 = vld [vmem:[%s983 + $0xd8] sm:$0xff]
      %v1012 = vld [vmem:[%s983 + $0xe0] sm:$0xff]
      %v1013 = vld [vmem:[%s983 + $0xe8] sm:$0xff]
      %v1014 = vld [vmem:[%s983 + $0xf0] sm:$0xff]
      %v1015 = vld [vmem:[%s983 + $0xf8] sm:$0xff]
      %v1016 = vmul.f32 %v984, %v684
      %v1017 = vmul.f32 %v985, %v684
      %v1018 = vmul.f32 %v986, %v684
      %v1019 = vmul.f32 %v987, %v684
      %v1020 = vmul.f32 %v988, %v684
      %v1021 = vmul.f32 %v989, %v684
      %v1022 = vmul.f32 %v990, %v684
      %v1023 = vmul.f32 %v991, %v684
      %v1024 = vmul.f32 %v992, %v684
      %v1025 = vmul.f32 %v993, %v684
      %v1026 = vmul.f32 %v994, %v684
      %v1027 = vmul.f32 %v995, %v684
      %v1028 = vmul.f32 %v996, %v684
      %v1029 = vmul.f32 %v997, %v684
      %v1030 = vmul.f32 %v998, %v684
      %v1031 = vmul.f32 %v999, %v684
      %v1032 = vmul.f32 %v1000, %v684
      %v1033 = vmul.f32 %v1001, %v684
      %v1034 = vmul.f32 %v1002, %v684
      %v1035 = vmul.f32 %v1003, %v684
      %v1036 = vmul.f32 %v1004, %v684
      %v1037 = vmul.f32 %v1005, %v684
      %v1038 = vmul.f32 %v1006, %v684
      %v1039 = vmul.f32 %v1007, %v684
      %v1040 = vmul.f32 %v1008, %v684
      %v1041 = vmul.f32 %v1009, %v684
      %v1042 = vmul.f32 %v1010, %v684
      %v1043 = vmul.f32 %v1011, %v684
      %v1044 = vmul.f32 %v1012, %v684
      %v1045 = vmul.f32 %v1013, %v684
      %v1046 = vmul.f32 %v1014, %v684
      %v1047 = vmul.f32 %v1015, %v684
      %v1048 = vadd.f32 %v1016, %v722
      %v1049 = vadd.f32 %v1017, %v722
      %v1050 = vadd.f32 %v1018, %v722
      %v1051 = vadd.f32 %v1019, %v722
      %v1052 = vadd.f32 %v1020, %v722
      %v1053 = vadd.f32 %v1021, %v722
      %v1054 = vadd.f32 %v1022, %v722
      %v1055 = vadd.f32 %v1023, %v722
      %v1056 = vadd.f32 %v1024, %v722
      %v1057 = vadd.f32 %v1025, %v722
      %v1058 = vadd.f32 %v1026, %v722
      %v1059 = vadd.f32 %v1027, %v722
      %v1060 = vadd.f32 %v1028, %v722
      %v1061 = vadd.f32 %v1029, %v722
      %v1062 = vadd.f32 %v1030, %v722
      %v1063 = vadd.f32 %v1031, %v722
      %v1064 = vadd.f32 %v1032, %v722
      %v1065 = vadd.f32 %v1033, %v722
      %v1066 = vadd.f32 %v1034, %v722
      %v1067 = vadd.f32 %v1035, %v722
      %v1068 = vadd.f32 %v1036, %v722
      %v1069 = vadd.f32 %v1037, %v722
      %v1070 = vadd.f32 %v1038, %v722
      %v1071 = vadd.f32 %v1039, %v722
      %v1072 = vadd.f32 %v1040, %v722
      %v1073 = vadd.f32 %v1041, %v722
      %v1074 = vadd.f32 %v1042, %v722
      %v1075 = vadd.f32 %v1043, %v722
      %v1076 = vadd.f32 %v1044, %v722
      %v1077 = vadd.f32 %v1045, %v722
      %v1078 = vadd.f32 %v1046, %v722
      %v1079 = vadd.f32 %v1047, %v722
      %v1080 = vadd.f32 %v1048, %v488
      %v1081 = vadd.f32 %v1049, %v493
      %v1082 = vadd.f32 %v1050, %v498
      %v1083 = vadd.f32 %v1051, %v503
      %v1084 = vadd.f32 %v1052, %v508
      %v1085 = vadd.f32 %v1053, %v513
      %v1086 = vadd.f32 %v1054, %v518
      %v1087 = vadd.f32 %v1055, %v523
      %v1088 = vadd.f32 %v1056, %v528
      %v1089 = vadd.f32 %v1057, %v533
      %v1090 = vadd.f32 %v1058, %v538
      %v1091 = vadd.f32 %v1059, %v543
      %v1092 = vadd.f32 %v1060, %v548
      %v1093 = vadd.f32 %v1061, %v553
      %v1094 = vadd.f32 %v1062, %v558
      %v1095 = vadd.f32 %v1063, %v563
      %v1096 = vadd.f32 %v1064, %v568
      %v1097 = vadd.f32 %v1065, %v573
      %v1098 = vadd.f32 %v1066, %v578
      %v1099 = vadd.f32 %v1067, %v583
      %v1100 = vadd.f32 %v1068, %v588
      %v1101 = vadd.f32 %v1069, %v593
      %v1102 = vadd.f32 %v1070, %v598
      %v1103 = vadd.f32 %v1071, %v603
      %v1104 = vadd.f32 %v1072, %v608
      %v1105 = vadd.f32 %v1073, %v613
      %v1106 = vadd.f32 %v1074, %v618
      %v1107 = vadd.f32 %v1075, %v623
      %v1108 = vadd.f32 %v1076, %v628
      %v1109 = vadd.f32 %v1077, %v633
      %v1110 = vadd.f32 %v1078, %v638
      %v1111 = vadd.f32 %v1079, %v643
      %s1112 = scalar_lea.vmem %s278, 512
      %1113 = vst.msk [vmem:[%s1112] sm:$0xff] %vm788, %v1080
      %1114 = vst.msk [vmem:[%s1112 + $0x8] sm:$0xff] %vm788, %v1081
      %1115 = vst.msk [vmem:[%s1112 + $0x10] sm:$0xff] %vm788, %v1082
      %1116 = vst.msk [vmem:[%s1112 + $0x18] sm:$0xff] %vm788, %v1083
      %1117 = vst.msk [vmem:[%s1112 + $0x20] sm:$0xff] %vm788, %v1084
      %1118 = vst.msk [vmem:[%s1112 + $0x28] sm:$0xff] %vm788, %v1085
      %1119 = vst.msk [vmem:[%s1112 + $0x30] sm:$0xff] %vm788, %v1086
      %1120 = vst.msk [vmem:[%s1112 + $0x38] sm:$0xff] %vm788, %v1087
      %1121 = vst.msk [vmem:[%s1112 + $0x40] sm:$0xff] %vm788, %v1088
      %1122 = vst.msk [vmem:[%s1112 + $0x48] sm:$0xff] %vm788, %v1089
      %1123 = vst.msk [vmem:[%s1112 + $0x50] sm:$0xff] %vm788, %v1090
      %1124 = vst.msk [vmem:[%s1112 + $0x58] sm:$0xff] %vm788, %v1091
      %1125 = vst.msk [vmem:[%s1112 + $0x60] sm:$0xff] %vm788, %v1092
      %1126 = vst.msk [vmem:[%s1112 + $0x68] sm:$0xff] %vm788, %v1093
      %1127 = vst.msk [vmem:[%s1112 + $0x70] sm:$0xff] %vm788, %v1094
      %1128 = vst.msk [vmem:[%s1112 + $0x78] sm:$0xff] %vm788, %v1095
      %1129 = vst.msk [vmem:[%s1112 + $0x80] sm:$0xff] %vm788, %v1096
      %1130 = vst.msk [vmem:[%s1112 + $0x88] sm:$0xff] %vm788, %v1097
      %1131 = vst.msk [vmem:[%s1112 + $0x90] sm:$0xff] %vm788, %v1098
      %1132 = vst.msk [vmem:[%s1112 + $0x98] sm:$0xff] %vm788, %v1099
      %1133 = vst.msk [vmem:[%s1112 + $0xa0] sm:$0xff] %vm788, %v1100
      %1134 = vst.msk [vmem:[%s1112 + $0xa8] sm:$0xff] %vm788, %v1101
      %1135 = vst.msk [vmem:[%s1112 + $0xb0] sm:$0xff] %vm788, %v1102
      %1136 = vst.msk [vmem:[%s1112 + $0xb8] sm:$0xff] %vm788, %v1103
      %1137 = vst.msk [vmem:[%s1112 + $0xc0] sm:$0xff] %vm788, %v1104
      %1138 = vst.msk [vmem:[%s1112 + $0xc8] sm:$0xff] %vm788, %v1105
      %1139 = vst.msk [vmem:[%s1112 + $0xd0] sm:$0xff] %vm788, %v1106
      %1140 = vst.msk [vmem:[%s1112 + $0xd8] sm:$0xff] %vm788, %v1107
      %1141 = vst.msk [vmem:[%s1112 + $0xe0] sm:$0xff] %vm788, %v1108
      %1142 = vst.msk [vmem:[%s1112 + $0xe8] sm:$0xff] %vm788, %v1109
      %1143 = vst.msk [vmem:[%s1112 + $0xf0] sm:$0xff] %vm788, %v1110
      %1144 = vst.msk [vmem:[%s1112 + $0xf8] sm:$0xff] %vm788, %v1111
      %s1145 = scalar_lea.vmem %s266, 768
      %v1146 = vld [vmem:[%s1145] sm:$0xff]
      %v1147 = vld [vmem:[%s1145 + $0x8] sm:$0xff]
      %v1148 = vld [vmem:[%s1145 + $0x10] sm:$0xff]
      %v1149 = vld [vmem:[%s1145 + $0x18] sm:$0xff]
      %v1150 = vld [vmem:[%s1145 + $0x20] sm:$0xff]
      %v1151 = vld [vmem:[%s1145 + $0x28] sm:$0xff]
      %v1152 = vld [vmem:[%s1145 + $0x30] sm:$0xff]
      %v1153 = vld [vmem:[%s1145 + $0x38] sm:$0xff]
      %v1154 = vld [vmem:[%s1145 + $0x40] sm:$0xff]
      %v1155 = vld [vmem:[%s1145 + $0x48] sm:$0xff]
      %v1156 = vld [vmem:[%s1145 + $0x50] sm:$0xff]
      %v1157 = vld [vmem:[%s1145 + $0x58] sm:$0xff]
      %v1158 = vld [vmem:[%s1145 + $0x60] sm:$0xff]
      %v1159 = vld [vmem:[%s1145 + $0x68] sm:$0xff]
      %v1160 = vld [vmem:[%s1145 + $0x70] sm:$0xff]
      %v1161 = vld [vmem:[%s1145 + $0x78] sm:$0xff]
      %v1162 = vld [vmem:[%s1145 + $0x80] sm:$0xff]
      %v1163 = vld [vmem:[%s1145 + $0x88] sm:$0xff]
      %v1164 = vld [vmem:[%s1145 + $0x90] sm:$0xff]
      %v1165 = vld [vmem:[%s1145 + $0x98] sm:$0xff]
      %v1166 = vld [vmem:[%s1145 + $0xa0] sm:$0xff]
      %v1167 = vld [vmem:[%s1145 + $0xa8] sm:$0xff]
      %v1168 = vld [vmem:[%s1145 + $0xb0] sm:$0xff]
      %v1169 = vld [vmem:[%s1145 + $0xb8] sm:$0xff]
      %v1170 = vld [vmem:[%s1145 + $0xc0] sm:$0xff]
      %v1171 = vld [vmem:[%s1145 + $0xc8] sm:$0xff]
      %v1172 = vld [vmem:[%s1145 + $0xd0] sm:$0xff]
      %v1173 = vld [vmem:[%s1145 + $0xd8] sm:$0xff]
      %v1174 = vld [vmem:[%s1145 + $0xe0] sm:$0xff]
      %v1175 = vld [vmem:[%s1145 + $0xe8] sm:$0xff]
      %v1176 = vld [vmem:[%s1145 + $0xf0] sm:$0xff]
      %v1177 = vld [vmem:[%s1145 + $0xf8] sm:$0xff]
      %v1178 = vmul.f32 %v1146, %v684
      %v1179 = vmul.f32 %v1147, %v684
      %v1180 = vmul.f32 %v1148, %v684
      %v1181 = vmul.f32 %v1149, %v684
      %v1182 = vmul.f32 %v1150, %v684
      %v1183 = vmul.f32 %v1151, %v684
      %v1184 = vmul.f32 %v1152, %v684
      %v1185 = vmul.f32 %v1153, %v684
      %v1186 = vmul.f32 %v1154, %v684
      %v1187 = vmul.f32 %v1155, %v684
      %v1188 = vmul.f32 %v1156, %v684
      %v1189 = vmul.f32 %v1157, %v684
      %v1190 = vmul.f32 %v1158, %v684
      %v1191 = vmul.f32 %v1159, %v684
      %v1192 = vmul.f32 %v1160, %v684
      %v1193 = vmul.f32 %v1161, %v684
      %v1194 = vmul.f32 %v1162, %v684
      %v1195 = vmul.f32 %v1163, %v684
      %v1196 = vmul.f32 %v1164, %v684
      %v1197 = vmul.f32 %v1165, %v684
      %v1198 = vmul.f32 %v1166, %v684
      %v1199 = vmul.f32 %v1167, %v684
      %v1200 = vmul.f32 %v1168, %v684
      %v1201 = vmul.f32 %v1169, %v684
      %v1202 = vmul.f32 %v1170, %v684
      %v1203 = vmul.f32 %v1171, %v684
      %v1204 = vmul.f32 %v1172, %v684
      %v1205 = vmul.f32 %v1173, %v684
      %v1206 = vmul.f32 %v1174, %v684
      %v1207 = vmul.f32 %v1175, %v684
      %v1208 = vmul.f32 %v1176, %v684
      %v1209 = vmul.f32 %v1177, %v684
      %v1210 = vadd.f32 %v1178, %v722
      %v1211 = vadd.f32 %v1179, %v722
      %v1212 = vadd.f32 %v1180, %v722
      %v1213 = vadd.f32 %v1181, %v722
      %v1214 = vadd.f32 %v1182, %v722
      %v1215 = vadd.f32 %v1183, %v722
      %v1216 = vadd.f32 %v1184, %v722
      %v1217 = vadd.f32 %v1185, %v722
      %v1218 = vadd.f32 %v1186, %v722
      %v1219 = vadd.f32 %v1187, %v722
      %v1220 = vadd.f32 %v1188, %v722
      %v1221 = vadd.f32 %v1189, %v722
      %v1222 = vadd.f32 %v1190, %v722
      %v1223 = vadd.f32 %v1191, %v722
      %v1224 = vadd.f32 %v1192, %v722
      %v1225 = vadd.f32 %v1193, %v722
      %v1226 = vadd.f32 %v1194, %v722
      %v1227 = vadd.f32 %v1195, %v722
      %v1228 = vadd.f32 %v1196, %v722
      %v1229 = vadd.f32 %v1197, %v722
      %v1230 = vadd.f32 %v1198, %v722
      %v1231 = vadd.f32 %v1199, %v722
      %v1232 = vadd.f32 %v1200, %v722
      %v1233 = vadd.f32 %v1201, %v722
      %v1234 = vadd.f32 %v1202, %v722
      %v1235 = vadd.f32 %v1203, %v722
      %v1236 = vadd.f32 %v1204, %v722
      %v1237 = vadd.f32 %v1205, %v722
      %v1238 = vadd.f32 %v1206, %v722
      %v1239 = vadd.f32 %v1207, %v722
      %v1240 = vadd.f32 %v1208, %v722
      %v1241 = vadd.f32 %v1209, %v722
      %v1242 = vadd.f32 %v1210, %v488
      %v1243 = vadd.f32 %v1211, %v493
      %v1244 = vadd.f32 %v1212, %v498
      %v1245 = vadd.f32 %v1213, %v503
      %v1246 = vadd.f32 %v1214, %v508
      %v1247 = vadd.f32 %v1215, %v513
      %v1248 = vadd.f32 %v1216, %v518
      %v1249 = vadd.f32 %v1217, %v523
      %v1250 = vadd.f32 %v1218, %v528
      %v1251 = vadd.f32 %v1219, %v533
      %v1252 = vadd.f32 %v1220, %v538
      %v1253 = vadd.f32 %v1221, %v543
      %v1254 = vadd.f32 %v1222, %v548
      %v1255 = vadd.f32 %v1223, %v553
      %v1256 = vadd.f32 %v1224, %v558
      %v1257 = vadd.f32 %v1225, %v563
      %v1258 = vadd.f32 %v1226, %v568
      %v1259 = vadd.f32 %v1227, %v573
      %v1260 = vadd.f32 %v1228, %v578
      %v1261 = vadd.f32 %v1229, %v583
      %v1262 = vadd.f32 %v1230, %v588
      %v1263 = vadd.f32 %v1231, %v593
      %v1264 = vadd.f32 %v1232, %v598
      %v1265 = vadd.f32 %v1233, %v603
      %v1266 = vadd.f32 %v1234, %v608
      %v1267 = vadd.f32 %v1235, %v613
      %v1268 = vadd.f32 %v1236, %v618
      %v1269 = vadd.f32 %v1237, %v623
      %v1270 = vadd.f32 %v1238, %v628
      %v1271 = vadd.f32 %v1239, %v633
      %v1272 = vadd.f32 %v1240, %v638
      %v1273 = vadd.f32 %v1241, %v643
      %s1274 = scalar_lea.vmem %s278, 768
      %1275 = vst.msk [vmem:[%s1274] sm:$0xff] %vm788, %v1242
      %1276 = vst.msk [vmem:[%s1274 + $0x8] sm:$0xff] %vm788, %v1243
      %1277 = vst.msk [vmem:[%s1274 + $0x10] sm:$0xff] %vm788, %v1244
      %1278 = vst.msk [vmem:[%s1274 + $0x18] sm:$0xff] %vm788, %v1245
      %1279 = vst.msk [vmem:[%s1274 + $0x20] sm:$0xff] %vm788, %v1246
      %1280 = vst.msk [vmem:[%s1274 + $0x28] sm:$0xff] %vm788, %v1247
      %1281 = vst.msk [vmem:[%s1274 + $0x30] sm:$0xff] %vm788, %v1248
      %1282 = vst.msk [vmem:[%s1274 + $0x38] sm:$0xff] %vm788, %v1249
      %1283 = vst.msk [vmem:[%s1274 + $0x40] sm:$0xff] %vm788, %v1250
      %1284 = vst.msk [vmem:[%s1274 + $0x48] sm:$0xff] %vm788, %v1251
      %1285 = vst.msk [vmem:[%s1274 + $0x50] sm:$0xff] %vm788, %v1252
      %1286 = vst.msk [vmem:[%s1274 + $0x58] sm:$0xff] %vm788, %v1253
      %1287 = vst.msk [vmem:[%s1274 + $0x60] sm:$0xff] %vm788, %v1254
      %1288 = vst.msk [vmem:[%s1274 + $0x68] sm:$0xff] %vm788, %v1255
      %1289 = vst.msk [vmem:[%s1274 + $0x70] sm:$0xff] %vm788, %v1256
      %1290 = vst.msk [vmem:[%s1274 + $0x78] sm:$0xff] %vm788, %v1257
      %1291 = vst.msk [vmem:[%s1274 + $0x80] sm:$0xff] %vm788, %v1258
      %1292 = vst.msk [vmem:[%s1274 + $0x88] sm:$0xff] %vm788, %v1259
      %1293 = vst.msk [vmem:[%s1274 + $0x90] sm:$0xff] %vm788, %v1260
      %1294 = vst.msk [vmem:[%s1274 + $0x98] sm:$0xff] %vm788, %v1261
      %1295 = vst.msk [vmem:[%s1274 + $0xa0] sm:$0xff] %vm788, %v1262
      %1296 = vst.msk [vmem:[%s1274 + $0xa8] sm:$0xff] %vm788, %v1263
      %1297 = vst.msk [vmem:[%s1274 + $0xb0] sm:$0xff] %vm788, %v1264
      %1298 = vst.msk [vmem:[%s1274 + $0xb8] sm:$0xff] %vm788, %v1265
      %1299 = vst.msk [vmem:[%s1274 + $0xc0] sm:$0xff] %vm788, %v1266
      %1300 = vst.msk [vmem:[%s1274 + $0xc8] sm:$0xff] %vm788, %v1267
      %1301 = vst.msk [vmem:[%s1274 + $0xd0] sm:$0xff] %vm788, %v1268
      %1302 = vst.msk [vmem:[%s1274 + $0xd8] sm:$0xff] %vm788, %v1269
      %1303 = vst.msk [vmem:[%s1274 + $0xe0] sm:$0xff] %vm788, %v1270
      %1304 = vst.msk [vmem:[%s1274 + $0xe8] sm:$0xff] %vm788, %v1271
      %1305 = vst.msk [vmem:[%s1274 + $0xf0] sm:$0xff] %vm788, %v1272
      %1306 = vst.msk [vmem:[%s1274 + $0xf8] sm:$0xff] %vm788, %v1273
      %s1307 = smul.u32 4, %s17
      %p1308 = scmp.lt.s32.totalorder %s1307, 7
      %s1309 = scalar_select %p1308, %s1307, 7
      %s1310 = smul.addr %s1309, 32
      %s1311 = smul.addr %s1310, 8
      %s1312 = scalar_lea.vmem %s6, %s1311
      // Predicated region
      $region45: #{_lambda_.5} parent=43 // pred_check
        %p1313 = pneg %p171
      $region46: #{_lambda_.5} parent=43 // pred_check_branch
        %1315 = sbr.rel (%p1313) target = $region48
      $region47: #{_lambda_.5} parent=43 // pred_region
        %s1316 = smul.u32 4, %s17
      $region48: #{_lambda_.5} parent=43 // pred_fallthru
        _
    $region44: #{_lambda_.5} parent=5 // pred_fallthru
      _
    %p1317 = scmp.le.s32.totalorder 2, %s12
    // Predicated region
    $region49: #{_lambda_.5} parent=5 // pred_check
      %p1318 = pneg %p1317
    $region50: #{_lambda_.5} parent=5 // pred_check_branch
      %1320 = sbr.rel (%p1318) target = $region52
    $region51: #{_lambda_.5} parent=5 // pred_region
      %s1321 = ssub.s32 %s12, 2
      // Predicated region
      $region53: #{_lambda_.5} parent=51 // pred_check
        %p1322 = pneg %p177
      $region54: #{_lambda_.5} parent=51 // pred_check_branch
        %1324 = sbr.rel (%p1322) target = $region56
      $region55: #{_lambda_.5} parent=51 // pred_region
        %s1325 = smul.u32 4, %s18
        %p1326 = scmp.lt.s32.totalorder %s1325, 7
        %s1327 = scalar_select %p1326, %s1325, 7
        %s1328 = smul.addr %s1327, 32
        %s1329 = smul.addr %s1328, 8
        %s1330 = scalar_lea.vmem %s6, %s1329
      $region56: #{_lambda_.5} parent=51 // pred_fallthru
        _
    $region52: #{_lambda_.5} parent=5 // pred_fallthru
      _
  $region6: #{_lambda_.5} parent=0 // loop_footer
    %s16 = sadd.s32 1, %s12
  $region7: #{_lambda_.5} parent=0 // loop_footer_branch
    %11 = sbr.rel target = $region3
  $region8: #{_lambda_.5} parent=0 // loop_exit
    _

// kernel: _lambda_.3
$region0: #{_lambda_.3}
  #allocation0 [shape = 'u32[]', space=smem, size = 0x4, offset = 0x4, fixed_abs, tag = 'smem constant byte address 0x4 - core index']
  #allocation1 [shape = 'u32[144,128]{1,0:T(1,128)}', space=vmem, size = 0x12000, scoped, tag = 'internal scratch']
  #allocation2 [shape = 'f32[18,18,4]{2,1,0:T(8,128)}', space=vmem, size = 0x36000, scoped, tag = 'scratch operand']
  #allocation3 [shape = 'f32[256,36]{1,0:T(8,128)}', space=vmem, size = 0x20000, scoped, tag = 'scratch operand']
  %s0 = inlined_call_operand.vmem [shape: f32[2,16,16,4], index: 0, kind: input, shape index: {}]
  %s1 = inlined_call_operand.vmem [shape: f32[36,8], index: 1, kind: input, shape index: {}]
  %s2 = inlined_call_operand.vmem [shape: f32[2,16,16,8], index: 2, kind: output, shape index: {0}]
  %s3 = inlined_call_operand.vmem [shape: f32[2,2,8], index: 3, kind: output, shape index: {1}]
  %4 = xla_tuple %s2, %s3
  %s5 = sld [smem:[#allocation0]]
  $region49: #{_lambda_.3} parent=0
    _
  %s7 = ssub.s32 1, %s5
  %s8 = scalar_select 0, %s7, %s5
  loop: start=0, step=1, limit=4
  $region2: #{_lambda_.3} parent=0 // loop_pre_header
    _
  $region3: #{_lambda_.3} parent=0 // loop_header
    %s10 = sphi 0, %s14
    %p11 = scmp.ge.s32.totalorder %s10, 4
    %s20 = sphi 0, %s22
    %s23 = sphi 0, %s20
    %s24 = sphi 0, %s23
    %s40 = sphi 0, %s24
    %s44 = sphi 0, %s44
    %s46 = sphi 0, %s44
    %s47 = sphi 0, %s46
    %s61 = sphi 0, %s47
    %s67 = sphi 0, %s69
    %s70 = sphi 0, %s67
    %s71 = sphi 0, %s70
    %s87 = sphi 0, %s71
    %s93 = sphi 0, %s95
    %s96 = sphi 0, %s93
    %s97 = sphi 0, %s96
    %s113 = sphi 0, %s97
  $region4: #{_lambda_.3} parent=0 // loop_header_branch
    %13 = sbr.rel (%p11) target = $region8
  $region5: #{_lambda_.3} parent=0 // loop_body
    %s15 = ssub.s32 %s10, 1
    %s16 = ssub.s32 %s10, 2
    %s17 = sadd.s32 %s10, 1
    %s18 = ssub.s32 %s10, %s17
    %p19 = scmp.eq.s32.totalorder %s18, 0
    %s21 = sadd.s32 %s20, 1
    %s22 = scalar_select %p19, %s20, %s21
    %p25 = pneg %p19
    %p26 = scmp.eq.s32.totalorder %s10, 1
    %p27 = por %p25, %p26
    %p28 = scmp.ne.s32.totalorder %s20, %s23
    %p29 = scmp.eq.s32.totalorder %s10, 0
    %p30 = por %p28, %p29
    %p31 = scmp.ne.s32.totalorder %s20, %s23
    %p32 = scmp.eq.s32.totalorder %s15, 1
    %p33 = por %p31, %p32
    %p34 = scmp.ne.s32.totalorder %s23, %s24
    %p35 = scmp.eq.s32.totalorder %s15, 0
    %p36 = por %p34, %p35
    %p37 = scmp.ne.s32.totalorder %s23, %s24
    %p38 = scmp.eq.s32.totalorder %s16, 1
    %p39 = por %p37, %p38
    %p41 = scmp.ne.s32.totalorder %s24, %s40
    %p42 = scmp.eq.s32.totalorder %s16, 0
    %p43 = por %p41, %p42
    %s45 = sadd.s32 %s44, 1
    %p48 = scmp.eq.s32.totalorder %s10, 1
    %p49 = scmp.ne.s32.totalorder %s44, %s46
    %p50 = scmp.eq.s32.totalorder %s10, 0
    %p51 = por %p49, %p50
    %p52 = scmp.ne.s32.totalorder %s44, %s46
    %p53 = scmp.eq.s32.totalorder %s15, 1
    %p54 = por %p52, %p53
    %p55 = scmp.ne.s32.totalorder %s46, %s47
    %p56 = scmp.eq.s32.totalorder %s15, 0
    %p57 = por %p55, %p56
    %p58 = scmp.ne.s32.totalorder %s46, %s47
    %p59 = scmp.eq.s32.totalorder %s16, 1
    %p60 = por %p58, %p59
    %p62 = scmp.ne.s32.totalorder %s47, %s61
    %p63 = scmp.eq.s32.totalorder %s16, 0
    %p64 = por %p62, %p63
    %s65 = ssub.s32 %s10, %s17
    %p66 = scmp.eq.s32.totalorder %s65, 0
    %s68 = sadd.s32 %s67, 1
    %s69 = scalar_select %p66, %s67, %s68
    %p72 = pneg %p66
    %p73 = scmp.eq.s32.totalorder %s10, 1
    %p74 = por %p72, %p73
    %p75 = scmp.ne.s32.totalorder %s67, %s70
    %p76 = scmp.eq.s32.totalorder %s10, 0
    %p77 = por %p75, %p76
    %p78 = scmp.ne.s32.totalorder %s67, %s70
    %p79 = scmp.eq.s32.totalorder %s15, 1
    %p80 = por %p78, %p79
    %p81 = scmp.ne.s32.totalorder %s70, %s71
    %p82 = scmp.eq.s32.totalorder %s15, 0
    %p83 = por %p81, %p82
    %p84 = scmp.ne.s32.totalorder %s70, %s71
    %p85 = scmp.eq.s32.totalorder %s16, 1
    %p86 = por %p84, %p85
    %p88 = scmp.ne.s32.totalorder %s71, %s87
    %p89 = scmp.eq.s32.totalorder %s16, 0
    %p90 = por %p88, %p89
    %s91 = ssub.s32 %s10, %s17
    %p92 = scmp.eq.s32.totalorder %s91, 0
    %s94 = sadd.s32 %s93, 1
    %s95 = scalar_select %p92, %s93, %s94
    %p98 = pneg %p92
    %p99 = scmp.eq.s32.totalorder %s10, 1
    %p100 = por %p98, %p99
    %p101 = scmp.ne.s32.totalorder %s93, %s96
    %p102 = scmp.eq.s32.totalorder %s10, 0
    %p103 = por %p101, %p102
    %p104 = scmp.ne.s32.totalorder %s93, %s96
    %p105 = scmp.eq.s32.totalorder %s15, 1
    %p106 = por %p104, %p105
    %p107 = scmp.ne.s32.totalorder %s96, %s97
    %p108 = scmp.eq.s32.totalorder %s15, 0
    %p109 = por %p107, %p108
    %p110 = scmp.ne.s32.totalorder %s96, %s97
    %p111 = scmp.eq.s32.totalorder %s16, 1
    %p112 = por %p110, %p111
    %p114 = scmp.ne.s32.totalorder %s97, %s113
    %p115 = scmp.eq.s32.totalorder %s16, 0
    %p116 = por %p114, %p115
    %p117 = scmp.le.s32.totalorder 1, %s10
    %p118 = scmp.lt.s32.totalorder %s10, 3
    %p119 = pnand %p117, %p118
    %p120 = pneg %p119
    // Predicated region
    $region9: #{_lambda_.3} parent=5 // pred_check
      _
    $region10: #{_lambda_.3} parent=5 // pred_check_branch
      %122 = sbr.rel (%p119) target = $region12
    $region11: #{_lambda_.3} parent=5 // pred_region
      %s123 = ssub.s32 %s10, 1
      // Predicated region
      $region13: #{_lambda_.3} parent=11 // pred_check
        %p124 = pneg %p57
      $region14: #{_lambda_.3} parent=11 // pred_check_branch
        %126 = sbr.rel (%p124) target = $region16
      $region15: #{_lambda_.3} parent=11 // pred_region
        _
      $region16: #{_lambda_.3} parent=11 // pred_fallthru
        _
    $region12: #{_lambda_.3} parent=5 // pred_fallthru
      _
    %p127 = scmp.lt.s32.totalorder %s10, 2
    // Predicated region
    $region17: #{_lambda_.3} parent=5 // pred_check
      %p128 = pneg %p127
    $region18: #{_lambda_.3} parent=5 // pred_check_branch
      %130 = sbr.rel (%p128) target = $region20
    $region19: #{_lambda_.3} parent=5 // pred_region
      // Predicated region
      $region21: #{_lambda_.3} parent=19 // pred_check
        %p131 = pneg %p30
      $region22: #{_lambda_.3} parent=19 // pred_check_branch
        %133 = sbr.rel (%p131) target = $region24
      $region23: #{_lambda_.3} parent=19 // pred_region
        %p134 = scmp.lt.s32.totalorder %s10, 1
        %s135 = scalar_select %p134, %s10, 1
        %s136 = smul.addr %s135, 32
        %s137 = smul.addr %s136, 8
        %s138 = scalar_lea.vmem %s0, %s137
      $region24: #{_lambda_.3} parent=19 // pred_fallthru
        _
    $region20: #{_lambda_.3} parent=5 // pred_fallthru
      _
    %p139 = scmp.le.s32.totalorder 1, %s10
    %p140 = scmp.lt.s32.totalorder %s10, 3
    %p141 = pnand %p139, %p140
    %p142 = pneg %p141
    // Predicated region
    $region25: #{_lambda_.3} parent=5 // pred_check
      _
    $region26: #{_lambda_.3} parent=5 // pred_check_branch
      %144 = sbr.rel (%p141) target = $region28
    $region27: #{_lambda_.3} parent=5 // pred_region
      %s145 = ssub.s32 %s10, 1
      %p146 = scmp.lt.s32.totalorder %s15, 1
      %s147 = scalar_select %p146, %s15, 1
      %s148 = smul.addr %s147, 32
      %s149 = smul.addr %s148, 8
      %s150 = scalar_lea.vmem %s0, %s149
      %p151 = pneg %p36
      %p152 = pneg %p33
      %p153 = pneg %p57
      %p154 = pneg %p54
      %p155 = pneg %p83
      %p156 = pneg %p80
      %p157 = scmp.lt.s32.totalorder %s15, 1
      %s158 = scalar_select %p157, %s15, 1
      %s159 = smul.addr %s158, 32
      %s160 = smul.addr %s159, 8
      %s161 = scalar_lea.vmem %s2, %s160
      %p162 = pneg %p109
      %p163 = pneg %p106
      %p164 = scmp.lt.s32.totalorder %s15, 1
      %s165 = scalar_select %p164, %s15, 1
      %s166 = smul.addr %s165, 2
      %s167 = scalar_lea.vmem %s3, %s166
      %p168 = scmp.lt.s32.totalorder %s15, 1
      %s169 = scalar_select %p168, %s15, 1
      %s170 = smul.addr %s169, 32
      %s171 = smul.addr %s170, 8
      %s172 = scalar_lea.vmem %s0, %s171
      %p173 = scmp.lt.s32.totalorder %s15, 1
      %s174 = scalar_select %p173, %s15, 1
      %s175 = smul.addr %s174, 32
      %s176 = smul.addr %s175, 8
      %s177 = scalar_lea.vmem %s2, %s176
      %p178 = scmp.lt.s32.totalorder %s15, 1
      %s179 = scalar_select %p178, %s15, 1
      %s180 = smul.addr %s179, 2
      %s181 = scalar_lea.vmem %s3, %s180
      %vm182 = vcmask 31744
      %183 = vst.msk [vmem:[#allocation2] sm:$0xff] %vm182, 0.0
      %184 = vst.msk [vmem:[#allocation2 + $0x8] sm:$0xff] %vm182, 0.0
      %vm185 = vcmask 25600
      %186 = vst.msk [vmem:[#allocation2 + $0x10] sm:$0x3] %vm185, 0.0
      %s187 = scalar_lea.vmem [#allocation2], 408
      %188 = vst.msk [vmem:[%s187] sm:$0xff] %vm182, 0.0
      %189 = vst.msk [vmem:[%s187 + $0x8] sm:$0xff] %vm182, 0.0
      %190 = vst.msk [vmem:[%s187 + $0x10] sm:$0x3] %vm185, 0.0
      %s191 = scalar_lea.vmem [#allocation2], 24
      %vm192 = vcmask 24576
      %193 = vst.msk [vmem:[%s191] sm:$0x1] %vm192, 0.0
      %194 = vst.msk [vmem:[%s191 + $0x18] sm:$0x1] %vm192, 0.0
      %195 = vst.msk [vmem:[%s191 + $0x30] sm:$0x1] %vm192, 0.0
      %196 = vst.msk [vmem:[%s191 + $0x48] sm:$0x1] %vm192, 0.0
      %197 = vst.msk [vmem:[%s191 + $0x60] sm:$0x1] %vm192, 0.0
      %198 = vst.msk [vmem:[%s191 + $0x78] sm:$0x1] %vm192, 0.0
      %199 = vst.msk [vmem:[%s191 + $0x90] sm:$0x1] %vm192, 0.0
      %200 = vst.msk [vmem:[%s191 + $0xa8] sm:$0x1] %vm192, 0.0
      %201 = vst.msk [vmem:[%s191 + $0xc0] sm:$0x1] %vm192, 0.0
      %202 = vst.msk [vmem:[%s191 + $0xd8] sm:$0x1] %vm192, 0.0
      %203 = vst.msk [vmem:[%s191 + $0xf0] sm:$0x1] %vm192, 0.0
      %204 = vst.msk [vmem:[%s191 + $0x108] sm:$0x1] %vm192, 0.0
      %205 = vst.msk [vmem:[%s191 + $0x120] sm:$0x1] %vm192, 0.0
      %206 = vst.msk [vmem:[%s191 + $0x138] sm:$0x1] %vm192, 0.0
      %207 = vst.msk [vmem:[%s191 + $0x150] sm:$0x1] %vm192, 0.0
      %208 = vst.msk [vmem:[%s191 + $0x168] sm:$0x1] %vm192, 0.0
      %209 = vst.msk [vmem:[%s191 + $0x11] sm:$0x1] %vm192, 0.0
      %210 = vst.msk [vmem:[%s191 + $0x29] sm:$0x1] %vm192, 0.0
      %211 = vst.msk [vmem:[%s191 + $0x41] sm:$0x1] %vm192, 0.0
      %212 = vst.msk [vmem:[%s191 + $0x59] sm:$0x1] %vm192, 0.0
      %213 = vst.msk [vmem:[%s191 + $0x71] sm:$0x1] %vm192, 0.0
      %214 = vst.msk [vmem:[%s191 + $0x89] sm:$0x1] %vm192, 0.0
      %215 = vst.msk [vmem:[%s191 + $0xa1] sm:$0x1] %vm192, 0.0
      %216 = vst.msk [vmem:[%s191 + $0xb9] sm:$0x1] %vm192, 0.0
      %217 = vst.msk [vmem:[%s191 + $0xd1] sm:$0x1] %vm192, 0.0
      %218 = vst.msk [vmem:[%s191 + $0xe9] sm:$0x1] %vm192, 0.0
      %219 = vst.msk [vmem:[%s191 + $0x101] sm:$0x1] %vm192, 0.0
      %220 = vst.msk [vmem:[%s191 + $0x119] sm:$0x1] %vm192, 0.0
      %221 = vst.msk [vmem:[%s191 + $0x131] sm:$0x1] %vm192, 0.0
      %222 = vst.msk [vmem:[%s191 + $0x149] sm:$0x1] %vm192, 0.0
      %223 = vst.msk [vmem:[%s191 + $0x161] sm:$0x1] %vm192, 0.0
      %224 = vst.msk [vmem:[%s191 + $0x179] sm:$0x1] %vm192, 0.0
      %v225 = vld [vmem:[%s172] sm:$0xff]
      %v226 = vld [vmem:[%s172 + $0x8] sm:$0xff]
      %v227 = vld [vmem:[%s172 + $0x10] sm:$0xff]
      %v228 = vld [vmem:[%s172 + $0x18] sm:$0xff]
      %v229 = vld [vmem:[%s172 + $0x20] sm:$0xff]
      %v230 = vld [vmem:[%s172 + $0x28] sm:$0xff]
      %v231 = vld [vmem:[%s172 + $0x30] sm:$0xff]
      %v232 = vld [vmem:[%s172 + $0x38] sm:$0xff]
      %v233 = vld [vmem:[%s172 + $0x40] sm:$0xff]
      %v234 = vld [vmem:[%s172 + $0x48] sm:$0xff]
      %v235 = vld [vmem:[%s172 + $0x50] sm:$0xff]
      %v236 = vld [vmem:[%s172 + $0x58] sm:$0xff]
      %v237 = vld [vmem:[%s172 + $0x60] sm:$0xff]
      %v238 = vld [vmem:[%s172 + $0x68] sm:$0xff]
      %v239 = vld [vmem:[%s172 + $0x70] sm:$0xff]
      %v240 = vld [vmem:[%s172 + $0x78] sm:$0xff]
      %v241 = vld [vmem:[%s172 + $0x80] sm:$0xff]
      %v242 = vld [vmem:[%s172 + $0x88] sm:$0xff]
      %v243 = vld [vmem:[%s172 + $0x90] sm:$0xff]
      %v244 = vld [vmem:[%s172 + $0x98] sm:$0xff]
      %v245 = vld [vmem:[%s172 + $0xa0] sm:$0xff]
      %v246 = vld [vmem:[%s172 + $0xa8] sm:$0xff]
      %v247 = vld [vmem:[%s172 + $0xb0] sm:$0xff]
      %v248 = vld [vmem:[%s172 + $0xb8] sm:$0xff]
      %v249 = vld [vmem:[%s172 + $0xc0] sm:$0xff]
      %v250 = vld [vmem:[%s172 + $0xc8] sm:$0xff]
      %v251 = vld [vmem:[%s172 + $0xd0] sm:$0xff]
      %v252 = vld [vmem:[%s172 + $0xd8] sm:$0xff]
      %v253 = vld [vmem:[%s172 + $0xe0] sm:$0xff]
      %v254 = vld [vmem:[%s172 + $0xe8] sm:$0xff]
      %v255 = vld [vmem:[%s172 + $0xf0] sm:$0xff]
      %v256 = vld [vmem:[%s172 + $0xf8] sm:$0xff]
      %257 = vst.msk [vmem:[%s191 + $0x1] sm:$0xff] %vm182, %v225
      %258 = vst.msk [vmem:[%s191 + $0x9] sm:$0xff] %vm182, %v226
      %259 = vst.msk [vmem:[%s191 + $0x19] sm:$0xff] %vm182, %v227
      %260 = vst.msk [vmem:[%s191 + $0x21] sm:$0xff] %vm182, %v228
      %261 = vst.msk [vmem:[%s191 + $0x31] sm:$0xff] %vm182, %v229
      %262 = vst.msk [vmem:[%s191 + $0x39] sm:$0xff] %vm182, %v230
      %263 = vst.msk [vmem:[%s191 + $0x49] sm:$0xff] %vm182, %v231
      %264 = vst.msk [vmem:[%s191 + $0x51] sm:$0xff] %vm182, %v232
      %265 = vst.msk [vmem:[%s191 + $0x61] sm:$0xff] %vm182, %v233
      %266 = vst.msk [vmem:[%s191 + $0x69] sm:$0xff] %vm182, %v234
      %267 = vst.msk [vmem:[%s191 + $0x79] sm:$0xff] %vm182, %v235
      %268 = vst.msk [vmem:[%s191 + $0x81] sm:$0xff] %vm182, %v236
      %269 = vst.msk [vmem:[%s191 + $0x91] sm:$0xff] %vm182, %v237
      %270 = vst.msk [vmem:[%s191 + $0x99] sm:$0xff] %vm182, %v238
      %271 = vst.msk [vmem:[%s191 + $0xa9] sm:$0xff] %vm182, %v239
      %272 = vst.msk [vmem:[%s191 + $0xb1] sm:$0xff] %vm182, %v240
      %273 = vst.msk [vmem:[%s191 + $0xc1] sm:$0xff] %vm182, %v241
      %274 = vst.msk [vmem:[%s191 + $0xc9] sm:$0xff] %vm182, %v242
      %275 = vst.msk [vmem:[%s191 + $0xd9] sm:$0xff] %vm182, %v243
      %276 = vst.msk [vmem:[%s191 + $0xe1] sm:$0xff] %vm182, %v244
      %277 = vst.msk [vmem:[%s191 + $0xf1] sm:$0xff] %vm182, %v245
      %278 = vst.msk [vmem:[%s191 + $0xf9] sm:$0xff] %vm182, %v246
      %279 = vst.msk [vmem:[%s191 + $0x109] sm:$0xff] %vm182, %v247
      %280 = vst.msk [vmem:[%s191 + $0x111] sm:$0xff] %vm182, %v248
      %281 = vst.msk [vmem:[%s191 + $0x121] sm:$0xff] %vm182, %v249
      %282 = vst.msk [vmem:[%s191 + $0x129] sm:$0xff] %vm182, %v250
      %283 = vst.msk [vmem:[%s191 + $0x139] sm:$0xff] %vm182, %v251
      %284 = vst.msk [vmem:[%s191 + $0x141] sm:$0xff] %vm182, %v252
      %285 = vst.msk [vmem:[%s191 + $0x151] sm:$0xff] %vm182, %v253
      %286 = vst.msk [vmem:[%s191 + $0x159] sm:$0xff] %vm182, %v254
      %287 = vst.msk [vmem:[%s191 + $0x169] sm:$0xff] %vm182, %v255
      %288 = vst.msk [vmem:[%s191 + $0x171] sm:$0xff] %vm182, %v256
      %v289 = vld [vmem:[#allocation2] sm:$0xff]
      %v290 = vld [vmem:[#allocation2 + $0x8] sm:$0xff]
      %v291 = vld [vmem:[#allocation2 + $0x18] sm:$0xff]
      %v292 = vld [vmem:[#allocation2 + $0x20] sm:$0xff]
      %v293 = vld [vmem:[#allocation2 + $0x30] sm:$0xff]
      %v294 = vld [vmem:[#allocation2 + $0x38] sm:$0xff]
      %v295 = vld [vmem:[#allocation2 + $0x48] sm:$0xff]
      %v296 = vld [vmem:[#allocation2 + $0x50] sm:$0xff]
      %v297 = vld [vmem:[#allocation2 + $0x60] sm:$0xff]
      %v298 = vld [vmem:[#allocation2 + $0x68] sm:$0xff]
      %v299 = vld [vmem:[#allocation2 + $0x78] sm:$0xff]
      %v300 = vld [vmem:[#allocation2 + $0x80] sm:$0xff]
      %v301 = vld [vmem:[#allocation2 + $0x90] sm:$0xff]
      %v302 = vld [vmem:[#allocation2 + $0x98] sm:$0xff]
      %v303 = vld [vmem:[#allocation2 + $0xa8] sm:$0xff]
      %v304 = vld [vmem:[#allocation2 + $0xb0] sm:$0xff]
      %v305 = vld [vmem:[#allocation2 + $0xc0] sm:$0xff]
      %v306 = vld [vmem:[#allocation2 + $0xc8] sm:$0xff]
      %v307 = vld [vmem:[#allocation2 + $0xd8] sm:$0xff]
      %v308 = vld [vmem:[#allocation2 + $0xe0] sm:$0xff]
      %v309 = vld [vmem:[#allocation2 + $0xf0] sm:$0xff]
      %v310 = vld [vmem:[#allocation2 + $0xf8] sm:$0xff]
      %v311 = vld [vmem:[#allocation2 + $0x108] sm:$0xff]
      %v312 = vld [vmem:[#allocation2 + $0x110] sm:$0xff]
      %v313 = vld [vmem:[#allocation2 + $0x120] sm:$0xff]
      %v314 = vld [vmem:[#allocation2 + $0x128] sm:$0xff]
      %v315 = vld [vmem:[#allocation2 + $0x138] sm:$0xff]
      %v316 = vld [vmem:[#allocation2 + $0x140] sm:$0xff]
      %v317 = vld [vmem:[#allocation2 + $0x150] sm:$0xff]
      %v318 = vld [vmem:[#allocation2 + $0x158] sm:$0xff]
      %v319 = vld [vmem:[#allocation2 + $0x168] sm:$0xff]
      %v320 = vld [vmem:[#allocation2 + $0x170] sm:$0xff]
      %321 = vst.msk [vmem:[#allocation3] sm:$0xff] %vm182, %v289
      %322 = vst.msk [vmem:[#allocation3 + $0x8] sm:$0xff] %vm182, %v290
      %323 = vst.msk [vmem:[#allocation3 + $0x10] sm:$0xff] %vm182, %v291
      %324 = vst.msk [vmem:[#allocation3 + $0x18] sm:$0xff] %vm182, %v292
      %325 = vst.msk [vmem:[#allocation3 + $0x20] sm:$0xff] %vm182, %v293
      %326 = vst.msk [vmem:[#allocation3 + $0x28] sm:$0xff] %vm182, %v294
      %327 = vst.msk [vmem:[#allocation3 + $0x30] sm:$0xff] %vm182, %v295
      %328 = vst.msk [vmem:[#allocation3 + $0x38] sm:$0xff] %vm182, %v296
      %329 = vst.msk [vmem:[#allocation3 + $0x40] sm:$0xff] %vm182, %v297
      %330 = vst.msk [vmem:[#allocation3 + $0x48] sm:$0xff] %vm182, %v298
      %331 = vst.msk [vmem:[#allocation3 + $0x50] sm:$0xff] %vm182, %v299
      %332 = vst.msk [vmem:[#allocation3 + $0x58] sm:$0xff] %vm182, %v300
      %333 = vst.msk [vmem:[#allocation3 + $0x60] sm:$0xff] %vm182, %v301
      %334 = vst.msk [vmem:[#allocation3 + $0x68] sm:$0xff] %vm182, %v302
      %335 = vst.msk [vmem:[#allocation3 + $0x70] sm:$0xff] %vm182, %v303
      %336 = vst.msk [vmem:[#allocation3 + $0x78] sm:$0xff] %vm182, %v304
      %337 = vst.msk [vmem:[#allocation3 + $0x80] sm:$0xff] %vm182, %v305
      %338 = vst.msk [vmem:[#allocation3 + $0x88] sm:$0xff] %vm182, %v306
      %339 = vst.msk [vmem:[#allocation3 + $0x90] sm:$0xff] %vm182, %v307
      %340 = vst.msk [vmem:[#allocation3 + $0x98] sm:$0xff] %vm182, %v308
      %341 = vst.msk [vmem:[#allocation3 + $0xa0] sm:$0xff] %vm182, %v309
      %342 = vst.msk [vmem:[#allocation3 + $0xa8] sm:$0xff] %vm182, %v310
      %343 = vst.msk [vmem:[#allocation3 + $0xb0] sm:$0xff] %vm182, %v311
      %344 = vst.msk [vmem:[#allocation3 + $0xb8] sm:$0xff] %vm182, %v312
      %345 = vst.msk [vmem:[#allocation3 + $0xc0] sm:$0xff] %vm182, %v313
      %346 = vst.msk [vmem:[#allocation3 + $0xc8] sm:$0xff] %vm182, %v314
      %347 = vst.msk [vmem:[#allocation3 + $0xd0] sm:$0xff] %vm182, %v315
      %348 = vst.msk [vmem:[#allocation3 + $0xd8] sm:$0xff] %vm182, %v316
      %349 = vst.msk [vmem:[#allocation3 + $0xe0] sm:$0xff] %vm182, %v317
      %350 = vst.msk [vmem:[#allocation3 + $0xe8] sm:$0xff] %vm182, %v318
      %351 = vst.msk [vmem:[#allocation3 + $0xf0] sm:$0xff] %vm182, %v319
      %352 = vst.msk [vmem:[#allocation3 + $0xf8] sm:$0xff] %vm182, %v320
      %v353 = vld [vmem:[#allocation2 + $0x1] sm:$0xff]
      %v354 = vld [vmem:[#allocation2 + $0x9] sm:$0xff]
      %v355 = vld [vmem:[#allocation2 + $0x19] sm:$0xff]
      %v356 = vld [vmem:[#allocation2 + $0x21] sm:$0xff]
      %v357 = vld [vmem:[#allocation2 + $0x31] sm:$0xff]
      %v358 = vld [vmem:[#allocation2 + $0x39] sm:$0xff]
      %v359 = vld [vmem:[#allocation2 + $0x49] sm:$0xff]
      %v360 = vld [vmem:[#allocation2 + $0x51] sm:$0xff]
      %v361 = vld [vmem:[#allocation2 + $0x61] sm:$0xff]
      %v362 = vld [vmem:[#allocation2 + $0x69] sm:$0xff]
      %v363 = vld [vmem:[#allocation2 + $0x79] sm:$0xff]
      %v364 = vld [vmem:[#allocation2 + $0x81] sm:$0xff]
      %v365 = vld [vmem:[#allocation2 + $0x91] sm:$0xff]
      %v366 = vld [vmem:[#allocation2 + $0x99] sm:$0xff]
      %v367 = vld [vmem:[#allocation2 + $0xa9] sm:$0xff]
      %v368 = vld [vmem:[#allocation2 + $0xb1] sm:$0xff]
      %v369 = vld [vmem:[#allocation2 + $0xc1] sm:$0xff]
      %v370 = vld [vmem:[#allocation2 + $0xc9] sm:$0xff]
      %v371 = vld [vmem:[#allocation2 + $0xd9] sm:$0xff]
      %v372 = vld [vmem:[#allocation2 + $0xe1] sm:$0xff]
      %v373 = vld [vmem:[#allocation2 + $0xf1] sm:$0xff]
      %v374 = vld [vmem:[#allocation2 + $0xf9] sm:$0xff]
      %v375 = vld [vmem:[#allocation2 + $0x109] sm:$0xff]
      %v376 = vld [vmem:[#allocation2 + $0x111] sm:$0xff]
      %v377 = vld [vmem:[#allocation2 + $0x121] sm:$0xff]
      %v378 = vld [vmem:[#allocation2 + $0x129] sm:$0xff]
      %v379 = vld [vmem:[#allocation2 + $0x139] sm:$0xff]
      %v380 = vld [vmem:[#allocation2 + $0x141] sm:$0xff]
      %v381 = vld [vmem:[#allocation2 + $0x151] sm:$0xff]
      %v382 = vld [vmem:[#allocation2 + $0x159] sm:$0xff]
      %v383 = vld [vmem:[#allocation2 + $0x169] sm:$0xff]
      %v384 = vld [vmem:[#allocation2 + $0x171] sm:$0xff]
      %417 = vrot.lane.b32.xlu0 %v353, 4
      %v418 = vpop.permute.xlu0 %417
      %419 = vrot.lane.b32.xlu0 %v354, 4
      %v420 = vpop.permute.xlu0 %419
      %421 = vrot.lane.b32.xlu0 %v355, 4
      %v422 = vpop.permute.xlu0 %421
      %423 = vrot.lane.b32.xlu0 %v356, 4
      %v424 = vpop.permute.xlu0 %423
      %425 = vrot.lane.b32.xlu0 %v357, 4
      %v426 = vpop.permute.xlu0 %425
      %427 = vrot.lane.b32.xlu0 %v358, 4
      %v428 = vpop.permute.xlu0 %427
      %429 = vrot.lane.b32.xlu0 %v359, 4
      %v430 = vpop.permute.xlu0 %429
      %431 = vrot.lane.b32.xlu0 %v360, 4
      %v432 = vpop.permute.xlu0 %431
      %433 = vrot.lane.b32.xlu0 %v361, 4
      %v434 = vpop.permute.xlu0 %433
      %435 = vrot.lane.b32.xlu0 %v362, 4
      %v436 = vpop.permute.xlu0 %435
      %437 = vrot.lane.b32.xlu0 %v363, 4
      %v438 = vpop.permute.xlu0 %437
      %439 = vrot.lane.b32.xlu0 %v364, 4
      %v440 = vpop.permute.xlu0 %439
      %441 = vrot.lane.b32.xlu0 %v365, 4
      %v442 = vpop.permute.xlu0 %441
      %443 = vrot.lane.b32.xlu0 %v366, 4
      %v444 = vpop.permute.xlu0 %443
      %445 = vrot.lane.b32.xlu0 %v367, 4
      %v446 = vpop.permute.xlu0 %445
      %447 = vrot.lane.b32.xlu0 %v368, 4
      %v448 = vpop.permute.xlu0 %447
      %449 = vrot.lane.b32.xlu0 %v369, 4
      %v450 = vpop.permute.xlu0 %449
      %451 = vrot.lane.b32.xlu0 %v370, 4
      %v452 = vpop.permute.xlu0 %451
      %453 = vrot.lane.b32.xlu0 %v371, 4
      %v454 = vpop.permute.xlu0 %453
      %455 = vrot.lane.b32.xlu0 %v372, 4
      %v456 = vpop.permute.xlu0 %455
      %457 = vrot.lane.b32.xlu0 %v373, 4
      %v458 = vpop.permute.xlu0 %457
      %459 = vrot.lane.b32.xlu0 %v374, 4
      %v460 = vpop.permute.xlu0 %459
      %461 = vrot.lane.b32.xlu0 %v375, 4
      %v462 = vpop.permute.xlu0 %461
      %463 = vrot.lane.b32.xlu0 %v376, 4
      %v464 = vpop.permute.xlu0 %463
      %465 = vrot.lane.b32.xlu0 %v377, 4
      %v466 = vpop.permute.xlu0 %465
      %467 = vrot.lane.b32.xlu0 %v378, 4
      %v468 = vpop.permute.xlu0 %467
      %469 = vrot.lane.b32.xlu0 %v379, 4
      %v470 = vpop.permute.xlu0 %469
      %471 = vrot.lane.b32.xlu0 %v380, 4
      %v472 = vpop.permute.xlu0 %471
      %473 = vrot.lane.b32.xlu0 %v381, 4
      %v474 = vpop.permute.xlu0 %473
      %475 = vrot.lane.b32.xlu0 %v382, 4
      %v476 = vpop.permute.xlu0 %475
      %477 = vrot.lane.b32.xlu0 %v383, 4
      %v478 = vpop.permute.xlu0 %477
      %479 = vrot.lane.b32.xlu0 %v384, 4
      %v480 = vpop.permute.xlu0 %479
      %vm513 = vcmask 64544
      %514 = vst.msk [vmem:[#allocation3] sm:$0xff] %vm513, %v418
      %515 = vst.msk [vmem:[#allocation3 + $0x8] sm:$0xff] %vm513, %v420
      %516 = vst.msk [vmem:[#allocation3 + $0x10] sm:$0xff] %vm513, %v422
      %517 = vst.msk [vmem:[#allocation3 + $0x18] sm:$0xff] %vm513, %v424
      %518 = vst.msk [vmem:[#allocation3 + $0x20] sm:$0xff] %vm513, %v426
      %519 = vst.msk [vmem:[#allocation3 + $0x28] sm:$0xff] %vm513, %v428
      %520 = vst.msk [vmem:[#allocation3 + $0x30] sm:$0xff] %vm513, %v430
      %521 = vst.msk [vmem:[#allocation3 + $0x38] sm:$0xff] %vm513, %v432
      %522 = vst.msk [vmem:[#allocation3 + $0x40] sm:$0xff] %vm513, %v434
      %523 = vst.msk [vmem:[#allocation3 + $0x48] sm:$0xff] %vm513, %v436
      %524 = vst.msk [vmem:[#allocation3 + $0x50] sm:$0xff] %vm513, %v438
      %525 = vst.msk [vmem:[#allocation3 + $0x58] sm:$0xff] %vm513, %v440
      %526 = vst.msk [vmem:[#allocation3 + $0x60] sm:$0xff] %vm513, %v442
      %527 = vst.msk [vmem:[#allocation3 + $0x68] sm:$0xff] %vm513, %v444
      %528 = vst.msk [vmem:[#allocation3 + $0x70] sm:$0xff] %vm513, %v446
      %529 = vst.msk [vmem:[#allocation3 + $0x78] sm:$0xff] %vm513, %v448
      %530 = vst.msk [vmem:[#allocation3 + $0x80] sm:$0xff] %vm513, %v450
      %531 = vst.msk [vmem:[#allocation3 + $0x88] sm:$0xff] %vm513, %v452
      %532 = vst.msk [vmem:[#allocation3 + $0x90] sm:$0xff] %vm513, %v454
      %533 = vst.msk [vmem:[#allocation3 + $0x98] sm:$0xff] %vm513, %v456
      %534 = vst.msk [vmem:[#allocation3 + $0xa0] sm:$0xff] %vm513, %v458
      %535 = vst.msk [vmem:[#allocation3 + $0xa8] sm:$0xff] %vm513, %v460
      %536 = vst.msk [vmem:[#allocation3 + $0xb0] sm:$0xff] %vm513, %v462
      %537 = vst.msk [vmem:[#allocation3 + $0xb8] sm:$0xff] %vm513, %v464
      %538 = vst.msk [vmem:[#allocation3 + $0xc0] sm:$0xff] %vm513, %v466
      %539 = vst.msk [vmem:[#allocation3 + $0xc8] sm:$0xff] %vm513, %v468
      %540 = vst.msk [vmem:[#allocation3 + $0xd0] sm:$0xff] %vm513, %v470
      %541 = vst.msk [vmem:[#allocation3 + $0xd8] sm:$0xff] %vm513, %v472
      %542 = vst.msk [vmem:[#allocation3 + $0xe0] sm:$0xff] %vm513, %v474
      %543 = vst.msk [vmem:[#allocation3 + $0xe8] sm:$0xff] %vm513, %v476
      %544 = vst.msk [vmem:[#allocation3 + $0xf0] sm:$0xff] %vm513, %v478
      %545 = vst.msk [vmem:[#allocation3 + $0xf8] sm:$0xff] %vm513, %v480
      %v546 = vld [vmem:[#allocation2 + $0x2] sm:$0xff]
      %v547 = vld [vmem:[#allocation2 + $0xa] sm:$0xff]
      %v548 = vld [vmem:[#allocation2 + $0x1a] sm:$0xff]
      %v549 = vld [vmem:[#allocation2 + $0x22] sm:$0xff]
      %v550 = vld [vmem:[#allocation2 + $0x32] sm:$0xff]
      %v551 = vld [vmem:[#allocation2 + $0x3a] sm:$0xff]
      %v552 = vld [vmem:[#allocation2 + $0x4a] sm:$0xff]
      %v553 = vld [vmem:[#allocation2 + $0x52] sm:$0xff]
      %v554 = vld [vmem:[#allocation2 + $0x62] sm:$0xff]
      %v555 = vld [vmem:[#allocation2 + $0x6a] sm:$0xff]
      %v556 = vld [vmem:[#allocation2 + $0x7a] sm:$0xff]
      %v557 = vld [vmem:[#allocation2 + $0x82] sm:$0xff]
      %v558 = vld [vmem:[#allocation2 + $0x92] sm:$0xff]
      %v559 = vld [vmem:[#allocation2 + $0x9a] sm:$0xff]
      %v560 = vld [vmem:[#allocation2 + $0xaa] sm:$0xff]
      %v561 = vld [vmem:[#allocation2 + $0xb2] sm:$0xff]
      %v562 = vld [vmem:[#allocation2 + $0xc2] sm:$0xff]
      %v563 = vld [vmem:[#allocation2 + $0xca] sm:$0xff]
      %v564 = vld [vmem:[#allocation2 + $0xda] sm:$0xff]
      %v565 = vld [vmem:[#allocation2 + $0xe2] sm:$0xff]
      %v566 = vld [vmem:[#allocation2 + $0xf2] sm:$0xff]
      %v567 = vld [vmem:[#allocation2 + $0xfa] sm:$0xff]
      %v568 = vld [vmem:[#allocation2 + $0x10a] sm:$0xff]
      %v569 = vld [vmem:[#allocation2 + $0x112] sm:$0xff]
      %v570 = vld [vmem:[#allocation2 + $0x122] sm:$0xff]
      %v571 = vld [vmem:[#allocation2 + $0x12a] sm:$0xff]
      %v572 = vld [vmem:[#allocation2 + $0x13a] sm:$0xff]
      %v573 = vld [vmem:[#allocation2 + $0x142] sm:$0xff]
      %v574 = vld [vmem:[#allocation2 + $0x152] sm:$0xff]
      %v575 = vld [vmem:[#allocation2 + $0x15a] sm:$0xff]
      %v576 = vld [vmem:[#allocation2 + $0x16a] sm:$0xff]
      %v577 = vld [vmem:[#allocation2 + $0x172] sm:$0xff]
      %610 = vrot.lane.b32.xlu0 %v546, 8
      %v611 = vpop.permute.xlu0 %610
      %612 = vrot.lane.b32.xlu0 %v547, 8
      %v613 = vpop.permute.xlu0 %612
      %614 = vrot.lane.b32.xlu0 %v548, 8
      %v615 = vpop.permute.xlu0 %614
      %616 = vrot.lane.b32.xlu0 %v549, 8
      %v617 = vpop.permute.xlu0 %616
      %618 = vrot.lane.b32.xlu0 %v550, 8
      %v619 = vpop.permute.xlu0 %618
      %620 = vrot.lane.b32.xlu0 %v551, 8
      %v621 = vpop.permute.xlu0 %620
      %622 = vrot.lane.b32.xlu0 %v552, 8
      %v623 = vpop.permute.xlu0 %622
      %624 = vrot.lane.b32.xlu0 %v553, 8
      %v625 = vpop.permute.xlu0 %624
      %626 = vrot.lane.b32.xlu0 %v554, 8
      %v627 = vpop.permute.xlu0 %626
      %628 = vrot.lane.b32.xlu0 %v555, 8
      %v629 = vpop.permute.xlu0 %628
      %630 = vrot.lane.b32.xlu0 %v556, 8
      %v631 = vpop.permute.xlu0 %630
      %632 = vrot.lane.b32.xlu0 %v557, 8
      %v633 = vpop.permute.xlu0 %632
      %634 = vrot.lane.b32.xlu0 %v558, 8
      %v635 = vpop.permute.xlu0 %634
      %636 = vrot.lane.b32.xlu0 %v559, 8
      %v637 = vpop.permute.xlu0 %636
      %638 = vrot.lane.b32.xlu0 %v560, 8
      %v639 = vpop.permute.xlu0 %638
      %640 = vrot.lane.b32.xlu0 %v561, 8
      %v641 = vpop.permute.xlu0 %640
      %642 = vrot.lane.b32.xlu0 %v562, 8
      %v643 = vpop.permute.xlu0 %642
      %644 = vrot.lane.b32.xlu0 %v563, 8
      %v645 = vpop.permute.xlu0 %644
      %646 = vrot.lane.b32.xlu0 %v564, 8
      %v647 = vpop.permute.xlu0 %646
      %648 = vrot.lane.b32.xlu0 %v565, 8
      %v649 = vpop.permute.xlu0 %648
      %650 = vrot.lane.b32.xlu0 %v566, 8
      %v651 = vpop.permute.xlu0 %650
      %652 = vrot.lane.b32.xlu0 %v567, 8
      %v653 = vpop.permute.xlu0 %652
      %654 = vrot.lane.b32.xlu0 %v568, 8
      %v655 = vpop.permute.xlu0 %654
      %656 = vrot.lane.b32.xlu0 %v569, 8
      %v657 = vpop.permute.xlu0 %656
      %658 = vrot.lane.b32.xlu0 %v570, 8
      %v659 = vpop.permute.xlu0 %658
      %660 = vrot.lane.b32.xlu0 %v571, 8
      %v661 = vpop.permute.xlu0 %660
      %662 = vrot.lane.b32.xlu0 %v572, 8
      %v663 = vpop.permute.xlu0 %662
      %664 = vrot.lane.b32.xlu0 %v573, 8
      %v665 = vpop.permute.xlu0 %664
      %666 = vrot.lane.b32.xlu0 %v574, 8
      %v667 = vpop.permute.xlu0 %666
      %668 = vrot.lane.b32.xlu0 %v575, 8
      %v669 = vpop.permute.xlu0 %668
      %670 = vrot.lane.b32.xlu0 %v576, 8
      %v671 = vpop.permute.xlu0 %670
      %672 = vrot.lane.b32.xlu0 %v577, 8
      %v673 = vpop.permute.xlu0 %672
      %vm706 = vcmask 97344
      %707 = vst.msk [vmem:[#allocation3] sm:$0xff] %vm706, %v611
      %708 = vst.msk [vmem:[#allocation3 + $0x8] sm:$0xff] %vm706, %v613
      %709 = vst.msk [vmem:[#allocation3 + $0x10] sm:$0xff] %vm706, %v615
      %710 = vst.msk [vmem:[#allocation3 + $0x18] sm:$0xff] %vm706, %v617
      %711 = vst.msk [vmem:[#allocation3 + $0x20] sm:$0xff] %vm706, %v619
      %712 = vst.msk [vmem:[#allocation3 + $0x28] sm:$0xff] %vm706, %v621
      %713 = vst.msk [vmem:[#allocation3 + $0x30] sm:$0xff] %vm706, %v623
      %714 = vst.msk [vmem:[#allocation3 + $0x38] sm:$0xff] %vm706, %v625
      %715 = vst.msk [vmem:[#allocation3 + $0x40] sm:$0xff] %vm706, %v627
      %716 = vst.msk [vmem:[#allocation3 + $0x48] sm:$0xff] %vm706, %v629
      %717 = vst.msk [vmem:[#allocation3 + $0x50] sm:$0xff] %vm706, %v631
      %718 = vst.msk [vmem:[#allocation3 + $0x58] sm:$0xff] %vm706, %v633
      %719 = vst.msk [vmem:[#allocation3 + $0x60] sm:$0xff] %vm706, %v635
      %720 = vst.msk [vmem:[#allocation3 + $0x68] sm:$0xff] %vm706, %v637
      %721 = vst.msk [vmem:[#allocation3 + $0x70] sm:$0xff] %vm706, %v639
      %722 = vst.msk [vmem:[#allocation3 + $0x78] sm:$0xff] %vm706, %v641
      %723 = vst.msk [vmem:[#allocation3 + $0x80] sm:$0xff] %vm706, %v643
      %724 = vst.msk [vmem:[#allocation3 + $0x88] sm:$0xff] %vm706, %v645
      %725 = vst.msk [vmem:[#allocation3 + $0x90] sm:$0xff] %vm706, %v647
      %726 = vst.msk [vmem:[#allocation3 + $0x98] sm:$0xff] %vm706, %v649
      %727 = vst.msk [vmem:[#allocation3 + $0xa0] sm:$0xff] %vm706, %v651
      %728 = vst.msk [vmem:[#allocation3 + $0xa8] sm:$0xff] %vm706, %v653
      %729 = vst.msk [vmem:[#allocation3 + $0xb0] sm:$0xff] %vm706, %v655
      %730 = vst.msk [vmem:[#allocation3 + $0xb8] sm:$0xff] %vm706, %v657
      %731 = vst.msk [vmem:[#allocation3 + $0xc0] sm:$0xff] %vm706, %v659
      %732 = vst.msk [vmem:[#allocation3 + $0xc8] sm:$0xff] %vm706, %v661
      %733 = vst.msk [vmem:[#allocation3 + $0xd0] sm:$0xff] %vm706, %v663
      %734 = vst.msk [vmem:[#allocation3 + $0xd8] sm:$0xff] %vm706, %v665
      %735 = vst.msk [vmem:[#allocation3 + $0xe0] sm:$0xff] %vm706, %v667
      %736 = vst.msk [vmem:[#allocation3 + $0xe8] sm:$0xff] %vm706, %v669
      %737 = vst.msk [vmem:[#allocation3 + $0xf0] sm:$0xff] %vm706, %v671
      %738 = vst.msk [vmem:[#allocation3 + $0xf8] sm:$0xff] %vm706, %v673
      %v739 = vld [vmem:[%s191] sm:$0xff]
      %v740 = vld [vmem:[%s191 + $0x8] sm:$0xff]
      %v741 = vld [vmem:[%s191 + $0x18] sm:$0xff]
      %v742 = vld [vmem:[%s191 + $0x20] sm:$0xff]
      %v743 = vld [vmem:[%s191 + $0x30] sm:$0xff]
      %v744 = vld [vmem:[%s191 + $0x38] sm:$0xff]
      %v745 = vld [vmem:[%s191 + $0x48] sm:$0xff]
      %v746 = vld [vmem:[%s191 + $0x50] sm:$0xff]
      %v747 = vld [vmem:[%s191 + $0x60] sm:$0xff]
      %v748 = vld [vmem:[%s191 + $0x68] sm:$0xff]
      %v749 = vld [vmem:[%s191 + $0x78] sm:$0xff]
      %v750 = vld [vmem:[%s191 + $0x80] sm:$0xff]
      %v751 = vld [vmem:[%s191 + $0x90] sm:$0xff]
      %v752 = vld [vmem:[%s191 + $0x98] sm:$0xff]
      %v753 = vld [vmem:[%s191 + $0xa8] sm:$0xff]
      %v754 = vld [vmem:[%s191 + $0xb0] sm:$0xff]
      %v755 = vld [vmem:[%s191 + $0xc0] sm:$0xff]
      %v756 = vld [vmem:[%s191 + $0xc8] sm:$0xff]
      %v757 = vld [vmem:[%s191 + $0xd8] sm:$0xff]
      %v758 = vld [vmem:[%s191 + $0xe0] sm:$0xff]
      %v759 = vld [vmem:[%s191 + $0xf0] sm:$0xff]
      %v760 = vld [vmem:[%s191 + $0xf8] sm:$0xff]
      %v761 = vld [vmem:[%s191 + $0x108] sm:$0xff]
      %v762 = vld [vmem:[%s191 + $0x110] sm:$0xff]
      %v763 = vld [vmem:[%s191 + $0x120] sm:$0xff]
      %v764 = vld [vmem:[%s191 + $0x128] sm:$0xff]
      %v765 = vld [vmem:[%s191 + $0x138] sm:$0xff]
      %v766 = vld [vmem:[%s191 + $0x140] sm:$0xff]
      %v767 = vld [vmem:[%s191 + $0x150] sm:$0xff]
      %v768 = vld [vmem:[%s191 + $0x158] sm:$0xff]
      %v769 = vld [vmem:[%s191 + $0x168] sm:$0xff]
      %v770 = vld [vmem:[%s191 + $0x170] sm:$0xff]
      %803 = vrot.lane.b32.xlu0 %v739, 12
      %v804 = vpop.permute.xlu0 %803
      %805 = vrot.lane.b32.xlu0 %v740, 12
      %v806 = vpop.permute.xlu0 %805
      %807 = vrot.lane.b32.xlu0 %v741, 12
      %v808 = vpop.permute.xlu0 %807
      %809 = vrot.lane.b32.xlu0 %v742, 12
      %v810 = vpop.permute.xlu0 %809
      %811 = vrot.lane.b32.xlu0 %v743, 12
      %v812 = vpop.permute.xlu0 %811
      %813 = vrot.lane.b32.xlu0 %v744, 12
      %v814 = vpop.permute.xlu0 %813
      %815 = vrot.lane.b32.xlu0 %v745, 12
      %v816 = vpop.permute.xlu0 %815
      %817 = vrot.lane.b32.xlu0 %v746, 12
      %v818 = vpop.permute.xlu0 %817
      %819 = vrot.lane.b32.xlu0 %v747, 12
      %v820 = vpop.permute.xlu0 %819
      %821 = vrot.lane.b32.xlu0 %v748, 12
      %v822 = vpop.permute.xlu0 %821
      %823 = vrot.lane.b32.xlu0 %v749, 12
      %v824 = vpop.permute.xlu0 %823
      %825 = vrot.lane.b32.xlu0 %v750, 12
      %v826 = vpop.permute.xlu0 %825
      %827 = vrot.lane.b32.xlu0 %v751, 12
      %v828 = vpop.permute.xlu0 %827
      %829 = vrot.lane.b32.xlu0 %v752, 12
      %v830 = vpop.permute.xlu0 %829
      %831 = vrot.lane.b32.xlu0 %v753, 12
      %v832 = vpop.permute.xlu0 %831
      %833 = vrot.lane.b32.xlu0 %v754, 12
      %v834 = vpop.permute.xlu0 %833
      %835 = vrot.lane.b32.xlu0 %v755, 12
      %v836 = vpop.permute.xlu0 %835
      %837 = vrot.lane.b32.xlu0 %v756, 12
      %v838 = vpop.permute.xlu0 %837
      %839 = vrot.lane.b32.xlu0 %v757, 12
      %v840 = vpop.permute.xlu0 %839
      %841 = vrot.lane.b32.xlu0 %v758, 12
      %v842 = vpop.permute.xlu0 %841
      %843 = vrot.lane.b32.xlu0 %v759, 12
      %v844 = vpop.permute.xlu0 %843
      %845 = vrot.lane.b32.xlu0 %v760, 12
      %v846 = vpop.permute.xlu0 %845
      %847 = vrot.lane.b32.xlu0 %v761, 12
      %v848 = vpop.permute.xlu0 %847
      %849 = vrot.lane.b32.xlu0 %v762, 12
      %v850 = vpop.permute.xlu0 %849
      %851 = vrot.lane.b32.xlu0 %v763, 12
      %v852 = vpop.permute.xlu0 %851
      %853 = vrot.lane.b32.xlu0 %v764, 12
      %v854 = vpop.permute.xlu0 %853
      %855 = vrot.lane.b32.xlu0 %v765, 12
      %v856 = vpop.permute.xlu0 %855
      %857 = vrot.lane.b32.xlu0 %v766, 12
      %v858 = vpop.permute.xlu0 %857
      %859 = vrot.lane.b32.xlu0 %v767, 12
      %v860 = vpop.permute.xlu0 %859
      %861 = vrot.lane.b32.xlu0 %v768, 12
      %v862 = vpop.permute.xlu0 %861
      %863 = vrot.lane.b32.xlu0 %v769, 12
      %v864 = vpop.permute.xlu0 %863
      %865 = vrot.lane.b32.xlu0 %v770, 12
      %v866 = vpop.permute.xlu0 %865
      %vm899 = vcmask 130144
      %900 = vst.msk [vmem:[#allocation3] sm:$0xff] %vm899, %v804
      %901 = vst.msk [vmem:[#allocation3 + $0x8] sm:$0xff] %vm899, %v806
      %902 = vst.msk [vmem:[#allocation3 + $0x10] sm:$0xff] %vm899, %v808
      %903 = vst.msk [vmem:[#allocation3 + $0x18] sm:$0xff] %vm899, %v810
      %904 = vst.msk [vmem:[#allocation3 + $0x20] sm:$0xff] %vm899, %v812
      %905 = vst.msk [vmem:[#allocation3 + $0x28] sm:$0xff] %vm899, %v814
      %906 = vst.msk [vmem:[#allocation3 + $0x30] sm:$0xff] %vm899, %v816
      %907 = vst.msk [vmem:[#allocation3 + $0x38] sm:$0xff] %vm899, %v818
      %908 = vst.msk [vmem:[#allocation3 + $0x40] sm:$0xff] %vm899, %v820
      %909 = vst.msk [vmem:[#allocation3 + $0x48] sm:$0xff] %vm899, %v822
      %910 = vst.msk [vmem:[#allocation3 + $0x50] sm:$0xff] %vm899, %v824
      %911 = vst.msk [vmem:[#allocation3 + $0x58] sm:$0xff] %vm899, %v826
      %912 = vst.msk [vmem:[#allocation3 + $0x60] sm:$0xff] %vm899, %v828
      %913 = vst.msk [vmem:[#allocation3 + $0x68] sm:$0xff] %vm899, %v830
      %914 = vst.msk [vmem:[#allocation3 + $0x70] sm:$0xff] %vm899, %v832
      %915 = vst.msk [vmem:[#allocation3 + $0x78] sm:$0xff] %vm899, %v834
      %916 = vst.msk [vmem:[#allocation3 + $0x80] sm:$0xff] %vm899, %v836
      %917 = vst.msk [vmem:[#allocation3 + $0x88] sm:$0xff] %vm899, %v838
      %918 = vst.msk [vmem:[#allocation3 + $0x90] sm:$0xff] %vm899, %v840
      %919 = vst.msk [vmem:[#allocation3 + $0x98] sm:$0xff] %vm899, %v842
      %920 = vst.msk [vmem:[#allocation3 + $0xa0] sm:$0xff] %vm899, %v844
      %921 = vst.msk [vmem:[#allocation3 + $0xa8] sm:$0xff] %vm899, %v846
      %922 = vst.msk [vmem:[#allocation3 + $0xb0] sm:$0xff] %vm899, %v848
      %923 = vst.msk [vmem:[#allocation3 + $0xb8] sm:$0xff] %vm899, %v850
      %924 = vst.msk [vmem:[#allocation3 + $0xc0] sm:$0xff] %vm899, %v852
      %925 = vst.msk [vmem:[#allocation3 + $0xc8] sm:$0xff] %vm899, %v854
      %926 = vst.msk [vmem:[#allocation3 + $0xd0] sm:$0xff] %vm899, %v856
      %927 = vst.msk [vmem:[#allocation3 + $0xd8] sm:$0xff] %vm899, %v858
      %928 = vst.msk [vmem:[#allocation3 + $0xe0] sm:$0xff] %vm899, %v860
      %929 = vst.msk [vmem:[#allocation3 + $0xe8] sm:$0xff] %vm899, %v862
      %930 = vst.msk [vmem:[#allocation3 + $0xf0] sm:$0xff] %vm899, %v864
      %931 = vst.msk [vmem:[#allocation3 + $0xf8] sm:$0xff] %vm899, %v866
      %v932 = vld [vmem:[%s191 + $0x1] sm:$0xff]
      %v933 = vld [vmem:[%s191 + $0x9] sm:$0xff]
      %v934 = vld [vmem:[%s191 + $0x19] sm:$0xff]
      %v935 = vld [vmem:[%s191 + $0x21] sm:$0xff]
      %v936 = vld [vmem:[%s191 + $0x31] sm:$0xff]
      %v937 = vld [vmem:[%s191 + $0x39] sm:$0xff]
      %v938 = vld [vmem:[%s191 + $0x49] sm:$0xff]
      %v939 = vld [vmem:[%s191 + $0x51] sm:$0xff]
      %v940 = vld [vmem:[%s191 + $0x61] sm:$0xff]
      %v941 = vld [vmem:[%s191 + $0x69] sm:$0xff]
      %v942 = vld [vmem:[%s191 + $0x79] sm:$0xff]
      %v943 = vld [vmem:[%s191 + $0x81] sm:$0xff]
      %v944 = vld [vmem:[%s191 + $0x91] sm:$0xff]
      %v945 = vld [vmem:[%s191 + $0x99] sm:$0xff]
      %v946 = vld [vmem:[%s191 + $0xa9] sm:$0xff]
      %v947 = vld [vmem:[%s191 + $0xb1] sm:$0xff]
      %v948 = vld [vmem:[%s191 + $0xc1] sm:$0xff]
      %v949 = vld [vmem:[%s191 + $0xc9] sm:$0xff]
      %v950 = vld [vmem:[%s191 + $0xd9] sm:$0xff]
      %v951 = vld [vmem:[%s191 + $0xe1] sm:$0xff]
      %v952 = vld [vmem:[%s191 + $0xf1] sm:$0xff]
      %v953 = vld [vmem:[%s191 + $0xf9] sm:$0xff]
      %v954 = vld [vmem:[%s191 + $0x109] sm:$0xff]
      %v955 = vld [vmem:[%s191 + $0x111] sm:$0xff]
      %v956 = vld [vmem:[%s191 + $0x121] sm:$0xff]
      %v957 = vld [vmem:[%s191 + $0x129] sm:$0xff]
      %v958 = vld [vmem:[%s191 + $0x139] sm:$0xff]
      %v959 = vld [vmem:[%s191 + $0x141] sm:$0xff]
      %v960 = vld [vmem:[%s191 + $0x151] sm:$0xff]
      %v961 = vld [vmem:[%s191 + $0x159] sm:$0xff]
      %v962 = vld [vmem:[%s191 + $0x169] sm:$0xff]
      %v963 = vld [vmem:[%s191 + $0x171] sm:$0xff]
      %996 = vrot.lane.b32.xlu0 %v932, 16
      %v997 = vpop.permute.xlu0 %996
      %998 = vrot.lane.b32.xlu0 %v933, 16
      %v999 = vpop.permute.xlu0 %998
      %1000 = vrot.lane.b32.xlu0 %v934, 16
      %v1001 = vpop.permute.xlu0 %1000
      %1002 = vrot.lane.b32.xlu0 %v935, 16
      %v1003 = vpop.permute.xlu0 %1002
      %1004 = vrot.lane.b32.xlu0 %v936, 16
      %v1005 = vpop.permute.xlu0 %1004
      %1006 = vrot.lane.b32.xlu0 %v937, 16
      %v1007 = vpop.permute.xlu0 %1006
      %1008 = vrot.lane.b32.xlu0 %v938, 16
      %v1009 = vpop.permute.xlu0 %1008
      %1010 = vrot.lane.b32.xlu0 %v939, 16
      %v1011 = vpop.permute.xlu0 %1010
      %1012 = vrot.lane.b32.xlu0 %v940, 16
      %v1013 = vpop.permute.xlu0 %1012
      %1014 = vrot.lane.b32.xlu0 %v941, 16
      %v1015 = vpop.permute.xlu0 %1014
      %1016 = vrot.lane.b32.xlu0 %v942, 16
      %v1017 = vpop.permute.xlu0 %1016
      %1018 = vrot.lane.b32.xlu0 %v943, 16
      %v1019 = vpop.permute.xlu0 %1018
      %1020 = vrot.lane.b32.xlu0 %v944, 16
      %v1021 = vpop.permute.xlu0 %1020
      %1022 = vrot.lane.b32.xlu0 %v945, 16
      %v1023 = vpop.permute.xlu0 %1022
      %1024 = vrot.lane.b32.xlu0 %v946, 16
      %v1025 = vpop.permute.xlu0 %1024
      %1026 = vrot.lane.b32.xlu0 %v947, 16
      %v1027 = vpop.permute.xlu0 %1026
      %1028 = vrot.lane.b32.xlu0 %v948, 16
      %v1029 = vpop.permute.xlu0 %1028
      %1030 = vrot.lane.b32.xlu0 %v949, 16
      %v1031 = vpop.permute.xlu0 %1030
      %1032 = vrot.lane.b32.xlu0 %v950, 16
      %v1033 = vpop.permute.xlu0 %1032
      %1034 = vrot.lane.b32.xlu0 %v951, 16
      %v1035 = vpop.permute.xlu0 %1034
      %1036 = vrot.lane.b32.xlu0 %v952, 16
      %v1037 = vpop.permute.xlu0 %1036
      %1038 = vrot.lane.b32.xlu0 %v953, 16
      %v1039 = vpop.permute.xlu0 %1038
      %1040 = vrot.lane.b32.xlu0 %v954, 16
      %v1041 = vpop.permute.xlu0 %1040
      %1042 = vrot.lane.b32.xlu0 %v955, 16
      %v1043 = vpop.permute.xlu0 %1042
      %1044 = vrot.lane.b32.xlu0 %v956, 16
      %v1045 = vpop.permute.xlu0 %1044
      %1046 = vrot.lane.b32.xlu0 %v957, 16
      %v1047 = vpop.permute.xlu0 %1046
      %1048 = vrot.lane.b32.xlu0 %v958, 16
      %v1049 = vpop.permute.xlu0 %1048
      %1050 = vrot.lane.b32.xlu0 %v959, 16
      %v1051 = vpop.permute.xlu0 %1050
      %1052 = vrot.lane.b32.xlu0 %v960, 16
      %v1053 = vpop.permute.xlu0 %1052
      %1054 = vrot.lane.b32.xlu0 %v961, 16
      %v1055 = vpop.permute.xlu0 %1054
      %1056 = vrot.lane.b32.xlu0 %v962, 16
      %v1057 = vpop.permute.xlu0 %1056
      %1058 = vrot.lane.b32.xlu0 %v963, 16
      %v1059 = vpop.permute.xlu0 %1058
      %vm1092 = vcmask 162944
      %1093 = vst.msk [vmem:[#allocation3] sm:$0xff] %vm1092, %v997
      %1094 = vst.msk [vmem:[#allocation3 + $0x8] sm:$0xff] %vm1092, %v999
      %1095 = vst.msk [vmem:[#allocation3 + $0x10] sm:$0xff] %vm1092, %v1001
      %1096 = vst.msk [vmem:[#allocation3 + $0x18] sm:$0xff] %vm1092, %v1003
      %1097 = vst.msk [vmem:[#allocation3 + $0x20] sm:$0xff] %vm1092, %v1005
      %1098 = vst.msk [vmem:[#allocation3 + $0x28] sm:$0xff] %vm1092, %v1007
      %1099 = vst.msk [vmem:[#allocation3 + $0x30] sm:$0xff] %vm1092, %v1009
      %1100 = vst.msk [vmem:[#allocation3 + $0x38] sm:$0xff] %vm1092, %v1011
      %1101 = vst.msk [vmem:[#allocation3 + $0x40] sm:$0xff] %vm1092, %v1013
      %1102 = vst.msk [vmem:[#allocation3 + $0x48] sm:$0xff] %vm1092, %v1015
      %1103 = vst.msk [vmem:[#allocation3 + $0x50] sm:$0xff] %vm1092, %v1017
      %1104 = vst.msk [vmem:[#allocation3 + $0x58] sm:$0xff] %vm1092, %v1019
      %1105 = vst.msk [vmem:[#allocation3 + $0x60] sm:$0xff] %vm1092, %v1021
      %1106 = vst.msk [vmem:[#allocation3 + $0x68] sm:$0xff] %vm1092, %v1023
      %1107 = vst.msk [vmem:[#allocation3 + $0x70] sm:$0xff] %vm1092, %v1025
      %1108 = vst.msk [vmem:[#allocation3 + $0x78] sm:$0xff] %vm1092, %v1027
      %1109 = vst.msk [vmem:[#allocation3 + $0x80] sm:$0xff] %vm1092, %v1029
      %1110 = vst.msk [vmem:[#allocation3 + $0x88] sm:$0xff] %vm1092, %v1031
      %1111 = vst.msk [vmem:[#allocation3 + $0x90] sm:$0xff] %vm1092, %v1033
      %1112 = vst.msk [vmem:[#allocation3 + $0x98] sm:$0xff] %vm1092, %v1035
      %1113 = vst.msk [vmem:[#allocation3 + $0xa0] sm:$0xff] %vm1092, %v1037
      %1114 = vst.msk [vmem:[#allocation3 + $0xa8] sm:$0xff] %vm1092, %v1039
      %1115 = vst.msk [vmem:[#allocation3 + $0xb0] sm:$0xff] %vm1092, %v1041
      %1116 = vst.msk [vmem:[#allocation3 + $0xb8] sm:$0xff] %vm1092, %v1043
      %1117 = vst.msk [vmem:[#allocation3 + $0xc0] sm:$0xff] %vm1092, %v1045
      %1118 = vst.msk [vmem:[#allocation3 + $0xc8] sm:$0xff] %vm1092, %v1047
      %1119 = vst.msk [vmem:[#allocation3 + $0xd0] sm:$0xff] %vm1092, %v1049
      %1120 = vst.msk [vmem:[#allocation3 + $0xd8] sm:$0xff] %vm1092, %v1051
      %1121 = vst.msk [vmem:[#allocation3 + $0xe0] sm:$0xff] %vm1092, %v1053
      %1122 = vst.msk [vmem:[#allocation3 + $0xe8] sm:$0xff] %vm1092, %v1055
      %1123 = vst.msk [vmem:[#allocation3 + $0xf0] sm:$0xff] %vm1092, %v1057
      %1124 = vst.msk [vmem:[#allocation3 + $0xf8] sm:$0xff] %vm1092, %v1059
      %v1125 = vld [vmem:[%s191 + $0x2] sm:$0xff]
      %v1126 = vld [vmem:[%s191 + $0xa] sm:$0xff]
      %v1127 = vld [vmem:[%s191 + $0x1a] sm:$0xff]
      %v1128 = vld [vmem:[%s191 + $0x22] sm:$0xff]
      %v1129 = vld [vmem:[%s191 + $0x32] sm:$0xff]
      %v1130 = vld [vmem:[%s191 + $0x3a] sm:$0xff]
      %v1131 = vld [vmem:[%s191 + $0x4a] sm:$0xff]
      %v1132 = vld [vmem:[%s191 + $0x52] sm:$0xff]
      %v1133 = vld [vmem:[%s191 + $0x62] sm:$0xff]
      %v1134 = vld [vmem:[%s191 + $0x6a] sm:$0xff]
      %v1135 = vld [vmem:[%s191 + $0x7a] sm:$0xff]
      %v1136 = vld [vmem:[%s191 + $0x82] sm:$0xff]
      %v1137 = vld [vmem:[%s191 + $0x92] sm:$0xff]
      %v1138 = vld [vmem:[%s191 + $0x9a] sm:$0xff]
      %v1139 = vld [vmem:[%s191 + $0xaa] sm:$0xff]
      %v1140 = vld [vmem:[%s191 + $0xb2] sm:$0xff]
      %v1141 = vld [vmem:[%s191 + $0xc2] sm:$0xff]
      %v1142 = vld [vmem:[%s191 + $0xca] sm:$0xff]
      %v1143 = vld [vmem:[%s191 + $0xda] sm:$0xff]
      %v1144 = vld [vmem:[%s191 + $0xe2] sm:$0xff]
      %v1145 = vld [vmem:[%s191 + $0xf2] sm:$0xff]
      %v1146 = vld [vmem:[%s191 + $0xfa] sm:$0xff]
      %v1147 = vld [vmem:[%s191 + $0x10a] sm:$0xff]
      %v1148 = vld [vmem:[%s191 + $0x112] sm:$0xff]
      %v1149 = vld [vmem:[%s191 + $0x122] sm:$0xff]
      %v1150 = vld [vmem:[%s191 + $0x12a] sm:$0xff]
      %v1151 = vld [vmem:[%s191 + $0x13a] sm:$0xff]
      %v1152 = vld [vmem:[%s191 + $0x142] sm:$0xff]
      %v1153 = vld [vmem:[%s191 + $0x152] sm:$0xff]
      %v1154 = vld [vmem:[%s191 + $0x15a] sm:$0xff]
      %v1155 = vld [vmem:[%s191 + $0x16a] sm:$0xff]
      %v1156 = vld [vmem:[%s191 + $0x172] sm:$0xff]
      %1189 = vrot.lane.b32.xlu0 %v1125, 20
      %v1190 = vpop.permute.xlu0 %1189
      %1191 = vrot.lane.b32.xlu0 %v1126, 20
      %v1192 = vpop.permute.xlu0 %1191
      %1193 = vrot.lane.b32.xlu0 %v1127, 20
      %v1194 = vpop.permute.xlu0 %1193
      %1195 = vrot.lane.b32.xlu0 %v1128, 20
      %v1196 = vpop.permute.xlu0 %1195
      %1197 = vrot.lane.b32.xlu0 %v1129, 20
      %v1198 = vpop.permute.xlu0 %1197
      %1199 = vrot.lane.b32.xlu0 %v1130, 20
      %v1200 = vpop.permute.xlu0 %1199
      %1201 = vrot.lane.b32.xlu0 %v1131, 20
      %v1202 = vpop.permute.xlu0 %1201
      %1203 = vrot.lane.b32.xlu0 %v1132, 20
      %v1204 = vpop.permute.xlu0 %1203
      %1205 = vrot.lane.b32.xlu0 %v1133, 20
      %v1206 = vpop.permute.xlu0 %1205
      %1207 = vrot.lane.b32.xlu0 %v1134, 20
      %v1208 = vpop.permute.xlu0 %1207
      %1209 = vrot.lane.b32.xlu0 %v1135, 20
      %v1210 = vpop.permute.xlu0 %1209
      %1211 = vrot.lane.b32.xlu0 %v1136, 20
      %v1212 = vpop.permute.xlu0 %1211
      %1213 = vrot.lane.b32.xlu0 %v1137, 20
      %v1214 = vpop.permute.xlu0 %1213
      %1215 = vrot.lane.b32.xlu0 %v1138, 20
      %v1216 = vpop.permute.xlu0 %1215
      %1217 = vrot.lane.b32.xlu0 %v1139, 20
      %v1218 = vpop.permute.xlu0 %1217
      %1219 = vrot.lane.b32.xlu0 %v1140, 20
      %v1220 = vpop.permute.xlu0 %1219
      %1221 = vrot.lane.b32.xlu0 %v1141, 20
      %v1222 = vpop.permute.xlu0 %1221
      %1223 = vrot.lane.b32.xlu0 %v1142, 20
      %v1224 = vpop.permute.xlu0 %1223
      %1225 = vrot.lane.b32.xlu0 %v1143, 20
      %v1226 = vpop.permute.xlu0 %1225
      %1227 = vrot.lane.b32.xlu0 %v1144, 20
      %v1228 = vpop.permute.xlu0 %1227
      %1229 = vrot.lane.b32.xlu0 %v1145, 20
      %v1230 = vpop.permute.xlu0 %1229
      %1231 = vrot.lane.b32.xlu0 %v1146, 20
      %v1232 = vpop.permute.xlu0 %1231
      %1233 = vrot.lane.b32.xlu0 %v1147, 20
      %v1234 = vpop.permute.xlu0 %1233
      %1235 = vrot.lane.b32.xlu0 %v1148, 20
      %v1236 = vpop.permute.xlu0 %1235
      %1237 = vrot.lane.b32.xlu0 %v1149, 20
      %v1238 = vpop.permute.xlu0 %1237
      %1239 = vrot.lane.b32.xlu0 %v1150, 20
      %v1240 = vpop.permute.xlu0 %1239
      %1241 = vrot.lane.b32.xlu0 %v1151, 20
      %v1242 = vpop.permute.xlu0 %1241
      %1243 = vrot.lane.b32.xlu0 %v1152, 20
      %v1244 = vpop.permute.xlu0 %1243
      %1245 = vrot.lane.b32.xlu0 %v1153, 20
      %v1246 = vpop.permute.xlu0 %1245
      %1247 = vrot.lane.b32.xlu0 %v1154, 20
      %v1248 = vpop.permute.xlu0 %1247
      %1249 = vrot.lane.b32.xlu0 %v1155, 20
      %v1250 = vpop.permute.xlu0 %1249
      %1251 = vrot.lane.b32.xlu0 %v1156, 20
      %v1252 = vpop.permute.xlu0 %1251
      %vm1285 = vcmask 195744
      %1286 = vst.msk [vmem:[#allocation3] sm:$0xff] %vm1285, %v1190
      %1287 = vst.msk [vmem:[#allocation3 + $0x8] sm:$0xff] %vm1285, %v1192
      %1288 = vst.msk [vmem:[#allocation3 + $0x10] sm:$0xff] %vm1285, %v1194
      %1289 = vst.msk [vmem:[#allocation3 + $0x18] sm:$0xff] %vm1285, %v1196
      %1290 = vst.msk [vmem:[#allocation3 + $0x20] sm:$0xff] %vm1285, %v1198
      %1291 = vst.msk [vmem:[#allocation3 + $0x28] sm:$0xff] %vm1285, %v1200
      %1292 = vst.msk [vmem:[#allocation3 + $0x30] sm:$0xff] %vm1285, %v1202
      %1293 = vst.msk [vmem:[#allocation3 + $0x38] sm:$0xff] %vm1285, %v1204
      %1294 = vst.msk [vmem:[#allocation3 + $0x40] sm:$0xff] %vm1285, %v1206
      %1295 = vst.msk [vmem:[#allocation3 + $0x48] sm:$0xff] %vm1285, %v1208
      %1296 = vst.msk [vmem:[#allocation3 + $0x50] sm:$0xff] %vm1285, %v1210
      %1297 = vst.msk [vmem:[#allocation3 + $0x58] sm:$0xff] %vm1285, %v1212
      %1298 = vst.msk [vmem:[#allocation3 + $0x60] sm:$0xff] %vm1285, %v1214
      %1299 = vst.msk [vmem:[#allocation3 + $0x68] sm:$0xff] %vm1285, %v1216
      %1300 = vst.msk [vmem:[#allocation3 + $0x70] sm:$0xff] %vm1285, %v1218
      %1301 = vst.msk [vmem:[#allocation3 + $0x78] sm:$0xff] %vm1285, %v1220
      %1302 = vst.msk [vmem:[#allocation3 + $0x80] sm:$0xff] %vm1285, %v1222
      %1303 = vst.msk [vmem:[#allocation3 + $0x88] sm:$0xff] %vm1285, %v1224
      %1304 = vst.msk [vmem:[#allocation3 + $0x90] sm:$0xff] %vm1285, %v1226
      %1305 = vst.msk [vmem:[#allocation3 + $0x98] sm:$0xff] %vm1285, %v1228
      %1306 = vst.msk [vmem:[#allocation3 + $0xa0] sm:$0xff] %vm1285, %v1230
      %1307 = vst.msk [vmem:[#allocation3 + $0xa8] sm:$0xff] %vm1285, %v1232
      %1308 = vst.msk [vmem:[#allocation3 + $0xb0] sm:$0xff] %vm1285, %v1234
      %1309 = vst.msk [vmem:[#allocation3 + $0xb8] sm:$0xff] %vm1285, %v1236
      %1310 = vst.msk [vmem:[#allocation3 + $0xc0] sm:$0xff] %vm1285, %v1238
      %1311 = vst.msk [vmem:[#allocation3 + $0xc8] sm:$0xff] %vm1285, %v1240
      %1312 = vst.msk [vmem:[#allocation3 + $0xd0] sm:$0xff] %vm1285, %v1242
      %1313 = vst.msk [vmem:[#allocation3 + $0xd8] sm:$0xff] %vm1285, %v1244
      %1314 = vst.msk [vmem:[#allocation3 + $0xe0] sm:$0xff] %vm1285, %v1246
      %1315 = vst.msk [vmem:[#allocation3 + $0xe8] sm:$0xff] %vm1285, %v1248
      %1316 = vst.msk [vmem:[#allocation3 + $0xf0] sm:$0xff] %vm1285, %v1250
      %1317 = vst.msk [vmem:[#allocation3 + $0xf8] sm:$0xff] %vm1285, %v1252
      %s1318 = scalar_lea.vmem [#allocation2], 48
      %v1319 = vld [vmem:[%s1318] sm:$0xff]
      %v1320 = vld [vmem:[%s1318 + $0x8] sm:$0xff]
      %v1321 = vld [vmem:[%s1318 + $0x18] sm:$0xff]
      %v1322 = vld [vmem:[%s1318 + $0x20] sm:$0xff]
      %v1323 = vld [vmem:[%s1318 + $0x30] sm:$0xff]
      %v1324 = vld [vmem:[%s1318 + $0x38] sm:$0xff]
      %v1325 = vld [vmem:[%s1318 + $0x48] sm:$0xff]
      %v1326 = vld [vmem:[%s1318 + $0x50] sm:$0xff]
      %v1327 = vld [vmem:[%s1318 + $0x60] sm:$0xff]
      %v1328 = vld [vmem:[%s1318 + $0x68] sm:$0xff]
      %v1329 = vld [vmem:[%s1318 + $0x78] sm:$0xff]
      %v1330 = vld [vmem:[%s1318 + $0x80] sm:$0xff]
      %v1331 = vld [vmem:[%s1318 + $0x90] sm:$0xff]
      %v1332 = vld [vmem:[%s1318 + $0x98] sm:$0xff]
      %v1333 = vld [vmem:[%s1318 + $0xa8] sm:$0xff]
      %v1334 = vld [vmem:[%s1318 + $0xb0] sm:$0xff]
      %v1335 = vld [vmem:[%s1318 + $0xc0] sm:$0xff]
      %v1336 = vld [vmem:[%s1318 + $0xc8] sm:$0xff]
      %v1337 = vld [vmem:[%s1318 + $0xd8] sm:$0xff]
      %v1338 = vld [vmem:[%s1318 + $0xe0] sm:$0xff]
      %v1339 = vld [vmem:[%s1318 + $0xf0] sm:$0xff]
      %v1340 = vld [vmem:[%s1318 + $0xf8] sm:$0xff]
      %v1341 = vld [vmem:[%s1318 + $0x108] sm:$0xff]
      %v1342 = vld [vmem:[%s1318 + $0x110] sm:$0xff]
      %v1343 = vld [vmem:[%s1318 + $0x120] sm:$0xff]
      %v1344 = vld [vmem:[%s1318 + $0x128] sm:$0xff]
      %v1345 = vld [vmem:[%s1318 + $0x138] sm:$0xff]
      %v1346 = vld [vmem:[%s1318 + $0x140] sm:$0xff]
      %v1347 = vld [vmem:[%s1318 + $0x150] sm:$0xff]
      %v1348 = vld [vmem:[%s1318 + $0x158] sm:$0xff]
      %v1349 = vld [vmem:[%s1318 + $0x168] sm:$0xff]
      %v1350 = vld [vmem:[%s1318 + $0x170] sm:$0xff]
      %1383 = vrot.lane.b32.xlu0 %v1319, 24
      %v1384 = vpop.permute.xlu0 %1383
      %1385 = vrot.lane.b32.xlu0 %v1320, 24
      %v1386 = vpop.permute.xlu0 %1385
      %1387 = vrot.lane.b32.xlu0 %v1321, 24
      %v1388 = vpop.permute.xlu0 %1387
      %1389 = vrot.lane.b32.xlu0 %v1322, 24
      %v1390 = vpop.permute.xlu0 %1389
      %1391 = vrot.lane.b32.xlu0 %v1323, 24
      %v1392 = vpop.permute.xlu0 %1391
      %1393 = vrot.lane.b32.xlu0 %v1324, 24
      %v1394 = vpop.permute.xlu0 %1393
      %1395 = vrot.lane.b32.xlu0 %v1325, 24
      %v1396 = vpop.permute.xlu0 %1395
      %1397 = vrot.lane.b32.xlu0 %v1326, 24
      %v1398 = vpop.permute.xlu0 %1397
      %1399 = vrot.lane.b32.xlu0 %v1327, 24
      %v1400 = vpop.permute.xlu0 %1399
      %1401 = vrot.lane.b32.xlu0 %v1328, 24
      %v1402 = vpop.permute.xlu0 %1401
      %1403 = vrot.lane.b32.xlu0 %v1329, 24
      %v1404 = vpop.permute.xlu0 %1403
      %1405 = vrot.lane.b32.xlu0 %v1330, 24
      %v1406 = vpop.permute.xlu0 %1405
      %1407 = vrot.lane.b32.xlu0 %v1331, 24
      %v1408 = vpop.permute.xlu0 %1407
      %1409 = vrot.lane.b32.xlu0 %v1332, 24
      %v1410 = vpop.permute.xlu0 %1409
      %1411 = vrot.lane.b32.xlu0 %v1333, 24
      %v1412 = vpop.permute.xlu0 %1411
      %1413 = vrot.lane.b32.xlu0 %v1334, 24
      %v1414 = vpop.permute.xlu0 %1413
      %1415 = vrot.lane.b32.xlu0 %v1335, 24
      %v1416 = vpop.permute.xlu0 %1415
      %1417 = vrot.lane.b32.xlu0 %v1336, 24
      %v1418 = vpop.permute.xlu0 %1417
      %1419 = vrot.lane.b32.xlu0 %v1337, 24
      %v1420 = vpop.permute.xlu0 %1419
      %1421 = vrot.lane.b32.xlu0 %v1338, 24
      %v1422 = vpop.permute.xlu0 %1421
      %1423 = vrot.lane.b32.xlu0 %v1339, 24
      %v1424 = vpop.permute.xlu0 %1423
      %1425 = vrot.lane.b32.xlu0 %v1340, 24
      %v1426 = vpop.permute.xlu0 %1425
      %1427 = vrot.lane.b32.xlu0 %v1341, 24
      %v1428 = vpop.permute.xlu0 %1427
      %1429 = vrot.lane.b32.xlu0 %v1342, 24
      %v1430 = vpop.permute.xlu0 %1429
      %1431 = vrot.lane.b32.xlu0 %v1343, 24
      %v1432 = vpop.permute.xlu0 %1431
      %1433 = vrot.lane.b32.xlu0 %v1344, 24
      %v1434 = vpop.permute.xlu0 %1433
      %1435 = vrot.lane.b32.xlu0 %v1345, 24
      %v1436 = vpop.permute.xlu0 %1435
      %1437 = vrot.lane.b32.xlu0 %v1346, 24
      %v1438 = vpop.permute.xlu0 %1437
      %1439 = vrot.lane.b32.xlu0 %v1347, 24
      %v1440 = vpop.permute.xlu0 %1439
      %1441 = vrot.lane.b32.xlu0 %v1348, 24
      %v1442 = vpop.permute.xlu0 %1441
      %1443 = vrot.lane.b32.xlu0 %v1349, 24
      %v1444 = vpop.permute.xlu0 %1443
      %1445 = vrot.lane.b32.xlu0 %v1350, 24
      %v1446 = vpop.permute.xlu0 %1445
      %vm1479 = vcmask 228544
      %1480 = vst.msk [vmem:[#allocation3] sm:$0xff] %vm1479, %v1384
      %1481 = vst.msk [vmem:[#allocation3 + $0x8] sm:$0xff] %vm1479, %v1386
      %1482 = vst.msk [vmem:[#allocation3 + $0x10] sm:$0xff] %vm1479, %v1388
      %1483 = vst.msk [vmem:[#allocation3 + $0x18] sm:$0xff] %vm1479, %v1390
      %1484 = vst.msk [vmem:[#allocation3 + $0x20] sm:$0xff] %vm1479, %v1392
      %1485 = vst.msk [vmem:[#allocation3 + $0x28] sm:$0xff] %vm1479, %v1394
      %1486 = vst.msk [vmem:[#allocation3 + $0x30] sm:$0xff] %vm1479, %v1396
      %1487 = vst.msk [vmem:[#allocation3 + $0x38] sm:$0xff] %vm1479, %v1398
      %1488 = vst.msk [vmem:[#allocation3 + $0x40] sm:$0xff] %vm1479, %v1400
      %1489 = vst.msk [vmem:[#allocation3 + $0x48] sm:$0xff] %vm1479, %v1402
      %1490 = vst.msk [vmem:[#allocation3 + $0x50] sm:$0xff] %vm1479, %v1404
      %1491 = vst.msk [vmem:[#allocation3 + $0x58] sm:$0xff] %vm1479, %v1406
      %1492 = vst.msk [vmem:[#allocation3 + $0x60] sm:$0xff] %vm1479, %v1408
      %1493 = vst.msk [vmem:[#allocation3 + $0x68] sm:$0xff] %vm1479, %v1410
      %1494 = vst.msk [vmem:[#allocation3 + $0x70] sm:$0xff] %vm1479, %v1412
      %1495 = vst.msk [vmem:[#allocation3 + $0x78] sm:$0xff] %vm1479, %v1414
      %1496 = vst.msk [vmem:[#allocation3 + $0x80] sm:$0xff] %vm1479, %v1416
      %1497 = vst.msk [vmem:[#allocation3 + $0x88] sm:$0xff] %vm1479, %v1418
      %1498 = vst.msk [vmem:[#allocation3 + $0x90] sm:$0xff] %vm1479, %v1420
      %1499 = vst.msk [vmem:[#allocation3 + $0x98] sm:$0xff] %vm1479, %v1422
      %1500 = vst.msk [vmem:[#allocation3 + $0xa0] sm:$0xff] %vm1479, %v1424
      %1501 = vst.msk [vmem:[#allocation3 + $0xa8] sm:$0xff] %vm1479, %v1426
      %1502 = vst.msk [vmem:[#allocation3 + $0xb0] sm:$0xff] %vm1479, %v1428
      %1503 = vst.msk [vmem:[#allocation3 + $0xb8] sm:$0xff] %vm1479, %v1430
      %1504 = vst.msk [vmem:[#allocation3 + $0xc0] sm:$0xff] %vm1479, %v1432
      %1505 = vst.msk [vmem:[#allocation3 + $0xc8] sm:$0xff] %vm1479, %v1434
      %1506 = vst.msk [vmem:[#allocation3 + $0xd0] sm:$0xff] %vm1479, %v1436
      %1507 = vst.msk [vmem:[#allocation3 + $0xd8] sm:$0xff] %vm1479, %v1438
      %1508 = vst.msk [vmem:[#allocation3 + $0xe0] sm:$0xff] %vm1479, %v1440
      %1509 = vst.msk [vmem:[#allocation3 + $0xe8] sm:$0xff] %vm1479, %v1442
      %1510 = vst.msk [vmem:[#allocation3 + $0xf0] sm:$0xff] %vm1479, %v1444
      %1511 = vst.msk [vmem:[#allocation3 + $0xf8] sm:$0xff] %vm1479, %v1446
      %v1512 = vld [vmem:[%s1318 + $0x1] sm:$0xff]
      %v1513 = vld [vmem:[%s1318 + $0x9] sm:$0xff]
      %v1514 = vld [vmem:[%s1318 + $0x19] sm:$0xff]
      %v1515 = vld [vmem:[%s1318 + $0x21] sm:$0xff]
      %v1516 = vld [vmem:[%s1318 + $0x31] sm:$0xff]
      %v1517 = vld [vmem:[%s1318 + $0x39] sm:$0xff]
      %v1518 = vld [vmem:[%s1318 + $0x49] sm:$0xff]
      %v1519 = vld [vmem:[%s1318 + $0x51] sm:$0xff]
      %v1520 = vld [vmem:[%s1318 + $0x61] sm:$0xff]
      %v1521 = vld [vmem:[%s1318 + $0x69] sm:$0xff]
      %v1522 = vld [vmem:[%s1318 + $0x79] sm:$0xff]
      %v1523 = vld [vmem:[%s1318 + $0x81] sm:$0xff]
      %v1524 = vld [vmem:[%s1318 + $0x91] sm:$0xff]
      %v1525 = vld [vmem:[%s1318 + $0x99] sm:$0xff]
      %v1526 = vld [vmem:[%s1318 + $0xa9] sm:$0xff]
      %v1527 = vld [vmem:[%s1318 + $0xb1] sm:$0xff]
      %v1528 = vld [vmem:[%s1318 + $0xc1] sm:$0xff]
      %v1529 = vld [vmem:[%s1318 + $0xc9] sm:$0xff]
      %v1530 = vld [vmem:[%s1318 + $0xd9] sm:$0xff]
      %v1531 = vld [vmem:[%s1318 + $0xe1] sm:$0xff]
      %v1532 = vld [vmem:[%s1318 + $0xf1] sm:$0xff]
      %v1533 = vld [vmem:[%s1318 + $0xf9] sm:$0xff]
      %v1534 = vld [vmem:[%s1318 + $0x109] sm:$0xff]
      %v1535 = vld [vmem:[%s1318 + $0x111] sm:$0xff]
      %v1536 = vld [vmem:[%s1318 + $0x121] sm:$0xff]
      %v1537 = vld [vmem:[%s1318 + $0x129] sm:$0xff]
      %v1538 = vld [vmem:[%s1318 + $0x139] sm:$0xff]
      %v1539 = vld [vmem:[%s1318 + $0x141] sm:$0xff]
      %v1540 = vld [vmem:[%s1318 + $0x151] sm:$0xff]
      %v1541 = vld [vmem:[%s1318 + $0x159] sm:$0xff]
      %v1542 = vld [vmem:[%s1318 + $0x169] sm:$0xff]
      %v1543 = vld [vmem:[%s1318 + $0x171] sm:$0xff]
      %1576 = vrot.lane.b32.xlu0 %v1512, 28
      %v1577 = vpop.permute.xlu0 %1576
      %1578 = vrot.lane.b32.xlu0 %v1513, 28
      %v1579 = vpop.permute.xlu0 %1578
      %1580 = vrot.lane.b32.xlu0 %v1514, 28
      %v1581 = vpop.permute.xlu0 %1580
      %1582 = vrot.lane.b32.xlu0 %v1515, 28
      %v1583 = vpop.permute.xlu0 %1582
      %1584 = vrot.lane.b32.xlu0 %v1516, 28
      %v1585 = vpop.permute.xlu0 %1584
      %1586 = vrot.lane.b32.xlu0 %v1517, 28
      %v1587 = vpop.permute.xlu0 %1586
      %1588 = vrot.lane.b32.xlu0 %v1518, 28
      %v1589 = vpop.permute.xlu0 %1588
      %1590 = vrot.lane.b32.xlu0 %v1519, 28
      %v1591 = vpop.permute.xlu0 %1590
      %1592 = vrot.lane.b32.xlu0 %v1520, 28
      %v1593 = vpop.permute.xlu0 %1592
      %1594 = vrot.lane.b32.xlu0 %v1521, 28
      %v1595 = vpop.permute.xlu0 %1594
      %1596 = vrot.lane.b32.xlu0 %v1522, 28
      %v1597 = vpop.permute.xlu0 %1596
      %1598 = vrot.lane.b32.xlu0 %v1523, 28
      %v1599 = vpop.permute.xlu0 %1598
      %1600 = vrot.lane.b32.xlu0 %v1524, 28
      %v1601 = vpop.permute.xlu0 %1600
      %1602 = vrot.lane.b32.xlu0 %v1525, 28
      %v1603 = vpop.permute.xlu0 %1602
      %1604 = vrot.lane.b32.xlu0 %v1526, 28
      %v1605 = vpop.permute.xlu0 %1604
      %1606 = vrot.lane.b32.xlu0 %v1527, 28
      %v1607 = vpop.permute.xlu0 %1606
      %1608 = vrot.lane.b32.xlu0 %v1528, 28
      %v1609 = vpop.permute.xlu0 %1608
      %1610 = vrot.lane.b32.xlu0 %v1529, 28
      %v1611 = vpop.permute.xlu0 %1610
      %1612 = vrot.lane.b32.xlu0 %v1530, 28
      %v1613 = vpop.permute.xlu0 %1612
      %1614 = vrot.lane.b32.xlu0 %v1531, 28
      %v1615 = vpop.permute.xlu0 %1614
      %1616 = vrot.lane.b32.xlu0 %v1532, 28
      %v1617 = vpop.permute.xlu0 %1616
      %1618 = vrot.lane.b32.xlu0 %v1533, 28
      %v1619 = vpop.permute.xlu0 %1618
      %1620 = vrot.lane.b32.xlu0 %v1534, 28
      %v1621 = vpop.permute.xlu0 %1620
      %1622 = vrot.lane.b32.xlu0 %v1535, 28
      %v1623 = vpop.permute.xlu0 %1622
      %1624 = vrot.lane.b32.xlu0 %v1536, 28
      %v1625 = vpop.permute.xlu0 %1624
      %1626 = vrot.lane.b32.xlu0 %v1537, 28
      %v1627 = vpop.permute.xlu0 %1626
      %1628 = vrot.lane.b32.xlu0 %v1538, 28
      %v1629 = vpop.permute.xlu0 %1628
      %1630 = vrot.lane.b32.xlu0 %v1539, 28
      %v1631 = vpop.permute.xlu0 %1630
      %1632 = vrot.lane.b32.xlu0 %v1540, 28
      %v1633 = vpop.permute.xlu0 %1632
      %1634 = vrot.lane.b32.xlu0 %v1541, 28
      %v1635 = vpop.permute.xlu0 %1634
      %1636 = vrot.lane.b32.xlu0 %v1542, 28
      %v1637 = vpop.permute.xlu0 %1636
      %1638 = vrot.lane.b32.xlu0 %v1543, 28
      %v1639 = vpop.permute.xlu0 %1638
      %vm1672 = vcmask 261344
      %1673 = vst.msk [vmem:[#allocation3] sm:$0xff] %vm1672, %v1577
      %1674 = vst.msk [vmem:[#allocation3 + $0x8] sm:$0xff] %vm1672, %v1579
      %1675 = vst.msk [vmem:[#allocation3 + $0x10] sm:$0xff] %vm1672, %v1581
      %1676 = vst.msk [vmem:[#allocation3 + $0x18] sm:$0xff] %vm1672, %v1583
      %1677 = vst.msk [vmem:[#allocation3 + $0x20] sm:$0xff] %vm1672, %v1585
      %1678 = vst.msk [vmem:[#allocation3 + $0x28] sm:$0xff] %vm1672, %v1587
      %1679 = vst.msk [vmem:[#allocation3 + $0x30] sm:$0xff] %vm1672, %v1589
      %1680 = vst.msk [vmem:[#allocation3 + $0x38] sm:$0xff] %vm1672, %v1591
      %1681 = vst.msk [vmem:[#allocation3 + $0x40] sm:$0xff] %vm1672, %v1593
      %1682 = vst.msk [vmem:[#allocation3 + $0x48] sm:$0xff] %vm1672, %v1595
      %1683 = vst.msk [vmem:[#allocation3 + $0x50] sm:$0xff] %vm1672, %v1597
      %1684 = vst.msk [vmem:[#allocation3 + $0x58] sm:$0xff] %vm1672, %v1599
      %1685 = vst.msk [vmem:[#allocation3 + $0x60] sm:$0xff] %vm1672, %v1601
      %1686 = vst.msk [vmem:[#allocation3 + $0x68] sm:$0xff] %vm1672, %v1603
      %1687 = vst.msk [vmem:[#allocation3 + $0x70] sm:$0xff] %vm1672, %v1605
      %1688 = vst.msk [vmem:[#allocation3 + $0x78] sm:$0xff] %vm1672, %v1607
      %1689 = vst.msk [vmem:[#allocation3 + $0x80] sm:$0xff] %vm1672, %v1609
      %1690 = vst.msk [vmem:[#allocation3 + $0x88] sm:$0xff] %vm1672, %v1611
      %1691 = vst.msk [vmem:[#allocation3 + $0x90] sm:$0xff] %vm1672, %v1613
      %1692 = vst.msk [vmem:[#allocation3 + $0x98] sm:$0xff] %vm1672, %v1615
      %1693 = vst.msk [vmem:[#allocation3 + $0xa0] sm:$0xff] %vm1672, %v1617
      %1694 = vst.msk [vmem:[#allocation3 + $0xa8] sm:$0xff] %vm1672, %v1619
      %1695 = vst.msk [vmem:[#allocation3 + $0xb0] sm:$0xff] %vm1672, %v1621
      %1696 = vst.msk [vmem:[#allocation3 + $0xb8] sm:$0xff] %vm1672, %v1623
      %1697 = vst.msk [vmem:[#allocation3 + $0xc0] sm:$0xff] %vm1672, %v1625
      %1698 = vst.msk [vmem:[#allocation3 + $0xc8] sm:$0xff] %vm1672, %v1627
      %1699 = vst.msk [vmem:[#allocation3 + $0xd0] sm:$0xff] %vm1672, %v1629
      %1700 = vst.msk [vmem:[#allocation3 + $0xd8] sm:$0xff] %vm1672, %v1631
      %1701 = vst.msk [vmem:[#allocation3 + $0xe0] sm:$0xff] %vm1672, %v1633
      %1702 = vst.msk [vmem:[#allocation3 + $0xe8] sm:$0xff] %vm1672, %v1635
      %1703 = vst.msk [vmem:[#allocation3 + $0xf0] sm:$0xff] %vm1672, %v1637
      %1704 = vst.msk [vmem:[#allocation3 + $0xf8] sm:$0xff] %vm1672, %v1639
      %v1705 = vld [vmem:[%s1318 + $0x2] sm:$0xff]
      %v1706 = vld [vmem:[%s1318 + $0xa] sm:$0xff]
      %v1707 = vld [vmem:[%s1318 + $0x1a] sm:$0xff]
      %v1708 = vld [vmem:[%s1318 + $0x22] sm:$0xff]
      %v1709 = vld [vmem:[%s1318 + $0x32] sm:$0xff]
      %v1710 = vld [vmem:[%s1318 + $0x3a] sm:$0xff]
      %v1711 = vld [vmem:[%s1318 + $0x4a] sm:$0xff]
      %v1712 = vld [vmem:[%s1318 + $0x52] sm:$0xff]
      %v1713 = vld [vmem:[%s1318 + $0x62] sm:$0xff]
      %v1714 = vld [vmem:[%s1318 + $0x6a] sm:$0xff]
      %v1715 = vld [vmem:[%s1318 + $0x7a] sm:$0xff]
      %v1716 = vld [vmem:[%s1318 + $0x82] sm:$0xff]
      %v1717 = vld [vmem:[%s1318 + $0x92] sm:$0xff]
      %v1718 = vld [vmem:[%s1318 + $0x9a] sm:$0xff]
      %v1719 = vld [vmem:[%s1318 + $0xaa] sm:$0xff]
      %v1720 = vld [vmem:[%s1318 + $0xb2] sm:$0xff]
      %v1721 = vld [vmem:[%s1318 + $0xc2] sm:$0xff]
      %v1722 = vld [vmem:[%s1318 + $0xca] sm:$0xff]
      %v1723 = vld [vmem:[%s1318 + $0xda] sm:$0xff]
      %v1724 = vld [vmem:[%s1318 + $0xe2] sm:$0xff]
      %v1725 = vld [vmem:[%s1318 + $0xf2] sm:$0xff]
      %v1726 = vld [vmem:[%s1318 + $0xfa] sm:$0xff]
      %v1727 = vld [vmem:[%s1318 + $0x10a] sm:$0xff]
      %v1728 = vld [vmem:[%s1318 + $0x112] sm:$0xff]
      %v1729 = vld [vmem:[%s1318 + $0x122] sm:$0xff]
      %v1730 = vld [vmem:[%s1318 + $0x12a] sm:$0xff]
      %v1731 = vld [vmem:[%s1318 + $0x13a] sm:$0xff]
      %v1732 = vld [vmem:[%s1318 + $0x142] sm:$0xff]
      %v1733 = vld [vmem:[%s1318 + $0x152] sm:$0xff]
      %v1734 = vld [vmem:[%s1318 + $0x15a] sm:$0xff]
      %v1735 = vld [vmem:[%s1318 + $0x16a] sm:$0xff]
      %v1736 = vld [vmem:[%s1318 + $0x172] sm:$0xff]
      %1769 = vrot.lane.b32.xlu0 %v1705, 32
      %v1770 = vpop.permute.xlu0 %1769
      %1771 = vrot.lane.b32.xlu0 %v1706, 32
      %v1772 = vpop.permute.xlu0 %1771
      %1773 = vrot.lane.b32.xlu0 %v1707, 32
      %v1774 = vpop.permute.xlu0 %1773
      %1775 = vrot.lane.b32.xlu0 %v1708, 32
      %v1776 = vpop.permute.xlu0 %1775
      %1777 = vrot.lane.b32.xlu0 %v1709, 32
      %v1778 = vpop.permute.xlu0 %1777
      %1779 = vrot.lane.b32.xlu0 %v1710, 32
      %v1780 = vpop.permute.xlu0 %1779
      %1781 = vrot.lane.b32.xlu0 %v1711, 32
      %v1782 = vpop.permute.xlu0 %1781
      %1783 = vrot.lane.b32.xlu0 %v1712, 32
      %v1784 = vpop.permute.xlu0 %1783
      %1785 = vrot.lane.b32.xlu0 %v1713, 32
      %v1786 = vpop.permute.xlu0 %1785
      %1787 = vrot.lane.b32.xlu0 %v1714, 32
      %v1788 = vpop.permute.xlu0 %1787
      %1789 = vrot.lane.b32.xlu0 %v1715, 32
      %v1790 = vpop.permute.xlu0 %1789
      %1791 = vrot.lane.b32.xlu0 %v1716, 32
      %v1792 = vpop.permute.xlu0 %1791
      %1793 = vrot.lane.b32.xlu0 %v1717, 32
      %v1794 = vpop.permute.xlu0 %1793
      %1795 = vrot.lane.b32.xlu0 %v1718, 32
      %v1796 = vpop.permute.xlu0 %1795
      %1797 = vrot.lane.b32.xlu0 %v1719, 32
      %v1798 = vpop.permute.xlu0 %1797
      %1799 = vrot.lane.b32.xlu0 %v1720, 32
      %v1800 = vpop.permute.xlu0 %1799
      %1801 = vrot.lane.b32.xlu0 %v1721, 32
      %v1802 = vpop.permute.xlu0 %1801
      %1803 = vrot.lane.b32.xlu0 %v1722, 32
      %v1804 = vpop.permute.xlu0 %1803
      %1805 = vrot.lane.b32.xlu0 %v1723, 32
      %v1806 = vpop.permute.xlu0 %1805
      %1807 = vrot.lane.b32.xlu0 %v1724, 32
      %v1808 = vpop.permute.xlu0 %1807
      %1809 = vrot.lane.b32.xlu0 %v1725, 32
      %v1810 = vpop.permute.xlu0 %1809
      %1811 = vrot.lane.b32.xlu0 %v1726, 32
      %v1812 = vpop.permute.xlu0 %1811
      %1813 = vrot.lane.b32.xlu0 %v1727, 32
      %v1814 = vpop.permute.xlu0 %1813
      %1815 = vrot.lane.b32.xlu0 %v1728, 32
      %v1816 = vpop.permute.xlu0 %1815
      %1817 = vrot.lane.b32.xlu0 %v1729, 32
      %v1818 = vpop.permute.xlu0 %1817
      %1819 = vrot.lane.b32.xlu0 %v1730, 32
      %v1820 = vpop.permute.xlu0 %1819
      %1821 = vrot.lane.b32.xlu0 %v1731, 32
      %v1822 = vpop.permute.xlu0 %1821
      %1823 = vrot.lane.b32.xlu0 %v1732, 32
      %v1824 = vpop.permute.xlu0 %1823
      %1825 = vrot.lane.b32.xlu0 %v1733, 32
      %v1826 = vpop.permute.xlu0 %1825
      %1827 = vrot.lane.b32.xlu0 %v1734, 32
      %v1828 = vpop.permute.xlu0 %1827
      %1829 = vrot.lane.b32.xlu0 %v1735, 32
      %v1830 = vpop.permute.xlu0 %1829
      %1831 = vrot.lane.b32.xlu0 %v1736, 32
      %v1832 = vpop.permute.xlu0 %1831
      %vm1865 = vcmask 294144
      %1866 = vst.msk [vmem:[#allocation3] sm:$0xff] %vm1865, %v1770
      %1867 = vst.msk [vmem:[#allocation3 + $0x8] sm:$0xff] %vm1865, %v1772
      %1868 = vst.msk [vmem:[#allocation3 + $0x10] sm:$0xff] %vm1865, %v1774
      %1869 = vst.msk [vmem:[#allocation3 + $0x18] sm:$0xff] %vm1865, %v1776
      %1870 = vst.msk [vmem:[#allocation3 + $0x20] sm:$0xff] %vm1865, %v1778
      %1871 = vst.msk [vmem:[#allocation3 + $0x28] sm:$0xff] %vm1865, %v1780
      %1872 = vst.msk [vmem:[#allocation3 + $0x30] sm:$0xff] %vm1865, %v1782
      %1873 = vst.msk [vmem:[#allocation3 + $0x38] sm:$0xff] %vm1865, %v1784
      %1874 = vst.msk [vmem:[#allocation3 + $0x40] sm:$0xff] %vm1865, %v1786
      %1875 = vst.msk [vmem:[#allocation3 + $0x48] sm:$0xff] %vm1865, %v1788
      %1876 = vst.msk [vmem:[#allocation3 + $0x50] sm:$0xff] %vm1865, %v1790
      %1877 = vst.msk [vmem:[#allocation3 + $0x58] sm:$0xff] %vm1865, %v1792
      %1878 = vst.msk [vmem:[#allocation3 + $0x60] sm:$0xff] %vm1865, %v1794
      %1879 = vst.msk [vmem:[#allocation3 + $0x68] sm:$0xff] %vm1865, %v1796
      %1880 = vst.msk [vmem:[#allocation3 + $0x70] sm:$0xff] %vm1865, %v1798
      %1881 = vst.msk [vmem:[#allocation3 + $0x78] sm:$0xff] %vm1865, %v1800
      %1882 = vst.msk [vmem:[#allocation3 + $0x80] sm:$0xff] %vm1865, %v1802
      %1883 = vst.msk [vmem:[#allocation3 + $0x88] sm:$0xff] %vm1865, %v1804
      %1884 = vst.msk [vmem:[#allocation3 + $0x90] sm:$0xff] %vm1865, %v1806
      %1885 = vst.msk [vmem:[#allocation3 + $0x98] sm:$0xff] %vm1865, %v1808
      %1886 = vst.msk [vmem:[#allocation3 + $0xa0] sm:$0xff] %vm1865, %v1810
      %1887 = vst.msk [vmem:[#allocation3 + $0xa8] sm:$0xff] %vm1865, %v1812
      %1888 = vst.msk [vmem:[#allocation3 + $0xb0] sm:$0xff] %vm1865, %v1814
      %1889 = vst.msk [vmem:[#allocation3 + $0xb8] sm:$0xff] %vm1865, %v1816
      %1890 = vst.msk [vmem:[#allocation3 + $0xc0] sm:$0xff] %vm1865, %v1818
      %1891 = vst.msk [vmem:[#allocation3 + $0xc8] sm:$0xff] %vm1865, %v1820
      %1892 = vst.msk [vmem:[#allocation3 + $0xd0] sm:$0xff] %vm1865, %v1822
      %1893 = vst.msk [vmem:[#allocation3 + $0xd8] sm:$0xff] %vm1865, %v1824
      %1894 = vst.msk [vmem:[#allocation3 + $0xe0] sm:$0xff] %vm1865, %v1826
      %1895 = vst.msk [vmem:[#allocation3 + $0xe8] sm:$0xff] %vm1865, %v1828
      %1896 = vst.msk [vmem:[#allocation3 + $0xf0] sm:$0xff] %vm1865, %v1830
      %1897 = vst.msk [vmem:[#allocation3 + $0xf8] sm:$0xff] %vm1865, %v1832
      %v1898 = vld [vmem:[#allocation3] sm:$0xff]
      %v1899 = vld [vmem:[#allocation3 + $0x8] sm:$0xff]
      %v1900 = vld [vmem:[#allocation3 + $0x10] sm:$0xff]
      %v1901 = vld [vmem:[#allocation3 + $0x18] sm:$0xff]
      %v1902 = vld [vmem:[#allocation3 + $0x20] sm:$0xff]
      %v1903 = vld [vmem:[#allocation3 + $0x28] sm:$0xff]
      %v1904 = vld [vmem:[#allocation3 + $0x30] sm:$0xff]
      %v1905 = vld [vmem:[#allocation3 + $0x38] sm:$0xff]
      %v1906 = vld [vmem:[#allocation3 + $0x40] sm:$0xff]
      %v1907 = vld [vmem:[#allocation3 + $0x48] sm:$0xff]
      %v1908 = vld [vmem:[#allocation3 + $0x50] sm:$0xff]
      %v1909 = vld [vmem:[#allocation3 + $0x58] sm:$0xff]
      %v1910 = vld [vmem:[#allocation3 + $0x60] sm:$0xff]
      %v1911 = vld [vmem:[#allocation3 + $0x68] sm:$0xff]
      %v1912 = vld [vmem:[#allocation3 + $0x70] sm:$0xff]
      %v1913 = vld [vmem:[#allocation3 + $0x78] sm:$0xff]
      %v1914 = vld [vmem:[#allocation3 + $0x80] sm:$0xff]
      %v1915 = vld [vmem:[#allocation3 + $0x88] sm:$0xff]
      %v1916 = vld [vmem:[#allocation3 + $0x90] sm:$0xff]
      %v1917 = vld [vmem:[#allocation3 + $0x98] sm:$0xff]
      %v1918 = vld [vmem:[#allocation3 + $0xa0] sm:$0xff]
      %v1919 = vld [vmem:[#allocation3 + $0xa8] sm:$0xff]
      %v1920 = vld [vmem:[#allocation3 + $0xb0] sm:$0xff]
      %v1921 = vld [vmem:[#allocation3 + $0xb8] sm:$0xff]
      %v1922 = vld [vmem:[#allocation3 + $0xc0] sm:$0xff]
      %v1923 = vld [vmem:[#allocation3 + $0xc8] sm:$0xff]
      %v1924 = vld [vmem:[#allocation3 + $0xd0] sm:$0xff]
      %v1925 = vld [vmem:[#allocation3 + $0xd8] sm:$0xff]
      %v1926 = vld [vmem:[#allocation3 + $0xe0] sm:$0xff]
      %v1927 = vld [vmem:[#allocation3 + $0xe8] sm:$0xff]
      %v1928 = vld [vmem:[#allocation3 + $0xf0] sm:$0xff]
      %v1929 = vld [vmem:[#allocation3 + $0xf8] sm:$0xff]
      %v1930 = vld [vmem:[%s1] sm:$0xff]
      %v1931 = vld [vmem:[%s1 + $0x8] sm:$0xff]
      %v1932 = vld [vmem:[%s1 + $0x10] sm:$0xff]
      %v1933 = vld [vmem:[%s1 + $0x18] sm:$0xff]
      %v1934 = vld [vmem:[%s1 + $0x20] sm:$0xf]
      %vm1935 = vcmask 293888
      %v1937 = vsel %vm1935, %v1898, 0
      %v1940 = vsel %vm1935, %v1899, 0
      %v1943 = vsel %vm1935, %v1900, 0
      %v1946 = vsel %vm1935, %v1901, 0
      %v1949 = vsel %vm1935, %v1902, 0
      %v1952 = vsel %vm1935, %v1903, 0
      %v1955 = vsel %vm1935, %v1904, 0
      %v1958 = vsel %vm1935, %v1905, 0
      %v1961 = vsel %vm1935, %v1906, 0
      %v1964 = vsel %vm1935, %v1907, 0
      %v1967 = vsel %vm1935, %v1908, 0
      %v1970 = vsel %vm1935, %v1909, 0
      %v1973 = vsel %vm1935, %v1910, 0
      %v1976 = vsel %vm1935, %v1911, 0
      %v1979 = vsel %vm1935, %v1912, 0
      %v1982 = vsel %vm1935, %v1913, 0
      %v1985 = vsel %vm1935, %v1914, 0
      %v1988 = vsel %vm1935, %v1915, 0
      %v1991 = vsel %vm1935, %v1916, 0
      %v1994 = vsel %vm1935, %v1917, 0
      %v1997 = vsel %vm1935, %v1918, 0
      %v2000 = vsel %vm1935, %v1919, 0
      %v2003 = vsel %vm1935, %v1920, 0
      %v2006 = vsel %vm1935, %v1921, 0
      %v2009 = vsel %vm1935, %v1922, 0
      %v2012 = vsel %vm1935, %v1923, 0
      %v2015 = vsel %vm1935, %v1924, 0
      %v2018 = vsel %vm1935, %v1925, 0
      %v2021 = vsel %vm1935, %v1926, 0
      %v2024 = vsel %vm1935, %v1927, 0
      %v2027 = vsel %vm1935, %v1928, 0
      %v2030 = vsel %vm1935, %v1929, 0
      %vm2032 = vcmask 1043456
      %v2034 = vsel %vm2032, %v1934, 0
      %2036 = vmatprep.subr.mxu0 0.0
      %2037 = vmatpush1.msra.mxu0 0.0
      %2038 = vmatprep.subr.mxu0 0.0
      %2039 = vmatpush1.msra.mxu0 0.0
      %2040 = vmatprep.subr.mxu0 0.0
      %2041 = vmatpush1.msra.mxu0 0.0
      %2042 = vmatprep.subr.mxu0 0.0
      %2043 = vmatpush1.msra.mxu0 0.0
      %2044 = vmatprep.subr.mxu0 0.0
      %2045 = vmatpush1.msra.mxu0 0.0
      %2046 = vmatprep.subr.mxu0 0.0
      %2047 = vmatpush1.msra.mxu0 0.0
      %2048 = vmatprep.subr.mxu0 0.0
      %2049 = vmatpush1.msra.mxu0 0.0
      %2050 = vmatprep.subr.mxu0 0.0
      %2051 = vmatpush1.msra.mxu0 0.0
      %2052 = vmatprep.subr.mxu0 0.0
      %2053 = vmatpush1.msra.mxu0 0.0
      %2054 = vmatprep.subr.mxu0 0.0
      %2055 = vmatpush1.msra.mxu0 0.0
      %2056 = vmatprep.subr.mxu0 0.0
      %2057 = vmatpush1.msra.mxu0 0.0
      %2058 = vmatprep.subr.mxu0 0.0
      %2059 = vmatpush1.msra.mxu0 %v2034
      %2060 = vmatprep.subr.mxu0 0.0
      %2061 = vmatpush1.msra.mxu0 %v1933
      %2062 = vmatprep.subr.mxu0 0.0
      %2063 = vmatpush1.msra.mxu0 %v1932
      %2064 = vmatprep.subr.mxu0 0.0
      %2065 = vmatpush1.msra.mxu0 %v1931
      %2066 = vmatprep.subr.mxu0 0.0
      %2067 = vmatpush1.msra.mxu0 %v1930
      %2068 = vmatprep.subr.mxu0 0.0
      %2069 = vmatpush2.msra.mxu0 0.0
      %2070 = vmatprep.subr.mxu0 0.0
      %2071 = vmatpush2.msra.mxu0 0.0
      %2072 = vmatprep.subr.mxu0 0.0
      %2073 = vmatpush2.msra.mxu0 0.0
      %2074 = vmatprep.subr.mxu0 0.0
      %2075 = vmatpush2.msra.mxu0 0.0
      %2076 = vmatprep.subr.mxu0 0.0
      %2077 = vmatpush2.msra.mxu0 0.0
      %2078 = vmatprep.subr.mxu0 0.0
      %2079 = vmatpush2.msra.mxu0 0.0
      %2080 = vmatprep.subr.mxu0 0.0
      %2081 = vmatpush2.msra.mxu0 0.0
      %2082 = vmatprep.subr.mxu0 0.0
      %2083 = vmatpush2.msra.mxu0 0.0
      %2084 = vmatprep.subr.mxu0 0.0
      %2085 = vmatpush2.msra.mxu0 0.0
      %2086 = vmatprep.subr.mxu0 0.0
      %2087 = vmatpush2.msra.mxu0 0.0
      %2088 = vmatprep.subr.mxu0 0.0
      %2089 = vmatpush2.msra.mxu0 0.0
      %2090 = vmatprep.subr.mxu0 0.0
      %2091 = vmatpush2.msra.mxu0 0.0
      %2092 = vmatprep.subr.mxu0 0.0
      %2093 = vmatpush2.msra.mxu0 0.0
      %2094 = vmatprep.subr.mxu0 0.0
      %2095 = vmatpush2.msra.mxu0 0.0
      %2096 = vmatprep.subr.mxu0 0.0
      %2097 = vmatpush2.msra.mxu0 0.0
      %2098 = vmatprep.subr.mxu0 0.0
      %2099 = vmatpush2.msra.mxu0 0.0
      %2100 = vmatprep.mubr.f32.mxu0 0.0
      %2101 = vmatmul.mubr.f32.gmra.mxu0 %v1937
      %v2102 = vpop.f32.mrf.mxu0
      %v2103 = vadd.f32 0.0, %v2102
      %v2104 = vpop.f32.mrf.mxu0
      %2105 = vmatprep.mubr.f32.mxu0 0.0
      %2106 = vmatmul.mubr.f32.gmra.mxu0 %v1940
      %v2107 = vpop.f32.mrf.mxu0
      %v2108 = vadd.f32 0.0, %v2107
      %v2109 = vpop.f32.mrf.mxu0
      %2110 = vmatprep.mubr.f32.mxu0 0.0
      %2111 = vmatmul.mubr.f32.gmra.mxu0 %v1943
      %v2112 = vpop.f32.mrf.mxu0
      %v2113 = vadd.f32 0.0, %v2112
      %v2114 = vpop.f32.mrf.mxu0
      %2115 = vmatprep.mubr.f32.mxu0 0.0
      %2116 = vmatmul.mubr.f32.gmra.mxu0 %v1946
      %v2117 = vpop.f32.mrf.mxu0
      %v2118 = vadd.f32 0.0, %v2117
      %v2119 = vpop.f32.mrf.mxu0
      %2120 = vmatprep.mubr.f32.mxu0 0.0
      %2121 = vmatmul.mubr.f32.gmra.mxu0 %v1949
      %v2122 = vpop.f32.mrf.mxu0
      %v2123 = vadd.f32 0.0, %v2122
      %v2124 = vpop.f32.mrf.mxu0
      %2125 = vmatprep.mubr.f32.mxu0 0.0
      %2126 = vmatmul.mubr.f32.gmra.mxu0 %v1952
      %v2127 = vpop.f32.mrf.mxu0
      %v2128 = vadd.f32 0.0, %v2127
      %v2129 = vpop.f32.mrf.mxu0
      %2130 = vmatprep.mubr.f32.mxu0 0.0
      %2131 = vmatmul.mubr.f32.gmra.mxu0 %v1955
      %v2132 = vpop.f32.mrf.mxu0
      %v2133 = vadd.f32 0.0, %v2132
      %v2134 = vpop.f32.mrf.mxu0
      %2135 = vmatprep.mubr.f32.mxu0 0.0
      %2136 = vmatmul.mubr.f32.gmra.mxu0 %v1958
      %v2137 = vpop.f32.mrf.mxu0
      %v2138 = vadd.f32 0.0, %v2137
      %v2139 = vpop.f32.mrf.mxu0
      %2140 = vmatprep.mubr.f32.mxu0 0.0
      %2141 = vmatmul.mubr.f32.gmra.mxu0 %v1961
      %v2142 = vpop.f32.mrf.mxu0
      %v2143 = vadd.f32 0.0, %v2142
      %v2144 = vpop.f32.mrf.mxu0
      %2145 = vmatprep.mubr.f32.mxu0 0.0
      %2146 = vmatmul.mubr.f32.gmra.mxu0 %v1964
      %v2147 = vpop.f32.mrf.mxu0
      %v2148 = vadd.f32 0.0, %v2147
      %v2149 = vpop.f32.mrf.mxu0
      %2150 = vmatprep.mubr.f32.mxu0 0.0
      %2151 = vmatmul.mubr.f32.gmra.mxu0 %v1967
      %v2152 = vpop.f32.mrf.mxu0
      %v2153 = vadd.f32 0.0, %v2152
      %v2154 = vpop.f32.mrf.mxu0
      %2155 = vmatprep.mubr.f32.mxu0 0.0
      %2156 = vmatmul.mubr.f32.gmra.mxu0 %v1970
      %v2157 = vpop.f32.mrf.mxu0
      %v2158 = vadd.f32 0.0, %v2157
      %v2159 = vpop.f32.mrf.mxu0
      %2160 = vmatprep.mubr.f32.mxu0 0.0
      %2161 = vmatmul.mubr.f32.gmra.mxu0 %v1973
      %v2162 = vpop.f32.mrf.mxu0
      %v2163 = vadd.f32 0.0, %v2162
      %v2164 = vpop.f32.mrf.mxu0
      %2165 = vmatprep.mubr.f32.mxu0 0.0
      %2166 = vmatmul.mubr.f32.gmra.mxu0 %v1976
      %v2167 = vpop.f32.mrf.mxu0
      %v2168 = vadd.f32 0.0, %v2167
      %v2169 = vpop.f32.mrf.mxu0
      %2170 = vmatprep.mubr.f32.mxu0 0.0
      %2171 = vmatmul.mubr.f32.gmra.mxu0 %v1979
      %v2172 = vpop.f32.mrf.mxu0
      %v2173 = vadd.f32 0.0, %v2172
      %v2174 = vpop.f32.mrf.mxu0
      %2175 = vmatprep.mubr.f32.mxu0 0.0
      %2176 = vmatmul.mubr.f32.gmra.mxu0 %v1982
      %v2177 = vpop.f32.mrf.mxu0
      %v2178 = vadd.f32 0.0, %v2177
      %v2179 = vpop.f32.mrf.mxu0
      %2180 = vmatprep.mubr.f32.mxu0 0.0
      %2181 = vmatmul.mubr.f32.gmra.mxu0 %v1985
      %v2182 = vpop.f32.mrf.mxu0
      %v2183 = vadd.f32 0.0, %v2182
      %v2184 = vpop.f32.mrf.mxu0
      %2185 = vmatprep.mubr.f32.mxu0 0.0
      %2186 = vmatmul.mubr.f32.gmra.mxu0 %v1988
      %v2187 = vpop.f32.mrf.mxu0
      %v2188 = vadd.f32 0.0, %v2187
      %v2189 = vpop.f32.mrf.mxu0
      %2190 = vmatprep.mubr.f32.mxu0 0.0
      %2191 = vmatmul.mubr.f32.gmra.mxu0 %v1991
      %v2192 = vpop.f32.mrf.mxu0
      %v2193 = vadd.f32 0.0, %v2192
      %v2194 = vpop.f32.mrf.mxu0
      %2195 = vmatprep.mubr.f32.mxu0 0.0
      %2196 = vmatmul.mubr.f32.gmra.mxu0 %v1994
      %v2197 = vpop.f32.mrf.mxu0
      %v2198 = vadd.f32 0.0, %v2197
      %v2199 = vpop.f32.mrf.mxu0
      %2200 = vmatprep.mubr.f32.mxu0 0.0
      %2201 = vmatmul.mubr.f32.gmra.mxu0 %v1997
      %v2202 = vpop.f32.mrf.mxu0
      %v2203 = vadd.f32 0.0, %v2202
      %v2204 = vpop.f32.mrf.mxu0
      %2205 = vmatprep.mubr.f32.mxu0 0.0
      %2206 = vmatmul.mubr.f32.gmra.mxu0 %v2000
      %v2207 = vpop.f32.mrf.mxu0
      %v2208 = vadd.f32 0.0, %v2207
      %v2209 = vpop.f32.mrf.mxu0
      %2210 = vmatprep.mubr.f32.mxu0 0.0
      %2211 = vmatmul.mubr.f32.gmra.mxu0 %v2003
      %v2212 = vpop.f32.mrf.mxu0
      %v2213 = vadd.f32 0.0, %v2212
      %v2214 = vpop.f32.mrf.mxu0
      %2215 = vmatprep.mubr.f32.mxu0 0.0
      %2216 = vmatmul.mubr.f32.gmra.mxu0 %v2006
      %v2217 = vpop.f32.mrf.mxu0
      %v2218 = vadd.f32 0.0, %v2217
      %v2219 = vpop.f32.mrf.mxu0
      %2220 = vmatprep.mubr.f32.mxu0 0.0
      %2221 = vmatmul.mubr.f32.gmra.mxu0 %v2009
      %v2222 = vpop.f32.mrf.mxu0
      %v2223 = vadd.f32 0.0, %v2222
      %v2224 = vpop.f32.mrf.mxu0
      %2225 = vmatprep.mubr.f32.mxu0 0.0
      %2226 = vmatmul.mubr.f32.gmra.mxu0 %v2012
      %v2227 = vpop.f32.mrf.mxu0
      %v2228 = vadd.f32 0.0, %v2227
      %v2229 = vpop.f32.mrf.mxu0
      %2230 = vmatprep.mubr.f32.mxu0 0.0
      %2231 = vmatmul.mubr.f32.gmra.mxu0 %v2015
      %v2232 = vpop.f32.mrf.mxu0
      %v2233 = vadd.f32 0.0, %v2232
      %v2234 = vpop.f32.mrf.mxu0
      %2235 = vmatprep.mubr.f32.mxu0 0.0
      %2236 = vmatmul.mubr.f32.gmra.mxu0 %v2018
      %v2237 = vpop.f32.mrf.mxu0
      %v2238 = vadd.f32 0.0, %v2237
      %v2239 = vpop.f32.mrf.mxu0
      %2240 = vmatprep.mubr.f32.mxu0 0.0
      %2241 = vmatmul.mubr.f32.gmra.mxu0 %v2021
      %v2242 = vpop.f32.mrf.mxu0
      %v2243 = vadd.f32 0.0, %v2242
      %v2244 = vpop.f32.mrf.mxu0
      %2245 = vmatprep.mubr.f32.mxu0 0.0
      %2246 = vmatmul.mubr.f32.gmra.mxu0 %v2024
      %v2247 = vpop.f32.mrf.mxu0
      %v2248 = vadd.f32 0.0, %v2247
      %v2249 = vpop.f32.mrf.mxu0
      %2250 = vmatprep.mubr.f32.mxu0 0.0
      %2251 = vmatmul.mubr.f32.gmra.mxu0 %v2027
      %v2252 = vpop.f32.mrf.mxu0
      %v2253 = vadd.f32 0.0, %v2252
      %v2254 = vpop.f32.mrf.mxu0
      %2255 = vmatprep.mubr.f32.mxu0 0.0
      %2256 = vmatmul.mubr.f32.gmra.mxu0 %v2030
      %v2257 = vpop.f32.mrf.mxu0
      %v2258 = vadd.f32 0.0, %v2257
      %v2259 = vpop.f32.mrf.mxu0
      %2260 = vdwg.mxu0
      %vm2261 = vcmask 64512
      %2262 = vst.msk [vmem:[%s177] sm:$0xff] %vm2261, %v2103
      %2263 = vst.msk [vmem:[%s177 + $0x8] sm:$0xff] %vm2261, %v2108
      %2264 = vst.msk [vmem:[%s177 + $0x10] sm:$0xff] %vm2261, %v2113
      %2265 = vst.msk [vmem:[%s177 + $0x18] sm:$0xff] %vm2261, %v2118
      %2266 = vst.msk [vmem:[%s177 + $0x20] sm:$0xff] %vm2261, %v2123
      %2267 = vst.msk [vmem:[%s177 + $0x28] sm:$0xff] %vm2261, %v2128
      %2268 = vst.msk [vmem:[%s177 + $0x30] sm:$0xff] %vm2261, %v2133
      %2269 = vst.msk [vmem:[%s177 + $0x38] sm:$0xff] %vm2261, %v2138
      %2270 = vst.msk [vmem:[%s177 + $0x40] sm:$0xff] %vm2261, %v2143
      %2271 = vst.msk [vmem:[%s177 + $0x48] sm:$0xff] %vm2261, %v2148
      %2272 = vst.msk [vmem:[%s177 + $0x50] sm:$0xff] %vm2261, %v2153
      %2273 = vst.msk [vmem:[%s177 + $0x58] sm:$0xff] %vm2261, %v2158
      %2274 = vst.msk [vmem:[%s177 + $0x60] sm:$0xff] %vm2261, %v2163
      %2275 = vst.msk [vmem:[%s177 + $0x68] sm:$0xff] %vm2261, %v2168
      %2276 = vst.msk [vmem:[%s177 + $0x70] sm:$0xff] %vm2261, %v2173
      %2277 = vst.msk [vmem:[%s177 + $0x78] sm:$0xff] %vm2261, %v2178
      %2278 = vst.msk [vmem:[%s177 + $0x80] sm:$0xff] %vm2261, %v2183
      %2279 = vst.msk [vmem:[%s177 + $0x88] sm:$0xff] %vm2261, %v2188
      %2280 = vst.msk [vmem:[%s177 + $0x90] sm:$0xff] %vm2261, %v2193
      %2281 = vst.msk [vmem:[%s177 + $0x98] sm:$0xff] %vm2261, %v2198
      %2282 = vst.msk [vmem:[%s177 + $0xa0] sm:$0xff] %vm2261, %v2203
      %2283 = vst.msk [vmem:[%s177 + $0xa8] sm:$0xff] %vm2261, %v2208
      %2284 = vst.msk [vmem:[%s177 + $0xb0] sm:$0xff] %vm2261, %v2213
      %2285 = vst.msk [vmem:[%s177 + $0xb8] sm:$0xff] %vm2261, %v2218
      %2286 = vst.msk [vmem:[%s177 + $0xc0] sm:$0xff] %vm2261, %v2223
      %2287 = vst.msk [vmem:[%s177 + $0xc8] sm:$0xff] %vm2261, %v2228
      %2288 = vst.msk [vmem:[%s177 + $0xd0] sm:$0xff] %vm2261, %v2233
      %2289 = vst.msk [vmem:[%s177 + $0xd8] sm:$0xff] %vm2261, %v2238
      %2290 = vst.msk [vmem:[%s177 + $0xe0] sm:$0xff] %vm2261, %v2243
      %2291 = vst.msk [vmem:[%s177 + $0xe8] sm:$0xff] %vm2261, %v2248
      %2292 = vst.msk [vmem:[%s177 + $0xf0] sm:$0xff] %vm2261, %v2253
      %2293 = vst.msk [vmem:[%s177 + $0xf8] sm:$0xff] %vm2261, %v2258
      %v2294 = vsel %vm2261, %v2103, 0.0
      %v2295 = vsel %vm2261, %v2108, 0.0
      %v2296 = vadd.f32 %v2294, %v2295
      %v2297 = vsel %vm2261, %v2113, 0.0
      %v2298 = vadd.f32 %v2296, %v2297
      %v2299 = vsel %vm2261, %v2118, 0.0
      %v2300 = vadd.f32 %v2298, %v2299
      %v2301 = vsel %vm2261, %v2123, 0.0
      %v2302 = vadd.f32 %v2300, %v2301
      %v2303 = vsel %vm2261, %v2128, 0.0
      %v2304 = vadd.f32 %v2302, %v2303
      %v2305 = vsel %vm2261, %v2133, 0.0
      %v2306 = vadd.f32 %v2304, %v2305
      %v2307 = vsel %vm2261, %v2138, 0.0
      %v2308 = vadd.f32 %v2306, %v2307
      %v2309 = vsel %vm2261, %v2143, 0.0
      %v2310 = vadd.f32 %v2308, %v2309
      %v2311 = vsel %vm2261, %v2148, 0.0
      %v2312 = vadd.f32 %v2310, %v2311
      %v2313 = vsel %vm2261, %v2153, 0.0
      %v2314 = vadd.f32 %v2312, %v2313
      %v2315 = vsel %vm2261, %v2158, 0.0
      %v2316 = vadd.f32 %v2314, %v2315
      %v2317 = vsel %vm2261, %v2163, 0.0
      %v2318 = vadd.f32 %v2316, %v2317
      %v2319 = vsel %vm2261, %v2168, 0.0
      %v2320 = vadd.f32 %v2318, %v2319
      %v2321 = vsel %vm2261, %v2173, 0.0
      %v2322 = vadd.f32 %v2320, %v2321
      %v2323 = vsel %vm2261, %v2178, 0.0
      %v2324 = vadd.f32 %v2322, %v2323
      %v2325 = vsel %vm2261, %v2183, 0.0
      %v2326 = vadd.f32 %v2324, %v2325
      %v2327 = vsel %vm2261, %v2188, 0.0
      %v2328 = vadd.f32 %v2326, %v2327
      %v2329 = vsel %vm2261, %v2193, 0.0
      %v2330 = vadd.f32 %v2328, %v2329
      %v2331 = vsel %vm2261, %v2198, 0.0
      %v2332 = vadd.f32 %v2330, %v2331
      %v2333 = vsel %vm2261, %v2203, 0.0
      %v2334 = vadd.f32 %v2332, %v2333
      %v2335 = vsel %vm2261, %v2208, 0.0
      %v2336 = vadd.f32 %v2334, %v2335
      %v2337 = vsel %vm2261, %v2213, 0.0
      %v2338 = vadd.f32 %v2336, %v2337
      %v2339 = vsel %vm2261, %v2218, 0.0
      %v2340 = vadd.f32 %v2338, %v2339
      %v2341 = vsel %vm2261, %v2223, 0.0
      %v2342 = vadd.f32 %v2340, %v2341
      %v2343 = vsel %vm2261, %v2228, 0.0
      %v2344 = vadd.f32 %v2342, %v2343
      %v2345 = vsel %vm2261, %v2233, 0.0
      %v2346 = vadd.f32 %v2344, %v2345
      %v2347 = vsel %vm2261, %v2238, 0.0
      %v2348 = vadd.f32 %v2346, %v2347
      %v2349 = vsel %vm2261, %v2243, 0.0
      %v2350 = vadd.f32 %v2348, %v2349
      %v2351 = vsel %vm2261, %v2248, 0.0
      %v2352 = vadd.f32 %v2350, %v2351
      %v2353 = vsel %vm2261, %v2253, 0.0
      %v2354 = vadd.f32 %v2352, %v2353
      %v2355 = vsel %vm2261, %v2258, 0.0
      %v2356 = vadd.f32 %v2354, %v2355
      %v2357 = vrot.slane %v2356, 4
      %v2358 = vadd.f32 %v2356, %v2357
      %v2359 = vrot.slane %v2358, 2
      %v2360 = vadd.f32 %v2358, %v2359
      %v2361 = vrot.slane %v2360, 1
      %v2362 = vadd.f32 %v2360, %v2361
      %vm2363 = vcmask 57344
      %2364 = vst.msk [vmem:[%s181] sm:$0x1] %vm2363, %v2362
      %v2365 = vmul.f32 %v2103, %v2103
      %v2366 = vmul.f32 %v2108, %v2108
      %v2367 = vmul.f32 %v2113, %v2113
      %v2368 = vmul.f32 %v2118, %v2118
      %v2369 = vmul.f32 %v2123, %v2123
      %v2370 = vmul.f32 %v2128, %v2128
      %v2371 = vmul.f32 %v2133, %v2133
      %v2372 = vmul.f32 %v2138, %v2138
      %v2373 = vmul.f32 %v2143, %v2143
      %v2374 = vmul.f32 %v2148, %v2148
      %v2375 = vmul.f32 %v2153, %v2153
      %v2376 = vmul.f32 %v2158, %v2158
      %v2377 = vmul.f32 %v2163, %v2163
      %v2378 = vmul.f32 %v2168, %v2168
      %v2379 = vmul.f32 %v2173, %v2173
      %v2380 = vmul.f32 %v2178, %v2178
      %v2381 = vmul.f32 %v2183, %v2183
      %v2382 = vmul.f32 %v2188, %v2188
      %v2383 = vmul.f32 %v2193, %v2193
      %v2384 = vmul.f32 %v2198, %v2198
      %v2385 = vmul.f32 %v2203, %v2203
      %v2386 = vmul.f32 %v2208, %v2208
      %v2387 = vmul.f32 %v2213, %v2213
      %v2388 = vmul.f32 %v2218, %v2218
      %v2389 = vmul.f32 %v2223, %v2223
      %v2390 = vmul.f32 %v2228, %v2228
      %v2391 = vmul.f32 %v2233, %v2233
      %v2392 = vmul.f32 %v2238, %v2238
      %v2393 = vmul.f32 %v2243, %v2243
      %v2394 = vmul.f32 %v2248, %v2248
      %v2395 = vmul.f32 %v2253, %v2253
      %v2396 = vmul.f32 %v2258, %v2258
      %v2397 = vsel %vm2261, %v2365, 0.0
      %v2398 = vsel %vm2261, %v2366, 0.0
      %v2399 = vadd.f32 %v2397, %v2398
      %v2400 = vsel %vm2261, %v2367, 0.0
      %v2401 = vadd.f32 %v2399, %v2400
      %v2402 = vsel %vm2261, %v2368, 0.0
      %v2403 = vadd.f32 %v2401, %v2402
      %v2404 = vsel %vm2261, %v2369, 0.0
      %v2405 = vadd.f32 %v2403, %v2404
      %v2406 = vsel %vm2261, %v2370, 0.0
      %v2407 = vadd.f32 %v2405, %v2406
      %v2408 = vsel %vm2261, %v2371, 0.0
      %v2409 = vadd.f32 %v2407, %v2408
      %v2410 = vsel %vm2261, %v2372, 0.0
      %v2411 = vadd.f32 %v2409, %v2410
      %v2412 = vsel %vm2261, %v2373, 0.0
      %v2413 = vadd.f32 %v2411, %v2412
      %v2414 = vsel %vm2261, %v2374, 0.0
      %v2415 = vadd.f32 %v2413, %v2414
      %v2416 = vsel %vm2261, %v2375, 0.0
      %v2417 = vadd.f32 %v2415, %v2416
      %v2418 = vsel %vm2261, %v2376, 0.0
      %v2419 = vadd.f32 %v2417, %v2418
      %v2420 = vsel %vm2261, %v2377, 0.0
      %v2421 = vadd.f32 %v2419, %v2420
      %v2422 = vsel %vm2261, %v2378, 0.0
      %v2423 = vadd.f32 %v2421, %v2422
      %v2424 = vsel %vm2261, %v2379, 0.0
      %v2425 = vadd.f32 %v2423, %v2424
      %v2426 = vsel %vm2261, %v2380, 0.0
      %v2427 = vadd.f32 %v2425, %v2426
      %v2428 = vsel %vm2261, %v2381, 0.0
      %v2429 = vadd.f32 %v2427, %v2428
      %v2430 = vsel %vm2261, %v2382, 0.0
      %v2431 = vadd.f32 %v2429, %v2430
      %v2432 = vsel %vm2261, %v2383, 0.0
      %v2433 = vadd.f32 %v2431, %v2432
      %v2434 = vsel %vm2261, %v2384, 0.0
      %v2435 = vadd.f32 %v2433, %v2434
      %v2436 = vsel %vm2261, %v2385, 0.0
      %v2437 = vadd.f32 %v2435, %v2436
      %v2438 = vsel %vm2261, %v2386, 0.0
      %v2439 = vadd.f32 %v2437, %v2438
      %v2440 = vsel %vm2261, %v2387, 0.0
      %v2441 = vadd.f32 %v2439, %v2440
      %v2442 = vsel %vm2261, %v2388, 0.0
      %v2443 = vadd.f32 %v2441, %v2442
      %v2444 = vsel %vm2261, %v2389, 0.0
      %v2445 = vadd.f32 %v2443, %v2444
      %v2446 = vsel %vm2261, %v2390, 0.0
      %v2447 = vadd.f32 %v2445, %v2446
      %v2448 = vsel %vm2261, %v2391, 0.0
      %v2449 = vadd.f32 %v2447, %v2448
      %v2450 = vsel %vm2261, %v2392, 0.0
      %v2451 = vadd.f32 %v2449, %v2450
      %v2452 = vsel %vm2261, %v2393, 0.0
      %v2453 = vadd.f32 %v2451, %v2452
      %v2454 = vsel %vm2261, %v2394, 0.0
      %v2455 = vadd.f32 %v2453, %v2454
      %v2456 = vsel %vm2261, %v2395, 0.0
      %v2457 = vadd.f32 %v2455, %v2456
      %v2458 = vsel %vm2261, %v2396, 0.0
      %v2459 = vadd.f32 %v2457, %v2458
      %v2460 = vrot.slane %v2459, 4
      %v2461 = vadd.f32 %v2459, %v2460
      %v2462 = vrot.slane %v2461, 2
      %v2463 = vadd.f32 %v2461, %v2462
      %v2464 = vrot.slane %v2463, 1
      %v2465 = vadd.f32 %v2463, %v2464
      %2466 = vst.msk [vmem:[%s181 + $0x1] sm:$0x1] %vm2363, %v2465
      %p2467 = scmp.lt.s32.totalorder %s15, 1
      %s2468 = scalar_select %p2467, %s15, 1
      %s2469 = smul.addr %s2468, 32
      %s2470 = smul.addr %s2469, 8
      %s2471 = scalar_lea.vmem %s2, %s2470
      %p2472 = scmp.lt.s32.totalorder %s15, 1
      %s2473 = scalar_select %p2472, %s15, 1
      %s2474 = smul.addr %s2473, 2
      %s2475 = scalar_lea.vmem %s3, %s2474
      // Predicated region
      $region29: #{_lambda_.3} parent=27 // pred_check
        %p2476 = pneg %p80
      $region30: #{_lambda_.3} parent=27 // pred_check_branch
        %2478 = sbr.rel (%p2476) target = $region32
      $region31: #{_lambda_.3} parent=27 // pred_region
        _
      $region32: #{_lambda_.3} parent=27 // pred_fallthru
        _
      // Predicated region
      $region33: #{_lambda_.3} parent=27 // pred_check
        %p2479 = pneg %p106
      $region34: #{_lambda_.3} parent=27 // pred_check_branch
        %2481 = sbr.rel (%p2479) target = $region36
      $region35: #{_lambda_.3} parent=27 // pred_region
        _
      $region36: #{_lambda_.3} parent=27 // pred_fallthru
        _
    $region28: #{_lambda_.3} parent=5 // pred_fallthru
      _
    %p2482 = scmp.le.s32.totalorder 2, %s10
    // Predicated region
    $region37: #{_lambda_.3} parent=5 // pred_check
      %p2483 = pneg %p2482
    $region38: #{_lambda_.3} parent=5 // pred_check_branch
      %2485 = sbr.rel (%p2483) target = $region40
    $region39: #{_lambda_.3} parent=5 // pred_region
      %s2486 = ssub.s32 %s10, 2
      // Predicated region
      $region41: #{_lambda_.3} parent=39 // pred_check
        %p2487 = pneg %p86
      $region42: #{_lambda_.3} parent=39 // pred_check_branch
        %2489 = sbr.rel (%p2487) target = $region44
      $region43: #{_lambda_.3} parent=39 // pred_region
        %p2490 = scmp.lt.s32.totalorder %s16, 1
        %s2491 = scalar_select %p2490, %s16, 1
        %s2492 = smul.addr %s2491, 32
        %s2493 = smul.addr %s2492, 8
        %s2494 = scalar_lea.vmem %s2, %s2493
      $region44: #{_lambda_.3} parent=39 // pred_fallthru
        _
      // Predicated region
      $region45: #{_lambda_.3} parent=39 // pred_check
        %p2495 = pneg %p112
      $region46: #{_lambda_.3} parent=39 // pred_check_branch
        %2497 = sbr.rel (%p2495) target = $region48
      $region47: #{_lambda_.3} parent=39 // pred_region
        %p2498 = scmp.lt.s32.totalorder %s16, 1
        %s2499 = scalar_select %p2498, %s16, 1
        %s2500 = smul.addr %s2499, 2
        %s2501 = scalar_lea.vmem %s3, %s2500
      $region48: #{_lambda_.3} parent=39 // pred_fallthru
        _
    $region40: #{_lambda_.3} parent=5 // pred_fallthru
      _
  $region6: #{_lambda_.3} parent=0 // loop_footer
    %s14 = sadd.s32 1, %s10
  $region7: #{_lambda_.3} parent=0 // loop_footer_branch
    %9 = sbr.rel target = $region3
  $region8: #{_lambda_.3} parent=0 // loop_exit
    _

// kernel: _lambda_.4
$region0: #{_lambda_.4}
  #allocation0 [shape = 'u32[]', space=smem, size = 0x4, offset = 0x4, fixed_abs, tag = 'smem constant byte address 0x4 - core index']
  #allocation1 [shape = 'u32[144,128]{1,0:T(1,128)}', space=vmem, size = 0x12000, scoped, tag = 'internal scratch']
  #allocation2 [shape = 'f32[18,18,8]{2,1,0:T(8,128)}', space=vmem, size = 0x36000, scoped, tag = 'scratch operand']
  #allocation3 [shape = 'f32[256,32]{1,0:T(8,128)}', space=vmem, size = 0x20000, scoped, tag = 'scratch operand']
  %s0 = inlined_call_operand.vmem [shape: f32[2,16,16,8], index: 0, kind: input, shape index: {}]
  %s1 = inlined_call_operand.vmem [shape: f32[1,8], index: 1, kind: input, shape index: {}]
  %s2 = inlined_call_operand.vmem [shape: f32[1,8], index: 2, kind: input, shape index: {}]
  %s3 = inlined_call_operand.vmem [shape: f32[4,32,16], index: 3, kind: input, shape index: {}]
  %s4 = inlined_call_operand.vmem [shape: f32[8,16,16,16], index: 4, kind: output, shape index: {0}]
  %s5 = inlined_call_operand.vmem [shape: f32[2,2,16], index: 5, kind: output, shape index: {1}]
  %6 = xla_tuple %s4, %s5
  %s7 = sld [smem:[#allocation0]]
  $region57: #{_lambda_.4} parent=0
    _
  %s9 = ssub.s32 1, %s7
  %s10 = scalar_select 0, %s9, %s7
  loop: start=0, step=1, limit=4
  $region2: #{_lambda_.4} parent=0 // loop_pre_header
    _
  $region3: #{_lambda_.4} parent=0 // loop_header
    %s12 = sphi 0, %s16
    %p13 = scmp.ge.s32.totalorder %s12, 4
    %s22 = sphi 0, %s24
    %s25 = sphi 0, %s22
    %s26 = sphi 0, %s25
    %s42 = sphi 0, %s26
    %s46 = sphi 0, %s46
    %s48 = sphi 0, %s46
    %s49 = sphi 0, %s48
    %s63 = sphi 0, %s49
    %s67 = sphi 0, %s67
    %s69 = sphi 0, %s67
    %s70 = sphi 0, %s69
    %s84 = sphi 0, %s70
    %s88 = sphi 0, %s88
    %s90 = sphi 0, %s88
    %s91 = sphi 0, %s90
    %s105 = sphi 0, %s91
    %s111 = sphi 0, %s113
    %s114 = sphi 0, %s111
    %s115 = sphi 0, %s114
    %s131 = sphi 0, %s115
    %s137 = sphi 0, %s139
    %s140 = sphi 0, %s137
    %s141 = sphi 0, %s140
    %s157 = sphi 0, %s141
  $region4: #{_lambda_.4} parent=0 // loop_header_branch
    %15 = sbr.rel (%p13) target = $region8
  $region5: #{_lambda_.4} parent=0 // loop_body
    %s17 = ssub.s32 %s12, 1
    %s18 = ssub.s32 %s12, 2
    %s19 = sadd.s32 %s12, 1
    %s20 = ssub.s32 %s12, %s19
    %p21 = scmp.eq.s32.totalorder %s20, 0
    %s23 = sadd.s32 %s22, 1
    %s24 = scalar_select %p21, %s22, %s23
    %p27 = pneg %p21
    %p28 = scmp.eq.s32.totalorder %s12, 1
    %p29 = por %p27, %p28
    %p30 = scmp.ne.s32.totalorder %s22, %s25
    %p31 = scmp.eq.s32.totalorder %s12, 0
    %p32 = por %p30, %p31
    %p33 = scmp.ne.s32.totalorder %s22, %s25
    %p34 = scmp.eq.s32.totalorder %s17, 1
    %p35 = por %p33, %p34
    %p36 = scmp.ne.s32.totalorder %s25, %s26
    %p37 = scmp.eq.s32.totalorder %s17, 0
    %p38 = por %p36, %p37
    %p39 = scmp.ne.s32.totalorder %s25, %s26
    %p40 = scmp.eq.s32.totalorder %s18, 1
    %p41 = por %p39, %p40
    %p43 = scmp.ne.s32.totalorder %s26, %s42
    %p44 = scmp.eq.s32.totalorder %s18, 0
    %p45 = por %p43, %p44
    %s47 = sadd.s32 %s46, 1
    %p50 = scmp.eq.s32.totalorder %s12, 1
    %p51 = scmp.ne.s32.totalorder %s46, %s48
    %p52 = scmp.eq.s32.totalorder %s12, 0
    %p53 = por %p51, %p52
    %p54 = scmp.ne.s32.totalorder %s46, %s48
    %p55 = scmp.eq.s32.totalorder %s17, 1
    %p56 = por %p54, %p55
    %p57 = scmp.ne.s32.totalorder %s48, %s49
    %p58 = scmp.eq.s32.totalorder %s17, 0
    %p59 = por %p57, %p58
    %p60 = scmp.ne.s32.totalorder %s48, %s49
    %p61 = scmp.eq.s32.totalorder %s18, 1
    %p62 = por %p60, %p61
    %p64 = scmp.ne.s32.totalorder %s49, %s63
    %p65 = scmp.eq.s32.totalorder %s18, 0
    %p66 = por %p64, %p65
    %s68 = sadd.s32 %s67, 1
    %p71 = scmp.eq.s32.totalorder %s12, 1
    %p72 = scmp.ne.s32.totalorder %s67, %s69
    %p73 = scmp.eq.s32.totalorder %s12, 0
    %p74 = por %p72, %p73
    %p75 = scmp.ne.s32.totalorder %s67, %s69
    %p76 = scmp.eq.s32.totalorder %s17, 1
    %p77 = por %p75, %p76
    %p78 = scmp.ne.s32.totalorder %s69, %s70
    %p79 = scmp.eq.s32.totalorder %s17, 0
    %p80 = por %p78, %p79
    %p81 = scmp.ne.s32.totalorder %s69, %s70
    %p82 = scmp.eq.s32.totalorder %s18, 1
    %p83 = por %p81, %p82
    %p85 = scmp.ne.s32.totalorder %s70, %s84
    %p86 = scmp.eq.s32.totalorder %s18, 0
    %p87 = por %p85, %p86
    %s89 = sadd.s32 %s88, 1
    %p92 = scmp.eq.s32.totalorder %s12, 1
    %p93 = scmp.ne.s32.totalorder %s88, %s90
    %p94 = scmp.eq.s32.totalorder %s12, 0
    %p95 = por %p93, %p94
    %p96 = scmp.ne.s32.totalorder %s88, %s90
    %p97 = scmp.eq.s32.totalorder %s17, 1
    %p98 = por %p96, %p97
    %p99 = scmp.ne.s32.totalorder %s90, %s91
    %p100 = scmp.eq.s32.totalorder %s17, 0
    %p101 = por %p99, %p100
    %p102 = scmp.ne.s32.totalorder %s90, %s91
    %p103 = scmp.eq.s32.totalorder %s18, 1
    %p104 = por %p102, %p103
    %p106 = scmp.ne.s32.totalorder %s91, %s105
    %p107 = scmp.eq.s32.totalorder %s18, 0
    %p108 = por %p106, %p107
    %s109 = ssub.s32 %s12, %s19
    %p110 = scmp.eq.s32.totalorder %s109, 0
    %s112 = sadd.s32 %s111, 1
    %s113 = scalar_select %p110, %s111, %s112
    %p116 = pneg %p110
    %p117 = scmp.eq.s32.totalorder %s12, 1
    %p118 = por %p116, %p117
    %p119 = scmp.ne.s32.totalorder %s111, %s114
    %p120 = scmp.eq.s32.totalorder %s12, 0
    %p121 = por %p119, %p120
    %p122 = scmp.ne.s32.totalorder %s111, %s114
    %p123 = scmp.eq.s32.totalorder %s17, 1
    %p124 = por %p122, %p123
    %p125 = scmp.ne.s32.totalorder %s114, %s115
    %p126 = scmp.eq.s32.totalorder %s17, 0
    %p127 = por %p125, %p126
    %p128 = scmp.ne.s32.totalorder %s114, %s115
    %p129 = scmp.eq.s32.totalorder %s18, 1
    %p130 = por %p128, %p129
    %p132 = scmp.ne.s32.totalorder %s115, %s131
    %p133 = scmp.eq.s32.totalorder %s18, 0
    %p134 = por %p132, %p133
    %s135 = ssub.s32 %s12, %s19
    %p136 = scmp.eq.s32.totalorder %s135, 0
    %s138 = sadd.s32 %s137, 1
    %s139 = scalar_select %p136, %s137, %s138
    %p142 = pneg %p136
    %p143 = scmp.eq.s32.totalorder %s12, 1
    %p144 = por %p142, %p143
    %p145 = scmp.ne.s32.totalorder %s137, %s140
    %p146 = scmp.eq.s32.totalorder %s12, 0
    %p147 = por %p145, %p146
    %p148 = scmp.ne.s32.totalorder %s137, %s140
    %p149 = scmp.eq.s32.totalorder %s17, 1
    %p150 = por %p148, %p149
    %p151 = scmp.ne.s32.totalorder %s140, %s141
    %p152 = scmp.eq.s32.totalorder %s17, 0
    %p153 = por %p151, %p152
    %p154 = scmp.ne.s32.totalorder %s140, %s141
    %p155 = scmp.eq.s32.totalorder %s18, 1
    %p156 = por %p154, %p155
    %p158 = scmp.ne.s32.totalorder %s141, %s157
    %p159 = scmp.eq.s32.totalorder %s18, 0
    %p160 = por %p158, %p159
    %p161 = scmp.le.s32.totalorder 1, %s12
    %p162 = scmp.lt.s32.totalorder %s12, 3
    %p163 = pnand %p161, %p162
    %p164 = pneg %p163
    // Predicated region
    $region9: #{_lambda_.4} parent=5 // pred_check
      _
    $region10: #{_lambda_.4} parent=5 // pred_check_branch
      %166 = sbr.rel (%p163) target = $region12
    $region11: #{_lambda_.4} parent=5 // pred_region
      %s167 = ssub.s32 %s12, 1
      // Predicated region
      $region13: #{_lambda_.4} parent=11 // pred_check
        %p168 = pneg %p59
      $region14: #{_lambda_.4} parent=11 // pred_check_branch
        %170 = sbr.rel (%p168) target = $region16
      $region15: #{_lambda_.4} parent=11 // pred_region
        _
      $region16: #{_lambda_.4} parent=11 // pred_fallthru
        _
      // Predicated region
      $region17: #{_lambda_.4} parent=11 // pred_check
        %p171 = pneg %p80
      $region18: #{_lambda_.4} parent=11 // pred_check_branch
        %173 = sbr.rel (%p171) target = $region20
      $region19: #{_lambda_.4} parent=11 // pred_region
        _
      $region20: #{_lambda_.4} parent=11 // pred_fallthru
        _
      // Predicated region
      $region21: #{_lambda_.4} parent=11 // pred_check
        %p174 = pneg %p101
      $region22: #{_lambda_.4} parent=11 // pred_check_branch
        %176 = sbr.rel (%p174) target = $region24
      $region23: #{_lambda_.4} parent=11 // pred_region
        _
      $region24: #{_lambda_.4} parent=11 // pred_fallthru
        _
    $region12: #{_lambda_.4} parent=5 // pred_fallthru
      _
    %p177 = scmp.lt.s32.totalorder %s12, 2
    // Predicated region
    $region25: #{_lambda_.4} parent=5 // pred_check
      %p178 = pneg %p177
    $region26: #{_lambda_.4} parent=5 // pred_check_branch
      %180 = sbr.rel (%p178) target = $region28
    $region27: #{_lambda_.4} parent=5 // pred_region
      // Predicated region
      $region29: #{_lambda_.4} parent=27 // pred_check
        %p181 = pneg %p32
      $region30: #{_lambda_.4} parent=27 // pred_check_branch
        %183 = sbr.rel (%p181) target = $region32
      $region31: #{_lambda_.4} parent=27 // pred_region
        %p184 = scmp.lt.s32.totalorder %s12, 1
        %s185 = scalar_select %p184, %s12, 1
        %s186 = smul.addr %s185, 32
        %s187 = smul.addr %s186, 8
        %s188 = scalar_lea.vmem %s0, %s187
      $region32: #{_lambda_.4} parent=27 // pred_fallthru
        _
    $region28: #{_lambda_.4} parent=5 // pred_fallthru
      _
    %p189 = scmp.le.s32.totalorder 1, %s12
    %p190 = scmp.lt.s32.totalorder %s12, 3
    %p191 = pnand %p189, %p190
    %p192 = pneg %p191
    // Predicated region
    $region33: #{_lambda_.4} parent=5 // pred_check
      _
    $region34: #{_lambda_.4} parent=5 // pred_check_branch
      %194 = sbr.rel (%p191) target = $region36
    $region35: #{_lambda_.4} parent=5 // pred_region
      %s195 = ssub.s32 %s12, 1
      %p196 = scmp.lt.s32.totalorder %s17, 1
      %s197 = scalar_select %p196, %s17, 1
      %s198 = smul.addr %s197, 32
      %s199 = smul.addr %s198, 8
      %s200 = scalar_lea.vmem %s0, %s199
      %p201 = pneg %p38
      %p202 = pneg %p35
      %p203 = pneg %p59
      %p204 = pneg %p56
      %p205 = pneg %p80
      %p206 = pneg %p77
      %p207 = pneg %p101
      %p208 = pneg %p98
      %p209 = pneg %p127
      %p210 = pneg %p124
      %s211 = smul.u32 4, %s17
      %p212 = scmp.lt.s32.totalorder %s211, 7
      %s213 = scalar_select %p212, %s211, 7
      %s214 = smul.addr %s213, 32
      %s215 = smul.addr %s214, 8
      %s216 = scalar_lea.vmem %s4, %s215
      %p217 = pneg %p153
      %p218 = pneg %p150
      %p219 = scmp.lt.s32.totalorder %s17, 1
      %s220 = scalar_select %p219, %s17, 1
      %s221 = smul.addr %s220, 2
      %s222 = scalar_lea.vmem %s5, %s221
      %p223 = scmp.lt.s32.totalorder %s17, 1
      %s224 = scalar_select %p223, %s17, 1
      %s225 = smul.addr %s224, 32
      %s226 = smul.addr %s225, 8
      %s227 = scalar_lea.vmem %s0, %s226
      %s228 = smul.u32 4, %s17
      %p229 = scmp.lt.s32.totalorder %s228, 7
      %s230 = scalar_select %p229, %s228, 7
      %s231 = smul.addr %s230, 32
      %s232 = smul.addr %s231, 8
      %s233 = scalar_lea.vmem %s4, %s232
      %s234 = smul.u32 4, %s17
      %p235 = scmp.lt.s32.totalorder %s17, 1
      %s236 = scalar_select %p235, %s17, 1
      %s237 = smul.addr %s236, 2
      %s238 = scalar_lea.vmem %s5, %s237
      %v239 = vld [vmem:[%s227] sm:$0xff]
      %v240 = vld [vmem:[%s227 + $0x8] sm:$0xff]
      %v241 = vld [vmem:[%s227 + $0x10] sm:$0xff]
      %v242 = vld [vmem:[%s227 + $0x18] sm:$0xff]
      %v243 = vld [vmem:[%s227 + $0x20] sm:$0xff]
      %v244 = vld [vmem:[%s227 + $0x28] sm:$0xff]
      %v245 = vld [vmem:[%s227 + $0x30] sm:$0xff]
      %v246 = vld [vmem:[%s227 + $0x38] sm:$0xff]
      %v247 = vld [vmem:[%s227 + $0x40] sm:$0xff]
      %v248 = vld [vmem:[%s227 + $0x48] sm:$0xff]
      %v249 = vld [vmem:[%s227 + $0x50] sm:$0xff]
      %v250 = vld [vmem:[%s227 + $0x58] sm:$0xff]
      %v251 = vld [vmem:[%s227 + $0x60] sm:$0xff]
      %v252 = vld [vmem:[%s227 + $0x68] sm:$0xff]
      %v253 = vld [vmem:[%s227 + $0x70] sm:$0xff]
      %v254 = vld [vmem:[%s227 + $0x78] sm:$0xff]
      %v255 = vld [vmem:[%s227 + $0x80] sm:$0xff]
      %v256 = vld [vmem:[%s227 + $0x88] sm:$0xff]
      %v257 = vld [vmem:[%s227 + $0x90] sm:$0xff]
      %v258 = vld [vmem:[%s227 + $0x98] sm:$0xff]
      %v259 = vld [vmem:[%s227 + $0xa0] sm:$0xff]
      %v260 = vld [vmem:[%s227 + $0xa8] sm:$0xff]
      %v261 = vld [vmem:[%s227 + $0xb0] sm:$0xff]
      %v262 = vld [vmem:[%s227 + $0xb8] sm:$0xff]
      %v263 = vld [vmem:[%s227 + $0xc0] sm:$0xff]
      %v264 = vld [vmem:[%s227 + $0xc8] sm:$0xff]
      %v265 = vld [vmem:[%s227 + $0xd0] sm:$0xff]
      %v266 = vld [vmem:[%s227 + $0xd8] sm:$0xff]
      %v267 = vld [vmem:[%s227 + $0xe0] sm:$0xff]
      %v268 = vld [vmem:[%s227 + $0xe8] sm:$0xff]
      %v269 = vld [vmem:[%s227 + $0xf0] sm:$0xff]
      %v270 = vld [vmem:[%s227 + $0xf8] sm:$0xff]
      %v271 = vld [vmem:[%s1] sm:$0x1]
      %v273 = vlaneseq
      %v274 = vshrl.u32 %v273, 7
      %v275 = vsub.s32 0, %v274
      %v276 = vrot.slane %v271, %v275
      %v278 = vmul.f32 %v239, %v276
      %v279 = vmul.f32 %v240, %v276
      %v280 = vmul.f32 %v241, %v276
      %v281 = vmul.f32 %v242, %v276
      %v282 = vmul.f32 %v243, %v276
      %v283 = vmul.f32 %v244, %v276
      %v284 = vmul.f32 %v245, %v276
      %v285 = vmul.f32 %v246, %v276
      %v286 = vmul.f32 %v247, %v276
      %v287 = vmul.f32 %v248, %v276
      %v288 = vmul.f32 %v249, %v276
      %v289 = vmul.f32 %v250, %v276
      %v290 = vmul.f32 %v251, %v276
      %v291 = vmul.f32 %v252, %v276
      %v292 = vmul.f32 %v253, %v276
      %v293 = vmul.f32 %v254, %v276
      %v294 = vmul.f32 %v255, %v276
      %v295 = vmul.f32 %v256, %v276
      %v296 = vmul.f32 %v257, %v276
      %v297 = vmul.f32 %v258, %v276
      %v298 = vmul.f32 %v259, %v276
      %v299 = vmul.f32 %v260, %v276
      %v300 = vmul.f32 %v261, %v276
      %v301 = vmul.f32 %v262, %v276
      %v302 = vmul.f32 %v263, %v276
      %v303 = vmul.f32 %v264, %v276
      %v304 = vmul.f32 %v265, %v276
      %v305 = vmul.f32 %v266, %v276
      %v306 = vmul.f32 %v267, %v276
      %v307 = vmul.f32 %v268, %v276
      %v308 = vmul.f32 %v269, %v276
      %v309 = vmul.f32 %v270, %v276
      %v310 = vld [vmem:[%s2] sm:$0x1]
      %v312 = vlaneseq
      %v313 = vshrl.u32 %v312, 7
      %v314 = vsub.s32 0, %v313
      %v315 = vrot.slane %v310, %v314
      %v317 = vadd.f32 %v278, %v315
      %v318 = vadd.f32 %v279, %v315
      %v319 = vadd.f32 %v280, %v315
      %v320 = vadd.f32 %v281, %v315
      %v321 = vadd.f32 %v282, %v315
      %v322 = vadd.f32 %v283, %v315
      %v323 = vadd.f32 %v284, %v315
      %v324 = vadd.f32 %v285, %v315
      %v325 = vadd.f32 %v286, %v315
      %v326 = vadd.f32 %v287, %v315
      %v327 = vadd.f32 %v288, %v315
      %v328 = vadd.f32 %v289, %v315
      %v329 = vadd.f32 %v290, %v315
      %v330 = vadd.f32 %v291, %v315
      %v331 = vadd.f32 %v292, %v315
      %v332 = vadd.f32 %v293, %v315
      %v333 = vadd.f32 %v294, %v315
      %v334 = vadd.f32 %v295, %v315
      %v335 = vadd.f32 %v296, %v315
      %v336 = vadd.f32 %v297, %v315
      %v337 = vadd.f32 %v298, %v315
      %v338 = vadd.f32 %v299, %v315
      %v339 = vadd.f32 %v300, %v315
      %v340 = vadd.f32 %v301, %v315
      %v341 = vadd.f32 %v302, %v315
      %v342 = vadd.f32 %v303, %v315
      %v343 = vadd.f32 %v304, %v315
      %v344 = vadd.f32 %v305, %v315
      %v345 = vadd.f32 %v306, %v315
      %v346 = vadd.f32 %v307, %v315
      %v347 = vadd.f32 %v308, %v315
      %v348 = vadd.f32 %v309, %v315
      %v349 = vxor.u32 %v317, 2147483648
      %v350 = vxor.u32 %v318, 2147483648
      %v351 = vxor.u32 %v319, 2147483648
      %v352 = vxor.u32 %v320, 2147483648
      %v353 = vxor.u32 %v321, 2147483648
      %v354 = vxor.u32 %v322, 2147483648
      %v355 = vxor.u32 %v323, 2147483648
      %v356 = vxor.u32 %v324, 2147483648
      %v357 = vxor.u32 %v325, 2147483648
      %v358 = vxor.u32 %v326, 2147483648
      %v359 = vxor.u32 %v327, 2147483648
      %v360 = vxor.u32 %v328, 2147483648
      %v361 = vxor.u32 %v329, 2147483648
      %v362 = vxor.u32 %v330, 2147483648
      %v363 = vxor.u32 %v331, 2147483648
      %v364 = vxor.u32 %v332, 2147483648
      %v365 = vxor.u32 %v333, 2147483648
      %v366 = vxor.u32 %v334, 2147483648
      %v367 = vxor.u32 %v335, 2147483648
      %v368 = vxor.u32 %v336, 2147483648
      %v369 = vxor.u32 %v337, 2147483648
      %v370 = vxor.u32 %v338, 2147483648
      %v371 = vxor.u32 %v339, 2147483648
      %v372 = vxor.u32 %v340, 2147483648
      %v373 = vxor.u32 %v341, 2147483648
      %v374 = vxor.u32 %v342, 2147483648
      %v375 = vxor.u32 %v343, 2147483648
      %v376 = vxor.u32 %v344, 2147483648
      %v377 = vxor.u32 %v345, 2147483648
      %v378 = vxor.u32 %v346, 2147483648
      %v379 = vxor.u32 %v347, 2147483648
      %v380 = vxor.u32 %v348, 2147483648
      %v381 = vmul.f32 %v349, 1.442695
      %v382 = vpow.pop %v381
      %v383 = vmul.f32 %v350, 1.442695
      %v384 = vpow.pop %v383
      %v385 = vmul.f32 %v351, 1.442695
      %v386 = vpow.pop %v385
      %v387 = vmul.f32 %v352, 1.442695
      %v388 = vpow.pop %v387
      %v389 = vmul.f32 %v353, 1.442695
      %v390 = vpow.pop %v389
      %v391 = vmul.f32 %v354, 1.442695
      %v392 = vpow.pop %v391
      %v393 = vmul.f32 %v355, 1.442695
      %v394 = vpow.pop %v393
      %v395 = vmul.f32 %v356, 1.442695
      %v396 = vpow.pop %v395
      %v397 = vmul.f32 %v357, 1.442695
      %v398 = vpow.pop %v397
      %v399 = vmul.f32 %v358, 1.442695
      %v400 = vpow.pop %v399
      %v401 = vmul.f32 %v359, 1.442695
      %v402 = vpow.pop %v401
      %v403 = vmul.f32 %v360, 1.442695
      %v404 = vpow.pop %v403
      %v405 = vmul.f32 %v361, 1.442695
      %v406 = vpow.pop %v405
      %v407 = vmul.f32 %v362, 1.442695
      %v408 = vpow.pop %v407
      %v409 = vmul.f32 %v363, 1.442695
      %v410 = vpow.pop %v409
      %v411 = vmul.f32 %v364, 1.442695
      %v412 = vpow.pop %v411
      %v413 = vmul.f32 %v365, 1.442695
      %v414 = vpow.pop %v413
      %v415 = vmul.f32 %v366, 1.442695
      %v416 = vpow.pop %v415
      %v417 = vmul.f32 %v367, 1.442695
      %v418 = vpow.pop %v417
      %v419 = vmul.f32 %v368, 1.442695
      %v420 = vpow.pop %v419
      %v421 = vmul.f32 %v369, 1.442695
      %v422 = vpow.pop %v421
      %v423 = vmul.f32 %v370, 1.442695
      %v424 = vpow.pop %v423
      %v425 = vmul.f32 %v371, 1.442695
      %v426 = vpow.pop %v425
      %v427 = vmul.f32 %v372, 1.442695
      %v428 = vpow.pop %v427
      %v429 = vmul.f32 %v373, 1.442695
      %v430 = vpow.pop %v429
      %v431 = vmul.f32 %v374, 1.442695
      %v432 = vpow.pop %v431
      %v433 = vmul.f32 %v375, 1.442695
      %v434 = vpow.pop %v433
      %v435 = vmul.f32 %v376, 1.442695
      %v436 = vpow.pop %v435
      %v437 = vmul.f32 %v377, 1.442695
      %v438 = vpow.pop %v437
      %v439 = vmul.f32 %v378, 1.442695
      %v440 = vpow.pop %v439
      %v441 = vmul.f32 %v379, 1.442695
      %v442 = vpow.pop %v441
      %v443 = vmul.f32 %v380, 1.442695
      %v444 = vpow.pop %v443
      %v445 = vadd.f32 %v382, 1.0
      %v446 = vadd.f32 %v384, 1.0
      %v447 = vadd.f32 %v386, 1.0
      %v448 = vadd.f32 %v388, 1.0
      %v449 = vadd.f32 %v390, 1.0
      %v450 = vadd.f32 %v392, 1.0
      %v451 = vadd.f32 %v394, 1.0
      %v452 = vadd.f32 %v396, 1.0
      %v453 = vadd.f32 %v398, 1.0
      %v454 = vadd.f32 %v400, 1.0
      %v455 = vadd.f32 %v402, 1.0
      %v456 = vadd.f32 %v404, 1.0
      %v457 = vadd.f32 %v406, 1.0
      %v458 = vadd.f32 %v408, 1.0
      %v459 = vadd.f32 %v410, 1.0
      %v460 = vadd.f32 %v412, 1.0
      %v461 = vadd.f32 %v414, 1.0
      %v462 = vadd.f32 %v416, 1.0
      %v463 = vadd.f32 %v418, 1.0
      %v464 = vadd.f32 %v420, 1.0
      %v465 = vadd.f32 %v422, 1.0
      %v466 = vadd.f32 %v424, 1.0
      %v467 = vadd.f32 %v426, 1.0
      %v468 = vadd.f32 %v428, 1.0
      %v469 = vadd.f32 %v430, 1.0
      %v470 = vadd.f32 %v432, 1.0
      %v471 = vadd.f32 %v434, 1.0
      %v472 = vadd.f32 %v436, 1.0
      %v473 = vadd.f32 %v438, 1.0
      %v474 = vadd.f32 %v440, 1.0
      %v475 = vadd.f32 %v442, 1.0
      %v476 = vadd.f32 %v444, 1.0
      %v477 = vrcp.pop %v445
      %v478 = vmul.f32 1.0, %v477
      %v479 = vrcp.pop %v446
      %v480 = vmul.f32 1.0, %v479
      %v481 = vrcp.pop %v447
      %v482 = vmul.f32 1.0, %v481
      %v483 = vrcp.pop %v448
      %v484 = vmul.f32 1.0, %v483
      %v485 = vrcp.pop %v449
      %v486 = vmul.f32 1.0, %v485
      %v487 = vrcp.pop %v450
      %v488 = vmul.f32 1.0, %v487
      %v489 = vrcp.pop %v451
      %v490 = vmul.f32 1.0, %v489
      %v491 = vrcp.pop %v452
      %v492 = vmul.f32 1.0, %v491
      %v493 = vrcp.pop %v453
      %v494 = vmul.f32 1.0, %v493
      %v495 = vrcp.pop %v454
      %v496 = vmul.f32 1.0, %v495
      %v497 = vrcp.pop %v455
      %v498 = vmul.f32 1.0, %v497
      %v499 = vrcp.pop %v456
      %v500 = vmul.f32 1.0, %v499
      %v501 = vrcp.pop %v457
      %v502 = vmul.f32 1.0, %v501
      %v503 = vrcp.pop %v458
      %v504 = vmul.f32 1.0, %v503
      %v505 = vrcp.pop %v459
      %v506 = vmul.f32 1.0, %v505
      %v507 = vrcp.pop %v460
      %v508 = vmul.f32 1.0, %v507
      %v509 = vrcp.pop %v461
      %v510 = vmul.f32 1.0, %v509
      %v511 = vrcp.pop %v462
      %v512 = vmul.f32 1.0, %v511
      %v513 = vrcp.pop %v463
      %v514 = vmul.f32 1.0, %v513
      %v515 = vrcp.pop %v464
      %v516 = vmul.f32 1.0, %v515
      %v517 = vrcp.pop %v465
      %v518 = vmul.f32 1.0, %v517
      %v519 = vrcp.pop %v466
      %v520 = vmul.f32 1.0, %v519
      %v521 = vrcp.pop %v467
      %v522 = vmul.f32 1.0, %v521
      %v523 = vrcp.pop %v468
      %v524 = vmul.f32 1.0, %v523
      %v525 = vrcp.pop %v469
      %v526 = vmul.f32 1.0, %v525
      %v527 = vrcp.pop %v470
      %v528 = vmul.f32 1.0, %v527
      %v529 = vrcp.pop %v471
      %v530 = vmul.f32 1.0, %v529
      %v531 = vrcp.pop %v472
      %v532 = vmul.f32 1.0, %v531
      %v533 = vrcp.pop %v473
      %v534 = vmul.f32 1.0, %v533
      %v535 = vrcp.pop %v474
      %v536 = vmul.f32 1.0, %v535
      %v537 = vrcp.pop %v475
      %v538 = vmul.f32 1.0, %v537
      %v539 = vrcp.pop %v476
      %v540 = vmul.f32 1.0, %v539
      %v541 = vmul.f32 %v317, %v478
      %v542 = vmul.f32 %v318, %v480
      %v543 = vmul.f32 %v319, %v482
      %v544 = vmul.f32 %v320, %v484
      %v545 = vmul.f32 %v321, %v486
      %v546 = vmul.f32 %v322, %v488
      %v547 = vmul.f32 %v323, %v490
      %v548 = vmul.f32 %v324, %v492
      %v549 = vmul.f32 %v325, %v494
      %v550 = vmul.f32 %v326, %v496
      %v551 = vmul.f32 %v327, %v498
      %v552 = vmul.f32 %v328, %v500
      %v553 = vmul.f32 %v329, %v502
      %v554 = vmul.f32 %v330, %v504
      %v555 = vmul.f32 %v331, %v506
      %v556 = vmul.f32 %v332, %v508
      %v557 = vmul.f32 %v333, %v510
      %v558 = vmul.f32 %v334, %v512
      %v559 = vmul.f32 %v335, %v514
      %v560 = vmul.f32 %v336, %v516
      %v561 = vmul.f32 %v337, %v518
      %v562 = vmul.f32 %v338, %v520
      %v563 = vmul.f32 %v339, %v522
      %v564 = vmul.f32 %v340, %v524
      %v565 = vmul.f32 %v341, %v526
      %v566 = vmul.f32 %v342, %v528
      %v567 = vmul.f32 %v343, %v530
      %v568 = vmul.f32 %v344, %v532
      %v569 = vmul.f32 %v345, %v534
      %v570 = vmul.f32 %v346, %v536
      %v571 = vmul.f32 %v347, %v538
      %v572 = vmul.f32 %v348, %v540
      %vm573 = vcmask 64512
      %574 = vst.msk [vmem:[#allocation2] sm:$0xff] %vm573, 0.0
      %575 = vst.msk [vmem:[#allocation2 + $0x8] sm:$0xff] %vm573, 0.0
      %vm576 = vcmask 58368
      %577 = vst.msk [vmem:[#allocation2 + $0x10] sm:$0x3] %vm576, 0.0
      %s578 = scalar_lea.vmem [#allocation2], 408
      %579 = vst.msk [vmem:[%s578] sm:$0xff] %vm573, 0.0
      %580 = vst.msk [vmem:[%s578 + $0x8] sm:$0xff] %vm573, 0.0
      %581 = vst.msk [vmem:[%s578 + $0x10] sm:$0x3] %vm576, 0.0
      %s582 = scalar_lea.vmem [#allocation2], 24
      %vm583 = vcmask 57344
      %584 = vst.msk [vmem:[%s582] sm:$0x1] %vm583, 0.0
      %585 = vst.msk [vmem:[%s582 + $0x18] sm:$0x1] %vm583, 0.0
      %586 = vst.msk [vmem:[%s582 + $0x30] sm:$0x1] %vm583, 0.0
      %587 = vst.msk [vmem:[%s582 + $0x48] sm:$0x1] %vm583, 0.0
      %588 = vst.msk [vmem:[%s582 + $0x60] sm:$0x1] %vm583, 0.0
      %589 = vst.msk [vmem:[%s582 + $0x78] sm:$0x1] %vm583, 0.0
      %590 = vst.msk [vmem:[%s582 + $0x90] sm:$0x1] %vm583, 0.0
      %591 = vst.msk [vmem:[%s582 + $0xa8] sm:$0x1] %vm583, 0.0
      %592 = vst.msk [vmem:[%s582 + $0xc0] sm:$0x1] %vm583, 0.0
      %593 = vst.msk [vmem:[%s582 + $0xd8] sm:$0x1] %vm583, 0.0
      %594 = vst.msk [vmem:[%s582 + $0xf0] sm:$0x1] %vm583, 0.0
      %595 = vst.msk [vmem:[%s582 + $0x108] sm:$0x1] %vm583, 0.0
      %596 = vst.msk [vmem:[%s582 + $0x120] sm:$0x1] %vm583, 0.0
      %597 = vst.msk [vmem:[%s582 + $0x138] sm:$0x1] %vm583, 0.0
      %598 = vst.msk [vmem:[%s582 + $0x150] sm:$0x1] %vm583, 0.0
      %599 = vst.msk [vmem:[%s582 + $0x168] sm:$0x1] %vm583, 0.0
      %600 = vst.msk [vmem:[%s582 + $0x11] sm:$0x1] %vm583, 0.0
      %601 = vst.msk [vmem:[%s582 + $0x29] sm:$0x1] %vm583, 0.0
      %602 = vst.msk [vmem:[%s582 + $0x41] sm:$0x1] %vm583, 0.0
      %603 = vst.msk [vmem:[%s582 + $0x59] sm:$0x1] %vm583, 0.0
      %604 = vst.msk [vmem:[%s582 + $0x71] sm:$0x1] %vm583, 0.0
      %605 = vst.msk [vmem:[%s582 + $0x89] sm:$0x1] %vm583, 0.0
      %606 = vst.msk [vmem:[%s582 + $0xa1] sm:$0x1] %vm583, 0.0
      %607 = vst.msk [vmem:[%s582 + $0xb9] sm:$0x1] %vm583, 0.0
      %608 = vst.msk [vmem:[%s582 + $0xd1] sm:$0x1] %vm583, 0.0
      %609 = vst.msk [vmem:[%s582 + $0xe9] sm:$0x1] %vm583, 0.0
      %610 = vst.msk [vmem:[%s582 + $0x101] sm:$0x1] %vm583, 0.0
      %611 = vst.msk [vmem:[%s582 + $0x119] sm:$0x1] %vm583, 0.0
      %612 = vst.msk [vmem:[%s582 + $0x131] sm:$0x1] %vm583, 0.0
      %613 = vst.msk [vmem:[%s582 + $0x149] sm:$0x1] %vm583, 0.0
      %614 = vst.msk [vmem:[%s582 + $0x161] sm:$0x1] %vm583, 0.0
      %615 = vst.msk [vmem:[%s582 + $0x179] sm:$0x1] %vm583, 0.0
      %616 = vst.msk [vmem:[%s582 + $0x1] sm:$0xff] %vm573, %v541
      %617 = vst.msk [vmem:[%s582 + $0x9] sm:$0xff] %vm573, %v542
      %618 = vst.msk [vmem:[%s582 + $0x19] sm:$0xff] %vm573, %v543
      %619 = vst.msk [vmem:[%s582 + $0x21] sm:$0xff] %vm573, %v544
      %620 = vst.msk [vmem:[%s582 + $0x31] sm:$0xff] %vm573, %v545
      %621 = vst.msk [vmem:[%s582 + $0x39] sm:$0xff] %vm573, %v546
      %622 = vst.msk [vmem:[%s582 + $0x49] sm:$0xff] %vm573, %v547
      %623 = vst.msk [vmem:[%s582 + $0x51] sm:$0xff] %vm573, %v548
      %624 = vst.msk [vmem:[%s582 + $0x61] sm:$0xff] %vm573, %v549
      %625 = vst.msk [vmem:[%s582 + $0x69] sm:$0xff] %vm573, %v550
      %626 = vst.msk [vmem:[%s582 + $0x79] sm:$0xff] %vm573, %v551
      %627 = vst.msk [vmem:[%s582 + $0x81] sm:$0xff] %vm573, %v552
      %628 = vst.msk [vmem:[%s582 + $0x91] sm:$0xff] %vm573, %v553
      %629 = vst.msk [vmem:[%s582 + $0x99] sm:$0xff] %vm573, %v554
      %630 = vst.msk [vmem:[%s582 + $0xa9] sm:$0xff] %vm573, %v555
      %631 = vst.msk [vmem:[%s582 + $0xb1] sm:$0xff] %vm573, %v556
      %632 = vst.msk [vmem:[%s582 + $0xc1] sm:$0xff] %vm573, %v557
      %633 = vst.msk [vmem:[%s582 + $0xc9] sm:$0xff] %vm573, %v558
      %634 = vst.msk [vmem:[%s582 + $0xd9] sm:$0xff] %vm573, %v559
      %635 = vst.msk [vmem:[%s582 + $0xe1] sm:$0xff] %vm573, %v560
      %636 = vst.msk [vmem:[%s582 + $0xf1] sm:$0xff] %vm573, %v561
      %637 = vst.msk [vmem:[%s582 + $0xf9] sm:$0xff] %vm573, %v562
      %638 = vst.msk [vmem:[%s582 + $0x109] sm:$0xff] %vm573, %v563
      %639 = vst.msk [vmem:[%s582 + $0x111] sm:$0xff] %vm573, %v564
      %640 = vst.msk [vmem:[%s582 + $0x121] sm:$0xff] %vm573, %v565
      %641 = vst.msk [vmem:[%s582 + $0x129] sm:$0xff] %vm573, %v566
      %642 = vst.msk [vmem:[%s582 + $0x139] sm:$0xff] %vm573, %v567
      %643 = vst.msk [vmem:[%s582 + $0x141] sm:$0xff] %vm573, %v568
      %644 = vst.msk [vmem:[%s582 + $0x151] sm:$0xff] %vm573, %v569
      %645 = vst.msk [vmem:[%s582 + $0x159] sm:$0xff] %vm573, %v570
      %646 = vst.msk [vmem:[%s582 + $0x169] sm:$0xff] %vm573, %v571
      %647 = vst.msk [vmem:[%s582 + $0x171] sm:$0xff] %vm573, %v572
      %v648 = vld [vmem:[#allocation2] sm:$0xff]
      %v649 = vld [vmem:[#allocation2 + $0x8] sm:$0xff]
      %v650 = vld [vmem:[#allocation2 + $0x18] sm:$0xff]
      %v651 = vld [vmem:[#allocation2 + $0x20] sm:$0xff]
      %v652 = vld [vmem:[#allocation2 + $0x30] sm:$0xff]
      %v653 = vld [vmem:[#allocation2 + $0x38] sm:$0xff]
      %v654 = vld [vmem:[#allocation2 + $0x48] sm:$0xff]
      %v655 = vld [vmem:[#allocation2 + $0x50] sm:$0xff]
      %v656 = vld [vmem:[#allocation2 + $0x60] sm:$0xff]
      %v657 = vld [vmem:[#allocation2 + $0x68] sm:$0xff]
      %v658 = vld [vmem:[#allocation2 + $0x78] sm:$0xff]
      %v659 = vld [vmem:[#allocation2 + $0x80] sm:$0xff]
      %v660 = vld [vmem:[#allocation2 + $0x90] sm:$0xff]
      %v661 = vld [vmem:[#allocation2 + $0x98] sm:$0xff]
      %v662 = vld [vmem:[#allocation2 + $0xa8] sm:$0xff]
      %v663 = vld [vmem:[#allocation2 + $0xb0] sm:$0xff]
      %v664 = vld [vmem:[#allocation2 + $0xc0] sm:$0xff]
      %v665 = vld [vmem:[#allocation2 + $0xc8] sm:$0xff]
      %v666 = vld [vmem:[#allocation2 + $0xd8] sm:$0xff]
      %v667 = vld [vmem:[#allocation2 + $0xe0] sm:$0xff]
      %v668 = vld [vmem:[#allocation2 + $0xf0] sm:$0xff]
      %v669 = vld [vmem:[#allocation2 + $0xf8] sm:$0xff]
      %v670 = vld [vmem:[#allocation2 + $0x108] sm:$0xff]
      %v671 = vld [vmem:[#allocation2 + $0x110] sm:$0xff]
      %v672 = vld [vmem:[#allocation2 + $0x120] sm:$0xff]
      %v673 = vld [vmem:[#allocation2 + $0x128] sm:$0xff]
      %v674 = vld [vmem:[#allocation2 + $0x138] sm:$0xff]
      %v675 = vld [vmem:[#allocation2 + $0x140] sm:$0xff]
      %v676 = vld [vmem:[#allocation2 + $0x150] sm:$0xff]
      %v677 = vld [vmem:[#allocation2 + $0x158] sm:$0xff]
      %v678 = vld [vmem:[#allocation2 + $0x168] sm:$0xff]
      %v679 = vld [vmem:[#allocation2 + $0x170] sm:$0xff]
      %680 = vst.msk [vmem:[#allocation3] sm:$0xff] %vm573, %v648
      %681 = vst.msk [vmem:[#allocation3 + $0x8] sm:$0xff] %vm573, %v649
      %682 = vst.msk [vmem:[#allocation3 + $0x10] sm:$0xff] %vm573, %v650
      %683 = vst.msk [vmem:[#allocation3 + $0x18] sm:$0xff] %vm573, %v651
      %684 = vst.msk [vmem:[#allocation3 + $0x20] sm:$0xff] %vm573, %v652
      %685 = vst.msk [vmem:[#allocation3 + $0x28] sm:$0xff] %vm573, %v653
      %686 = vst.msk [vmem:[#allocation3 + $0x30] sm:$0xff] %vm573, %v654
      %687 = vst.msk [vmem:[#allocation3 + $0x38] sm:$0xff] %vm573, %v655
      %688 = vst.msk [vmem:[#allocation3 + $0x40] sm:$0xff] %vm573, %v656
      %689 = vst.msk [vmem:[#allocation3 + $0x48] sm:$0xff] %vm573, %v657
      %690 = vst.msk [vmem:[#allocation3 + $0x50] sm:$0xff] %vm573, %v658
      %691 = vst.msk [vmem:[#allocation3 + $0x58] sm:$0xff] %vm573, %v659
      %692 = vst.msk [vmem:[#allocation3 + $0x60] sm:$0xff] %vm573, %v660
      %693 = vst.msk [vmem:[#allocation3 + $0x68] sm:$0xff] %vm573, %v661
      %694 = vst.msk [vmem:[#allocation3 + $0x70] sm:$0xff] %vm573, %v662
      %695 = vst.msk [vmem:[#allocation3 + $0x78] sm:$0xff] %vm573, %v663
      %696 = vst.msk [vmem:[#allocation3 + $0x80] sm:$0xff] %vm573, %v664
      %697 = vst.msk [vmem:[#allocation3 + $0x88] sm:$0xff] %vm573, %v665
      %698 = vst.msk [vmem:[#allocation3 + $0x90] sm:$0xff] %vm573, %v666
      %699 = vst.msk [vmem:[#allocation3 + $0x98] sm:$0xff] %vm573, %v667
      %700 = vst.msk [vmem:[#allocation3 + $0xa0] sm:$0xff] %vm573, %v668
      %701 = vst.msk [vmem:[#allocation3 + $0xa8] sm:$0xff] %vm573, %v669
      %702 = vst.msk [vmem:[#allocation3 + $0xb0] sm:$0xff] %vm573, %v670
      %703 = vst.msk [vmem:[#allocation3 + $0xb8] sm:$0xff] %vm573, %v671
      %704 = vst.msk [vmem:[#allocation3 + $0xc0] sm:$0xff] %vm573, %v672
      %705 = vst.msk [vmem:[#allocation3 + $0xc8] sm:$0xff] %vm573, %v673
      %706 = vst.msk [vmem:[#allocation3 + $0xd0] sm:$0xff] %vm573, %v674
      %707 = vst.msk [vmem:[#allocation3 + $0xd8] sm:$0xff] %vm573, %v675
      %708 = vst.msk [vmem:[#allocation3 + $0xe0] sm:$0xff] %vm573, %v676
      %709 = vst.msk [vmem:[#allocation3 + $0xe8] sm:$0xff] %vm573, %v677
      %710 = vst.msk [vmem:[#allocation3 + $0xf0] sm:$0xff] %vm573, %v678
      %711 = vst.msk [vmem:[#allocation3 + $0xf8] sm:$0xff] %vm573, %v679
      %v712 = vld [vmem:[#allocation2 + $0x1] sm:$0xff]
      %v713 = vld [vmem:[#allocation2 + $0x9] sm:$0xff]
      %v714 = vld [vmem:[#allocation2 + $0x19] sm:$0xff]
      %v715 = vld [vmem:[#allocation2 + $0x21] sm:$0xff]
      %v716 = vld [vmem:[#allocation2 + $0x31] sm:$0xff]
      %v717 = vld [vmem:[#allocation2 + $0x39] sm:$0xff]
      %v718 = vld [vmem:[#allocation2 + $0x49] sm:$0xff]
      %v719 = vld [vmem:[#allocation2 + $0x51] sm:$0xff]
      %v720 = vld [vmem:[#allocation2 + $0x61] sm:$0xff]
      %v721 = vld [vmem:[#allocation2 + $0x69] sm:$0xff]
      %v722 = vld [vmem:[#allocation2 + $0x79] sm:$0xff]
      %v723 = vld [vmem:[#allocation2 + $0x81] sm:$0xff]
      %v724 = vld [vmem:[#allocation2 + $0x91] sm:$0xff]
      %v725 = vld [vmem:[#allocation2 + $0x99] sm:$0xff]
      %v726 = vld [vmem:[#allocation2 + $0xa9] sm:$0xff]
      %v727 = vld [vmem:[#allocation2 + $0xb1] sm:$0xff]
      %v728 = vld [vmem:[#allocation2 + $0xc1] sm:$0xff]
      %v729 = vld [vmem:[#allocation2 + $0xc9] sm:$0xff]
      %v730 = vld [vmem:[#allocation2 + $0xd9] sm:$0xff]
      %v731 = vld [vmem:[#allocation2 + $0xe1] sm:$0xff]
      %v732 = vld [vmem:[#allocation2 + $0xf1] sm:$0xff]
      %v733 = vld [vmem:[#allocation2 + $0xf9] sm:$0xff]
      %v734 = vld [vmem:[#allocation2 + $0x109] sm:$0xff]
      %v735 = vld [vmem:[#allocation2 + $0x111] sm:$0xff]
      %v736 = vld [vmem:[#allocation2 + $0x121] sm:$0xff]
      %v737 = vld [vmem:[#allocation2 + $0x129] sm:$0xff]
      %v738 = vld [vmem:[#allocation2 + $0x139] sm:$0xff]
      %v739 = vld [vmem:[#allocation2 + $0x141] sm:$0xff]
      %v740 = vld [vmem:[#allocation2 + $0x151] sm:$0xff]
      %v741 = vld [vmem:[#allocation2 + $0x159] sm:$0xff]
      %v742 = vld [vmem:[#allocation2 + $0x169] sm:$0xff]
      %v743 = vld [vmem:[#allocation2 + $0x171] sm:$0xff]
      %776 = vrot.lane.b32.xlu0 %v712, 8
      %v777 = vpop.permute.xlu0 %776
      %778 = vrot.lane.b32.xlu0 %v713, 8
      %v779 = vpop.permute.xlu0 %778
      %780 = vrot.lane.b32.xlu0 %v714, 8
      %v781 = vpop.permute.xlu0 %780
      %782 = vrot.lane.b32.xlu0 %v715, 8
      %v783 = vpop.permute.xlu0 %782
      %784 = vrot.lane.b32.xlu0 %v716, 8
      %v785 = vpop.permute.xlu0 %784
      %786 = vrot.lane.b32.xlu0 %v717, 8
      %v787 = vpop.permute.xlu0 %786
      %788 = vrot.lane.b32.xlu0 %v718, 8
      %v789 = vpop.permute.xlu0 %788
      %790 = vrot.lane.b32.xlu0 %v719, 8
      %v791 = vpop.permute.xlu0 %790
      %792 = vrot.lane.b32.xlu0 %v720, 8
      %v793 = vpop.permute.xlu0 %792
      %794 = vrot.lane.b32.xlu0 %v721, 8
      %v795 = vpop.permute.xlu0 %794
      %796 = vrot.lane.b32.xlu0 %v722, 8
      %v797 = vpop.permute.xlu0 %796
      %798 = vrot.lane.b32.xlu0 %v723, 8
      %v799 = vpop.permute.xlu0 %798
      %800 = vrot.lane.b32.xlu0 %v724, 8
      %v801 = vpop.permute.xlu0 %800
      %802 = vrot.lane.b32.xlu0 %v725, 8
      %v803 = vpop.permute.xlu0 %802
      %804 = vrot.lane.b32.xlu0 %v726, 8
      %v805 = vpop.permute.xlu0 %804
      %806 = vrot.lane.b32.xlu0 %v727, 8
      %v807 = vpop.permute.xlu0 %806
      %808 = vrot.lane.b32.xlu0 %v728, 8
      %v809 = vpop.permute.xlu0 %808
      %810 = vrot.lane.b32.xlu0 %v729, 8
      %v811 = vpop.permute.xlu0 %810
      %812 = vrot.lane.b32.xlu0 %v730, 8
      %v813 = vpop.permute.xlu0 %812
      %814 = vrot.lane.b32.xlu0 %v731, 8
      %v815 = vpop.permute.xlu0 %814
      %816 = vrot.lane.b32.xlu0 %v732, 8
      %v817 = vpop.permute.xlu0 %816
      %818 = vrot.lane.b32.xlu0 %v733, 8
      %v819 = vpop.permute.xlu0 %818
      %820 = vrot.lane.b32.xlu0 %v734, 8
      %v821 = vpop.permute.xlu0 %820
      %822 = vrot.lane.b32.xlu0 %v735, 8
      %v823 = vpop.permute.xlu0 %822
      %824 = vrot.lane.b32.xlu0 %v736, 8
      %v825 = vpop.permute.xlu0 %824
      %826 = vrot.lane.b32.xlu0 %v737, 8
      %v827 = vpop.permute.xlu0 %826
      %828 = vrot.lane.b32.xlu0 %v738, 8
      %v829 = vpop.permute.xlu0 %828
      %830 = vrot.lane.b32.xlu0 %v739, 8
      %v831 = vpop.permute.xlu0 %830
      %832 = vrot.lane.b32.xlu0 %v740, 8
      %v833 = vpop.permute.xlu0 %832
      %834 = vrot.lane.b32.xlu0 %v741, 8
      %v835 = vpop.permute.xlu0 %834
      %836 = vrot.lane.b32.xlu0 %v742, 8
      %v837 = vpop.permute.xlu0 %836
      %838 = vrot.lane.b32.xlu0 %v743, 8
      %v839 = vpop.permute.xlu0 %838
      %vm872 = vcmask 130112
      %873 = vst.msk [vmem:[#allocation3] sm:$0xff] %vm872, %v777
      %874 = vst.msk [vmem:[#allocation3 + $0x8] sm:$0xff] %vm872, %v779
      %875 = vst.msk [vmem:[#allocation3 + $0x10] sm:$0xff] %vm872, %v781
      %876 = vst.msk [vmem:[#allocation3 + $0x18] sm:$0xff] %vm872, %v783
      %877 = vst.msk [vmem:[#allocation3 + $0x20] sm:$0xff] %vm872, %v785
      %878 = vst.msk [vmem:[#allocation3 + $0x28] sm:$0xff] %vm872, %v787
      %879 = vst.msk [vmem:[#allocation3 + $0x30] sm:$0xff] %vm872, %v789
      %880 = vst.msk [vmem:[#allocation3 + $0x38] sm:$0xff] %vm872, %v791
      %881 = vst.msk [vmem:[#allocation3 + $0x40] sm:$0xff] %vm872, %v793
      %882 = vst.msk [vmem:[#allocation3 + $0x48] sm:$0xff] %vm872, %v795
      %883 = vst.msk [vmem:[#allocation3 + $0x50] sm:$0xff] %vm872, %v797
      %884 = vst.msk [vmem:[#allocation3 + $0x58] sm:$0xff] %vm872, %v799
      %885 = vst.msk [vmem:[#allocation3 + $0x60] sm:$0xff] %vm872, %v801
      %886 = vst.msk [vmem:[#allocation3 + $0x68] sm:$0xff] %vm872, %v803
      %887 = vst.msk [vmem:[#allocation3 + $0x70] sm:$0xff] %vm872, %v805
      %888 = vst.msk [vmem:[#allocation3 + $0x78] sm:$0xff] %vm872, %v807
      %889 = vst.msk [vmem:[#allocation3 + $0x80] sm:$0xff] %vm872, %v809
      %890 = vst.msk [vmem:[#allocation3 + $0x88] sm:$0xff] %vm872, %v811
      %891 = vst.msk [vmem:[#allocation3 + $0x90] sm:$0xff] %vm872, %v813
      %892 = vst.msk [vmem:[#allocation3 + $0x98] sm:$0xff] %vm872, %v815
      %893 = vst.msk [vmem:[#allocation3 + $0xa0] sm:$0xff] %vm872, %v817
      %894 = vst.msk [vmem:[#allocation3 + $0xa8] sm:$0xff] %vm872, %v819
      %895 = vst.msk [vmem:[#allocation3 + $0xb0] sm:$0xff] %vm872, %v821
      %896 = vst.msk [vmem:[#allocation3 + $0xb8] sm:$0xff] %vm872, %v823
      %897 = vst.msk [vmem:[#allocation3 + $0xc0] sm:$0xff] %vm872, %v825
      %898 = vst.msk [vmem:[#allocation3 + $0xc8] sm:$0xff] %vm872, %v827
      %899 = vst.msk [vmem:[#allocation3 + $0xd0] sm:$0xff] %vm872, %v829
      %900 = vst.msk [vmem:[#allocation3 + $0xd8] sm:$0xff] %vm872, %v831
      %901 = vst.msk [vmem:[#allocation3 + $0xe0] sm:$0xff] %vm872, %v833
      %902 = vst.msk [vmem:[#allocation3 + $0xe8] sm:$0xff] %vm872, %v835
      %903 = vst.msk [vmem:[#allocation3 + $0xf0] sm:$0xff] %vm872, %v837
      %904 = vst.msk [vmem:[#allocation3 + $0xf8] sm:$0xff] %vm872, %v839
      %v905 = vld [vmem:[%s582] sm:$0xff]
      %v906 = vld [vmem:[%s582 + $0x8] sm:$0xff]
      %v907 = vld [vmem:[%s582 + $0x18] sm:$0xff]
      %v908 = vld [vmem:[%s582 + $0x20] sm:$0xff]
      %v909 = vld [vmem:[%s582 + $0x30] sm:$0xff]
      %v910 = vld [vmem:[%s582 + $0x38] sm:$0xff]
      %v911 = vld [vmem:[%s582 + $0x48] sm:$0xff]
      %v912 = vld [vmem:[%s582 + $0x50] sm:$0xff]
      %v913 = vld [vmem:[%s582 + $0x60] sm:$0xff]
      %v914 = vld [vmem:[%s582 + $0x68] sm:$0xff]
      %v915 = vld [vmem:[%s582 + $0x78] sm:$0xff]
      %v916 = vld [vmem:[%s582 + $0x80] sm:$0xff]
      %v917 = vld [vmem:[%s582 + $0x90] sm:$0xff]
      %v918 = vld [vmem:[%s582 + $0x98] sm:$0xff]
      %v919 = vld [vmem:[%s582 + $0xa8] sm:$0xff]
      %v920 = vld [vmem:[%s582 + $0xb0] sm:$0xff]
      %v921 = vld [vmem:[%s582 + $0xc0] sm:$0xff]
      %v922 = vld [vmem:[%s582 + $0xc8] sm:$0xff]
      %v923 = vld [vmem:[%s582 + $0xd8] sm:$0xff]
      %v924 = vld [vmem:[%s582 + $0xe0] sm:$0xff]
      %v925 = vld [vmem:[%s582 + $0xf0] sm:$0xff]
      %v926 = vld [vmem:[%s582 + $0xf8] sm:$0xff]
      %v927 = vld [vmem:[%s582 + $0x108] sm:$0xff]
      %v928 = vld [vmem:[%s582 + $0x110] sm:$0xff]
      %v929 = vld [vmem:[%s582 + $0x120] sm:$0xff]
      %v930 = vld [vmem:[%s582 + $0x128] sm:$0xff]
      %v931 = vld [vmem:[%s582 + $0x138] sm:$0xff]
      %v932 = vld [vmem:[%s582 + $0x140] sm:$0xff]
      %v933 = vld [vmem:[%s582 + $0x150] sm:$0xff]
      %v934 = vld [vmem:[%s582 + $0x158] sm:$0xff]
      %v935 = vld [vmem:[%s582 + $0x168] sm:$0xff]
      %v936 = vld [vmem:[%s582 + $0x170] sm:$0xff]
      %969 = vrot.lane.b32.xlu0 %v905, 16
      %v970 = vpop.permute.xlu0 %969
      %971 = vrot.lane.b32.xlu0 %v906, 16
      %v972 = vpop.permute.xlu0 %971
      %973 = vrot.lane.b32.xlu0 %v907, 16
      %v974 = vpop.permute.xlu0 %973
      %975 = vrot.lane.b32.xlu0 %v908, 16
      %v976 = vpop.permute.xlu0 %975
      %977 = vrot.lane.b32.xlu0 %v909, 16
      %v978 = vpop.permute.xlu0 %977
      %979 = vrot.lane.b32.xlu0 %v910, 16
      %v980 = vpop.permute.xlu0 %979
      %981 = vrot.lane.b32.xlu0 %v911, 16
      %v982 = vpop.permute.xlu0 %981
      %983 = vrot.lane.b32.xlu0 %v912, 16
      %v984 = vpop.permute.xlu0 %983
      %985 = vrot.lane.b32.xlu0 %v913, 16
      %v986 = vpop.permute.xlu0 %985
      %987 = vrot.lane.b32.xlu0 %v914, 16
      %v988 = vpop.permute.xlu0 %987
      %989 = vrot.lane.b32.xlu0 %v915, 16
      %v990 = vpop.permute.xlu0 %989
      %991 = vrot.lane.b32.xlu0 %v916, 16
      %v992 = vpop.permute.xlu0 %991
      %993 = vrot.lane.b32.xlu0 %v917, 16
      %v994 = vpop.permute.xlu0 %993
      %995 = vrot.lane.b32.xlu0 %v918, 16
      %v996 = vpop.permute.xlu0 %995
      %997 = vrot.lane.b32.xlu0 %v919, 16
      %v998 = vpop.permute.xlu0 %997
      %999 = vrot.lane.b32.xlu0 %v920, 16
      %v1000 = vpop.permute.xlu0 %999
      %1001 = vrot.lane.b32.xlu0 %v921, 16
      %v1002 = vpop.permute.xlu0 %1001
      %1003 = vrot.lane.b32.xlu0 %v922, 16
      %v1004 = vpop.permute.xlu0 %1003
      %1005 = vrot.lane.b32.xlu0 %v923, 16
      %v1006 = vpop.permute.xlu0 %1005
      %1007 = vrot.lane.b32.xlu0 %v924, 16
      %v1008 = vpop.permute.xlu0 %1007
      %1009 = vrot.lane.b32.xlu0 %v925, 16
      %v1010 = vpop.permute.xlu0 %1009
      %1011 = vrot.lane.b32.xlu0 %v926, 16
      %v1012 = vpop.permute.xlu0 %1011
      %1013 = vrot.lane.b32.xlu0 %v927, 16
      %v1014 = vpop.permute.xlu0 %1013
      %1015 = vrot.lane.b32.xlu0 %v928, 16
      %v1016 = vpop.permute.xlu0 %1015
      %1017 = vrot.lane.b32.xlu0 %v929, 16
      %v1018 = vpop.permute.xlu0 %1017
      %1019 = vrot.lane.b32.xlu0 %v930, 16
      %v1020 = vpop.permute.xlu0 %1019
      %1021 = vrot.lane.b32.xlu0 %v931, 16
      %v1022 = vpop.permute.xlu0 %1021
      %1023 = vrot.lane.b32.xlu0 %v932, 16
      %v1024 = vpop.permute.xlu0 %1023
      %1025 = vrot.lane.b32.xlu0 %v933, 16
      %v1026 = vpop.permute.xlu0 %1025
      %1027 = vrot.lane.b32.xlu0 %v934, 16
      %v1028 = vpop.permute.xlu0 %1027
      %1029 = vrot.lane.b32.xlu0 %v935, 16
      %v1030 = vpop.permute.xlu0 %1029
      %1031 = vrot.lane.b32.xlu0 %v936, 16
      %v1032 = vpop.permute.xlu0 %1031
      %vm1065 = vcmask 195712
      %1066 = vst.msk [vmem:[#allocation3] sm:$0xff] %vm1065, %v970
      %1067 = vst.msk [vmem:[#allocation3 + $0x8] sm:$0xff] %vm1065, %v972
      %1068 = vst.msk [vmem:[#allocation3 + $0x10] sm:$0xff] %vm1065, %v974
      %1069 = vst.msk [vmem:[#allocation3 + $0x18] sm:$0xff] %vm1065, %v976
      %1070 = vst.msk [vmem:[#allocation3 + $0x20] sm:$0xff] %vm1065, %v978
      %1071 = vst.msk [vmem:[#allocation3 + $0x28] sm:$0xff] %vm1065, %v980
      %1072 = vst.msk [vmem:[#allocation3 + $0x30] sm:$0xff] %vm1065, %v982
      %1073 = vst.msk [vmem:[#allocation3 + $0x38] sm:$0xff] %vm1065, %v984
      %1074 = vst.msk [vmem:[#allocation3 + $0x40] sm:$0xff] %vm1065, %v986
      %1075 = vst.msk [vmem:[#allocation3 + $0x48] sm:$0xff] %vm1065, %v988
      %1076 = vst.msk [vmem:[#allocation3 + $0x50] sm:$0xff] %vm1065, %v990
      %1077 = vst.msk [vmem:[#allocation3 + $0x58] sm:$0xff] %vm1065, %v992
      %1078 = vst.msk [vmem:[#allocation3 + $0x60] sm:$0xff] %vm1065, %v994
      %1079 = vst.msk [vmem:[#allocation3 + $0x68] sm:$0xff] %vm1065, %v996
      %1080 = vst.msk [vmem:[#allocation3 + $0x70] sm:$0xff] %vm1065, %v998
      %1081 = vst.msk [vmem:[#allocation3 + $0x78] sm:$0xff] %vm1065, %v1000
      %1082 = vst.msk [vmem:[#allocation3 + $0x80] sm:$0xff] %vm1065, %v1002
      %1083 = vst.msk [vmem:[#allocation3 + $0x88] sm:$0xff] %vm1065, %v1004
      %1084 = vst.msk [vmem:[#allocation3 + $0x90] sm:$0xff] %vm1065, %v1006
      %1085 = vst.msk [vmem:[#allocation3 + $0x98] sm:$0xff] %vm1065, %v1008
      %1086 = vst.msk [vmem:[#allocation3 + $0xa0] sm:$0xff] %vm1065, %v1010
      %1087 = vst.msk [vmem:[#allocation3 + $0xa8] sm:$0xff] %vm1065, %v1012
      %1088 = vst.msk [vmem:[#allocation3 + $0xb0] sm:$0xff] %vm1065, %v1014
      %1089 = vst.msk [vmem:[#allocation3 + $0xb8] sm:$0xff] %vm1065, %v1016
      %1090 = vst.msk [vmem:[#allocation3 + $0xc0] sm:$0xff] %vm1065, %v1018
      %1091 = vst.msk [vmem:[#allocation3 + $0xc8] sm:$0xff] %vm1065, %v1020
      %1092 = vst.msk [vmem:[#allocation3 + $0xd0] sm:$0xff] %vm1065, %v1022
      %1093 = vst.msk [vmem:[#allocation3 + $0xd8] sm:$0xff] %vm1065, %v1024
      %1094 = vst.msk [vmem:[#allocation3 + $0xe0] sm:$0xff] %vm1065, %v1026
      %1095 = vst.msk [vmem:[#allocation3 + $0xe8] sm:$0xff] %vm1065, %v1028
      %1096 = vst.msk [vmem:[#allocation3 + $0xf0] sm:$0xff] %vm1065, %v1030
      %1097 = vst.msk [vmem:[#allocation3 + $0xf8] sm:$0xff] %vm1065, %v1032
      %v1098 = vld [vmem:[%s582 + $0x1] sm:$0xff]
      %v1099 = vld [vmem:[%s582 + $0x9] sm:$0xff]
      %v1100 = vld [vmem:[%s582 + $0x19] sm:$0xff]
      %v1101 = vld [vmem:[%s582 + $0x21] sm:$0xff]
      %v1102 = vld [vmem:[%s582 + $0x31] sm:$0xff]
      %v1103 = vld [vmem:[%s582 + $0x39] sm:$0xff]
      %v1104 = vld [vmem:[%s582 + $0x49] sm:$0xff]
      %v1105 = vld [vmem:[%s582 + $0x51] sm:$0xff]
      %v1106 = vld [vmem:[%s582 + $0x61] sm:$0xff]
      %v1107 = vld [vmem:[%s582 + $0x69] sm:$0xff]
      %v1108 = vld [vmem:[%s582 + $0x79] sm:$0xff]
      %v1109 = vld [vmem:[%s582 + $0x81] sm:$0xff]
      %v1110 = vld [vmem:[%s582 + $0x91] sm:$0xff]
      %v1111 = vld [vmem:[%s582 + $0x99] sm:$0xff]
      %v1112 = vld [vmem:[%s582 + $0xa9] sm:$0xff]
      %v1113 = vld [vmem:[%s582 + $0xb1] sm:$0xff]
      %v1114 = vld [vmem:[%s582 + $0xc1] sm:$0xff]
      %v1115 = vld [vmem:[%s582 + $0xc9] sm:$0xff]
      %v1116 = vld [vmem:[%s582 + $0xd9] sm:$0xff]
      %v1117 = vld [vmem:[%s582 + $0xe1] sm:$0xff]
      %v1118 = vld [vmem:[%s582 + $0xf1] sm:$0xff]
      %v1119 = vld [vmem:[%s582 + $0xf9] sm:$0xff]
      %v1120 = vld [vmem:[%s582 + $0x109] sm:$0xff]
      %v1121 = vld [vmem:[%s582 + $0x111] sm:$0xff]
      %v1122 = vld [vmem:[%s582 + $0x121] sm:$0xff]
      %v1123 = vld [vmem:[%s582 + $0x129] sm:$0xff]
      %v1124 = vld [vmem:[%s582 + $0x139] sm:$0xff]
      %v1125 = vld [vmem:[%s582 + $0x141] sm:$0xff]
      %v1126 = vld [vmem:[%s582 + $0x151] sm:$0xff]
      %v1127 = vld [vmem:[%s582 + $0x159] sm:$0xff]
      %v1128 = vld [vmem:[%s582 + $0x169] sm:$0xff]
      %v1129 = vld [vmem:[%s582 + $0x171] sm:$0xff]
      %1162 = vrot.lane.b32.xlu0 %v1098, 24
      %v1163 = vpop.permute.xlu0 %1162
      %1164 = vrot.lane.b32.xlu0 %v1099, 24
      %v1165 = vpop.permute.xlu0 %1164
      %1166 = vrot.lane.b32.xlu0 %v1100, 24
      %v1167 = vpop.permute.xlu0 %1166
      %1168 = vrot.lane.b32.xlu0 %v1101, 24
      %v1169 = vpop.permute.xlu0 %1168
      %1170 = vrot.lane.b32.xlu0 %v1102, 24
      %v1171 = vpop.permute.xlu0 %1170
      %1172 = vrot.lane.b32.xlu0 %v1103, 24
      %v1173 = vpop.permute.xlu0 %1172
      %1174 = vrot.lane.b32.xlu0 %v1104, 24
      %v1175 = vpop.permute.xlu0 %1174
      %1176 = vrot.lane.b32.xlu0 %v1105, 24
      %v1177 = vpop.permute.xlu0 %1176
      %1178 = vrot.lane.b32.xlu0 %v1106, 24
      %v1179 = vpop.permute.xlu0 %1178
      %1180 = vrot.lane.b32.xlu0 %v1107, 24
      %v1181 = vpop.permute.xlu0 %1180
      %1182 = vrot.lane.b32.xlu0 %v1108, 24
      %v1183 = vpop.permute.xlu0 %1182
      %1184 = vrot.lane.b32.xlu0 %v1109, 24
      %v1185 = vpop.permute.xlu0 %1184
      %1186 = vrot.lane.b32.xlu0 %v1110, 24
      %v1187 = vpop.permute.xlu0 %1186
      %1188 = vrot.lane.b32.xlu0 %v1111, 24
      %v1189 = vpop.permute.xlu0 %1188
      %1190 = vrot.lane.b32.xlu0 %v1112, 24
      %v1191 = vpop.permute.xlu0 %1190
      %1192 = vrot.lane.b32.xlu0 %v1113, 24
      %v1193 = vpop.permute.xlu0 %1192
      %1194 = vrot.lane.b32.xlu0 %v1114, 24
      %v1195 = vpop.permute.xlu0 %1194
      %1196 = vrot.lane.b32.xlu0 %v1115, 24
      %v1197 = vpop.permute.xlu0 %1196
      %1198 = vrot.lane.b32.xlu0 %v1116, 24
      %v1199 = vpop.permute.xlu0 %1198
      %1200 = vrot.lane.b32.xlu0 %v1117, 24
      %v1201 = vpop.permute.xlu0 %1200
      %1202 = vrot.lane.b32.xlu0 %v1118, 24
      %v1203 = vpop.permute.xlu0 %1202
      %1204 = vrot.lane.b32.xlu0 %v1119, 24
      %v1205 = vpop.permute.xlu0 %1204
      %1206 = vrot.lane.b32.xlu0 %v1120, 24
      %v1207 = vpop.permute.xlu0 %1206
      %1208 = vrot.lane.b32.xlu0 %v1121, 24
      %v1209 = vpop.permute.xlu0 %1208
      %1210 = vrot.lane.b32.xlu0 %v1122, 24
      %v1211 = vpop.permute.xlu0 %1210
      %1212 = vrot.lane.b32.xlu0 %v1123, 24
      %v1213 = vpop.permute.xlu0 %1212
      %1214 = vrot.lane.b32.xlu0 %v1124, 24
      %v1215 = vpop.permute.xlu0 %1214
      %1216 = vrot.lane.b32.xlu0 %v1125, 24
      %v1217 = vpop.permute.xlu0 %1216
      %1218 = vrot.lane.b32.xlu0 %v1126, 24
      %v1219 = vpop.permute.xlu0 %1218
      %1220 = vrot.lane.b32.xlu0 %v1127, 24
      %v1221 = vpop.permute.xlu0 %1220
      %1222 = vrot.lane.b32.xlu0 %v1128, 24
      %v1223 = vpop.permute.xlu0 %1222
      %1224 = vrot.lane.b32.xlu0 %v1129, 24
      %v1225 = vpop.permute.xlu0 %1224
      %vm1258 = vcmask 261312
      %1259 = vst.msk [vmem:[#allocation3] sm:$0xff] %vm1258, %v1163
      %1260 = vst.msk [vmem:[#allocation3 + $0x8] sm:$0xff] %vm1258, %v1165
      %1261 = vst.msk [vmem:[#allocation3 + $0x10] sm:$0xff] %vm1258, %v1167
      %1262 = vst.msk [vmem:[#allocation3 + $0x18] sm:$0xff] %vm1258, %v1169
      %1263 = vst.msk [vmem:[#allocation3 + $0x20] sm:$0xff] %vm1258, %v1171
      %1264 = vst.msk [vmem:[#allocation3 + $0x28] sm:$0xff] %vm1258, %v1173
      %1265 = vst.msk [vmem:[#allocation3 + $0x30] sm:$0xff] %vm1258, %v1175
      %1266 = vst.msk [vmem:[#allocation3 + $0x38] sm:$0xff] %vm1258, %v1177
      %1267 = vst.msk [vmem:[#allocation3 + $0x40] sm:$0xff] %vm1258, %v1179
      %1268 = vst.msk [vmem:[#allocation3 + $0x48] sm:$0xff] %vm1258, %v1181
      %1269 = vst.msk [vmem:[#allocation3 + $0x50] sm:$0xff] %vm1258, %v1183
      %1270 = vst.msk [vmem:[#allocation3 + $0x58] sm:$0xff] %vm1258, %v1185
      %1271 = vst.msk [vmem:[#allocation3 + $0x60] sm:$0xff] %vm1258, %v1187
      %1272 = vst.msk [vmem:[#allocation3 + $0x68] sm:$0xff] %vm1258, %v1189
      %1273 = vst.msk [vmem:[#allocation3 + $0x70] sm:$0xff] %vm1258, %v1191
      %1274 = vst.msk [vmem:[#allocation3 + $0x78] sm:$0xff] %vm1258, %v1193
      %1275 = vst.msk [vmem:[#allocation3 + $0x80] sm:$0xff] %vm1258, %v1195
      %1276 = vst.msk [vmem:[#allocation3 + $0x88] sm:$0xff] %vm1258, %v1197
      %1277 = vst.msk [vmem:[#allocation3 + $0x90] sm:$0xff] %vm1258, %v1199
      %1278 = vst.msk [vmem:[#allocation3 + $0x98] sm:$0xff] %vm1258, %v1201
      %1279 = vst.msk [vmem:[#allocation3 + $0xa0] sm:$0xff] %vm1258, %v1203
      %1280 = vst.msk [vmem:[#allocation3 + $0xa8] sm:$0xff] %vm1258, %v1205
      %1281 = vst.msk [vmem:[#allocation3 + $0xb0] sm:$0xff] %vm1258, %v1207
      %1282 = vst.msk [vmem:[#allocation3 + $0xb8] sm:$0xff] %vm1258, %v1209
      %1283 = vst.msk [vmem:[#allocation3 + $0xc0] sm:$0xff] %vm1258, %v1211
      %1284 = vst.msk [vmem:[#allocation3 + $0xc8] sm:$0xff] %vm1258, %v1213
      %1285 = vst.msk [vmem:[#allocation3 + $0xd0] sm:$0xff] %vm1258, %v1215
      %1286 = vst.msk [vmem:[#allocation3 + $0xd8] sm:$0xff] %vm1258, %v1217
      %1287 = vst.msk [vmem:[#allocation3 + $0xe0] sm:$0xff] %vm1258, %v1219
      %1288 = vst.msk [vmem:[#allocation3 + $0xe8] sm:$0xff] %vm1258, %v1221
      %1289 = vst.msk [vmem:[#allocation3 + $0xf0] sm:$0xff] %vm1258, %v1223
      %1290 = vst.msk [vmem:[#allocation3 + $0xf8] sm:$0xff] %vm1258, %v1225
      %v1291 = vld [vmem:[#allocation3] sm:$0xff]
      %v1292 = vld [vmem:[#allocation3 + $0x8] sm:$0xff]
      %v1293 = vld [vmem:[#allocation3 + $0x10] sm:$0xff]
      %v1294 = vld [vmem:[#allocation3 + $0x18] sm:$0xff]
      %v1295 = vld [vmem:[#allocation3 + $0x20] sm:$0xff]
      %v1296 = vld [vmem:[#allocation3 + $0x28] sm:$0xff]
      %v1297 = vld [vmem:[#allocation3 + $0x30] sm:$0xff]
      %v1298 = vld [vmem:[#allocation3 + $0x38] sm:$0xff]
      %v1299 = vld [vmem:[#allocation3 + $0x40] sm:$0xff]
      %v1300 = vld [vmem:[#allocation3 + $0x48] sm:$0xff]
      %v1301 = vld [vmem:[#allocation3 + $0x50] sm:$0xff]
      %v1302 = vld [vmem:[#allocation3 + $0x58] sm:$0xff]
      %v1303 = vld [vmem:[#allocation3 + $0x60] sm:$0xff]
      %v1304 = vld [vmem:[#allocation3 + $0x68] sm:$0xff]
      %v1305 = vld [vmem:[#allocation3 + $0x70] sm:$0xff]
      %v1306 = vld [vmem:[#allocation3 + $0x78] sm:$0xff]
      %v1307 = vld [vmem:[#allocation3 + $0x80] sm:$0xff]
      %v1308 = vld [vmem:[#allocation3 + $0x88] sm:$0xff]
      %v1309 = vld [vmem:[#allocation3 + $0x90] sm:$0xff]
      %v1310 = vld [vmem:[#allocation3 + $0x98] sm:$0xff]
      %v1311 = vld [vmem:[#allocation3 + $0xa0] sm:$0xff]
      %v1312 = vld [vmem:[#allocation3 + $0xa8] sm:$0xff]
      %v1313 = vld [vmem:[#allocation3 + $0xb0] sm:$0xff]
      %v1314 = vld [vmem:[#allocation3 + $0xb8] sm:$0xff]
      %v1315 = vld [vmem:[#allocation3 + $0xc0] sm:$0xff]
      %v1316 = vld [vmem:[#allocation3 + $0xc8] sm:$0xff]
      %v1317 = vld [vmem:[#allocation3 + $0xd0] sm:$0xff]
      %v1318 = vld [vmem:[#allocation3 + $0xd8] sm:$0xff]
      %v1319 = vld [vmem:[#allocation3 + $0xe0] sm:$0xff]
      %v1320 = vld [vmem:[#allocation3 + $0xe8] sm:$0xff]
      %v1321 = vld [vmem:[#allocation3 + $0xf0] sm:$0xff]
      %v1322 = vld [vmem:[#allocation3 + $0xf8] sm:$0xff]
      %v1323 = vld [vmem:[%s3] sm:$0xff]
      %v1324 = vld [vmem:[%s3 + $0x8] sm:$0xff]
      %v1325 = vld [vmem:[%s3 + $0x10] sm:$0xff]
      %v1326 = vld [vmem:[%s3 + $0x18] sm:$0xff]
      %vm1327 = vcmask 261120
      %v1329 = vsel %vm1327, %v1291, 0
      %v1332 = vsel %vm1327, %v1292, 0
      %v1335 = vsel %vm1327, %v1293, 0
      %v1338 = vsel %vm1327, %v1294, 0
      %v1341 = vsel %vm1327, %v1295, 0
      %v1344 = vsel %vm1327, %v1296, 0
      %v1347 = vsel %vm1327, %v1297, 0
      %v1350 = vsel %vm1327, %v1298, 0
      %v1353 = vsel %vm1327, %v1299, 0
      %v1356 = vsel %vm1327, %v1300, 0
      %v1359 = vsel %vm1327, %v1301, 0
      %v1362 = vsel %vm1327, %v1302, 0
      %v1365 = vsel %vm1327, %v1303, 0
      %v1368 = vsel %vm1327, %v1304, 0
      %v1371 = vsel %vm1327, %v1305, 0
      %v1374 = vsel %vm1327, %v1306, 0
      %v1377 = vsel %vm1327, %v1307, 0
      %v1380 = vsel %vm1327, %v1308, 0
      %v1383 = vsel %vm1327, %v1309, 0
      %v1386 = vsel %vm1327, %v1310, 0
      %v1389 = vsel %vm1327, %v1311, 0
      %v1392 = vsel %vm1327, %v1312, 0
      %v1395 = vsel %vm1327, %v1313, 0
      %v1398 = vsel %vm1327, %v1314, 0
      %v1401 = vsel %vm1327, %v1315, 0
      %v1404 = vsel %vm1327, %v1316, 0
      %v1407 = vsel %vm1327, %v1317, 0
      %v1410 = vsel %vm1327, %v1318, 0
      %v1413 = vsel %vm1327, %v1319, 0
      %v1416 = vsel %vm1327, %v1320, 0
      %v1419 = vsel %vm1327, %v1321, 0
      %v1422 = vsel %vm1327, %v1322, 0
      %1424 = vmatprep.subr.mxu0 0.0
      %1425 = vmatpush1.msra.mxu0 0.0
      %1426 = vmatprep.subr.mxu0 0.0
      %1427 = vmatpush1.msra.mxu0 0.0
      %1428 = vmatprep.subr.mxu0 0.0
      %1429 = vmatpush1.msra.mxu0 0.0
      %1430 = vmatprep.subr.mxu0 0.0
      %1431 = vmatpush1.msra.mxu0 0.0
      %1432 = vmatprep.subr.mxu0 0.0
      %1433 = vmatpush1.msra.mxu0 0.0
      %1434 = vmatprep.subr.mxu0 0.0
      %1435 = vmatpush1.msra.mxu0 0.0
      %1436 = vmatprep.subr.mxu0 0.0
      %1437 = vmatpush1.msra.mxu0 0.0
      %1438 = vmatprep.subr.mxu0 0.0
      %1439 = vmatpush1.msra.mxu0 0.0
      %1440 = vmatprep.subr.mxu0 0.0
      %1441 = vmatpush1.msra.mxu0 0.0
      %1442 = vmatprep.subr.mxu0 0.0
      %1443 = vmatpush1.msra.mxu0 0.0
      %1444 = vmatprep.subr.mxu0 0.0
      %1445 = vmatpush1.msra.mxu0 0.0
      %1446 = vmatprep.subr.mxu0 0.0
      %1447 = vmatpush1.msra.mxu0 0.0
      %1448 = vmatprep.subr.mxu0 0.0
      %1449 = vmatpush1.msra.mxu0 %v1326
      %1450 = vmatprep.subr.mxu0 0.0
      %1451 = vmatpush1.msra.mxu0 %v1325
      %1452 = vmatprep.subr.mxu0 0.0
      %1453 = vmatpush1.msra.mxu0 %v1324
      %1454 = vmatprep.subr.mxu0 0.0
      %1455 = vmatpush1.msra.mxu0 %v1323
      %1456 = vmatprep.subr.mxu0 0.0
      %1457 = vmatpush2.msra.mxu0 0.0
      %1458 = vmatprep.subr.mxu0 0.0
      %1459 = vmatpush2.msra.mxu0 0.0
      %1460 = vmatprep.subr.mxu0 0.0
      %1461 = vmatpush2.msra.mxu0 0.0
      %1462 = vmatprep.subr.mxu0 0.0
      %1463 = vmatpush2.msra.mxu0 0.0
      %1464 = vmatprep.subr.mxu0 0.0
      %1465 = vmatpush2.msra.mxu0 0.0
      %1466 = vmatprep.subr.mxu0 0.0
      %1467 = vmatpush2.msra.mxu0 0.0
      %1468 = vmatprep.subr.mxu0 0.0
      %1469 = vmatpush2.msra.mxu0 0.0
      %1470 = vmatprep.subr.mxu0 0.0
      %1471 = vmatpush2.msra.mxu0 0.0
      %1472 = vmatprep.subr.mxu0 0.0
      %1473 = vmatpush2.msra.mxu0 0.0
      %1474 = vmatprep.subr.mxu0 0.0
      %1475 = vmatpush2.msra.mxu0 0.0
      %1476 = vmatprep.subr.mxu0 0.0
      %1477 = vmatpush2.msra.mxu0 0.0
      %1478 = vmatprep.subr.mxu0 0.0
      %1479 = vmatpush2.msra.mxu0 0.0
      %1480 = vmatprep.subr.mxu0 0.0
      %1481 = vmatpush2.msra.mxu0 0.0
      %1482 = vmatprep.subr.mxu0 0.0
      %1483 = vmatpush2.msra.mxu0 0.0
      %1484 = vmatprep.subr.mxu0 0.0
      %1485 = vmatpush2.msra.mxu0 0.0
      %1486 = vmatprep.subr.mxu0 0.0
      %1487 = vmatpush2.msra.mxu0 0.0
      %1488 = vmatprep.mubr.f32.mxu0 0.0
      %1489 = vmatmul.mubr.f32.gmra.mxu0 %v1329
      %v1490 = vpop.f32.mrf.mxu0
      %v1491 = vadd.f32 0.0, %v1490
      %v1492 = vpop.f32.mrf.mxu0
      %1493 = vmatprep.mubr.f32.mxu0 0.0
      %1494 = vmatmul.mubr.f32.gmra.mxu0 %v1332
      %v1495 = vpop.f32.mrf.mxu0
      %v1496 = vadd.f32 0.0, %v1495
      %v1497 = vpop.f32.mrf.mxu0
      %1498 = vmatprep.mubr.f32.mxu0 0.0
      %1499 = vmatmul.mubr.f32.gmra.mxu0 %v1335
      %v1500 = vpop.f32.mrf.mxu0
      %v1501 = vadd.f32 0.0, %v1500
      %v1502 = vpop.f32.mrf.mxu0
      %1503 = vmatprep.mubr.f32.mxu0 0.0
      %1504 = vmatmul.mubr.f32.gmra.mxu0 %v1338
      %v1505 = vpop.f32.mrf.mxu0
      %v1506 = vadd.f32 0.0, %v1505
      %v1507 = vpop.f32.mrf.mxu0
      %1508 = vmatprep.mubr.f32.mxu0 0.0
      %1509 = vmatmul.mubr.f32.gmra.mxu0 %v1341
      %v1510 = vpop.f32.mrf.mxu0
      %v1511 = vadd.f32 0.0, %v1510
      %v1512 = vpop.f32.mrf.mxu0
      %1513 = vmatprep.mubr.f32.mxu0 0.0
      %1514 = vmatmul.mubr.f32.gmra.mxu0 %v1344
      %v1515 = vpop.f32.mrf.mxu0
      %v1516 = vadd.f32 0.0, %v1515
      %v1517 = vpop.f32.mrf.mxu0
      %1518 = vmatprep.mubr.f32.mxu0 0.0
      %1519 = vmatmul.mubr.f32.gmra.mxu0 %v1347
      %v1520 = vpop.f32.mrf.mxu0
      %v1521 = vadd.f32 0.0, %v1520
      %v1522 = vpop.f32.mrf.mxu0
      %1523 = vmatprep.mubr.f32.mxu0 0.0
      %1524 = vmatmul.mubr.f32.gmra.mxu0 %v1350
      %v1525 = vpop.f32.mrf.mxu0
      %v1526 = vadd.f32 0.0, %v1525
      %v1527 = vpop.f32.mrf.mxu0
      %1528 = vmatprep.mubr.f32.mxu0 0.0
      %1529 = vmatmul.mubr.f32.gmra.mxu0 %v1353
      %v1530 = vpop.f32.mrf.mxu0
      %v1531 = vadd.f32 0.0, %v1530
      %v1532 = vpop.f32.mrf.mxu0
      %1533 = vmatprep.mubr.f32.mxu0 0.0
      %1534 = vmatmul.mubr.f32.gmra.mxu0 %v1356
      %v1535 = vpop.f32.mrf.mxu0
      %v1536 = vadd.f32 0.0, %v1535
      %v1537 = vpop.f32.mrf.mxu0
      %1538 = vmatprep.mubr.f32.mxu0 0.0
      %1539 = vmatmul.mubr.f32.gmra.mxu0 %v1359
      %v1540 = vpop.f32.mrf.mxu0
      %v1541 = vadd.f32 0.0, %v1540
      %v1542 = vpop.f32.mrf.mxu0
      %1543 = vmatprep.mubr.f32.mxu0 0.0
      %1544 = vmatmul.mubr.f32.gmra.mxu0 %v1362
      %v1545 = vpop.f32.mrf.mxu0
      %v1546 = vadd.f32 0.0, %v1545
      %v1547 = vpop.f32.mrf.mxu0
      %1548 = vmatprep.mubr.f32.mxu0 0.0
      %1549 = vmatmul.mubr.f32.gmra.mxu0 %v1365
      %v1550 = vpop.f32.mrf.mxu0
      %v1551 = vadd.f32 0.0, %v1550
      %v1552 = vpop.f32.mrf.mxu0
      %1553 = vmatprep.mubr.f32.mxu0 0.0
      %1554 = vmatmul.mubr.f32.gmra.mxu0 %v1368
      %v1555 = vpop.f32.mrf.mxu0
      %v1556 = vadd.f32 0.0, %v1555
      %v1557 = vpop.f32.mrf.mxu0
      %1558 = vmatprep.mubr.f32.mxu0 0.0
      %1559 = vmatmul.mubr.f32.gmra.mxu0 %v1371
      %v1560 = vpop.f32.mrf.mxu0
      %v1561 = vadd.f32 0.0, %v1560
      %v1562 = vpop.f32.mrf.mxu0
      %1563 = vmatprep.mubr.f32.mxu0 0.0
      %1564 = vmatmul.mubr.f32.gmra.mxu0 %v1374
      %v1565 = vpop.f32.mrf.mxu0
      %v1566 = vadd.f32 0.0, %v1565
      %v1567 = vpop.f32.mrf.mxu0
      %1568 = vmatprep.mubr.f32.mxu0 0.0
      %1569 = vmatmul.mubr.f32.gmra.mxu0 %v1377
      %v1570 = vpop.f32.mrf.mxu0
      %v1571 = vadd.f32 0.0, %v1570
      %v1572 = vpop.f32.mrf.mxu0
      %1573 = vmatprep.mubr.f32.mxu0 0.0
      %1574 = vmatmul.mubr.f32.gmra.mxu0 %v1380
      %v1575 = vpop.f32.mrf.mxu0
      %v1576 = vadd.f32 0.0, %v1575
      %v1577 = vpop.f32.mrf.mxu0
      %1578 = vmatprep.mubr.f32.mxu0 0.0
      %1579 = vmatmul.mubr.f32.gmra.mxu0 %v1383
      %v1580 = vpop.f32.mrf.mxu0
      %v1581 = vadd.f32 0.0, %v1580
      %v1582 = vpop.f32.mrf.mxu0
      %1583 = vmatprep.mubr.f32.mxu0 0.0
      %1584 = vmatmul.mubr.f32.gmra.mxu0 %v1386
      %v1585 = vpop.f32.mrf.mxu0
      %v1586 = vadd.f32 0.0, %v1585
      %v1587 = vpop.f32.mrf.mxu0
      %1588 = vmatprep.mubr.f32.mxu0 0.0
      %1589 = vmatmul.mubr.f32.gmra.mxu0 %v1389
      %v1590 = vpop.f32.mrf.mxu0
      %v1591 = vadd.f32 0.0, %v1590
      %v1592 = vpop.f32.mrf.mxu0
      %1593 = vmatprep.mubr.f32.mxu0 0.0
      %1594 = vmatmul.mubr.f32.gmra.mxu0 %v1392
      %v1595 = vpop.f32.mrf.mxu0
      %v1596 = vadd.f32 0.0, %v1595
      %v1597 = vpop.f32.mrf.mxu0
      %1598 = vmatprep.mubr.f32.mxu0 0.0
      %1599 = vmatmul.mubr.f32.gmra.mxu0 %v1395
      %v1600 = vpop.f32.mrf.mxu0
      %v1601 = vadd.f32 0.0, %v1600
      %v1602 = vpop.f32.mrf.mxu0
      %1603 = vmatprep.mubr.f32.mxu0 0.0
      %1604 = vmatmul.mubr.f32.gmra.mxu0 %v1398
      %v1605 = vpop.f32.mrf.mxu0
      %v1606 = vadd.f32 0.0, %v1605
      %v1607 = vpop.f32.mrf.mxu0
      %1608 = vmatprep.mubr.f32.mxu0 0.0
      %1609 = vmatmul.mubr.f32.gmra.mxu0 %v1401
      %v1610 = vpop.f32.mrf.mxu0
      %v1611 = vadd.f32 0.0, %v1610
      %v1612 = vpop.f32.mrf.mxu0
      %1613 = vmatprep.mubr.f32.mxu0 0.0
      %1614 = vmatmul.mubr.f32.gmra.mxu0 %v1404
      %v1615 = vpop.f32.mrf.mxu0
      %v1616 = vadd.f32 0.0, %v1615
      %v1617 = vpop.f32.mrf.mxu0
      %1618 = vmatprep.mubr.f32.mxu0 0.0
      %1619 = vmatmul.mubr.f32.gmra.mxu0 %v1407
      %v1620 = vpop.f32.mrf.mxu0
      %v1621 = vadd.f32 0.0, %v1620
      %v1622 = vpop.f32.mrf.mxu0
      %1623 = vmatprep.mubr.f32.mxu0 0.0
      %1624 = vmatmul.mubr.f32.gmra.mxu0 %v1410
      %v1625 = vpop.f32.mrf.mxu0
      %v1626 = vadd.f32 0.0, %v1625
      %v1627 = vpop.f32.mrf.mxu0
      %1628 = vmatprep.mubr.f32.mxu0 0.0
      %1629 = vmatmul.mubr.f32.gmra.mxu0 %v1413
      %v1630 = vpop.f32.mrf.mxu0
      %v1631 = vadd.f32 0.0, %v1630
      %v1632 = vpop.f32.mrf.mxu0
      %1633 = vmatprep.mubr.f32.mxu0 0.0
      %1634 = vmatmul.mubr.f32.gmra.mxu0 %v1416
      %v1635 = vpop.f32.mrf.mxu0
      %v1636 = vadd.f32 0.0, %v1635
      %v1637 = vpop.f32.mrf.mxu0
      %1638 = vmatprep.mubr.f32.mxu0 0.0
      %1639 = vmatmul.mubr.f32.gmra.mxu0 %v1419
      %v1640 = vpop.f32.mrf.mxu0
      %v1641 = vadd.f32 0.0, %v1640
      %v1642 = vpop.f32.mrf.mxu0
      %1643 = vmatprep.mubr.f32.mxu0 0.0
      %1644 = vmatmul.mubr.f32.gmra.mxu0 %v1422
      %v1645 = vpop.f32.mrf.mxu0
      %v1646 = vadd.f32 0.0, %v1645
      %v1647 = vpop.f32.mrf.mxu0
      %1648 = vdwg.mxu0
      %vm1649 = vcmask 130048
      %1650 = vst.msk [vmem:[%s233] sm:$0xff] %vm1649, %v1491
      %1651 = vst.msk [vmem:[%s233 + $0x8] sm:$0xff] %vm1649, %v1496
      %1652 = vst.msk [vmem:[%s233 + $0x10] sm:$0xff] %vm1649, %v1501
      %1653 = vst.msk [vmem:[%s233 + $0x18] sm:$0xff] %vm1649, %v1506
      %1654 = vst.msk [vmem:[%s233 + $0x20] sm:$0xff] %vm1649, %v1511
      %1655 = vst.msk [vmem:[%s233 + $0x28] sm:$0xff] %vm1649, %v1516
      %1656 = vst.msk [vmem:[%s233 + $0x30] sm:$0xff] %vm1649, %v1521
      %1657 = vst.msk [vmem:[%s233 + $0x38] sm:$0xff] %vm1649, %v1526
      %1658 = vst.msk [vmem:[%s233 + $0x40] sm:$0xff] %vm1649, %v1531
      %1659 = vst.msk [vmem:[%s233 + $0x48] sm:$0xff] %vm1649, %v1536
      %1660 = vst.msk [vmem:[%s233 + $0x50] sm:$0xff] %vm1649, %v1541
      %1661 = vst.msk [vmem:[%s233 + $0x58] sm:$0xff] %vm1649, %v1546
      %1662 = vst.msk [vmem:[%s233 + $0x60] sm:$0xff] %vm1649, %v1551
      %1663 = vst.msk [vmem:[%s233 + $0x68] sm:$0xff] %vm1649, %v1556
      %1664 = vst.msk [vmem:[%s233 + $0x70] sm:$0xff] %vm1649, %v1561
      %1665 = vst.msk [vmem:[%s233 + $0x78] sm:$0xff] %vm1649, %v1566
      %1666 = vst.msk [vmem:[%s233 + $0x80] sm:$0xff] %vm1649, %v1571
      %1667 = vst.msk [vmem:[%s233 + $0x88] sm:$0xff] %vm1649, %v1576
      %1668 = vst.msk [vmem:[%s233 + $0x90] sm:$0xff] %vm1649, %v1581
      %1669 = vst.msk [vmem:[%s233 + $0x98] sm:$0xff] %vm1649, %v1586
      %1670 = vst.msk [vmem:[%s233 + $0xa0] sm:$0xff] %vm1649, %v1591
      %1671 = vst.msk [vmem:[%s233 + $0xa8] sm:$0xff] %vm1649, %v1596
      %1672 = vst.msk [vmem:[%s233 + $0xb0] sm:$0xff] %vm1649, %v1601
      %1673 = vst.msk [vmem:[%s233 + $0xb8] sm:$0xff] %vm1649, %v1606
      %1674 = vst.msk [vmem:[%s233 + $0xc0] sm:$0xff] %vm1649, %v1611
      %1675 = vst.msk [vmem:[%s233 + $0xc8] sm:$0xff] %vm1649, %v1616
      %1676 = vst.msk [vmem:[%s233 + $0xd0] sm:$0xff] %vm1649, %v1621
      %1677 = vst.msk [vmem:[%s233 + $0xd8] sm:$0xff] %vm1649, %v1626
      %1678 = vst.msk [vmem:[%s233 + $0xe0] sm:$0xff] %vm1649, %v1631
      %1679 = vst.msk [vmem:[%s233 + $0xe8] sm:$0xff] %vm1649, %v1636
      %1680 = vst.msk [vmem:[%s233 + $0xf0] sm:$0xff] %vm1649, %v1641
      %1681 = vst.msk [vmem:[%s233 + $0xf8] sm:$0xff] %vm1649, %v1646
      %v1682 = vsel %vm1649, %v1491, 0.0
      %v1683 = vsel %vm1649, %v1496, 0.0
      %v1684 = vadd.f32 %v1682, %v1683
      %v1685 = vsel %vm1649, %v1501, 0.0
      %v1686 = vadd.f32 %v1684, %v1685
      %v1687 = vsel %vm1649, %v1506, 0.0
      %v1688 = vadd.f32 %v1686, %v1687
      %v1689 = vsel %vm1649, %v1511, 0.0
      %v1690 = vadd.f32 %v1688, %v1689
      %v1691 = vsel %vm1649, %v1516, 0.0
      %v1692 = vadd.f32 %v1690, %v1691
      %v1693 = vsel %vm1649, %v1521, 0.0
      %v1694 = vadd.f32 %v1692, %v1693
      %v1695 = vsel %vm1649, %v1526, 0.0
      %v1696 = vadd.f32 %v1694, %v1695
      %v1697 = vsel %vm1649, %v1531, 0.0
      %v1698 = vadd.f32 %v1696, %v1697
      %v1699 = vsel %vm1649, %v1536, 0.0
      %v1700 = vadd.f32 %v1698, %v1699
      %v1701 = vsel %vm1649, %v1541, 0.0
      %v1702 = vadd.f32 %v1700, %v1701
      %v1703 = vsel %vm1649, %v1546, 0.0
      %v1704 = vadd.f32 %v1702, %v1703
      %v1705 = vsel %vm1649, %v1551, 0.0
      %v1706 = vadd.f32 %v1704, %v1705
      %v1707 = vsel %vm1649, %v1556, 0.0
      %v1708 = vadd.f32 %v1706, %v1707
      %v1709 = vsel %vm1649, %v1561, 0.0
      %v1710 = vadd.f32 %v1708, %v1709
      %v1711 = vsel %vm1649, %v1566, 0.0
      %v1712 = vadd.f32 %v1710, %v1711
      %v1713 = vsel %vm1649, %v1571, 0.0
      %v1714 = vadd.f32 %v1712, %v1713
      %v1715 = vsel %vm1649, %v1576, 0.0
      %v1716 = vadd.f32 %v1714, %v1715
      %v1717 = vsel %vm1649, %v1581, 0.0
      %v1718 = vadd.f32 %v1716, %v1717
      %v1719 = vsel %vm1649, %v1586, 0.0
      %v1720 = vadd.f32 %v1718, %v1719
      %v1721 = vsel %vm1649, %v1591, 0.0
      %v1722 = vadd.f32 %v1720, %v1721
      %v1723 = vsel %vm1649, %v1596, 0.0
      %v1724 = vadd.f32 %v1722, %v1723
      %v1725 = vsel %vm1649, %v1601, 0.0
      %v1726 = vadd.f32 %v1724, %v1725
      %v1727 = vsel %vm1649, %v1606, 0.0
      %v1728 = vadd.f32 %v1726, %v1727
      %v1729 = vsel %vm1649, %v1611, 0.0
      %v1730 = vadd.f32 %v1728, %v1729
      %v1731 = vsel %vm1649, %v1616, 0.0
      %v1732 = vadd.f32 %v1730, %v1731
      %v1733 = vsel %vm1649, %v1621, 0.0
      %v1734 = vadd.f32 %v1732, %v1733
      %v1735 = vsel %vm1649, %v1626, 0.0
      %v1736 = vadd.f32 %v1734, %v1735
      %v1737 = vsel %vm1649, %v1631, 0.0
      %v1738 = vadd.f32 %v1736, %v1737
      %v1739 = vsel %vm1649, %v1636, 0.0
      %v1740 = vadd.f32 %v1738, %v1739
      %v1741 = vsel %vm1649, %v1641, 0.0
      %v1742 = vadd.f32 %v1740, %v1741
      %v1743 = vsel %vm1649, %v1646, 0.0
      %v1744 = vadd.f32 %v1742, %v1743
      %v1745 = vrot.slane %v1744, 4
      %v1746 = vadd.f32 %v1744, %v1745
      %v1747 = vrot.slane %v1746, 2
      %v1748 = vadd.f32 %v1746, %v1747
      %v1749 = vrot.slane %v1748, 1
      %v1750 = vadd.f32 %v1748, %v1749
      %v1751 = vadd.f32 %v1750, 0.0
      %v1752 = vmul.f32 %v1491, %v1491
      %v1753 = vmul.f32 %v1496, %v1496
      %v1754 = vmul.f32 %v1501, %v1501
      %v1755 = vmul.f32 %v1506, %v1506
      %v1756 = vmul.f32 %v1511, %v1511
      %v1757 = vmul.f32 %v1516, %v1516
      %v1758 = vmul.f32 %v1521, %v1521
      %v1759 = vmul.f32 %v1526, %v1526
      %v1760 = vmul.f32 %v1531, %v1531
      %v1761 = vmul.f32 %v1536, %v1536
      %v1762 = vmul.f32 %v1541, %v1541
      %v1763 = vmul.f32 %v1546, %v1546
      %v1764 = vmul.f32 %v1551, %v1551
      %v1765 = vmul.f32 %v1556, %v1556
      %v1766 = vmul.f32 %v1561, %v1561
      %v1767 = vmul.f32 %v1566, %v1566
      %v1768 = vmul.f32 %v1571, %v1571
      %v1769 = vmul.f32 %v1576, %v1576
      %v1770 = vmul.f32 %v1581, %v1581
      %v1771 = vmul.f32 %v1586, %v1586
      %v1772 = vmul.f32 %v1591, %v1591
      %v1773 = vmul.f32 %v1596, %v1596
      %v1774 = vmul.f32 %v1601, %v1601
      %v1775 = vmul.f32 %v1606, %v1606
      %v1776 = vmul.f32 %v1611, %v1611
      %v1777 = vmul.f32 %v1616, %v1616
      %v1778 = vmul.f32 %v1621, %v1621
      %v1779 = vmul.f32 %v1626, %v1626
      %v1780 = vmul.f32 %v1631, %v1631
      %v1781 = vmul.f32 %v1636, %v1636
      %v1782 = vmul.f32 %v1641, %v1641
      %v1783 = vmul.f32 %v1646, %v1646
      %v1784 = vsel %vm1649, %v1752, 0.0
      %v1785 = vsel %vm1649, %v1753, 0.0
      %v1786 = vadd.f32 %v1784, %v1785
      %v1787 = vsel %vm1649, %v1754, 0.0
      %v1788 = vadd.f32 %v1786, %v1787
      %v1789 = vsel %vm1649, %v1755, 0.0
      %v1790 = vadd.f32 %v1788, %v1789
      %v1791 = vsel %vm1649, %v1756, 0.0
      %v1792 = vadd.f32 %v1790, %v1791
      %v1793 = vsel %vm1649, %v1757, 0.0
      %v1794 = vadd.f32 %v1792, %v1793
      %v1795 = vsel %vm1649, %v1758, 0.0
      %v1796 = vadd.f32 %v1794, %v1795
      %v1797 = vsel %vm1649, %v1759, 0.0
      %v1798 = vadd.f32 %v1796, %v1797
      %v1799 = vsel %vm1649, %v1760, 0.0
      %v1800 = vadd.f32 %v1798, %v1799
      %v1801 = vsel %vm1649, %v1761, 0.0
      %v1802 = vadd.f32 %v1800, %v1801
      %v1803 = vsel %vm1649, %v1762, 0.0
      %v1804 = vadd.f32 %v1802, %v1803
      %v1805 = vsel %vm1649, %v1763, 0.0
      %v1806 = vadd.f32 %v1804, %v1805
      %v1807 = vsel %vm1649, %v1764, 0.0
      %v1808 = vadd.f32 %v1806, %v1807
      %v1809 = vsel %vm1649, %v1765, 0.0
      %v1810 = vadd.f32 %v1808, %v1809
      %v1811 = vsel %vm1649, %v1766, 0.0
      %v1812 = vadd.f32 %v1810, %v1811
      %v1813 = vsel %vm1649, %v1767, 0.0
      %v1814 = vadd.f32 %v1812, %v1813
      %v1815 = vsel %vm1649, %v1768, 0.0
      %v1816 = vadd.f32 %v1814, %v1815
      %v1817 = vsel %vm1649, %v1769, 0.0
      %v1818 = vadd.f32 %v1816, %v1817
      %v1819 = vsel %vm1649, %v1770, 0.0
      %v1820 = vadd.f32 %v1818, %v1819
      %v1821 = vsel %vm1649, %v1771, 0.0
      %v1822 = vadd.f32 %v1820, %v1821
      %v1823 = vsel %vm1649, %v1772, 0.0
      %v1824 = vadd.f32 %v1822, %v1823
      %v1825 = vsel %vm1649, %v1773, 0.0
      %v1826 = vadd.f32 %v1824, %v1825
      %v1827 = vsel %vm1649, %v1774, 0.0
      %v1828 = vadd.f32 %v1826, %v1827
      %v1829 = vsel %vm1649, %v1775, 0.0
      %v1830 = vadd.f32 %v1828, %v1829
      %v1831 = vsel %vm1649, %v1776, 0.0
      %v1832 = vadd.f32 %v1830, %v1831
      %v1833 = vsel %vm1649, %v1777, 0.0
      %v1834 = vadd.f32 %v1832, %v1833
      %v1835 = vsel %vm1649, %v1778, 0.0
      %v1836 = vadd.f32 %v1834, %v1835
      %v1837 = vsel %vm1649, %v1779, 0.0
      %v1838 = vadd.f32 %v1836, %v1837
      %v1839 = vsel %vm1649, %v1780, 0.0
      %v1840 = vadd.f32 %v1838, %v1839
      %v1841 = vsel %vm1649, %v1781, 0.0
      %v1842 = vadd.f32 %v1840, %v1841
      %v1843 = vsel %vm1649, %v1782, 0.0
      %v1844 = vadd.f32 %v1842, %v1843
      %v1845 = vsel %vm1649, %v1783, 0.0
      %v1846 = vadd.f32 %v1844, %v1845
      %v1847 = vrot.slane %v1846, 4
      %v1848 = vadd.f32 %v1846, %v1847
      %v1849 = vrot.slane %v1848, 2
      %v1850 = vadd.f32 %v1848, %v1849
      %v1851 = vrot.slane %v1850, 1
      %v1852 = vadd.f32 %v1850, %v1851
      %v1853 = vadd.f32 %v1852, 0.0
      %v1854 = vld [vmem:[#allocation2 + $0x1] sm:$0xff]
      %v1855 = vld [vmem:[#allocation2 + $0x9] sm:$0xff]
      %v1856 = vld [vmem:[#allocation2 + $0x19] sm:$0xff]
      %v1857 = vld [vmem:[#allocation2 + $0x21] sm:$0xff]
      %v1858 = vld [vmem:[#allocation2 + $0x31] sm:$0xff]
      %v1859 = vld [vmem:[#allocation2 + $0x39] sm:$0xff]
      %v1860 = vld [vmem:[#allocation2 + $0x49] sm:$0xff]
      %v1861 = vld [vmem:[#allocation2 + $0x51] sm:$0xff]
      %v1862 = vld [vmem:[#allocation2 + $0x61] sm:$0xff]
      %v1863 = vld [vmem:[#allocation2 + $0x69] sm:$0xff]
      %v1864 = vld [vmem:[#allocation2 + $0x79] sm:$0xff]
      %v1865 = vld [vmem:[#allocation2 + $0x81] sm:$0xff]
      %v1866 = vld [vmem:[#allocation2 + $0x91] sm:$0xff]
      %v1867 = vld [vmem:[#allocation2 + $0x99] sm:$0xff]
      %v1868 = vld [vmem:[#allocation2 + $0xa9] sm:$0xff]
      %v1869 = vld [vmem:[#allocation2 + $0xb1] sm:$0xff]
      %v1870 = vld [vmem:[#allocation2 + $0xc1] sm:$0xff]
      %v1871 = vld [vmem:[#allocation2 + $0xc9] sm:$0xff]
      %v1872 = vld [vmem:[#allocation2 + $0xd9] sm:$0xff]
      %v1873 = vld [vmem:[#allocation2 + $0xe1] sm:$0xff]
      %v1874 = vld [vmem:[#allocation2 + $0xf1] sm:$0xff]
      %v1875 = vld [vmem:[#allocation2 + $0xf9] sm:$0xff]
      %v1876 = vld [vmem:[#allocation2 + $0x109] sm:$0xff]
      %v1877 = vld [vmem:[#allocation2 + $0x111] sm:$0xff]
      %v1878 = vld [vmem:[#allocation2 + $0x121] sm:$0xff]
      %v1879 = vld [vmem:[#allocation2 + $0x129] sm:$0xff]
      %v1880 = vld [vmem:[#allocation2 + $0x139] sm:$0xff]
      %v1881 = vld [vmem:[#allocation2 + $0x141] sm:$0xff]
      %v1882 = vld [vmem:[#allocation2 + $0x151] sm:$0xff]
      %v1883 = vld [vmem:[#allocation2 + $0x159] sm:$0xff]
      %v1884 = vld [vmem:[#allocation2 + $0x169] sm:$0xff]
      %v1885 = vld [vmem:[#allocation2 + $0x171] sm:$0xff]
      %1886 = vst.msk [vmem:[#allocation3] sm:$0xff] %vm573, %v1854
      %1887 = vst.msk [vmem:[#allocation3 + $0x8] sm:$0xff] %vm573, %v1855
      %1888 = vst.msk [vmem:[#allocation3 + $0x10] sm:$0xff] %vm573, %v1856
      %1889 = vst.msk [vmem:[#allocation3 + $0x18] sm:$0xff] %vm573, %v1857
      %1890 = vst.msk [vmem:[#allocation3 + $0x20] sm:$0xff] %vm573, %v1858
      %1891 = vst.msk [vmem:[#allocation3 + $0x28] sm:$0xff] %vm573, %v1859
      %1892 = vst.msk [vmem:[#allocation3 + $0x30] sm:$0xff] %vm573, %v1860
      %1893 = vst.msk [vmem:[#allocation3 + $0x38] sm:$0xff] %vm573, %v1861
      %1894 = vst.msk [vmem:[#allocation3 + $0x40] sm:$0xff] %vm573, %v1862
      %1895 = vst.msk [vmem:[#allocation3 + $0x48] sm:$0xff] %vm573, %v1863
      %1896 = vst.msk [vmem:[#allocation3 + $0x50] sm:$0xff] %vm573, %v1864
      %1897 = vst.msk [vmem:[#allocation3 + $0x58] sm:$0xff] %vm573, %v1865
      %1898 = vst.msk [vmem:[#allocation3 + $0x60] sm:$0xff] %vm573, %v1866
      %1899 = vst.msk [vmem:[#allocation3 + $0x68] sm:$0xff] %vm573, %v1867
      %1900 = vst.msk [vmem:[#allocation3 + $0x70] sm:$0xff] %vm573, %v1868
      %1901 = vst.msk [vmem:[#allocation3 + $0x78] sm:$0xff] %vm573, %v1869
      %1902 = vst.msk [vmem:[#allocation3 + $0x80] sm:$0xff] %vm573, %v1870
      %1903 = vst.msk [vmem:[#allocation3 + $0x88] sm:$0xff] %vm573, %v1871
      %1904 = vst.msk [vmem:[#allocation3 + $0x90] sm:$0xff] %vm573, %v1872
      %1905 = vst.msk [vmem:[#allocation3 + $0x98] sm:$0xff] %vm573, %v1873
      %1906 = vst.msk [vmem:[#allocation3 + $0xa0] sm:$0xff] %vm573, %v1874
      %1907 = vst.msk [vmem:[#allocation3 + $0xa8] sm:$0xff] %vm573, %v1875
      %1908 = vst.msk [vmem:[#allocation3 + $0xb0] sm:$0xff] %vm573, %v1876
      %1909 = vst.msk [vmem:[#allocation3 + $0xb8] sm:$0xff] %vm573, %v1877
      %1910 = vst.msk [vmem:[#allocation3 + $0xc0] sm:$0xff] %vm573, %v1878
      %1911 = vst.msk [vmem:[#allocation3 + $0xc8] sm:$0xff] %vm573, %v1879
      %1912 = vst.msk [vmem:[#allocation3 + $0xd0] sm:$0xff] %vm573, %v1880
      %1913 = vst.msk [vmem:[#allocation3 + $0xd8] sm:$0xff] %vm573, %v1881
      %1914 = vst.msk [vmem:[#allocation3 + $0xe0] sm:$0xff] %vm573, %v1882
      %1915 = vst.msk [vmem:[#allocation3 + $0xe8] sm:$0xff] %vm573, %v1883
      %1916 = vst.msk [vmem:[#allocation3 + $0xf0] sm:$0xff] %vm573, %v1884
      %1917 = vst.msk [vmem:[#allocation3 + $0xf8] sm:$0xff] %vm573, %v1885
      %v1918 = vld [vmem:[#allocation2 + $0x2] sm:$0xff]
      %v1919 = vld [vmem:[#allocation2 + $0xa] sm:$0xff]
      %v1920 = vld [vmem:[#allocation2 + $0x1a] sm:$0xff]
      %v1921 = vld [vmem:[#allocation2 + $0x22] sm:$0xff]
      %v1922 = vld [vmem:[#allocation2 + $0x32] sm:$0xff]
      %v1923 = vld [vmem:[#allocation2 + $0x3a] sm:$0xff]
      %v1924 = vld [vmem:[#allocation2 + $0x4a] sm:$0xff]
      %v1925 = vld [vmem:[#allocation2 + $0x52] sm:$0xff]
      %v1926 = vld [vmem:[#allocation2 + $0x62] sm:$0xff]
      %v1927 = vld [vmem:[#allocation2 + $0x6a] sm:$0xff]
      %v1928 = vld [vmem:[#allocation2 + $0x7a] sm:$0xff]
      %v1929 = vld [vmem:[#allocation2 + $0x82] sm:$0xff]
      %v1930 = vld [vmem:[#allocation2 + $0x92] sm:$0xff]
      %v1931 = vld [vmem:[#allocation2 + $0x9a] sm:$0xff]
      %v1932 = vld [vmem:[#allocation2 + $0xaa] sm:$0xff]
      %v1933 = vld [vmem:[#allocation2 + $0xb2] sm:$0xff]
      %v1934 = vld [vmem:[#allocation2 + $0xc2] sm:$0xff]
      %v1935 = vld [vmem:[#allocation2 + $0xca] sm:$0xff]
      %v1936 = vld [vmem:[#allocation2 + $0xda] sm:$0xff]
      %v1937 = vld [vmem:[#allocation2 + $0xe2] sm:$0xff]
      %v1938 = vld [vmem:[#allocation2 + $0xf2] sm:$0xff]
      %v1939 = vld [vmem:[#allocation2 + $0xfa] sm:$0xff]
      %v1940 = vld [vmem:[#allocation2 + $0x10a] sm:$0xff]
      %v1941 = vld [vmem:[#allocation2 + $0x112] sm:$0xff]
      %v1942 = vld [vmem:[#allocation2 + $0x122] sm:$0xff]
      %v1943 = vld [vmem:[#allocation2 + $0x12a] sm:$0xff]
      %v1944 = vld [vmem:[#allocation2 + $0x13a] sm:$0xff]
      %v1945 = vld [vmem:[#allocation2 + $0x142] sm:$0xff]
      %v1946 = vld [vmem:[#allocation2 + $0x152] sm:$0xff]
      %v1947 = vld [vmem:[#allocation2 + $0x15a] sm:$0xff]
      %v1948 = vld [vmem:[#allocation2 + $0x16a] sm:$0xff]
      %v1949 = vld [vmem:[#allocation2 + $0x172] sm:$0xff]
      %1982 = vrot.lane.b32.xlu0 %v1918, 8
      %v1983 = vpop.permute.xlu0 %1982
      %1984 = vrot.lane.b32.xlu0 %v1919, 8
      %v1985 = vpop.permute.xlu0 %1984
      %1986 = vrot.lane.b32.xlu0 %v1920, 8
      %v1987 = vpop.permute.xlu0 %1986
      %1988 = vrot.lane.b32.xlu0 %v1921, 8
      %v1989 = vpop.permute.xlu0 %1988
      %1990 = vrot.lane.b32.xlu0 %v1922, 8
      %v1991 = vpop.permute.xlu0 %1990
      %1992 = vrot.lane.b32.xlu0 %v1923, 8
      %v1993 = vpop.permute.xlu0 %1992
      %1994 = vrot.lane.b32.xlu0 %v1924, 8
      %v1995 = vpop.permute.xlu0 %1994
      %1996 = vrot.lane.b32.xlu0 %v1925, 8
      %v1997 = vpop.permute.xlu0 %1996
      %1998 = vrot.lane.b32.xlu0 %v1926, 8
      %v1999 = vpop.permute.xlu0 %1998
      %2000 = vrot.lane.b32.xlu0 %v1927, 8
      %v2001 = vpop.permute.xlu0 %2000
      %2002 = vrot.lane.b32.xlu0 %v1928, 8
      %v2003 = vpop.permute.xlu0 %2002
      %2004 = vrot.lane.b32.xlu0 %v1929, 8
      %v2005 = vpop.permute.xlu0 %2004
      %2006 = vrot.lane.b32.xlu0 %v1930, 8
      %v2007 = vpop.permute.xlu0 %2006
      %2008 = vrot.lane.b32.xlu0 %v1931, 8
      %v2009 = vpop.permute.xlu0 %2008
      %2010 = vrot.lane.b32.xlu0 %v1932, 8
      %v2011 = vpop.permute.xlu0 %2010
      %2012 = vrot.lane.b32.xlu0 %v1933, 8
      %v2013 = vpop.permute.xlu0 %2012
      %2014 = vrot.lane.b32.xlu0 %v1934, 8
      %v2015 = vpop.permute.xlu0 %2014
      %2016 = vrot.lane.b32.xlu0 %v1935, 8
      %v2017 = vpop.permute.xlu0 %2016
      %2018 = vrot.lane.b32.xlu0 %v1936, 8
      %v2019 = vpop.permute.xlu0 %2018
      %2020 = vrot.lane.b32.xlu0 %v1937, 8
      %v2021 = vpop.permute.xlu0 %2020
      %2022 = vrot.lane.b32.xlu0 %v1938, 8
      %v2023 = vpop.permute.xlu0 %2022
      %2024 = vrot.lane.b32.xlu0 %v1939, 8
      %v2025 = vpop.permute.xlu0 %2024
      %2026 = vrot.lane.b32.xlu0 %v1940, 8
      %v2027 = vpop.permute.xlu0 %2026
      %2028 = vrot.lane.b32.xlu0 %v1941, 8
      %v2029 = vpop.permute.xlu0 %2028
      %2030 = vrot.lane.b32.xlu0 %v1942, 8
      %v2031 = vpop.permute.xlu0 %2030
      %2032 = vrot.lane.b32.xlu0 %v1943, 8
      %v2033 = vpop.permute.xlu0 %2032
      %2034 = vrot.lane.b32.xlu0 %v1944, 8
      %v2035 = vpop.permute.xlu0 %2034
      %2036 = vrot.lane.b32.xlu0 %v1945, 8
      %v2037 = vpop.permute.xlu0 %2036
      %2038 = vrot.lane.b32.xlu0 %v1946, 8
      %v2039 = vpop.permute.xlu0 %2038
      %2040 = vrot.lane.b32.xlu0 %v1947, 8
      %v2041 = vpop.permute.xlu0 %2040
      %2042 = vrot.lane.b32.xlu0 %v1948, 8
      %v2043 = vpop.permute.xlu0 %2042
      %2044 = vrot.lane.b32.xlu0 %v1949, 8
      %v2045 = vpop.permute.xlu0 %2044
      %2078 = vst.msk [vmem:[#allocation3] sm:$0xff] %vm872, %v1983
      %2079 = vst.msk [vmem:[#allocation3 + $0x8] sm:$0xff] %vm872, %v1985
      %2080 = vst.msk [vmem:[#allocation3 + $0x10] sm:$0xff] %vm872, %v1987
      %2081 = vst.msk [vmem:[#allocation3 + $0x18] sm:$0xff] %vm872, %v1989
      %2082 = vst.msk [vmem:[#allocation3 + $0x20] sm:$0xff] %vm872, %v1991
      %2083 = vst.msk [vmem:[#allocation3 + $0x28] sm:$0xff] %vm872, %v1993
      %2084 = vst.msk [vmem:[#allocation3 + $0x30] sm:$0xff] %vm872, %v1995
      %2085 = vst.msk [vmem:[#allocation3 + $0x38] sm:$0xff] %vm872, %v1997
      %2086 = vst.msk [vmem:[#allocation3 + $0x40] sm:$0xff] %vm872, %v1999
      %2087 = vst.msk [vmem:[#allocation3 + $0x48] sm:$0xff] %vm872, %v2001
      %2088 = vst.msk [vmem:[#allocation3 + $0x50] sm:$0xff] %vm872, %v2003
      %2089 = vst.msk [vmem:[#allocation3 + $0x58] sm:$0xff] %vm872, %v2005
      %2090 = vst.msk [vmem:[#allocation3 + $0x60] sm:$0xff] %vm872, %v2007
      %2091 = vst.msk [vmem:[#allocation3 + $0x68] sm:$0xff] %vm872, %v2009
      %2092 = vst.msk [vmem:[#allocation3 + $0x70] sm:$0xff] %vm872, %v2011
      %2093 = vst.msk [vmem:[#allocation3 + $0x78] sm:$0xff] %vm872, %v2013
      %2094 = vst.msk [vmem:[#allocation3 + $0x80] sm:$0xff] %vm872, %v2015
      %2095 = vst.msk [vmem:[#allocation3 + $0x88] sm:$0xff] %vm872, %v2017
      %2096 = vst.msk [vmem:[#allocation3 + $0x90] sm:$0xff] %vm872, %v2019
      %2097 = vst.msk [vmem:[#allocation3 + $0x98] sm:$0xff] %vm872, %v2021
      %2098 = vst.msk [vmem:[#allocation3 + $0xa0] sm:$0xff] %vm872, %v2023
      %2099 = vst.msk [vmem:[#allocation3 + $0xa8] sm:$0xff] %vm872, %v2025
      %2100 = vst.msk [vmem:[#allocation3 + $0xb0] sm:$0xff] %vm872, %v2027
      %2101 = vst.msk [vmem:[#allocation3 + $0xb8] sm:$0xff] %vm872, %v2029
      %2102 = vst.msk [vmem:[#allocation3 + $0xc0] sm:$0xff] %vm872, %v2031
      %2103 = vst.msk [vmem:[#allocation3 + $0xc8] sm:$0xff] %vm872, %v2033
      %2104 = vst.msk [vmem:[#allocation3 + $0xd0] sm:$0xff] %vm872, %v2035
      %2105 = vst.msk [vmem:[#allocation3 + $0xd8] sm:$0xff] %vm872, %v2037
      %2106 = vst.msk [vmem:[#allocation3 + $0xe0] sm:$0xff] %vm872, %v2039
      %2107 = vst.msk [vmem:[#allocation3 + $0xe8] sm:$0xff] %vm872, %v2041
      %2108 = vst.msk [vmem:[#allocation3 + $0xf0] sm:$0xff] %vm872, %v2043
      %2109 = vst.msk [vmem:[#allocation3 + $0xf8] sm:$0xff] %vm872, %v2045
      %v2110 = vld [vmem:[%s582 + $0x1] sm:$0xff]
      %v2111 = vld [vmem:[%s582 + $0x9] sm:$0xff]
      %v2112 = vld [vmem:[%s582 + $0x19] sm:$0xff]
      %v2113 = vld [vmem:[%s582 + $0x21] sm:$0xff]
      %v2114 = vld [vmem:[%s582 + $0x31] sm:$0xff]
      %v2115 = vld [vmem:[%s582 + $0x39] sm:$0xff]
      %v2116 = vld [vmem:[%s582 + $0x49] sm:$0xff]
      %v2117 = vld [vmem:[%s582 + $0x51] sm:$0xff]
      %v2118 = vld [vmem:[%s582 + $0x61] sm:$0xff]
      %v2119 = vld [vmem:[%s582 + $0x69] sm:$0xff]
      %v2120 = vld [vmem:[%s582 + $0x79] sm:$0xff]
      %v2121 = vld [vmem:[%s582 + $0x81] sm:$0xff]
      %v2122 = vld [vmem:[%s582 + $0x91] sm:$0xff]
      %v2123 = vld [vmem:[%s582 + $0x99] sm:$0xff]
      %v2124 = vld [vmem:[%s582 + $0xa9] sm:$0xff]
      %v2125 = vld [vmem:[%s582 + $0xb1] sm:$0xff]
      %v2126 = vld [vmem:[%s582 + $0xc1] sm:$0xff]
      %v2127 = vld [vmem:[%s582 + $0xc9] sm:$0xff]
      %v2128 = vld [vmem:[%s582 + $0xd9] sm:$0xff]
      %v2129 = vld [vmem:[%s582 + $0xe1] sm:$0xff]
      %v2130 = vld [vmem:[%s582 + $0xf1] sm:$0xff]
      %v2131 = vld [vmem:[%s582 + $0xf9] sm:$0xff]
      %v2132 = vld [vmem:[%s582 + $0x109] sm:$0xff]
      %v2133 = vld [vmem:[%s582 + $0x111] sm:$0xff]
      %v2134 = vld [vmem:[%s582 + $0x121] sm:$0xff]
      %v2135 = vld [vmem:[%s582 + $0x129] sm:$0xff]
      %v2136 = vld [vmem:[%s582 + $0x139] sm:$0xff]
      %v2137 = vld [vmem:[%s582 + $0x141] sm:$0xff]
      %v2138 = vld [vmem:[%s582 + $0x151] sm:$0xff]
      %v2139 = vld [vmem:[%s582 + $0x159] sm:$0xff]
      %v2140 = vld [vmem:[%s582 + $0x169] sm:$0xff]
      %v2141 = vld [vmem:[%s582 + $0x171] sm:$0xff]
      %2174 = vrot.lane.b32.xlu0 %v2110, 16
      %v2175 = vpop.permute.xlu0 %2174
      %2176 = vrot.lane.b32.xlu0 %v2111, 16
      %v2177 = vpop.permute.xlu0 %2176
      %2178 = vrot.lane.b32.xlu0 %v2112, 16
      %v2179 = vpop.permute.xlu0 %2178
      %2180 = vrot.lane.b32.xlu0 %v2113, 16
      %v2181 = vpop.permute.xlu0 %2180
      %2182 = vrot.lane.b32.xlu0 %v2114, 16
      %v2183 = vpop.permute.xlu0 %2182
      %2184 = vrot.lane.b32.xlu0 %v2115, 16
      %v2185 = vpop.permute.xlu0 %2184
      %2186 = vrot.lane.b32.xlu0 %v2116, 16
      %v2187 = vpop.permute.xlu0 %2186
      %2188 = vrot.lane.b32.xlu0 %v2117, 16
      %v2189 = vpop.permute.xlu0 %2188
      %2190 = vrot.lane.b32.xlu0 %v2118, 16
      %v2191 = vpop.permute.xlu0 %2190
      %2192 = vrot.lane.b32.xlu0 %v2119, 16
      %v2193 = vpop.permute.xlu0 %2192
      %2194 = vrot.lane.b32.xlu0 %v2120, 16
      %v2195 = vpop.permute.xlu0 %2194
      %2196 = vrot.lane.b32.xlu0 %v2121, 16
      %v2197 = vpop.permute.xlu0 %2196
      %2198 = vrot.lane.b32.xlu0 %v2122, 16
      %v2199 = vpop.permute.xlu0 %2198
      %2200 = vrot.lane.b32.xlu0 %v2123, 16
      %v2201 = vpop.permute.xlu0 %2200
      %2202 = vrot.lane.b32.xlu0 %v2124, 16
      %v2203 = vpop.permute.xlu0 %2202
      %2204 = vrot.lane.b32.xlu0 %v2125, 16
      %v2205 = vpop.permute.xlu0 %2204
      %2206 = vrot.lane.b32.xlu0 %v2126, 16
      %v2207 = vpop.permute.xlu0 %2206
      %2208 = vrot.lane.b32.xlu0 %v2127, 16
      %v2209 = vpop.permute.xlu0 %2208
      %2210 = vrot.lane.b32.xlu0 %v2128, 16
      %v2211 = vpop.permute.xlu0 %2210
      %2212 = vrot.lane.b32.xlu0 %v2129, 16
      %v2213 = vpop.permute.xlu0 %2212
      %2214 = vrot.lane.b32.xlu0 %v2130, 16
      %v2215 = vpop.permute.xlu0 %2214
      %2216 = vrot.lane.b32.xlu0 %v2131, 16
      %v2217 = vpop.permute.xlu0 %2216
      %2218 = vrot.lane.b32.xlu0 %v2132, 16
      %v2219 = vpop.permute.xlu0 %2218
      %2220 = vrot.lane.b32.xlu0 %v2133, 16
      %v2221 = vpop.permute.xlu0 %2220
      %2222 = vrot.lane.b32.xlu0 %v2134, 16
      %v2223 = vpop.permute.xlu0 %2222
      %2224 = vrot.lane.b32.xlu0 %v2135, 16
      %v2225 = vpop.permute.xlu0 %2224
      %2226 = vrot.lane.b32.xlu0 %v2136, 16
      %v2227 = vpop.permute.xlu0 %2226
      %2228 = vrot.lane.b32.xlu0 %v2137, 16
      %v2229 = vpop.permute.xlu0 %2228
      %2230 = vrot.lane.b32.xlu0 %v2138, 16
      %v2231 = vpop.permute.xlu0 %2230
      %2232 = vrot.lane.b32.xlu0 %v2139, 16
      %v2233 = vpop.permute.xlu0 %2232
      %2234 = vrot.lane.b32.xlu0 %v2140, 16
      %v2235 = vpop.permute.xlu0 %2234
      %2236 = vrot.lane.b32.xlu0 %v2141, 16
      %v2237 = vpop.permute.xlu0 %2236
      %2270 = vst.msk [vmem:[#allocation3] sm:$0xff] %vm1065, %v2175
      %2271 = vst.msk [vmem:[#allocation3 + $0x8] sm:$0xff] %vm1065, %v2177
      %2272 = vst.msk [vmem:[#allocation3 + $0x10] sm:$0xff] %vm1065, %v2179
      %2273 = vst.msk [vmem:[#allocation3 + $0x18] sm:$0xff] %vm1065, %v2181
      %2274 = vst.msk [vmem:[#allocation3 + $0x20] sm:$0xff] %vm1065, %v2183
      %2275 = vst.msk [vmem:[#allocation3 + $0x28] sm:$0xff] %vm1065, %v2185
      %2276 = vst.msk [vmem:[#allocation3 + $0x30] sm:$0xff] %vm1065, %v2187
      %2277 = vst.msk [vmem:[#allocation3 + $0x38] sm:$0xff] %vm1065, %v2189
      %2278 = vst.msk [vmem:[#allocation3 + $0x40] sm:$0xff] %vm1065, %v2191
      %2279 = vst.msk [vmem:[#allocation3 + $0x48] sm:$0xff] %vm1065, %v2193
      %2280 = vst.msk [vmem:[#allocation3 + $0x50] sm:$0xff] %vm1065, %v2195
      %2281 = vst.msk [vmem:[#allocation3 + $0x58] sm:$0xff] %vm1065, %v2197
      %2282 = vst.msk [vmem:[#allocation3 + $0x60] sm:$0xff] %vm1065, %v2199
      %2283 = vst.msk [vmem:[#allocation3 + $0x68] sm:$0xff] %vm1065, %v2201
      %2284 = vst.msk [vmem:[#allocation3 + $0x70] sm:$0xff] %vm1065, %v2203
      %2285 = vst.msk [vmem:[#allocation3 + $0x78] sm:$0xff] %vm1065, %v2205
      %2286 = vst.msk [vmem:[#allocation3 + $0x80] sm:$0xff] %vm1065, %v2207
      %2287 = vst.msk [vmem:[#allocation3 + $0x88] sm:$0xff] %vm1065, %v2209
      %2288 = vst.msk [vmem:[#allocation3 + $0x90] sm:$0xff] %vm1065, %v2211
      %2289 = vst.msk [vmem:[#allocation3 + $0x98] sm:$0xff] %vm1065, %v2213
      %2290 = vst.msk [vmem:[#allocation3 + $0xa0] sm:$0xff] %vm1065, %v2215
      %2291 = vst.msk [vmem:[#allocation3 + $0xa8] sm:$0xff] %vm1065, %v2217
      %2292 = vst.msk [vmem:[#allocation3 + $0xb0] sm:$0xff] %vm1065, %v2219
      %2293 = vst.msk [vmem:[#allocation3 + $0xb8] sm:$0xff] %vm1065, %v2221
      %2294 = vst.msk [vmem:[#allocation3 + $0xc0] sm:$0xff] %vm1065, %v2223
      %2295 = vst.msk [vmem:[#allocation3 + $0xc8] sm:$0xff] %vm1065, %v2225
      %2296 = vst.msk [vmem:[#allocation3 + $0xd0] sm:$0xff] %vm1065, %v2227
      %2297 = vst.msk [vmem:[#allocation3 + $0xd8] sm:$0xff] %vm1065, %v2229
      %2298 = vst.msk [vmem:[#allocation3 + $0xe0] sm:$0xff] %vm1065, %v2231
      %2299 = vst.msk [vmem:[#allocation3 + $0xe8] sm:$0xff] %vm1065, %v2233
      %2300 = vst.msk [vmem:[#allocation3 + $0xf0] sm:$0xff] %vm1065, %v2235
      %2301 = vst.msk [vmem:[#allocation3 + $0xf8] sm:$0xff] %vm1065, %v2237
      %v2302 = vld [vmem:[%s582 + $0x2] sm:$0xff]
      %v2303 = vld [vmem:[%s582 + $0xa] sm:$0xff]
      %v2304 = vld [vmem:[%s582 + $0x1a] sm:$0xff]
      %v2305 = vld [vmem:[%s582 + $0x22] sm:$0xff]
      %v2306 = vld [vmem:[%s582 + $0x32] sm:$0xff]
      %v2307 = vld [vmem:[%s582 + $0x3a] sm:$0xff]
      %v2308 = vld [vmem:[%s582 + $0x4a] sm:$0xff]
      %v2309 = vld [vmem:[%s582 + $0x52] sm:$0xff]
      %v2310 = vld [vmem:[%s582 + $0x62] sm:$0xff]
      %v2311 = vld [vmem:[%s582 + $0x6a] sm:$0xff]
      %v2312 = vld [vmem:[%s582 + $0x7a] sm:$0xff]
      %v2313 = vld [vmem:[%s582 + $0x82] sm:$0xff]
      %v2314 = vld [vmem:[%s582 + $0x92] sm:$0xff]
      %v2315 = vld [vmem:[%s582 + $0x9a] sm:$0xff]
      %v2316 = vld [vmem:[%s582 + $0xaa] sm:$0xff]
      %v2317 = vld [vmem:[%s582 + $0xb2] sm:$0xff]
      %v2318 = vld [vmem:[%s582 + $0xc2] sm:$0xff]
      %v2319 = vld [vmem:[%s582 + $0xca] sm:$0xff]
      %v2320 = vld [vmem:[%s582 + $0xda] sm:$0xff]
      %v2321 = vld [vmem:[%s582 + $0xe2] sm:$0xff]
      %v2322 = vld [vmem:[%s582 + $0xf2] sm:$0xff]
      %v2323 = vld [vmem:[%s582 + $0xfa] sm:$0xff]
      %v2324 = vld [vmem:[%s582 + $0x10a] sm:$0xff]
      %v2325 = vld [vmem:[%s582 + $0x112] sm:$0xff]
      %v2326 = vld [vmem:[%s582 + $0x122] sm:$0xff]
      %v2327 = vld [vmem:[%s582 + $0x12a] sm:$0xff]
      %v2328 = vld [vmem:[%s582 + $0x13a] sm:$0xff]
      %v2329 = vld [vmem:[%s582 + $0x142] sm:$0xff]
      %v2330 = vld [vmem:[%s582 + $0x152] sm:$0xff]
      %v2331 = vld [vmem:[%s582 + $0x15a] sm:$0xff]
      %v2332 = vld [vmem:[%s582 + $0x16a] sm:$0xff]
      %v2333 = vld [vmem:[%s582 + $0x172] sm:$0xff]
      %2366 = vrot.lane.b32.xlu0 %v2302, 24
      %v2367 = vpop.permute.xlu0 %2366
      %2368 = vrot.lane.b32.xlu0 %v2303, 24
      %v2369 = vpop.permute.xlu0 %2368
      %2370 = vrot.lane.b32.xlu0 %v2304, 24
      %v2371 = vpop.permute.xlu0 %2370
      %2372 = vrot.lane.b32.xlu0 %v2305, 24
      %v2373 = vpop.permute.xlu0 %2372
      %2374 = vrot.lane.b32.xlu0 %v2306, 24
      %v2375 = vpop.permute.xlu0 %2374
      %2376 = vrot.lane.b32.xlu0 %v2307, 24
      %v2377 = vpop.permute.xlu0 %2376
      %2378 = vrot.lane.b32.xlu0 %v2308, 24
      %v2379 = vpop.permute.xlu0 %2378
      %2380 = vrot.lane.b32.xlu0 %v2309, 24
      %v2381 = vpop.permute.xlu0 %2380
      %2382 = vrot.lane.b32.xlu0 %v2310, 24
      %v2383 = vpop.permute.xlu0 %2382
      %2384 = vrot.lane.b32.xlu0 %v2311, 24
      %v2385 = vpop.permute.xlu0 %2384
      %2386 = vrot.lane.b32.xlu0 %v2312, 24
      %v2387 = vpop.permute.xlu0 %2386
      %2388 = vrot.lane.b32.xlu0 %v2313, 24
      %v2389 = vpop.permute.xlu0 %2388
      %2390 = vrot.lane.b32.xlu0 %v2314, 24
      %v2391 = vpop.permute.xlu0 %2390
      %2392 = vrot.lane.b32.xlu0 %v2315, 24
      %v2393 = vpop.permute.xlu0 %2392
      %2394 = vrot.lane.b32.xlu0 %v2316, 24
      %v2395 = vpop.permute.xlu0 %2394
      %2396 = vrot.lane.b32.xlu0 %v2317, 24
      %v2397 = vpop.permute.xlu0 %2396
      %2398 = vrot.lane.b32.xlu0 %v2318, 24
      %v2399 = vpop.permute.xlu0 %2398
      %2400 = vrot.lane.b32.xlu0 %v2319, 24
      %v2401 = vpop.permute.xlu0 %2400
      %2402 = vrot.lane.b32.xlu0 %v2320, 24
      %v2403 = vpop.permute.xlu0 %2402
      %2404 = vrot.lane.b32.xlu0 %v2321, 24
      %v2405 = vpop.permute.xlu0 %2404
      %2406 = vrot.lane.b32.xlu0 %v2322, 24
      %v2407 = vpop.permute.xlu0 %2406
      %2408 = vrot.lane.b32.xlu0 %v2323, 24
      %v2409 = vpop.permute.xlu0 %2408
      %2410 = vrot.lane.b32.xlu0 %v2324, 24
      %v2411 = vpop.permute.xlu0 %2410
      %2412 = vrot.lane.b32.xlu0 %v2325, 24
      %v2413 = vpop.permute.xlu0 %2412
      %2414 = vrot.lane.b32.xlu0 %v2326, 24
      %v2415 = vpop.permute.xlu0 %2414
      %2416 = vrot.lane.b32.xlu0 %v2327, 24
      %v2417 = vpop.permute.xlu0 %2416
      %2418 = vrot.lane.b32.xlu0 %v2328, 24
      %v2419 = vpop.permute.xlu0 %2418
      %2420 = vrot.lane.b32.xlu0 %v2329, 24
      %v2421 = vpop.permute.xlu0 %2420
      %2422 = vrot.lane.b32.xlu0 %v2330, 24
      %v2423 = vpop.permute.xlu0 %2422
      %2424 = vrot.lane.b32.xlu0 %v2331, 24
      %v2425 = vpop.permute.xlu0 %2424
      %2426 = vrot.lane.b32.xlu0 %v2332, 24
      %v2427 = vpop.permute.xlu0 %2426
      %2428 = vrot.lane.b32.xlu0 %v2333, 24
      %v2429 = vpop.permute.xlu0 %2428
      %2462 = vst.msk [vmem:[#allocation3] sm:$0xff] %vm1258, %v2367
      %2463 = vst.msk [vmem:[#allocation3 + $0x8] sm:$0xff] %vm1258, %v2369
      %2464 = vst.msk [vmem:[#allocation3 + $0x10] sm:$0xff] %vm1258, %v2371
      %2465 = vst.msk [vmem:[#allocation3 + $0x18] sm:$0xff] %vm1258, %v2373
      %2466 = vst.msk [vmem:[#allocation3 + $0x20] sm:$0xff] %vm1258, %v2375
      %2467 = vst.msk [vmem:[#allocation3 + $0x28] sm:$0xff] %vm1258, %v2377
      %2468 = vst.msk [vmem:[#allocation3 + $0x30] sm:$0xff] %vm1258, %v2379
      %2469 = vst.msk [vmem:[#allocation3 + $0x38] sm:$0xff] %vm1258, %v2381
      %2470 = vst.msk [vmem:[#allocation3 + $0x40] sm:$0xff] %vm1258, %v2383
      %2471 = vst.msk [vmem:[#allocation3 + $0x48] sm:$0xff] %vm1258, %v2385
      %2472 = vst.msk [vmem:[#allocation3 + $0x50] sm:$0xff] %vm1258, %v2387
      %2473 = vst.msk [vmem:[#allocation3 + $0x58] sm:$0xff] %vm1258, %v2389
      %2474 = vst.msk [vmem:[#allocation3 + $0x60] sm:$0xff] %vm1258, %v2391
      %2475 = vst.msk [vmem:[#allocation3 + $0x68] sm:$0xff] %vm1258, %v2393
      %2476 = vst.msk [vmem:[#allocation3 + $0x70] sm:$0xff] %vm1258, %v2395
      %2477 = vst.msk [vmem:[#allocation3 + $0x78] sm:$0xff] %vm1258, %v2397
      %2478 = vst.msk [vmem:[#allocation3 + $0x80] sm:$0xff] %vm1258, %v2399
      %2479 = vst.msk [vmem:[#allocation3 + $0x88] sm:$0xff] %vm1258, %v2401
      %2480 = vst.msk [vmem:[#allocation3 + $0x90] sm:$0xff] %vm1258, %v2403
      %2481 = vst.msk [vmem:[#allocation3 + $0x98] sm:$0xff] %vm1258, %v2405
      %2482 = vst.msk [vmem:[#allocation3 + $0xa0] sm:$0xff] %vm1258, %v2407
      %2483 = vst.msk [vmem:[#allocation3 + $0xa8] sm:$0xff] %vm1258, %v2409
      %2484 = vst.msk [vmem:[#allocation3 + $0xb0] sm:$0xff] %vm1258, %v2411
      %2485 = vst.msk [vmem:[#allocation3 + $0xb8] sm:$0xff] %vm1258, %v2413
      %2486 = vst.msk [vmem:[#allocation3 + $0xc0] sm:$0xff] %vm1258, %v2415
      %2487 = vst.msk [vmem:[#allocation3 + $0xc8] sm:$0xff] %vm1258, %v2417
      %2488 = vst.msk [vmem:[#allocation3 + $0xd0] sm:$0xff] %vm1258, %v2419
      %2489 = vst.msk [vmem:[#allocation3 + $0xd8] sm:$0xff] %vm1258, %v2421
      %2490 = vst.msk [vmem:[#allocation3 + $0xe0] sm:$0xff] %vm1258, %v2423
      %2491 = vst.msk [vmem:[#allocation3 + $0xe8] sm:$0xff] %vm1258, %v2425
      %2492 = vst.msk [vmem:[#allocation3 + $0xf0] sm:$0xff] %vm1258, %v2427
      %2493 = vst.msk [vmem:[#allocation3 + $0xf8] sm:$0xff] %vm1258, %v2429
      %v2494 = vld [vmem:[#allocation3] sm:$0xff]
      %v2495 = vld [vmem:[#allocation3 + $0x8] sm:$0xff]
      %v2496 = vld [vmem:[#allocation3 + $0x10] sm:$0xff]
      %v2497 = vld [vmem:[#allocation3 + $0x18] sm:$0xff]
      %v2498 = vld [vmem:[#allocation3 + $0x20] sm:$0xff]
      %v2499 = vld [vmem:[#allocation3 + $0x28] sm:$0xff]
      %v2500 = vld [vmem:[#allocation3 + $0x30] sm:$0xff]
      %v2501 = vld [vmem:[#allocation3 + $0x38] sm:$0xff]
      %v2502 = vld [vmem:[#allocation3 + $0x40] sm:$0xff]
      %v2503 = vld [vmem:[#allocation3 + $0x48] sm:$0xff]
      %v2504 = vld [vmem:[#allocation3 + $0x50] sm:$0xff]
      %v2505 = vld [vmem:[#allocation3 + $0x58] sm:$0xff]
      %v2506 = vld [vmem:[#allocation3 + $0x60] sm:$0xff]
      %v2507 = vld [vmem:[#allocation3 + $0x68] sm:$0xff]
      %v2508 = vld [vmem:[#allocation3 + $0x70] sm:$0xff]
      %v2509 = vld [vmem:[#allocation3 + $0x78] sm:$0xff]
      %v2510 = vld [vmem:[#allocation3 + $0x80] sm:$0xff]
      %v2511 = vld [vmem:[#allocation3 + $0x88] sm:$0xff]
      %v2512 = vld [vmem:[#allocation3 + $0x90] sm:$0xff]
      %v2513 = vld [vmem:[#allocation3 + $0x98] sm:$0xff]
      %v2514 = vld [vmem:[#allocation3 + $0xa0] sm:$0xff]
      %v2515 = vld [vmem:[#allocation3 + $0xa8] sm:$0xff]
      %v2516 = vld [vmem:[#allocation3 + $0xb0] sm:$0xff]
      %v2517 = vld [vmem:[#allocation3 + $0xb8] sm:$0xff]
      %v2518 = vld [vmem:[#allocation3 + $0xc0] sm:$0xff]
      %v2519 = vld [vmem:[#allocation3 + $0xc8] sm:$0xff]
      %v2520 = vld [vmem:[#allocation3 + $0xd0] sm:$0xff]
      %v2521 = vld [vmem:[#allocation3 + $0xd8] sm:$0xff]
      %v2522 = vld [vmem:[#allocation3 + $0xe0] sm:$0xff]
      %v2523 = vld [vmem:[#allocation3 + $0xe8] sm:$0xff]
      %v2524 = vld [vmem:[#allocation3 + $0xf0] sm:$0xff]
      %v2525 = vld [vmem:[#allocation3 + $0xf8] sm:$0xff]
      %s2526 = scalar_lea.vmem %s3, 32
      %v2527 = vld [vmem:[%s2526] sm:$0xff]
      %v2528 = vld [vmem:[%s2526 + $0x8] sm:$0xff]
      %v2529 = vld [vmem:[%s2526 + $0x10] sm:$0xff]
      %v2530 = vld [vmem:[%s2526 + $0x18] sm:$0xff]
      %v2532 = vsel %vm1327, %v2494, 0
      %v2535 = vsel %vm1327, %v2495, 0
      %v2538 = vsel %vm1327, %v2496, 0
      %v2541 = vsel %vm1327, %v2497, 0
      %v2544 = vsel %vm1327, %v2498, 0
      %v2547 = vsel %vm1327, %v2499, 0
      %v2550 = vsel %vm1327, %v2500, 0
      %v2553 = vsel %vm1327, %v2501, 0
      %v2556 = vsel %vm1327, %v2502, 0
      %v2559 = vsel %vm1327, %v2503, 0
      %v2562 = vsel %vm1327, %v2504, 0
      %v2565 = vsel %vm1327, %v2505, 0
      %v2568 = vsel %vm1327, %v2506, 0
      %v2571 = vsel %vm1327, %v2507, 0
      %v2574 = vsel %vm1327, %v2508, 0
      %v2577 = vsel %vm1327, %v2509, 0
      %v2580 = vsel %vm1327, %v2510, 0
      %v2583 = vsel %vm1327, %v2511, 0
      %v2586 = vsel %vm1327, %v2512, 0
      %v2589 = vsel %vm1327, %v2513, 0
      %v2592 = vsel %vm1327, %v2514, 0
      %v2595 = vsel %vm1327, %v2515, 0
      %v2598 = vsel %vm1327, %v2516, 0
      %v2601 = vsel %vm1327, %v2517, 0
      %v2604 = vsel %vm1327, %v2518, 0
      %v2607 = vsel %vm1327, %v2519, 0
      %v2610 = vsel %vm1327, %v2520, 0
      %v2613 = vsel %vm1327, %v2521, 0
      %v2616 = vsel %vm1327, %v2522, 0
      %v2619 = vsel %vm1327, %v2523, 0
      %v2622 = vsel %vm1327, %v2524, 0
      %v2625 = vsel %vm1327, %v2525, 0
      %2627 = vmatprep.subr.mxu0 0.0
      %2628 = vmatpush1.msra.mxu0 0.0
      %2629 = vmatprep.subr.mxu0 0.0
      %2630 = vmatpush1.msra.mxu0 0.0
      %2631 = vmatprep.subr.mxu0 0.0
      %2632 = vmatpush1.msra.mxu0 0.0
      %2633 = vmatprep.subr.mxu0 0.0
      %2634 = vmatpush1.msra.mxu0 0.0
      %2635 = vmatprep.subr.mxu0 0.0
      %2636 = vmatpush1.msra.mxu0 0.0
      %2637 = vmatprep.subr.mxu0 0.0
      %2638 = vmatpush1.msra.mxu0 0.0
      %2639 = vmatprep.subr.mxu0 0.0
      %2640 = vmatpush1.msra.mxu0 0.0
      %2641 = vmatprep.subr.mxu0 0.0
      %2642 = vmatpush1.msra.mxu0 0.0
      %2643 = vmatprep.subr.mxu0 0.0
      %2644 = vmatpush1.msra.mxu0 0.0
      %2645 = vmatprep.subr.mxu0 0.0
      %2646 = vmatpush1.msra.mxu0 0.0
      %2647 = vmatprep.subr.mxu0 0.0
      %2648 = vmatpush1.msra.mxu0 0.0
      %2649 = vmatprep.subr.mxu0 0.0
      %2650 = vmatpush1.msra.mxu0 0.0
      %2651 = vmatprep.subr.mxu0 0.0
      %2652 = vmatpush1.msra.mxu0 %v2530
      %2653 = vmatprep.subr.mxu0 0.0
      %2654 = vmatpush1.msra.mxu0 %v2529
      %2655 = vmatprep.subr.mxu0 0.0
      %2656 = vmatpush1.msra.mxu0 %v2528
      %2657 = vmatprep.subr.mxu0 0.0
      %2658 = vmatpush1.msra.mxu0 %v2527
      %2659 = vmatprep.subr.mxu0 0.0
      %2660 = vmatpush2.msra.mxu0 0.0
      %2661 = vmatprep.subr.mxu0 0.0
      %2662 = vmatpush2.msra.mxu0 0.0
      %2663 = vmatprep.subr.mxu0 0.0
      %2664 = vmatpush2.msra.mxu0 0.0
      %2665 = vmatprep.subr.mxu0 0.0
      %2666 = vmatpush2.msra.mxu0 0.0
      %2667 = vmatprep.subr.mxu0 0.0
      %2668 = vmatpush2.msra.mxu0 0.0
      %2669 = vmatprep.subr.mxu0 0.0
      %2670 = vmatpush2.msra.mxu0 0.0
      %2671 = vmatprep.subr.mxu0 0.0
      %2672 = vmatpush2.msra.mxu0 0.0
      %2673 = vmatprep.subr.mxu0 0.0
      %2674 = vmatpush2.msra.mxu0 0.0
      %2675 = vmatprep.subr.mxu0 0.0
      %2676 = vmatpush2.msra.mxu0 0.0
      %2677 = vmatprep.subr.mxu0 0.0
      %2678 = vmatpush2.msra.mxu0 0.0
      %2679 = vmatprep.subr.mxu0 0.0
      %2680 = vmatpush2.msra.mxu0 0.0
      %2681 = vmatprep.subr.mxu0 0.0
      %2682 = vmatpush2.msra.mxu0 0.0
      %2683 = vmatprep.subr.mxu0 0.0
      %2684 = vmatpush2.msra.mxu0 0.0
      %2685 = vmatprep.subr.mxu0 0.0
      %2686 = vmatpush2.msra.mxu0 0.0
      %2687 = vmatprep.subr.mxu0 0.0
      %2688 = vmatpush2.msra.mxu0 0.0
      %2689 = vmatprep.subr.mxu0 0.0
      %2690 = vmatpush2.msra.mxu0 0.0
      %2691 = vmatprep.mubr.f32.mxu0 0.0
      %2692 = vmatmul.mubr.f32.gmra.mxu0 %v2532
      %v2693 = vpop.f32.mrf.mxu0
      %v2694 = vadd.f32 0.0, %v2693
      %v2695 = vpop.f32.mrf.mxu0
      %2696 = vmatprep.mubr.f32.mxu0 0.0
      %2697 = vmatmul.mubr.f32.gmra.mxu0 %v2535
      %v2698 = vpop.f32.mrf.mxu0
      %v2699 = vadd.f32 0.0, %v2698
      %v2700 = vpop.f32.mrf.mxu0
      %2701 = vmatprep.mubr.f32.mxu0 0.0
      %2702 = vmatmul.mubr.f32.gmra.mxu0 %v2538
      %v2703 = vpop.f32.mrf.mxu0
      %v2704 = vadd.f32 0.0, %v2703
      %v2705 = vpop.f32.mrf.mxu0
      %2706 = vmatprep.mubr.f32.mxu0 0.0
      %2707 = vmatmul.mubr.f32.gmra.mxu0 %v2541
      %v2708 = vpop.f32.mrf.mxu0
      %v2709 = vadd.f32 0.0, %v2708
      %v2710 = vpop.f32.mrf.mxu0
      %2711 = vmatprep.mubr.f32.mxu0 0.0
      %2712 = vmatmul.mubr.f32.gmra.mxu0 %v2544
      %v2713 = vpop.f32.mrf.mxu0
      %v2714 = vadd.f32 0.0, %v2713
      %v2715 = vpop.f32.mrf.mxu0
      %2716 = vmatprep.mubr.f32.mxu0 0.0
      %2717 = vmatmul.mubr.f32.gmra.mxu0 %v2547
      %v2718 = vpop.f32.mrf.mxu0
      %v2719 = vadd.f32 0.0, %v2718
      %v2720 = vpop.f32.mrf.mxu0
      %2721 = vmatprep.mubr.f32.mxu0 0.0
      %2722 = vmatmul.mubr.f32.gmra.mxu0 %v2550
      %v2723 = vpop.f32.mrf.mxu0
      %v2724 = vadd.f32 0.0, %v2723
      %v2725 = vpop.f32.mrf.mxu0
      %2726 = vmatprep.mubr.f32.mxu0 0.0
      %2727 = vmatmul.mubr.f32.gmra.mxu0 %v2553
      %v2728 = vpop.f32.mrf.mxu0
      %v2729 = vadd.f32 0.0, %v2728
      %v2730 = vpop.f32.mrf.mxu0
      %2731 = vmatprep.mubr.f32.mxu0 0.0
      %2732 = vmatmul.mubr.f32.gmra.mxu0 %v2556
      %v2733 = vpop.f32.mrf.mxu0
      %v2734 = vadd.f32 0.0, %v2733
      %v2735 = vpop.f32.mrf.mxu0
      %2736 = vmatprep.mubr.f32.mxu0 0.0
      %2737 = vmatmul.mubr.f32.gmra.mxu0 %v2559
      %v2738 = vpop.f32.mrf.mxu0
      %v2739 = vadd.f32 0.0, %v2738
      %v2740 = vpop.f32.mrf.mxu0
      %2741 = vmatprep.mubr.f32.mxu0 0.0
      %2742 = vmatmul.mubr.f32.gmra.mxu0 %v2562
      %v2743 = vpop.f32.mrf.mxu0
      %v2744 = vadd.f32 0.0, %v2743
      %v2745 = vpop.f32.mrf.mxu0
      %2746 = vmatprep.mubr.f32.mxu0 0.0
      %2747 = vmatmul.mubr.f32.gmra.mxu0 %v2565
      %v2748 = vpop.f32.mrf.mxu0
      %v2749 = vadd.f32 0.0, %v2748
      %v2750 = vpop.f32.mrf.mxu0
      %2751 = vmatprep.mubr.f32.mxu0 0.0
      %2752 = vmatmul.mubr.f32.gmra.mxu0 %v2568
      %v2753 = vpop.f32.mrf.mxu0
      %v2754 = vadd.f32 0.0, %v2753
      %v2755 = vpop.f32.mrf.mxu0
      %2756 = vmatprep.mubr.f32.mxu0 0.0
      %2757 = vmatmul.mubr.f32.gmra.mxu0 %v2571
      %v2758 = vpop.f32.mrf.mxu0
      %v2759 = vadd.f32 0.0, %v2758
      %v2760 = vpop.f32.mrf.mxu0
      %2761 = vmatprep.mubr.f32.mxu0 0.0
      %2762 = vmatmul.mubr.f32.gmra.mxu0 %v2574
      %v2763 = vpop.f32.mrf.mxu0
      %v2764 = vadd.f32 0.0, %v2763
      %v2765 = vpop.f32.mrf.mxu0
      %2766 = vmatprep.mubr.f32.mxu0 0.0
      %2767 = vmatmul.mubr.f32.gmra.mxu0 %v2577
      %v2768 = vpop.f32.mrf.mxu0
      %v2769 = vadd.f32 0.0, %v2768
      %v2770 = vpop.f32.mrf.mxu0
      %2771 = vmatprep.mubr.f32.mxu0 0.0
      %2772 = vmatmul.mubr.f32.gmra.mxu0 %v2580
      %v2773 = vpop.f32.mrf.mxu0
      %v2774 = vadd.f32 0.0, %v2773
      %v2775 = vpop.f32.mrf.mxu0
      %2776 = vmatprep.mubr.f32.mxu0 0.0
      %2777 = vmatmul.mubr.f32.gmra.mxu0 %v2583
      %v2778 = vpop.f32.mrf.mxu0
      %v2779 = vadd.f32 0.0, %v2778
      %v2780 = vpop.f32.mrf.mxu0
      %2781 = vmatprep.mubr.f32.mxu0 0.0
      %2782 = vmatmul.mubr.f32.gmra.mxu0 %v2586
      %v2783 = vpop.f32.mrf.mxu0
      %v2784 = vadd.f32 0.0, %v2783
      %v2785 = vpop.f32.mrf.mxu0
      %2786 = vmatprep.mubr.f32.mxu0 0.0
      %2787 = vmatmul.mubr.f32.gmra.mxu0 %v2589
      %v2788 = vpop.f32.mrf.mxu0
      %v2789 = vadd.f32 0.0, %v2788
      %v2790 = vpop.f32.mrf.mxu0
      %2791 = vmatprep.mubr.f32.mxu0 0.0
      %2792 = vmatmul.mubr.f32.gmra.mxu0 %v2592
      %v2793 = vpop.f32.mrf.mxu0
      %v2794 = vadd.f32 0.0, %v2793
      %v2795 = vpop.f32.mrf.mxu0
      %2796 = vmatprep.mubr.f32.mxu0 0.0
      %2797 = vmatmul.mubr.f32.gmra.mxu0 %v2595
      %v2798 = vpop.f32.mrf.mxu0
      %v2799 = vadd.f32 0.0, %v2798
      %v2800 = vpop.f32.mrf.mxu0
      %2801 = vmatprep.mubr.f32.mxu0 0.0
      %2802 = vmatmul.mubr.f32.gmra.mxu0 %v2598
      %v2803 = vpop.f32.mrf.mxu0
      %v2804 = vadd.f32 0.0, %v2803
      %v2805 = vpop.f32.mrf.mxu0
      %2806 = vmatprep.mubr.f32.mxu0 0.0
      %2807 = vmatmul.mubr.f32.gmra.mxu0 %v2601
      %v2808 = vpop.f32.mrf.mxu0
      %v2809 = vadd.f32 0.0, %v2808
      %v2810 = vpop.f32.mrf.mxu0
      %2811 = vmatprep.mubr.f32.mxu0 0.0
      %2812 = vmatmul.mubr.f32.gmra.mxu0 %v2604
      %v2813 = vpop.f32.mrf.mxu0
      %v2814 = vadd.f32 0.0, %v2813
      %v2815 = vpop.f32.mrf.mxu0
      %2816 = vmatprep.mubr.f32.mxu0 0.0
      %2817 = vmatmul.mubr.f32.gmra.mxu0 %v2607
      %v2818 = vpop.f32.mrf.mxu0
      %v2819 = vadd.f32 0.0, %v2818
      %v2820 = vpop.f32.mrf.mxu0
      %2821 = vmatprep.mubr.f32.mxu0 0.0
      %2822 = vmatmul.mubr.f32.gmra.mxu0 %v2610
      %v2823 = vpop.f32.mrf.mxu0
      %v2824 = vadd.f32 0.0, %v2823
      %v2825 = vpop.f32.mrf.mxu0
      %2826 = vmatprep.mubr.f32.mxu0 0.0
      %2827 = vmatmul.mubr.f32.gmra.mxu0 %v2613
      %v2828 = vpop.f32.mrf.mxu0
      %v2829 = vadd.f32 0.0, %v2828
      %v2830 = vpop.f32.mrf.mxu0
      %2831 = vmatprep.mubr.f32.mxu0 0.0
      %2832 = vmatmul.mubr.f32.gmra.mxu0 %v2616
      %v2833 = vpop.f32.mrf.mxu0
      %v2834 = vadd.f32 0.0, %v2833
      %v2835 = vpop.f32.mrf.mxu0
      %2836 = vmatprep.mubr.f32.mxu0 0.0
      %2837 = vmatmul.mubr.f32.gmra.mxu0 %v2619
      %v2838 = vpop.f32.mrf.mxu0
      %v2839 = vadd.f32 0.0, %v2838
      %v2840 = vpop.f32.mrf.mxu0
      %2841 = vmatprep.mubr.f32.mxu0 0.0
      %2842 = vmatmul.mubr.f32.gmra.mxu0 %v2622
      %v2843 = vpop.f32.mrf.mxu0
      %v2844 = vadd.f32 0.0, %v2843
      %v2845 = vpop.f32.mrf.mxu0
      %2846 = vmatprep.mubr.f32.mxu0 0.0
      %2847 = vmatmul.mubr.f32.gmra.mxu0 %v2625
      %v2848 = vpop.f32.mrf.mxu0
      %v2849 = vadd.f32 0.0, %v2848
      %v2850 = vpop.f32.mrf.mxu0
      %2851 = vdwg.mxu0
      %s2852 = scalar_lea.vmem %s233, 256
      %2853 = vst.msk [vmem:[%s2852] sm:$0xff] %vm1649, %v2694
      %2854 = vst.msk [vmem:[%s2852 + $0x8] sm:$0xff] %vm1649, %v2699
      %2855 = vst.msk [vmem:[%s2852 + $0x10] sm:$0xff] %vm1649, %v2704
      %2856 = vst.msk [vmem:[%s2852 + $0x18] sm:$0xff] %vm1649, %v2709
      %2857 = vst.msk [vmem:[%s2852 + $0x20] sm:$0xff] %vm1649, %v2714
      %2858 = vst.msk [vmem:[%s2852 + $0x28] sm:$0xff] %vm1649, %v2719
      %2859 = vst.msk [vmem:[%s2852 + $0x30] sm:$0xff] %vm1649, %v2724
      %2860 = vst.msk [vmem:[%s2852 + $0x38] sm:$0xff] %vm1649, %v2729
      %2861 = vst.msk [vmem:[%s2852 + $0x40] sm:$0xff] %vm1649, %v2734
      %2862 = vst.msk [vmem:[%s2852 + $0x48] sm:$0xff] %vm1649, %v2739
      %2863 = vst.msk [vmem:[%s2852 + $0x50] sm:$0xff] %vm1649, %v2744
      %2864 = vst.msk [vmem:[%s2852 + $0x58] sm:$0xff] %vm1649, %v2749
      %2865 = vst.msk [vmem:[%s2852 + $0x60] sm:$0xff] %vm1649, %v2754
      %2866 = vst.msk [vmem:[%s2852 + $0x68] sm:$0xff] %vm1649, %v2759
      %2867 = vst.msk [vmem:[%s2852 + $0x70] sm:$0xff] %vm1649, %v2764
      %2868 = vst.msk [vmem:[%s2852 + $0x78] sm:$0xff] %vm1649, %v2769
      %2869 = vst.msk [vmem:[%s2852 + $0x80] sm:$0xff] %vm1649, %v2774
      %2870 = vst.msk [vmem:[%s2852 + $0x88] sm:$0xff] %vm1649, %v2779
      %2871 = vst.msk [vmem:[%s2852 + $0x90] sm:$0xff] %vm1649, %v2784
      %2872 = vst.msk [vmem:[%s2852 + $0x98] sm:$0xff] %vm1649, %v2789
      %2873 = vst.msk [vmem:[%s2852 + $0xa0] sm:$0xff] %vm1649, %v2794
      %2874 = vst.msk [vmem:[%s2852 + $0xa8] sm:$0xff] %vm1649, %v2799
      %2875 = vst.msk [vmem:[%s2852 + $0xb0] sm:$0xff] %vm1649, %v2804
      %2876 = vst.msk [vmem:[%s2852 + $0xb8] sm:$0xff] %vm1649, %v2809
      %2877 = vst.msk [vmem:[%s2852 + $0xc0] sm:$0xff] %vm1649, %v2814
      %2878 = vst.msk [vmem:[%s2852 + $0xc8] sm:$0xff] %vm1649, %v2819
      %2879 = vst.msk [vmem:[%s2852 + $0xd0] sm:$0xff] %vm1649, %v2824
      %2880 = vst.msk [vmem:[%s2852 + $0xd8] sm:$0xff] %vm1649, %v2829
      %2881 = vst.msk [vmem:[%s2852 + $0xe0] sm:$0xff] %vm1649, %v2834
      %2882 = vst.msk [vmem:[%s2852 + $0xe8] sm:$0xff] %vm1649, %v2839
      %2883 = vst.msk [vmem:[%s2852 + $0xf0] sm:$0xff] %vm1649, %v2844
      %2884 = vst.msk [vmem:[%s2852 + $0xf8] sm:$0xff] %vm1649, %v2849
      %v2885 = vsel %vm1649, %v2694, 0.0
      %v2886 = vsel %vm1649, %v2699, 0.0
      %v2887 = vadd.f32 %v2885, %v2886
      %v2888 = vsel %vm1649, %v2704, 0.0
      %v2889 = vadd.f32 %v2887, %v2888
      %v2890 = vsel %vm1649, %v2709, 0.0
      %v2891 = vadd.f32 %v2889, %v2890
      %v2892 = vsel %vm1649, %v2714, 0.0
      %v2893 = vadd.f32 %v2891, %v2892
      %v2894 = vsel %vm1649, %v2719, 0.0
      %v2895 = vadd.f32 %v2893, %v2894
      %v2896 = vsel %vm1649, %v2724, 0.0
      %v2897 = vadd.f32 %v2895, %v2896
      %v2898 = vsel %vm1649, %v2729, 0.0
      %v2899 = vadd.f32 %v2897, %v2898
      %v2900 = vsel %vm1649, %v2734, 0.0
      %v2901 = vadd.f32 %v2899, %v2900
      %v2902 = vsel %vm1649, %v2739, 0.0
      %v2903 = vadd.f32 %v2901, %v2902
      %v2904 = vsel %vm1649, %v2744, 0.0
      %v2905 = vadd.f32 %v2903, %v2904
      %v2906 = vsel %vm1649, %v2749, 0.0
      %v2907 = vadd.f32 %v2905, %v2906
      %v2908 = vsel %vm1649, %v2754, 0.0
      %v2909 = vadd.f32 %v2907, %v2908
      %v2910 = vsel %vm1649, %v2759, 0.0
      %v2911 = vadd.f32 %v2909, %v2910
      %v2912 = vsel %vm1649, %v2764, 0.0
      %v2913 = vadd.f32 %v2911, %v2912
      %v2914 = vsel %vm1649, %v2769, 0.0
      %v2915 = vadd.f32 %v2913, %v2914
      %v2916 = vsel %vm1649, %v2774, 0.0
      %v2917 = vadd.f32 %v2915, %v2916
      %v2918 = vsel %vm1649, %v2779, 0.0
      %v2919 = vadd.f32 %v2917, %v2918
      %v2920 = vsel %vm1649, %v2784, 0.0
      %v2921 = vadd.f32 %v2919, %v2920
      %v2922 = vsel %vm1649, %v2789, 0.0
      %v2923 = vadd.f32 %v2921, %v2922
      %v2924 = vsel %vm1649, %v2794, 0.0
      %v2925 = vadd.f32 %v2923, %v2924
      %v2926 = vsel %vm1649, %v2799, 0.0
      %v2927 = vadd.f32 %v2925, %v2926
      %v2928 = vsel %vm1649, %v2804, 0.0
      %v2929 = vadd.f32 %v2927, %v2928
      %v2930 = vsel %vm1649, %v2809, 0.0
      %v2931 = vadd.f32 %v2929, %v2930
      %v2932 = vsel %vm1649, %v2814, 0.0
      %v2933 = vadd.f32 %v2931, %v2932
      %v2934 = vsel %vm1649, %v2819, 0.0
      %v2935 = vadd.f32 %v2933, %v2934
      %v2936 = vsel %vm1649, %v2824, 0.0
      %v2937 = vadd.f32 %v2935, %v2936
      %v2938 = vsel %vm1649, %v2829, 0.0
      %v2939 = vadd.f32 %v2937, %v2938
      %v2940 = vsel %vm1649, %v2834, 0.0
      %v2941 = vadd.f32 %v2939, %v2940
      %v2942 = vsel %vm1649, %v2839, 0.0
      %v2943 = vadd.f32 %v2941, %v2942
      %v2944 = vsel %vm1649, %v2844, 0.0
      %v2945 = vadd.f32 %v2943, %v2944
      %v2946 = vsel %vm1649, %v2849, 0.0
      %v2947 = vadd.f32 %v2945, %v2946
      %v2948 = vrot.slane %v2947, 4
      %v2949 = vadd.f32 %v2947, %v2948
      %v2950 = vrot.slane %v2949, 2
      %v2951 = vadd.f32 %v2949, %v2950
      %v2952 = vrot.slane %v2951, 1
      %v2953 = vadd.f32 %v2951, %v2952
      %v2954 = vadd.f32 %v1751, %v2953
      %v2955 = vmul.f32 %v2694, %v2694
      %v2956 = vmul.f32 %v2699, %v2699
      %v2957 = vmul.f32 %v2704, %v2704
      %v2958 = vmul.f32 %v2709, %v2709
      %v2959 = vmul.f32 %v2714, %v2714
      %v2960 = vmul.f32 %v2719, %v2719
      %v2961 = vmul.f32 %v2724, %v2724
      %v2962 = vmul.f32 %v2729, %v2729
      %v2963 = vmul.f32 %v2734, %v2734
      %v2964 = vmul.f32 %v2739, %v2739
      %v2965 = vmul.f32 %v2744, %v2744
      %v2966 = vmul.f32 %v2749, %v2749
      %v2967 = vmul.f32 %v2754, %v2754
      %v2968 = vmul.f32 %v2759, %v2759
      %v2969 = vmul.f32 %v2764, %v2764
      %v2970 = vmul.f32 %v2769, %v2769
      %v2971 = vmul.f32 %v2774, %v2774
      %v2972 = vmul.f32 %v2779, %v2779
      %v2973 = vmul.f32 %v2784, %v2784
      %v2974 = vmul.f32 %v2789, %v2789
      %v2975 = vmul.f32 %v2794, %v2794
      %v2976 = vmul.f32 %v2799, %v2799
      %v2977 = vmul.f32 %v2804, %v2804
      %v2978 = vmul.f32 %v2809, %v2809
      %v2979 = vmul.f32 %v2814, %v2814
      %v2980 = vmul.f32 %v2819, %v2819
      %v2981 = vmul.f32 %v2824, %v2824
      %v2982 = vmul.f32 %v2829, %v2829
      %v2983 = vmul.f32 %v2834, %v2834
      %v2984 = vmul.f32 %v2839, %v2839
      %v2985 = vmul.f32 %v2844, %v2844
      %v2986 = vmul.f32 %v2849, %v2849
      %v2987 = vsel %vm1649, %v2955, 0.0
      %v2988 = vsel %vm1649, %v2956, 0.0
      %v2989 = vadd.f32 %v2987, %v2988
      %v2990 = vsel %vm1649, %v2957, 0.0
      %v2991 = vadd.f32 %v2989, %v2990
      %v2992 = vsel %vm1649, %v2958, 0.0
      %v2993 = vadd.f32 %v2991, %v2992
      %v2994 = vsel %vm1649, %v2959, 0.0
      %v2995 = vadd.f32 %v2993, %v2994
      %v2996 = vsel %vm1649, %v2960, 0.0
      %v2997 = vadd.f32 %v2995, %v2996
      %v2998 = vsel %vm1649, %v2961, 0.0
      %v2999 = vadd.f32 %v2997, %v2998
      %v3000 = vsel %vm1649, %v2962, 0.0
      %v3001 = vadd.f32 %v2999, %v3000
      %v3002 = vsel %vm1649, %v2963, 0.0
      %v3003 = vadd.f32 %v3001, %v3002
      %v3004 = vsel %vm1649, %v2964, 0.0
      %v3005 = vadd.f32 %v3003, %v3004
      %v3006 = vsel %vm1649, %v2965, 0.0
      %v3007 = vadd.f32 %v3005, %v3006
      %v3008 = vsel %vm1649, %v2966, 0.0
      %v3009 = vadd.f32 %v3007, %v3008
      %v3010 = vsel %vm1649, %v2967, 0.0
      %v3011 = vadd.f32 %v3009, %v3010
      %v3012 = vsel %vm1649, %v2968, 0.0
      %v3013 = vadd.f32 %v3011, %v3012
      %v3014 = vsel %vm1649, %v2969, 0.0
      %v3015 = vadd.f32 %v3013, %v3014
      %v3016 = vsel %vm1649, %v2970, 0.0
      %v3017 = vadd.f32 %v3015, %v3016
      %v3018 = vsel %vm1649, %v2971, 0.0
      %v3019 = vadd.f32 %v3017, %v3018
      %v3020 = vsel %vm1649, %v2972, 0.0
      %v3021 = vadd.f32 %v3019, %v3020
      %v3022 = vsel %vm1649, %v2973, 0.0
      %v3023 = vadd.f32 %v3021, %v3022
      %v3024 = vsel %vm1649, %v2974, 0.0
      %v3025 = vadd.f32 %v3023, %v3024
      %v3026 = vsel %vm1649, %v2975, 0.0
      %v3027 = vadd.f32 %v3025, %v3026
      %v3028 = vsel %vm1649, %v2976, 0.0
      %v3029 = vadd.f32 %v3027, %v3028
      %v3030 = vsel %vm1649, %v2977, 0.0
      %v3031 = vadd.f32 %v3029, %v3030
      %v3032 = vsel %vm1649, %v2978, 0.0
      %v3033 = vadd.f32 %v3031, %v3032
      %v3034 = vsel %vm1649, %v2979, 0.0
      %v3035 = vadd.f32 %v3033, %v3034
      %v3036 = vsel %vm1649, %v2980, 0.0
      %v3037 = vadd.f32 %v3035, %v3036
      %v3038 = vsel %vm1649, %v2981, 0.0
      %v3039 = vadd.f32 %v3037, %v3038
      %v3040 = vsel %vm1649, %v2982, 0.0
      %v3041 = vadd.f32 %v3039, %v3040
      %v3042 = vsel %vm1649, %v2983, 0.0
      %v3043 = vadd.f32 %v3041, %v3042
      %v3044 = vsel %vm1649, %v2984, 0.0
      %v3045 = vadd.f32 %v3043, %v3044
      %v3046 = vsel %vm1649, %v2985, 0.0
      %v3047 = vadd.f32 %v3045, %v3046
      %v3048 = vsel %vm1649, %v2986, 0.0
      %v3049 = vadd.f32 %v3047, %v3048
      %v3050 = vrot.slane %v3049, 4
      %v3051 = vadd.f32 %v3049, %v3050
      %v3052 = vrot.slane %v3051, 2
      %v3053 = vadd.f32 %v3051, %v3052
      %v3054 = vrot.slane %v3053, 1
      %v3055 = vadd.f32 %v3053, %v3054
      %v3056 = vadd.f32 %v1853, %v3055
      %v3057 = vld [vmem:[%s582] sm:$0xff]
      %v3058 = vld [vmem:[%s582 + $0x8] sm:$0xff]
      %v3059 = vld [vmem:[%s582 + $0x18] sm:$0xff]
      %v3060 = vld [vmem:[%s582 + $0x20] sm:$0xff]
      %v3061 = vld [vmem:[%s582 + $0x30] sm:$0xff]
      %v3062 = vld [vmem:[%s582 + $0x38] sm:$0xff]
      %v3063 = vld [vmem:[%s582 + $0x48] sm:$0xff]
      %v3064 = vld [vmem:[%s582 + $0x50] sm:$0xff]
      %v3065 = vld [vmem:[%s582 + $0x60] sm:$0xff]
      %v3066 = vld [vmem:[%s582 + $0x68] sm:$0xff]
      %v3067 = vld [vmem:[%s582 + $0x78] sm:$0xff]
      %v3068 = vld [vmem:[%s582 + $0x80] sm:$0xff]
      %v3069 = vld [vmem:[%s582 + $0x90] sm:$0xff]
      %v3070 = vld [vmem:[%s582 + $0x98] sm:$0xff]
      %v3071 = vld [vmem:[%s582 + $0xa8] sm:$0xff]
      %v3072 = vld [vmem:[%s582 + $0xb0] sm:$0xff]
      %v3073 = vld [vmem:[%s582 + $0xc0] sm:$0xff]
      %v3074 = vld [vmem:[%s582 + $0xc8] sm:$0xff]
      %v3075 = vld [vmem:[%s582 + $0xd8] sm:$0xff]
      %v3076 = vld [vmem:[%s582 + $0xe0] sm:$0xff]
      %v3077 = vld [vmem:[%s582 + $0xf0] sm:$0xff]
      %v3078 = vld [vmem:[%s582 + $0xf8] sm:$0xff]
      %v3079 = vld [vmem:[%s582 + $0x108] sm:$0xff]
      %v3080 = vld [vmem:[%s582 + $0x110] sm:$0xff]
      %v3081 = vld [vmem:[%s582 + $0x120] sm:$0xff]
      %v3082 = vld [vmem:[%s582 + $0x128] sm:$0xff]
      %v3083 = vld [vmem:[%s582 + $0x138] sm:$0xff]
      %v3084 = vld [vmem:[%s582 + $0x140] sm:$0xff]
      %v3085 = vld [vmem:[%s582 + $0x150] sm:$0xff]
      %v3086 = vld [vmem:[%s582 + $0x158] sm:$0xff]
      %v3087 = vld [vmem:[%s582 + $0x168] sm:$0xff]
      %v3088 = vld [vmem:[%s582 + $0x170] sm:$0xff]
      %3089 = vst.msk [vmem:[#allocation3] sm:$0xff] %vm573, %v3057
      %3090 = vst.msk [vmem:[#allocation3 + $0x8] sm:$0xff] %vm573, %v3058
      %3091 = vst.msk [vmem:[#allocation3 + $0x10] sm:$0xff] %vm573, %v3059
      %3092 = vst.msk [vmem:[#allocation3 + $0x18] sm:$0xff] %vm573, %v3060
      %3093 = vst.msk [vmem:[#allocation3 + $0x20] sm:$0xff] %vm573, %v3061
      %3094 = vst.msk [vmem:[#allocation3 + $0x28] sm:$0xff] %vm573, %v3062
      %3095 = vst.msk [vmem:[#allocation3 + $0x30] sm:$0xff] %vm573, %v3063
      %3096 = vst.msk [vmem:[#allocation3 + $0x38] sm:$0xff] %vm573, %v3064
      %3097 = vst.msk [vmem:[#allocation3 + $0x40] sm:$0xff] %vm573, %v3065
      %3098 = vst.msk [vmem:[#allocation3 + $0x48] sm:$0xff] %vm573, %v3066
      %3099 = vst.msk [vmem:[#allocation3 + $0x50] sm:$0xff] %vm573, %v3067
      %3100 = vst.msk [vmem:[#allocation3 + $0x58] sm:$0xff] %vm573, %v3068
      %3101 = vst.msk [vmem:[#allocation3 + $0x60] sm:$0xff] %vm573, %v3069
      %3102 = vst.msk [vmem:[#allocation3 + $0x68] sm:$0xff] %vm573, %v3070
      %3103 = vst.msk [vmem:[#allocation3 + $0x70] sm:$0xff] %vm573, %v3071
      %3104 = vst.msk [vmem:[#allocation3 + $0x78] sm:$0xff] %vm573, %v3072
      %3105 = vst.msk [vmem:[#allocation3 + $0x80] sm:$0xff] %vm573, %v3073
      %3106 = vst.msk [vmem:[#allocation3 + $0x88] sm:$0xff] %vm573, %v3074
      %3107 = vst.msk [vmem:[#allocation3 + $0x90] sm:$0xff] %vm573, %v3075
      %3108 = vst.msk [vmem:[#allocation3 + $0x98] sm:$0xff] %vm573, %v3076
      %3109 = vst.msk [vmem:[#allocation3 + $0xa0] sm:$0xff] %vm573, %v3077
      %3110 = vst.msk [vmem:[#allocation3 + $0xa8] sm:$0xff] %vm573, %v3078
      %3111 = vst.msk [vmem:[#allocation3 + $0xb0] sm:$0xff] %vm573, %v3079
      %3112 = vst.msk [vmem:[#allocation3 + $0xb8] sm:$0xff] %vm573, %v3080
      %3113 = vst.msk [vmem:[#allocation3 + $0xc0] sm:$0xff] %vm573, %v3081
      %3114 = vst.msk [vmem:[#allocation3 + $0xc8] sm:$0xff] %vm573, %v3082
      %3115 = vst.msk [vmem:[#allocation3 + $0xd0] sm:$0xff] %vm573, %v3083
      %3116 = vst.msk [vmem:[#allocation3 + $0xd8] sm:$0xff] %vm573, %v3084
      %3117 = vst.msk [vmem:[#allocation3 + $0xe0] sm:$0xff] %vm573, %v3085
      %3118 = vst.msk [vmem:[#allocation3 + $0xe8] sm:$0xff] %vm573, %v3086
      %3119 = vst.msk [vmem:[#allocation3 + $0xf0] sm:$0xff] %vm573, %v3087
      %3120 = vst.msk [vmem:[#allocation3 + $0xf8] sm:$0xff] %vm573, %v3088
      %v3121 = vld [vmem:[%s582 + $0x1] sm:$0xff]
      %v3122 = vld [vmem:[%s582 + $0x9] sm:$0xff]
      %v3123 = vld [vmem:[%s582 + $0x19] sm:$0xff]
      %v3124 = vld [vmem:[%s582 + $0x21] sm:$0xff]
      %v3125 = vld [vmem:[%s582 + $0x31] sm:$0xff]
      %v3126 = vld [vmem:[%s582 + $0x39] sm:$0xff]
      %v3127 = vld [vmem:[%s582 + $0x49] sm:$0xff]
      %v3128 = vld [vmem:[%s582 + $0x51] sm:$0xff]
      %v3129 = vld [vmem:[%s582 + $0x61] sm:$0xff]
      %v3130 = vld [vmem:[%s582 + $0x69] sm:$0xff]
      %v3131 = vld [vmem:[%s582 + $0x79] sm:$0xff]
      %v3132 = vld [vmem:[%s582 + $0x81] sm:$0xff]
      %v3133 = vld [vmem:[%s582 + $0x91] sm:$0xff]
      %v3134 = vld [vmem:[%s582 + $0x99] sm:$0xff]
      %v3135 = vld [vmem:[%s582 + $0xa9] sm:$0xff]
      %v3136 = vld [vmem:[%s582 + $0xb1] sm:$0xff]
      %v3137 = vld [vmem:[%s582 + $0xc1] sm:$0xff]
      %v3138 = vld [vmem:[%s582 + $0xc9] sm:$0xff]
      %v3139 = vld [vmem:[%s582 + $0xd9] sm:$0xff]
      %v3140 = vld [vmem:[%s582 + $0xe1] sm:$0xff]
      %v3141 = vld [vmem:[%s582 + $0xf1] sm:$0xff]
      %v3142 = vld [vmem:[%s582 + $0xf9] sm:$0xff]
      %v3143 = vld [vmem:[%s582 + $0x109] sm:$0xff]
      %v3144 = vld [vmem:[%s582 + $0x111] sm:$0xff]
      %v3145 = vld [vmem:[%s582 + $0x121] sm:$0xff]
      %v3146 = vld [vmem:[%s582 + $0x129] sm:$0xff]
      %v3147 = vld [vmem:[%s582 + $0x139] sm:$0xff]
      %v3148 = vld [vmem:[%s582 + $0x141] sm:$0xff]
      %v3149 = vld [vmem:[%s582 + $0x151] sm:$0xff]
      %v3150 = vld [vmem:[%s582 + $0x159] sm:$0xff]
      %v3151 = vld [vmem:[%s582 + $0x169] sm:$0xff]
      %v3152 = vld [vmem:[%s582 + $0x171] sm:$0xff]
      %3185 = vrot.lane.b32.xlu0 %v3121, 8
      %v3186 = vpop.permute.xlu0 %3185
      %3187 = vrot.lane.b32.xlu0 %v3122, 8
      %v3188 = vpop.permute.xlu0 %3187
      %3189 = vrot.lane.b32.xlu0 %v3123, 8
      %v3190 = vpop.permute.xlu0 %3189
      %3191 = vrot.lane.b32.xlu0 %v3124, 8
      %v3192 = vpop.permute.xlu0 %3191
      %3193 = vrot.lane.b32.xlu0 %v3125, 8
      %v3194 = vpop.permute.xlu0 %3193
      %3195 = vrot.lane.b32.xlu0 %v3126, 8
      %v3196 = vpop.permute.xlu0 %3195
      %3197 = vrot.lane.b32.xlu0 %v3127, 8
      %v3198 = vpop.permute.xlu0 %3197
      %3199 = vrot.lane.b32.xlu0 %v3128, 8
      %v3200 = vpop.permute.xlu0 %3199
      %3201 = vrot.lane.b32.xlu0 %v3129, 8
      %v3202 = vpop.permute.xlu0 %3201
      %3203 = vrot.lane.b32.xlu0 %v3130, 8
      %v3204 = vpop.permute.xlu0 %3203
      %3205 = vrot.lane.b32.xlu0 %v3131, 8
      %v3206 = vpop.permute.xlu0 %3205
      %3207 = vrot.lane.b32.xlu0 %v3132, 8
      %v3208 = vpop.permute.xlu0 %3207
      %3209 = vrot.lane.b32.xlu0 %v3133, 8
      %v3210 = vpop.permute.xlu0 %3209
      %3211 = vrot.lane.b32.xlu0 %v3134, 8
      %v3212 = vpop.permute.xlu0 %3211
      %3213 = vrot.lane.b32.xlu0 %v3135, 8
      %v3214 = vpop.permute.xlu0 %3213
      %3215 = vrot.lane.b32.xlu0 %v3136, 8
      %v3216 = vpop.permute.xlu0 %3215
      %3217 = vrot.lane.b32.xlu0 %v3137, 8
      %v3218 = vpop.permute.xlu0 %3217
      %3219 = vrot.lane.b32.xlu0 %v3138, 8
      %v3220 = vpop.permute.xlu0 %3219
      %3221 = vrot.lane.b32.xlu0 %v3139, 8
      %v3222 = vpop.permute.xlu0 %3221
      %3223 = vrot.lane.b32.xlu0 %v3140, 8
      %v3224 = vpop.permute.xlu0 %3223
      %3225 = vrot.lane.b32.xlu0 %v3141, 8
      %v3226 = vpop.permute.xlu0 %3225
      %3227 = vrot.lane.b32.xlu0 %v3142, 8
      %v3228 = vpop.permute.xlu0 %3227
      %3229 = vrot.lane.b32.xlu0 %v3143, 8
      %v3230 = vpop.permute.xlu0 %3229
      %3231 = vrot.lane.b32.xlu0 %v3144, 8
      %v3232 = vpop.permute.xlu0 %3231
      %3233 = vrot.lane.b32.xlu0 %v3145, 8
      %v3234 = vpop.permute.xlu0 %3233
      %3235 = vrot.lane.b32.xlu0 %v3146, 8
      %v3236 = vpop.permute.xlu0 %3235
      %3237 = vrot.lane.b32.xlu0 %v3147, 8
      %v3238 = vpop.permute.xlu0 %3237
      %3239 = vrot.lane.b32.xlu0 %v3148, 8
      %v3240 = vpop.permute.xlu0 %3239
      %3241 = vrot.lane.b32.xlu0 %v3149, 8
      %v3242 = vpop.permute.xlu0 %3241
      %3243 = vrot.lane.b32.xlu0 %v3150, 8
      %v3244 = vpop.permute.xlu0 %3243
      %3245 = vrot.lane.b32.xlu0 %v3151, 8
      %v3246 = vpop.permute.xlu0 %3245
      %3247 = vrot.lane.b32.xlu0 %v3152, 8
      %v3248 = vpop.permute.xlu0 %3247
      %3281 = vst.msk [vmem:[#allocation3] sm:$0xff] %vm872, %v3186
      %3282 = vst.msk [vmem:[#allocation3 + $0x8] sm:$0xff] %vm872, %v3188
      %3283 = vst.msk [vmem:[#allocation3 + $0x10] sm:$0xff] %vm872, %v3190
      %3284 = vst.msk [vmem:[#allocation3 + $0x18] sm:$0xff] %vm872, %v3192
      %3285 = vst.msk [vmem:[#allocation3 + $0x20] sm:$0xff] %vm872, %v3194
      %3286 = vst.msk [vmem:[#allocation3 + $0x28] sm:$0xff] %vm872, %v3196
      %3287 = vst.msk [vmem:[#allocation3 + $0x30] sm:$0xff] %vm872, %v3198
      %3288 = vst.msk [vmem:[#allocation3 + $0x38] sm:$0xff] %vm872, %v3200
      %3289 = vst.msk [vmem:[#allocation3 + $0x40] sm:$0xff] %vm872, %v3202
      %3290 = vst.msk [vmem:[#allocation3 + $0x48] sm:$0xff] %vm872, %v3204
      %3291 = vst.msk [vmem:[#allocation3 + $0x50] sm:$0xff] %vm872, %v3206
      %3292 = vst.msk [vmem:[#allocation3 + $0x58] sm:$0xff] %vm872, %v3208
      %3293 = vst.msk [vmem:[#allocation3 + $0x60] sm:$0xff] %vm872, %v3210
      %3294 = vst.msk [vmem:[#allocation3 + $0x68] sm:$0xff] %vm872, %v3212
      %3295 = vst.msk [vmem:[#allocation3 + $0x70] sm:$0xff] %vm872, %v3214
      %3296 = vst.msk [vmem:[#allocation3 + $0x78] sm:$0xff] %vm872, %v3216
      %3297 = vst.msk [vmem:[#allocation3 + $0x80] sm:$0xff] %vm872, %v3218
      %3298 = vst.msk [vmem:[#allocation3 + $0x88] sm:$0xff] %vm872, %v3220
      %3299 = vst.msk [vmem:[#allocation3 + $0x90] sm:$0xff] %vm872, %v3222
      %3300 = vst.msk [vmem:[#allocation3 + $0x98] sm:$0xff] %vm872, %v3224
      %3301 = vst.msk [vmem:[#allocation3 + $0xa0] sm:$0xff] %vm872, %v3226
      %3302 = vst.msk [vmem:[#allocation3 + $0xa8] sm:$0xff] %vm872, %v3228
      %3303 = vst.msk [vmem:[#allocation3 + $0xb0] sm:$0xff] %vm872, %v3230
      %3304 = vst.msk [vmem:[#allocation3 + $0xb8] sm:$0xff] %vm872, %v3232
      %3305 = vst.msk [vmem:[#allocation3 + $0xc0] sm:$0xff] %vm872, %v3234
      %3306 = vst.msk [vmem:[#allocation3 + $0xc8] sm:$0xff] %vm872, %v3236
      %3307 = vst.msk [vmem:[#allocation3 + $0xd0] sm:$0xff] %vm872, %v3238
      %3308 = vst.msk [vmem:[#allocation3 + $0xd8] sm:$0xff] %vm872, %v3240
      %3309 = vst.msk [vmem:[#allocation3 + $0xe0] sm:$0xff] %vm872, %v3242
      %3310 = vst.msk [vmem:[#allocation3 + $0xe8] sm:$0xff] %vm872, %v3244
      %3311 = vst.msk [vmem:[#allocation3 + $0xf0] sm:$0xff] %vm872, %v3246
      %3312 = vst.msk [vmem:[#allocation3 + $0xf8] sm:$0xff] %vm872, %v3248
      %s3313 = scalar_lea.vmem [#allocation2], 48
      %v3314 = vld [vmem:[%s3313] sm:$0xff]
      %v3315 = vld [vmem:[%s3313 + $0x8] sm:$0xff]
      %v3316 = vld [vmem:[%s3313 + $0x18] sm:$0xff]
      %v3317 = vld [vmem:[%s3313 + $0x20] sm:$0xff]
      %v3318 = vld [vmem:[%s3313 + $0x30] sm:$0xff]
      %v3319 = vld [vmem:[%s3313 + $0x38] sm:$0xff]
      %v3320 = vld [vmem:[%s3313 + $0x48] sm:$0xff]
      %v3321 = vld [vmem:[%s3313 + $0x50] sm:$0xff]
      %v3322 = vld [vmem:[%s3313 + $0x60] sm:$0xff]
      %v3323 = vld [vmem:[%s3313 + $0x68] sm:$0xff]
      %v3324 = vld [vmem:[%s3313 + $0x78] sm:$0xff]
      %v3325 = vld [vmem:[%s3313 + $0x80] sm:$0xff]
      %v3326 = vld [vmem:[%s3313 + $0x90] sm:$0xff]
      %v3327 = vld [vmem:[%s3313 + $0x98] sm:$0xff]
      %v3328 = vld [vmem:[%s3313 + $0xa8] sm:$0xff]
      %v3329 = vld [vmem:[%s3313 + $0xb0] sm:$0xff]
      %v3330 = vld [vmem:[%s3313 + $0xc0] sm:$0xff]
      %v3331 = vld [vmem:[%s3313 + $0xc8] sm:$0xff]
      %v3332 = vld [vmem:[%s3313 + $0xd8] sm:$0xff]
      %v3333 = vld [vmem:[%s3313 + $0xe0] sm:$0xff]
      %v3334 = vld [vmem:[%s3313 + $0xf0] sm:$0xff]
      %v3335 = vld [vmem:[%s3313 + $0xf8] sm:$0xff]
      %v3336 = vld [vmem:[%s3313 + $0x108] sm:$0xff]
      %v3337 = vld [vmem:[%s3313 + $0x110] sm:$0xff]
      %v3338 = vld [vmem:[%s3313 + $0x120] sm:$0xff]
      %v3339 = vld [vmem:[%s3313 + $0x128] sm:$0xff]
      %v3340 = vld [vmem:[%s3313 + $0x138] sm:$0xff]
      %v3341 = vld [vmem:[%s3313 + $0x140] sm:$0xff]
      %v3342 = vld [vmem:[%s3313 + $0x150] sm:$0xff]
      %v3343 = vld [vmem:[%s3313 + $0x158] sm:$0xff]
      %v3344 = vld [vmem:[%s3313 + $0x168] sm:$0xff]
      %v3345 = vld [vmem:[%s3313 + $0x170] sm:$0xff]
      %3378 = vrot.lane.b32.xlu0 %v3314, 16
      %v3379 = vpop.permute.xlu0 %3378
      %3380 = vrot.lane.b32.xlu0 %v3315, 16
      %v3381 = vpop.permute.xlu0 %3380
      %3382 = vrot.lane.b32.xlu0 %v3316, 16
      %v3383 = vpop.permute.xlu0 %3382
      %3384 = vrot.lane.b32.xlu0 %v3317, 16
      %v3385 = vpop.permute.xlu0 %3384
      %3386 = vrot.lane.b32.xlu0 %v3318, 16
      %v3387 = vpop.permute.xlu0 %3386
      %3388 = vrot.lane.b32.xlu0 %v3319, 16
      %v3389 = vpop.permute.xlu0 %3388
      %3390 = vrot.lane.b32.xlu0 %v3320, 16
      %v3391 = vpop.permute.xlu0 %3390
      %3392 = vrot.lane.b32.xlu0 %v3321, 16
      %v3393 = vpop.permute.xlu0 %3392
      %3394 = vrot.lane.b32.xlu0 %v3322, 16
      %v3395 = vpop.permute.xlu0 %3394
      %3396 = vrot.lane.b32.xlu0 %v3323, 16
      %v3397 = vpop.permute.xlu0 %3396
      %3398 = vrot.lane.b32.xlu0 %v3324, 16
      %v3399 = vpop.permute.xlu0 %3398
      %3400 = vrot.lane.b32.xlu0 %v3325, 16
      %v3401 = vpop.permute.xlu0 %3400
      %3402 = vrot.lane.b32.xlu0 %v3326, 16
      %v3403 = vpop.permute.xlu0 %3402
      %3404 = vrot.lane.b32.xlu0 %v3327, 16
      %v3405 = vpop.permute.xlu0 %3404
      %3406 = vrot.lane.b32.xlu0 %v3328, 16
      %v3407 = vpop.permute.xlu0 %3406
      %3408 = vrot.lane.b32.xlu0 %v3329, 16
      %v3409 = vpop.permute.xlu0 %3408
      %3410 = vrot.lane.b32.xlu0 %v3330, 16
      %v3411 = vpop.permute.xlu0 %3410
      %3412 = vrot.lane.b32.xlu0 %v3331, 16
      %v3413 = vpop.permute.xlu0 %3412
      %3414 = vrot.lane.b32.xlu0 %v3332, 16
      %v3415 = vpop.permute.xlu0 %3414
      %3416 = vrot.lane.b32.xlu0 %v3333, 16
      %v3417 = vpop.permute.xlu0 %3416
      %3418 = vrot.lane.b32.xlu0 %v3334, 16
      %v3419 = vpop.permute.xlu0 %3418
      %3420 = vrot.lane.b32.xlu0 %v3335, 16
      %v3421 = vpop.permute.xlu0 %3420
      %3422 = vrot.lane.b32.xlu0 %v3336, 16
      %v3423 = vpop.permute.xlu0 %3422
      %3424 = vrot.lane.b32.xlu0 %v3337, 16
      %v3425 = vpop.permute.xlu0 %3424
      %3426 = vrot.lane.b32.xlu0 %v3338, 16
      %v3427 = vpop.permute.xlu0 %3426
      %3428 = vrot.lane.b32.xlu0 %v3339, 16
      %v3429 = vpop.permute.xlu0 %3428
      %3430 = vrot.lane.b32.xlu0 %v3340, 16
      %v3431 = vpop.permute.xlu0 %3430
      %3432 = vrot.lane.b32.xlu0 %v3341, 16
      %v3433 = vpop.permute.xlu0 %3432
      %3434 = vrot.lane.b32.xlu0 %v3342, 16
      %v3435 = vpop.permute.xlu0 %3434
      %3436 = vrot.lane.b32.xlu0 %v3343, 16
      %v3437 = vpop.permute.xlu0 %3436
      %3438 = vrot.lane.b32.xlu0 %v3344, 16
      %v3439 = vpop.permute.xlu0 %3438
      %3440 = vrot.lane.b32.xlu0 %v3345, 16
      %v3441 = vpop.permute.xlu0 %3440
      %3474 = vst.msk [vmem:[#allocation3] sm:$0xff] %vm1065, %v3379
      %3475 = vst.msk [vmem:[#allocation3 + $0x8] sm:$0xff] %vm1065, %v3381
      %3476 = vst.msk [vmem:[#allocation3 + $0x10] sm:$0xff] %vm1065, %v3383
      %3477 = vst.msk [vmem:[#allocation3 + $0x18] sm:$0xff] %vm1065, %v3385
      %3478 = vst.msk [vmem:[#allocation3 + $0x20] sm:$0xff] %vm1065, %v3387
      %3479 = vst.msk [vmem:[#allocation3 + $0x28] sm:$0xff] %vm1065, %v3389
      %3480 = vst.msk [vmem:[#allocation3 + $0x30] sm:$0xff] %vm1065, %v3391
      %3481 = vst.msk [vmem:[#allocation3 + $0x38] sm:$0xff] %vm1065, %v3393
      %3482 = vst.msk [vmem:[#allocation3 + $0x40] sm:$0xff] %vm1065, %v3395
      %3483 = vst.msk [vmem:[#allocation3 + $0x48] sm:$0xff] %vm1065, %v3397
      %3484 = vst.msk [vmem:[#allocation3 + $0x50] sm:$0xff] %vm1065, %v3399
      %3485 = vst.msk [vmem:[#allocation3 + $0x58] sm:$0xff] %vm1065, %v3401
      %3486 = vst.msk [vmem:[#allocation3 + $0x60] sm:$0xff] %vm1065, %v3403
      %3487 = vst.msk [vmem:[#allocation3 + $0x68] sm:$0xff] %vm1065, %v3405
      %3488 = vst.msk [vmem:[#allocation3 + $0x70] sm:$0xff] %vm1065, %v3407
      %3489 = vst.msk [vmem:[#allocation3 + $0x78] sm:$0xff] %vm1065, %v3409
      %3490 = vst.msk [vmem:[#allocation3 + $0x80] sm:$0xff] %vm1065, %v3411
      %3491 = vst.msk [vmem:[#allocation3 + $0x88] sm:$0xff] %vm1065, %v3413
      %3492 = vst.msk [vmem:[#allocation3 + $0x90] sm:$0xff] %vm1065, %v3415
      %3493 = vst.msk [vmem:[#allocation3 + $0x98] sm:$0xff] %vm1065, %v3417
      %3494 = vst.msk [vmem:[#allocation3 + $0xa0] sm:$0xff] %vm1065, %v3419
      %3495 = vst.msk [vmem:[#allocation3 + $0xa8] sm:$0xff] %vm1065, %v3421
      %3496 = vst.msk [vmem:[#allocation3 + $0xb0] sm:$0xff] %vm1065, %v3423
      %3497 = vst.msk [vmem:[#allocation3 + $0xb8] sm:$0xff] %vm1065, %v3425
      %3498 = vst.msk [vmem:[#allocation3 + $0xc0] sm:$0xff] %vm1065, %v3427
      %3499 = vst.msk [vmem:[#allocation3 + $0xc8] sm:$0xff] %vm1065, %v3429
      %3500 = vst.msk [vmem:[#allocation3 + $0xd0] sm:$0xff] %vm1065, %v3431
      %3501 = vst.msk [vmem:[#allocation3 + $0xd8] sm:$0xff] %vm1065, %v3433
      %3502 = vst.msk [vmem:[#allocation3 + $0xe0] sm:$0xff] %vm1065, %v3435
      %3503 = vst.msk [vmem:[#allocation3 + $0xe8] sm:$0xff] %vm1065, %v3437
      %3504 = vst.msk [vmem:[#allocation3 + $0xf0] sm:$0xff] %vm1065, %v3439
      %3505 = vst.msk [vmem:[#allocation3 + $0xf8] sm:$0xff] %vm1065, %v3441
      %v3506 = vld [vmem:[%s3313 + $0x1] sm:$0xff]
      %v3507 = vld [vmem:[%s3313 + $0x9] sm:$0xff]
      %v3508 = vld [vmem:[%s3313 + $0x19] sm:$0xff]
      %v3509 = vld [vmem:[%s3313 + $0x21] sm:$0xff]
      %v3510 = vld [vmem:[%s3313 + $0x31] sm:$0xff]
      %v3511 = vld [vmem:[%s3313 + $0x39] sm:$0xff]
      %v3512 = vld [vmem:[%s3313 + $0x49] sm:$0xff]
      %v3513 = vld [vmem:[%s3313 + $0x51] sm:$0xff]
      %v3514 = vld [vmem:[%s3313 + $0x61] sm:$0xff]
      %v3515 = vld [vmem:[%s3313 + $0x69] sm:$0xff]
      %v3516 = vld [vmem:[%s3313 + $0x79] sm:$0xff]
      %v3517 = vld [vmem:[%s3313 + $0x81] sm:$0xff]
      %v3518 = vld [vmem:[%s3313 + $0x91] sm:$0xff]
      %v3519 = vld [vmem:[%s3313 + $0x99] sm:$0xff]
      %v3520 = vld [vmem:[%s3313 + $0xa9] sm:$0xff]
      %v3521 = vld [vmem:[%s3313 + $0xb1] sm:$0xff]
      %v3522 = vld [vmem:[%s3313 + $0xc1] sm:$0xff]
      %v3523 = vld [vmem:[%s3313 + $0xc9] sm:$0xff]
      %v3524 = vld [vmem:[%s3313 + $0xd9] sm:$0xff]
      %v3525 = vld [vmem:[%s3313 + $0xe1] sm:$0xff]
      %v3526 = vld [vmem:[%s3313 + $0xf1] sm:$0xff]
      %v3527 = vld [vmem:[%s3313 + $0xf9] sm:$0xff]
      %v3528 = vld [vmem:[%s3313 + $0x109] sm:$0xff]
      %v3529 = vld [vmem:[%s3313 + $0x111] sm:$0xff]
      %v3530 = vld [vmem:[%s3313 + $0x121] sm:$0xff]
      %v3531 = vld [vmem:[%s3313 + $0x129] sm:$0xff]
      %v3532 = vld [vmem:[%s3313 + $0x139] sm:$0xff]
      %v3533 = vld [vmem:[%s3313 + $0x141] sm:$0xff]
      %v3534 = vld [vmem:[%s3313 + $0x151] sm:$0xff]
      %v3535 = vld [vmem:[%s3313 + $0x159] sm:$0xff]
      %v3536 = vld [vmem:[%s3313 + $0x169] sm:$0xff]
      %v3537 = vld [vmem:[%s3313 + $0x171] sm:$0xff]
      %3570 = vrot.lane.b32.xlu0 %v3506, 24
      %v3571 = vpop.permute.xlu0 %3570
      %3572 = vrot.lane.b32.xlu0 %v3507, 24
      %v3573 = vpop.permute.xlu0 %3572
      %3574 = vrot.lane.b32.xlu0 %v3508, 24
      %v3575 = vpop.permute.xlu0 %3574
      %3576 = vrot.lane.b32.xlu0 %v3509, 24
      %v3577 = vpop.permute.xlu0 %3576
      %3578 = vrot.lane.b32.xlu0 %v3510, 24
      %v3579 = vpop.permute.xlu0 %3578
      %3580 = vrot.lane.b32.xlu0 %v3511, 24
      %v3581 = vpop.permute.xlu0 %3580
      %3582 = vrot.lane.b32.xlu0 %v3512, 24
      %v3583 = vpop.permute.xlu0 %3582
      %3584 = vrot.lane.b32.xlu0 %v3513, 24
      %v3585 = vpop.permute.xlu0 %3584
      %3586 = vrot.lane.b32.xlu0 %v3514, 24
      %v3587 = vpop.permute.xlu0 %3586
      %3588 = vrot.lane.b32.xlu0 %v3515, 24
      %v3589 = vpop.permute.xlu0 %3588
      %3590 = vrot.lane.b32.xlu0 %v3516, 24
      %v3591 = vpop.permute.xlu0 %3590
      %3592 = vrot.lane.b32.xlu0 %v3517, 24
      %v3593 = vpop.permute.xlu0 %3592
      %3594 = vrot.lane.b32.xlu0 %v3518, 24
      %v3595 = vpop.permute.xlu0 %3594
      %3596 = vrot.lane.b32.xlu0 %v3519, 24
      %v3597 = vpop.permute.xlu0 %3596
      %3598 = vrot.lane.b32.xlu0 %v3520, 24
      %v3599 = vpop.permute.xlu0 %3598
      %3600 = vrot.lane.b32.xlu0 %v3521, 24
      %v3601 = vpop.permute.xlu0 %3600
      %3602 = vrot.lane.b32.xlu0 %v3522, 24
      %v3603 = vpop.permute.xlu0 %3602
      %3604 = vrot.lane.b32.xlu0 %v3523, 24
      %v3605 = vpop.permute.xlu0 %3604
      %3606 = vrot.lane.b32.xlu0 %v3524, 24
      %v3607 = vpop.permute.xlu0 %3606
      %3608 = vrot.lane.b32.xlu0 %v3525, 24
      %v3609 = vpop.permute.xlu0 %3608
      %3610 = vrot.lane.b32.xlu0 %v3526, 24
      %v3611 = vpop.permute.xlu0 %3610
      %3612 = vrot.lane.b32.xlu0 %v3527, 24
      %v3613 = vpop.permute.xlu0 %3612
      %3614 = vrot.lane.b32.xlu0 %v3528, 24
      %v3615 = vpop.permute.xlu0 %3614
      %3616 = vrot.lane.b32.xlu0 %v3529, 24
      %v3617 = vpop.permute.xlu0 %3616
      %3618 = vrot.lane.b32.xlu0 %v3530, 24
      %v3619 = vpop.permute.xlu0 %3618
      %3620 = vrot.lane.b32.xlu0 %v3531, 24
      %v3621 = vpop.permute.xlu0 %3620
      %3622 = vrot.lane.b32.xlu0 %v3532, 24
      %v3623 = vpop.permute.xlu0 %3622
      %3624 = vrot.lane.b32.xlu0 %v3533, 24
      %v3625 = vpop.permute.xlu0 %3624
      %3626 = vrot.lane.b32.xlu0 %v3534, 24
      %v3627 = vpop.permute.xlu0 %3626
      %3628 = vrot.lane.b32.xlu0 %v3535, 24
      %v3629 = vpop.permute.xlu0 %3628
      %3630 = vrot.lane.b32.xlu0 %v3536, 24
      %v3631 = vpop.permute.xlu0 %3630
      %3632 = vrot.lane.b32.xlu0 %v3537, 24
      %v3633 = vpop.permute.xlu0 %3632
      %3666 = vst.msk [vmem:[#allocation3] sm:$0xff] %vm1258, %v3571
      %3667 = vst.msk [vmem:[#allocation3 + $0x8] sm:$0xff] %vm1258, %v3573
      %3668 = vst.msk [vmem:[#allocation3 + $0x10] sm:$0xff] %vm1258, %v3575
      %3669 = vst.msk [vmem:[#allocation3 + $0x18] sm:$0xff] %vm1258, %v3577
      %3670 = vst.msk [vmem:[#allocation3 + $0x20] sm:$0xff] %vm1258, %v3579
      %3671 = vst.msk [vmem:[#allocation3 + $0x28] sm:$0xff] %vm1258, %v3581
      %3672 = vst.msk [vmem:[#allocation3 + $0x30] sm:$0xff] %vm1258, %v3583
      %3673 = vst.msk [vmem:[#allocation3 + $0x38] sm:$0xff] %vm1258, %v3585
      %3674 = vst.msk [vmem:[#allocation3 + $0x40] sm:$0xff] %vm1258, %v3587
      %3675 = vst.msk [vmem:[#allocation3 + $0x48] sm:$0xff] %vm1258, %v3589
      %3676 = vst.msk [vmem:[#allocation3 + $0x50] sm:$0xff] %vm1258, %v3591
      %3677 = vst.msk [vmem:[#allocation3 + $0x58] sm:$0xff] %vm1258, %v3593
      %3678 = vst.msk [vmem:[#allocation3 + $0x60] sm:$0xff] %vm1258, %v3595
      %3679 = vst.msk [vmem:[#allocation3 + $0x68] sm:$0xff] %vm1258, %v3597
      %3680 = vst.msk [vmem:[#allocation3 + $0x70] sm:$0xff] %vm1258, %v3599
      %3681 = vst.msk [vmem:[#allocation3 + $0x78] sm:$0xff] %vm1258, %v3601
      %3682 = vst.msk [vmem:[#allocation3 + $0x80] sm:$0xff] %vm1258, %v3603
      %3683 = vst.msk [vmem:[#allocation3 + $0x88] sm:$0xff] %vm1258, %v3605
      %3684 = vst.msk [vmem:[#allocation3 + $0x90] sm:$0xff] %vm1258, %v3607
      %3685 = vst.msk [vmem:[#allocation3 + $0x98] sm:$0xff] %vm1258, %v3609
      %3686 = vst.msk [vmem:[#allocation3 + $0xa0] sm:$0xff] %vm1258, %v3611
      %3687 = vst.msk [vmem:[#allocation3 + $0xa8] sm:$0xff] %vm1258, %v3613
      %3688 = vst.msk [vmem:[#allocation3 + $0xb0] sm:$0xff] %vm1258, %v3615
      %3689 = vst.msk [vmem:[#allocation3 + $0xb8] sm:$0xff] %vm1258, %v3617
      %3690 = vst.msk [vmem:[#allocation3 + $0xc0] sm:$0xff] %vm1258, %v3619
      %3691 = vst.msk [vmem:[#allocation3 + $0xc8] sm:$0xff] %vm1258, %v3621
      %3692 = vst.msk [vmem:[#allocation3 + $0xd0] sm:$0xff] %vm1258, %v3623
      %3693 = vst.msk [vmem:[#allocation3 + $0xd8] sm:$0xff] %vm1258, %v3625
      %3694 = vst.msk [vmem:[#allocation3 + $0xe0] sm:$0xff] %vm1258, %v3627
      %3695 = vst.msk [vmem:[#allocation3 + $0xe8] sm:$0xff] %vm1258, %v3629
      %3696 = vst.msk [vmem:[#allocation3 + $0xf0] sm:$0xff] %vm1258, %v3631
      %3697 = vst.msk [vmem:[#allocation3 + $0xf8] sm:$0xff] %vm1258, %v3633
      %v3698 = vld [vmem:[#allocation3] sm:$0xff]
      %v3699 = vld [vmem:[#allocation3 + $0x8] sm:$0xff]
      %v3700 = vld [vmem:[#allocation3 + $0x10] sm:$0xff]
      %v3701 = vld [vmem:[#allocation3 + $0x18] sm:$0xff]
      %v3702 = vld [vmem:[#allocation3 + $0x20] sm:$0xff]
      %v3703 = vld [vmem:[#allocation3 + $0x28] sm:$0xff]
      %v3704 = vld [vmem:[#allocation3 + $0x30] sm:$0xff]
      %v3705 = vld [vmem:[#allocation3 + $0x38] sm:$0xff]
      %v3706 = vld [vmem:[#allocation3 + $0x40] sm:$0xff]
      %v3707 = vld [vmem:[#allocation3 + $0x48] sm:$0xff]
      %v3708 = vld [vmem:[#allocation3 + $0x50] sm:$0xff]
      %v3709 = vld [vmem:[#allocation3 + $0x58] sm:$0xff]
      %v3710 = vld [vmem:[#allocation3 + $0x60] sm:$0xff]
      %v3711 = vld [vmem:[#allocation3 + $0x68] sm:$0xff]
      %v3712 = vld [vmem:[#allocation3 + $0x70] sm:$0xff]
      %v3713 = vld [vmem:[#allocation3 + $0x78] sm:$0xff]
      %v3714 = vld [vmem:[#allocation3 + $0x80] sm:$0xff]
      %v3715 = vld [vmem:[#allocation3 + $0x88] sm:$0xff]
      %v3716 = vld [vmem:[#allocation3 + $0x90] sm:$0xff]
      %v3717 = vld [vmem:[#allocation3 + $0x98] sm:$0xff]
      %v3718 = vld [vmem:[#allocation3 + $0xa0] sm:$0xff]
      %v3719 = vld [vmem:[#allocation3 + $0xa8] sm:$0xff]
      %v3720 = vld [vmem:[#allocation3 + $0xb0] sm:$0xff]
      %v3721 = vld [vmem:[#allocation3 + $0xb8] sm:$0xff]
      %v3722 = vld [vmem:[#allocation3 + $0xc0] sm:$0xff]
      %v3723 = vld [vmem:[#allocation3 + $0xc8] sm:$0xff]
      %v3724 = vld [vmem:[#allocation3 + $0xd0] sm:$0xff]
      %v3725 = vld [vmem:[#allocation3 + $0xd8] sm:$0xff]
      %v3726 = vld [vmem:[#allocation3 + $0xe0] sm:$0xff]
      %v3727 = vld [vmem:[#allocation3 + $0xe8] sm:$0xff]
      %v3728 = vld [vmem:[#allocation3 + $0xf0] sm:$0xff]
      %v3729 = vld [vmem:[#allocation3 + $0xf8] sm:$0xff]
      %s3730 = scalar_lea.vmem %s3, 64
      %v3731 = vld [vmem:[%s3730] sm:$0xff]
      %v3732 = vld [vmem:[%s3730 + $0x8] sm:$0xff]
      %v3733 = vld [vmem:[%s3730 + $0x10] sm:$0xff]
      %v3734 = vld [vmem:[%s3730 + $0x18] sm:$0xff]
      %v3736 = vsel %vm1327, %v3698, 0
      %v3739 = vsel %vm1327, %v3699, 0
      %v3742 = vsel %vm1327, %v3700, 0
      %v3745 = vsel %vm1327, %v3701, 0
      %v3748 = vsel %vm1327, %v3702, 0
      %v3751 = vsel %vm1327, %v3703, 0
      %v3754 = vsel %vm1327, %v3704, 0
      %v3757 = vsel %vm1327, %v3705, 0
      %v3760 = vsel %vm1327, %v3706, 0
      %v3763 = vsel %vm1327, %v3707, 0
      %v3766 = vsel %vm1327, %v3708, 0
      %v3769 = vsel %vm1327, %v3709, 0
      %v3772 = vsel %vm1327, %v3710, 0
      %v3775 = vsel %vm1327, %v3711, 0
      %v3778 = vsel %vm1327, %v3712, 0
      %v3781 = vsel %vm1327, %v3713, 0
      %v3784 = vsel %vm1327, %v3714, 0
      %v3787 = vsel %vm1327, %v3715, 0
      %v3790 = vsel %vm1327, %v3716, 0
      %v3793 = vsel %vm1327, %v3717, 0
      %v3796 = vsel %vm1327, %v3718, 0
      %v3799 = vsel %vm1327, %v3719, 0
      %v3802 = vsel %vm1327, %v3720, 0
      %v3805 = vsel %vm1327, %v3721, 0
      %v3808 = vsel %vm1327, %v3722, 0
      %v3811 = vsel %vm1327, %v3723, 0
      %v3814 = vsel %vm1327, %v3724, 0
      %v3817 = vsel %vm1327, %v3725, 0
      %v3820 = vsel %vm1327, %v3726, 0
      %v3823 = vsel %vm1327, %v3727, 0
      %v3826 = vsel %vm1327, %v3728, 0
      %v3829 = vsel %vm1327, %v3729, 0
      %3831 = vmatprep.subr.mxu0 0.0
      %3832 = vmatpush1.msra.mxu0 0.0
      %3833 = vmatprep.subr.mxu0 0.0
      %3834 = vmatpush1.msra.mxu0 0.0
      %3835 = vmatprep.subr.mxu0 0.0
      %3836 = vmatpush1.msra.mxu0 0.0
      %3837 = vmatprep.subr.mxu0 0.0
      %3838 = vmatpush1.msra.mxu0 0.0
      %3839 = vmatprep.subr.mxu0 0.0
      %3840 = vmatpush1.msra.mxu0 0.0
      %3841 = vmatprep.subr.mxu0 0.0
      %3842 = vmatpush1.msra.mxu0 0.0
      %3843 = vmatprep.subr.mxu0 0.0
      %3844 = vmatpush1.msra.mxu0 0.0
      %3845 = vmatprep.subr.mxu0 0.0
      %3846 = vmatpush1.msra.mxu0 0.0
      %3847 = vmatprep.subr.mxu0 0.0
      %3848 = vmatpush1.msra.mxu0 0.0
      %3849 = vmatprep.subr.mxu0 0.0
      %3850 = vmatpush1.msra.mxu0 0.0
      %3851 = vmatprep.subr.mxu0 0.0
      %3852 = vmatpush1.msra.mxu0 0.0
      %3853 = vmatprep.subr.mxu0 0.0
      %3854 = vmatpush1.msra.mxu0 0.0
      %3855 = vmatprep.subr.mxu0 0.0
      %3856 = vmatpush1.msra.mxu0 %v3734
      %3857 = vmatprep.subr.mxu0 0.0
      %3858 = vmatpush1.msra.mxu0 %v3733
      %3859 = vmatprep.subr.mxu0 0.0
      %3860 = vmatpush1.msra.mxu0 %v3732
      %3861 = vmatprep.subr.mxu0 0.0
      %3862 = vmatpush1.msra.mxu0 %v3731
      %3863 = vmatprep.subr.mxu0 0.0
      %3864 = vmatpush2.msra.mxu0 0.0
      %3865 = vmatprep.subr.mxu0 0.0
      %3866 = vmatpush2.msra.mxu0 0.0
      %3867 = vmatprep.subr.mxu0 0.0
      %3868 = vmatpush2.msra.mxu0 0.0
      %3869 = vmatprep.subr.mxu0 0.0
      %3870 = vmatpush2.msra.mxu0 0.0
      %3871 = vmatprep.subr.mxu0 0.0
      %3872 = vmatpush2.msra.mxu0 0.0
      %3873 = vmatprep.subr.mxu0 0.0
      %3874 = vmatpush2.msra.mxu0 0.0
      %3875 = vmatprep.subr.mxu0 0.0
      %3876 = vmatpush2.msra.mxu0 0.0
      %3877 = vmatprep.subr.mxu0 0.0
      %3878 = vmatpush2.msra.mxu0 0.0
      %3879 = vmatprep.subr.mxu0 0.0
      %3880 = vmatpush2.msra.mxu0 0.0
      %3881 = vmatprep.subr.mxu0 0.0
      %3882 = vmatpush2.msra.mxu0 0.0
      %3883 = vmatprep.subr.mxu0 0.0
      %3884 = vmatpush2.msra.mxu0 0.0
      %3885 = vmatprep.subr.mxu0 0.0
      %3886 = vmatpush2.msra.mxu0 0.0
      %3887 = vmatprep.subr.mxu0 0.0
      %3888 = vmatpush2.msra.mxu0 0.0
      %3889 = vmatprep.subr.mxu0 0.0
      %3890 = vmatpush2.msra.mxu0 0.0
      %3891 = vmatprep.subr.mxu0 0.0
      %3892 = vmatpush2.msra.mxu0 0.0
      %3893 = vmatprep.subr.mxu0 0.0
      %3894 = vmatpush2.msra.mxu0 0.0
      %3895 = vmatprep.mubr.f32.mxu0 0.0
      %3896 = vmatmul.mubr.f32.gmra.mxu0 %v3736
      %v3897 = vpop.f32.mrf.mxu0
      %v3898 = vadd.f32 0.0, %v3897
      %v3899 = vpop.f32.mrf.mxu0
      %3900 = vmatprep.mubr.f32.mxu0 0.0
      %3901 = vmatmul.mubr.f32.gmra.mxu0 %v3739
      %v3902 = vpop.f32.mrf.mxu0
      %v3903 = vadd.f32 0.0, %v3902
      %v3904 = vpop.f32.mrf.mxu0
      %3905 = vmatprep.mubr.f32.mxu0 0.0
      %3906 = vmatmul.mubr.f32.gmra.mxu0 %v3742
      %v3907 = vpop.f32.mrf.mxu0
      %v3908 = vadd.f32 0.0, %v3907
      %v3909 = vpop.f32.mrf.mxu0
      %3910 = vmatprep.mubr.f32.mxu0 0.0
      %3911 = vmatmul.mubr.f32.gmra.mxu0 %v3745
      %v3912 = vpop.f32.mrf.mxu0
      %v3913 = vadd.f32 0.0, %v3912
      %v3914 = vpop.f32.mrf.mxu0
      %3915 = vmatprep.mubr.f32.mxu0 0.0
      %3916 = vmatmul.mubr.f32.gmra.mxu0 %v3748
      %v3917 = vpop.f32.mrf.mxu0
      %v3918 = vadd.f32 0.0, %v3917
      %v3919 = vpop.f32.mrf.mxu0
      %3920 = vmatprep.mubr.f32.mxu0 0.0
      %3921 = vmatmul.mubr.f32.gmra.mxu0 %v3751
      %v3922 = vpop.f32.mrf.mxu0
      %v3923 = vadd.f32 0.0, %v3922
      %v3924 = vpop.f32.mrf.mxu0
      %3925 = vmatprep.mubr.f32.mxu0 0.0
      %3926 = vmatmul.mubr.f32.gmra.mxu0 %v3754
      %v3927 = vpop.f32.mrf.mxu0
      %v3928 = vadd.f32 0.0, %v3927
      %v3929 = vpop.f32.mrf.mxu0
      %3930 = vmatprep.mubr.f32.mxu0 0.0
      %3931 = vmatmul.mubr.f32.gmra.mxu0 %v3757
      %v3932 = vpop.f32.mrf.mxu0
      %v3933 = vadd.f32 0.0, %v3932
      %v3934 = vpop.f32.mrf.mxu0
      %3935 = vmatprep.mubr.f32.mxu0 0.0
      %3936 = vmatmul.mubr.f32.gmra.mxu0 %v3760
      %v3937 = vpop.f32.mrf.mxu0
      %v3938 = vadd.f32 0.0, %v3937
      %v3939 = vpop.f32.mrf.mxu0
      %3940 = vmatprep.mubr.f32.mxu0 0.0
      %3941 = vmatmul.mubr.f32.gmra.mxu0 %v3763
      %v3942 = vpop.f32.mrf.mxu0
      %v3943 = vadd.f32 0.0, %v3942
      %v3944 = vpop.f32.mrf.mxu0
      %3945 = vmatprep.mubr.f32.mxu0 0.0
      %3946 = vmatmul.mubr.f32.gmra.mxu0 %v3766
      %v3947 = vpop.f32.mrf.mxu0
      %v3948 = vadd.f32 0.0, %v3947
      %v3949 = vpop.f32.mrf.mxu0
      %3950 = vmatprep.mubr.f32.mxu0 0.0
      %3951 = vmatmul.mubr.f32.gmra.mxu0 %v3769
      %v3952 = vpop.f32.mrf.mxu0
      %v3953 = vadd.f32 0.0, %v3952
      %v3954 = vpop.f32.mrf.mxu0
      %3955 = vmatprep.mubr.f32.mxu0 0.0
      %3956 = vmatmul.mubr.f32.gmra.mxu0 %v3772
      %v3957 = vpop.f32.mrf.mxu0
      %v3958 = vadd.f32 0.0, %v3957
      %v3959 = vpop.f32.mrf.mxu0
      %3960 = vmatprep.mubr.f32.mxu0 0.0
      %3961 = vmatmul.mubr.f32.gmra.mxu0 %v3775
      %v3962 = vpop.f32.mrf.mxu0
      %v3963 = vadd.f32 0.0, %v3962
      %v3964 = vpop.f32.mrf.mxu0
      %3965 = vmatprep.mubr.f32.mxu0 0.0
      %3966 = vmatmul.mubr.f32.gmra.mxu0 %v3778
      %v3967 = vpop.f32.mrf.mxu0
      %v3968 = vadd.f32 0.0, %v3967
      %v3969 = vpop.f32.mrf.mxu0
      %3970 = vmatprep.mubr.f32.mxu0 0.0
      %3971 = vmatmul.mubr.f32.gmra.mxu0 %v3781
      %v3972 = vpop.f32.mrf.mxu0
      %v3973 = vadd.f32 0.0, %v3972
      %v3974 = vpop.f32.mrf.mxu0
      %3975 = vmatprep.mubr.f32.mxu0 0.0
      %3976 = vmatmul.mubr.f32.gmra.mxu0 %v3784
      %v3977 = vpop.f32.mrf.mxu0
      %v3978 = vadd.f32 0.0, %v3977
      %v3979 = vpop.f32.mrf.mxu0
      %3980 = vmatprep.mubr.f32.mxu0 0.0
      %3981 = vmatmul.mubr.f32.gmra.mxu0 %v3787
      %v3982 = vpop.f32.mrf.mxu0
      %v3983 = vadd.f32 0.0, %v3982
      %v3984 = vpop.f32.mrf.mxu0
      %3985 = vmatprep.mubr.f32.mxu0 0.0
      %3986 = vmatmul.mubr.f32.gmra.mxu0 %v3790
      %v3987 = vpop.f32.mrf.mxu0
      %v3988 = vadd.f32 0.0, %v3987
      %v3989 = vpop.f32.mrf.mxu0
      %3990 = vmatprep.mubr.f32.mxu0 0.0
      %3991 = vmatmul.mubr.f32.gmra.mxu0 %v3793
      %v3992 = vpop.f32.mrf.mxu0
      %v3993 = vadd.f32 0.0, %v3992
      %v3994 = vpop.f32.mrf.mxu0
      %3995 = vmatprep.mubr.f32.mxu0 0.0
      %3996 = vmatmul.mubr.f32.gmra.mxu0 %v3796
      %v3997 = vpop.f32.mrf.mxu0
      %v3998 = vadd.f32 0.0, %v3997
      %v3999 = vpop.f32.mrf.mxu0
      %4000 = vmatprep.mubr.f32.mxu0 0.0
      %4001 = vmatmul.mubr.f32.gmra.mxu0 %v3799
      %v4002 = vpop.f32.mrf.mxu0
      %v4003 = vadd.f32 0.0, %v4002
      %v4004 = vpop.f32.mrf.mxu0
      %4005 = vmatprep.mubr.f32.mxu0 0.0
      %4006 = vmatmul.mubr.f32.gmra.mxu0 %v3802
      %v4007 = vpop.f32.mrf.mxu0
      %v4008 = vadd.f32 0.0, %v4007
      %v4009 = vpop.f32.mrf.mxu0
      %4010 = vmatprep.mubr.f32.mxu0 0.0
      %4011 = vmatmul.mubr.f32.gmra.mxu0 %v3805
      %v4012 = vpop.f32.mrf.mxu0
      %v4013 = vadd.f32 0.0, %v4012
      %v4014 = vpop.f32.mrf.mxu0
      %4015 = vmatprep.mubr.f32.mxu0 0.0
      %4016 = vmatmul.mubr.f32.gmra.mxu0 %v3808
      %v4017 = vpop.f32.mrf.mxu0
      %v4018 = vadd.f32 0.0, %v4017
      %v4019 = vpop.f32.mrf.mxu0
      %4020 = vmatprep.mubr.f32.mxu0 0.0
      %4021 = vmatmul.mubr.f32.gmra.mxu0 %v3811
      %v4022 = vpop.f32.mrf.mxu0
      %v4023 = vadd.f32 0.0, %v4022
      %v4024 = vpop.f32.mrf.mxu0
      %4025 = vmatprep.mubr.f32.mxu0 0.0
      %4026 = vmatmul.mubr.f32.gmra.mxu0 %v3814
      %v4027 = vpop.f32.mrf.mxu0
      %v4028 = vadd.f32 0.0, %v4027
      %v4029 = vpop.f32.mrf.mxu0
      %4030 = vmatprep.mubr.f32.mxu0 0.0
      %4031 = vmatmul.mubr.f32.gmra.mxu0 %v3817
      %v4032 = vpop.f32.mrf.mxu0
      %v4033 = vadd.f32 0.0, %v4032
      %v4034 = vpop.f32.mrf.mxu0
      %4035 = vmatprep.mubr.f32.mxu0 0.0
      %4036 = vmatmul.mubr.f32.gmra.mxu0 %v3820
      %v4037 = vpop.f32.mrf.mxu0
      %v4038 = vadd.f32 0.0, %v4037
      %v4039 = vpop.f32.mrf.mxu0
      %4040 = vmatprep.mubr.f32.mxu0 0.0
      %4041 = vmatmul.mubr.f32.gmra.mxu0 %v3823
      %v4042 = vpop.f32.mrf.mxu0
      %v4043 = vadd.f32 0.0, %v4042
      %v4044 = vpop.f32.mrf.mxu0
      %4045 = vmatprep.mubr.f32.mxu0 0.0
      %4046 = vmatmul.mubr.f32.gmra.mxu0 %v3826
      %v4047 = vpop.f32.mrf.mxu0
      %v4048 = vadd.f32 0.0, %v4047
      %v4049 = vpop.f32.mrf.mxu0
      %4050 = vmatprep.mubr.f32.mxu0 0.0
      %4051 = vmatmul.mubr.f32.gmra.mxu0 %v3829
      %v4052 = vpop.f32.mrf.mxu0
      %v4053 = vadd.f32 0.0, %v4052
      %v4054 = vpop.f32.mrf.mxu0
      %4055 = vdwg.mxu0
      %s4056 = scalar_lea.vmem %s233, 512
      %4057 = vst.msk [vmem:[%s4056] sm:$0xff] %vm1649, %v3898
      %4058 = vst.msk [vmem:[%s4056 + $0x8] sm:$0xff] %vm1649, %v3903
      %4059 = vst.msk [vmem:[%s4056 + $0x10] sm:$0xff] %vm1649, %v3908
      %4060 = vst.msk [vmem:[%s4056 + $0x18] sm:$0xff] %vm1649, %v3913
      %4061 = vst.msk [vmem:[%s4056 + $0x20] sm:$0xff] %vm1649, %v3918
      %4062 = vst.msk [vmem:[%s4056 + $0x28] sm:$0xff] %vm1649, %v3923
      %4063 = vst.msk [vmem:[%s4056 + $0x30] sm:$0xff] %vm1649, %v3928
      %4064 = vst.msk [vmem:[%s4056 + $0x38] sm:$0xff] %vm1649, %v3933
      %4065 = vst.msk [vmem:[%s4056 + $0x40] sm:$0xff] %vm1649, %v3938
      %4066 = vst.msk [vmem:[%s4056 + $0x48] sm:$0xff] %vm1649, %v3943
      %4067 = vst.msk [vmem:[%s4056 + $0x50] sm:$0xff] %vm1649, %v3948
      %4068 = vst.msk [vmem:[%s4056 + $0x58] sm:$0xff] %vm1649, %v3953
      %4069 = vst.msk [vmem:[%s4056 + $0x60] sm:$0xff] %vm1649, %v3958
      %4070 = vst.msk [vmem:[%s4056 + $0x68] sm:$0xff] %vm1649, %v3963
      %4071 = vst.msk [vmem:[%s4056 + $0x70] sm:$0xff] %vm1649, %v3968
      %4072 = vst.msk [vmem:[%s4056 + $0x78] sm:$0xff] %vm1649, %v3973
      %4073 = vst.msk [vmem:[%s4056 + $0x80] sm:$0xff] %vm1649, %v3978
      %4074 = vst.msk [vmem:[%s4056 + $0x88] sm:$0xff] %vm1649, %v3983
      %4075 = vst.msk [vmem:[%s4056 + $0x90] sm:$0xff] %vm1649, %v3988
      %4076 = vst.msk [vmem:[%s4056 + $0x98] sm:$0xff] %vm1649, %v3993
      %4077 = vst.msk [vmem:[%s4056 + $0xa0] sm:$0xff] %vm1649, %v3998
      %4078 = vst.msk [vmem:[%s4056 + $0xa8] sm:$0xff] %vm1649, %v4003
      %4079 = vst.msk [vmem:[%s4056 + $0xb0] sm:$0xff] %vm1649, %v4008
      %4080 = vst.msk [vmem:[%s4056 + $0xb8] sm:$0xff] %vm1649, %v4013
      %4081 = vst.msk [vmem:[%s4056 + $0xc0] sm:$0xff] %vm1649, %v4018
      %4082 = vst.msk [vmem:[%s4056 + $0xc8] sm:$0xff] %vm1649, %v4023
      %4083 = vst.msk [vmem:[%s4056 + $0xd0] sm:$0xff] %vm1649, %v4028
      %4084 = vst.msk [vmem:[%s4056 + $0xd8] sm:$0xff] %vm1649, %v4033
      %4085 = vst.msk [vmem:[%s4056 + $0xe0] sm:$0xff] %vm1649, %v4038
      %4086 = vst.msk [vmem:[%s4056 + $0xe8] sm:$0xff] %vm1649, %v4043
      %4087 = vst.msk [vmem:[%s4056 + $0xf0] sm:$0xff] %vm1649, %v4048
      %4088 = vst.msk [vmem:[%s4056 + $0xf8] sm:$0xff] %vm1649, %v4053
      %v4089 = vsel %vm1649, %v3898, 0.0
      %v4090 = vsel %vm1649, %v3903, 0.0
      %v4091 = vadd.f32 %v4089, %v4090
      %v4092 = vsel %vm1649, %v3908, 0.0
      %v4093 = vadd.f32 %v4091, %v4092
      %v4094 = vsel %vm1649, %v3913, 0.0
      %v4095 = vadd.f32 %v4093, %v4094
      %v4096 = vsel %vm1649, %v3918, 0.0
      %v4097 = vadd.f32 %v4095, %v4096
      %v4098 = vsel %vm1649, %v3923, 0.0
      %v4099 = vadd.f32 %v4097, %v4098
      %v4100 = vsel %vm1649, %v3928, 0.0
      %v4101 = vadd.f32 %v4099, %v4100
      %v4102 = vsel %vm1649, %v3933, 0.0
      %v4103 = vadd.f32 %v4101, %v4102
      %v4104 = vsel %vm1649, %v3938, 0.0
      %v4105 = vadd.f32 %v4103, %v4104
      %v4106 = vsel %vm1649, %v3943, 0.0
      %v4107 = vadd.f32 %v4105, %v4106
      %v4108 = vsel %vm1649, %v3948, 0.0
      %v4109 = vadd.f32 %v4107, %v4108
      %v4110 = vsel %vm1649, %v3953, 0.0
      %v4111 = vadd.f32 %v4109, %v4110
      %v4112 = vsel %vm1649, %v3958, 0.0
      %v4113 = vadd.f32 %v4111, %v4112
      %v4114 = vsel %vm1649, %v3963, 0.0
      %v4115 = vadd.f32 %v4113, %v4114
      %v4116 = vsel %vm1649, %v3968, 0.0
      %v4117 = vadd.f32 %v4115, %v4116
      %v4118 = vsel %vm1649, %v3973, 0.0
      %v4119 = vadd.f32 %v4117, %v4118
      %v4120 = vsel %vm1649, %v3978, 0.0
      %v4121 = vadd.f32 %v4119, %v4120
      %v4122 = vsel %vm1649, %v3983, 0.0
      %v4123 = vadd.f32 %v4121, %v4122
      %v4124 = vsel %vm1649, %v3988, 0.0
      %v4125 = vadd.f32 %v4123, %v4124
      %v4126 = vsel %vm1649, %v3993, 0.0
      %v4127 = vadd.f32 %v4125, %v4126
      %v4128 = vsel %vm1649, %v3998, 0.0
      %v4129 = vadd.f32 %v4127, %v4128
      %v4130 = vsel %vm1649, %v4003, 0.0
      %v4131 = vadd.f32 %v4129, %v4130
      %v4132 = vsel %vm1649, %v4008, 0.0
      %v4133 = vadd.f32 %v4131, %v4132
      %v4134 = vsel %vm1649, %v4013, 0.0
      %v4135 = vadd.f32 %v4133, %v4134
      %v4136 = vsel %vm1649, %v4018, 0.0
      %v4137 = vadd.f32 %v4135, %v4136
      %v4138 = vsel %vm1649, %v4023, 0.0
      %v4139 = vadd.f32 %v4137, %v4138
      %v4140 = vsel %vm1649, %v4028, 0.0
      %v4141 = vadd.f32 %v4139, %v4140
      %v4142 = vsel %vm1649, %v4033, 0.0
      %v4143 = vadd.f32 %v4141, %v4142
      %v4144 = vsel %vm1649, %v4038, 0.0
      %v4145 = vadd.f32 %v4143, %v4144
      %v4146 = vsel %vm1649, %v4043, 0.0
      %v4147 = vadd.f32 %v4145, %v4146
      %v4148 = vsel %vm1649, %v4048, 0.0
      %v4149 = vadd.f32 %v4147, %v4148
      %v4150 = vsel %vm1649, %v4053, 0.0
      %v4151 = vadd.f32 %v4149, %v4150
      %v4152 = vrot.slane %v4151, 4
      %v4153 = vadd.f32 %v4151, %v4152
      %v4154 = vrot.slane %v4153, 2
      %v4155 = vadd.f32 %v4153, %v4154
      %v4156 = vrot.slane %v4155, 1
      %v4157 = vadd.f32 %v4155, %v4156
      %v4158 = vadd.f32 %v2954, %v4157
      %v4159 = vmul.f32 %v3898, %v3898
      %v4160 = vmul.f32 %v3903, %v3903
      %v4161 = vmul.f32 %v3908, %v3908
      %v4162 = vmul.f32 %v3913, %v3913
      %v4163 = vmul.f32 %v3918, %v3918
      %v4164 = vmul.f32 %v3923, %v3923
      %v4165 = vmul.f32 %v3928, %v3928
      %v4166 = vmul.f32 %v3933, %v3933
      %v4167 = vmul.f32 %v3938, %v3938
      %v4168 = vmul.f32 %v3943, %v3943
      %v4169 = vmul.f32 %v3948, %v3948
      %v4170 = vmul.f32 %v3953, %v3953
      %v4171 = vmul.f32 %v3958, %v3958
      %v4172 = vmul.f32 %v3963, %v3963
      %v4173 = vmul.f32 %v3968, %v3968
      %v4174 = vmul.f32 %v3973, %v3973
      %v4175 = vmul.f32 %v3978, %v3978
      %v4176 = vmul.f32 %v3983, %v3983
      %v4177 = vmul.f32 %v3988, %v3988
      %v4178 = vmul.f32 %v3993, %v3993
      %v4179 = vmul.f32 %v3998, %v3998
      %v4180 = vmul.f32 %v4003, %v4003
      %v4181 = vmul.f32 %v4008, %v4008
      %v4182 = vmul.f32 %v4013, %v4013
      %v4183 = vmul.f32 %v4018, %v4018
      %v4184 = vmul.f32 %v4023, %v4023
      %v4185 = vmul.f32 %v4028, %v4028
      %v4186 = vmul.f32 %v4033, %v4033
      %v4187 = vmul.f32 %v4038, %v4038
      %v4188 = vmul.f32 %v4043, %v4043
      %v4189 = vmul.f32 %v4048, %v4048
      %v4190 = vmul.f32 %v4053, %v4053
      %v4191 = vsel %vm1649, %v4159, 0.0
      %v4192 = vsel %vm1649, %v4160, 0.0
      %v4193 = vadd.f32 %v4191, %v4192
      %v4194 = vsel %vm1649, %v4161, 0.0
      %v4195 = vadd.f32 %v4193, %v4194
      %v4196 = vsel %vm1649, %v4162, 0.0
      %v4197 = vadd.f32 %v4195, %v4196
      %v4198 = vsel %vm1649, %v4163, 0.0
      %v4199 = vadd.f32 %v4197, %v4198
      %v4200 = vsel %vm1649, %v4164, 0.0
      %v4201 = vadd.f32 %v4199, %v4200
      %v4202 = vsel %vm1649, %v4165, 0.0
      %v4203 = vadd.f32 %v4201, %v4202
      %v4204 = vsel %vm1649, %v4166, 0.0
      %v4205 = vadd.f32 %v4203, %v4204
      %v4206 = vsel %vm1649, %v4167, 0.0
      %v4207 = vadd.f32 %v4205, %v4206
      %v4208 = vsel %vm1649, %v4168, 0.0
      %v4209 = vadd.f32 %v4207, %v4208
      %v4210 = vsel %vm1649, %v4169, 0.0
      %v4211 = vadd.f32 %v4209, %v4210
      %v4212 = vsel %vm1649, %v4170, 0.0
      %v4213 = vadd.f32 %v4211, %v4212
      %v4214 = vsel %vm1649, %v4171, 0.0
      %v4215 = vadd.f32 %v4213, %v4214
      %v4216 = vsel %vm1649, %v4172, 0.0
      %v4217 = vadd.f32 %v4215, %v4216
      %v4218 = vsel %vm1649, %v4173, 0.0
      %v4219 = vadd.f32 %v4217, %v4218
      %v4220 = vsel %vm1649, %v4174, 0.0
      %v4221 = vadd.f32 %v4219, %v4220
      %v4222 = vsel %vm1649, %v4175, 0.0
      %v4223 = vadd.f32 %v4221, %v4222
      %v4224 = vsel %vm1649, %v4176, 0.0
      %v4225 = vadd.f32 %v4223, %v4224
      %v4226 = vsel %vm1649, %v4177, 0.0
      %v4227 = vadd.f32 %v4225, %v4226
      %v4228 = vsel %vm1649, %v4178, 0.0
      %v4229 = vadd.f32 %v4227, %v4228
      %v4230 = vsel %vm1649, %v4179, 0.0
      %v4231 = vadd.f32 %v4229, %v4230
      %v4232 = vsel %vm1649, %v4180, 0.0
      %v4233 = vadd.f32 %v4231, %v4232
      %v4234 = vsel %vm1649, %v4181, 0.0
      %v4235 = vadd.f32 %v4233, %v4234
      %v4236 = vsel %vm1649, %v4182, 0.0
      %v4237 = vadd.f32 %v4235, %v4236
      %v4238 = vsel %vm1649, %v4183, 0.0
      %v4239 = vadd.f32 %v4237, %v4238
      %v4240 = vsel %vm1649, %v4184, 0.0
      %v4241 = vadd.f32 %v4239, %v4240
      %v4242 = vsel %vm1649, %v4185, 0.0
      %v4243 = vadd.f32 %v4241, %v4242
      %v4244 = vsel %vm1649, %v4186, 0.0
      %v4245 = vadd.f32 %v4243, %v4244
      %v4246 = vsel %vm1649, %v4187, 0.0
      %v4247 = vadd.f32 %v4245, %v4246
      %v4248 = vsel %vm1649, %v4188, 0.0
      %v4249 = vadd.f32 %v4247, %v4248
      %v4250 = vsel %vm1649, %v4189, 0.0
      %v4251 = vadd.f32 %v4249, %v4250
      %v4252 = vsel %vm1649, %v4190, 0.0
      %v4253 = vadd.f32 %v4251, %v4252
      %v4254 = vrot.slane %v4253, 4
      %v4255 = vadd.f32 %v4253, %v4254
      %v4256 = vrot.slane %v4255, 2
      %v4257 = vadd.f32 %v4255, %v4256
      %v4258 = vrot.slane %v4257, 1
      %v4259 = vadd.f32 %v4257, %v4258
      %v4260 = vadd.f32 %v3056, %v4259
      %v4261 = vld [vmem:[%s582 + $0x1] sm:$0xff]
      %v4262 = vld [vmem:[%s582 + $0x9] sm:$0xff]
      %v4263 = vld [vmem:[%s582 + $0x19] sm:$0xff]
      %v4264 = vld [vmem:[%s582 + $0x21] sm:$0xff]
      %v4265 = vld [vmem:[%s582 + $0x31] sm:$0xff]
      %v4266 = vld [vmem:[%s582 + $0x39] sm:$0xff]
      %v4267 = vld [vmem:[%s582 + $0x49] sm:$0xff]
      %v4268 = vld [vmem:[%s582 + $0x51] sm:$0xff]
      %v4269 = vld [vmem:[%s582 + $0x61] sm:$0xff]
      %v4270 = vld [vmem:[%s582 + $0x69] sm:$0xff]
      %v4271 = vld [vmem:[%s582 + $0x79] sm:$0xff]
      %v4272 = vld [vmem:[%s582 + $0x81] sm:$0xff]
      %v4273 = vld [vmem:[%s582 + $0x91] sm:$0xff]
      %v4274 = vld [vmem:[%s582 + $0x99] sm:$0xff]
      %v4275 = vld [vmem:[%s582 + $0xa9] sm:$0xff]
      %v4276 = vld [vmem:[%s582 + $0xb1] sm:$0xff]
      %v4277 = vld [vmem:[%s582 + $0xc1] sm:$0xff]
      %v4278 = vld [vmem:[%s582 + $0xc9] sm:$0xff]
      %v4279 = vld [vmem:[%s582 + $0xd9] sm:$0xff]
      %v4280 = vld [vmem:[%s582 + $0xe1] sm:$0xff]
      %v4281 = vld [vmem:[%s582 + $0xf1] sm:$0xff]
      %v4282 = vld [vmem:[%s582 + $0xf9] sm:$0xff]
      %v4283 = vld [vmem:[%s582 + $0x109] sm:$0xff]
      %v4284 = vld [vmem:[%s582 + $0x111] sm:$0xff]
      %v4285 = vld [vmem:[%s582 + $0x121] sm:$0xff]
      %v4286 = vld [vmem:[%s582 + $0x129] sm:$0xff]
      %v4287 = vld [vmem:[%s582 + $0x139] sm:$0xff]
      %v4288 = vld [vmem:[%s582 + $0x141] sm:$0xff]
      %v4289 = vld [vmem:[%s582 + $0x151] sm:$0xff]
      %v4290 = vld [vmem:[%s582 + $0x159] sm:$0xff]
      %v4291 = vld [vmem:[%s582 + $0x169] sm:$0xff]
      %v4292 = vld [vmem:[%s582 + $0x171] sm:$0xff]
      %4293 = vst.msk [vmem:[#allocation3] sm:$0xff] %vm573, %v4261
      %4294 = vst.msk [vmem:[#allocation3 + $0x8] sm:$0xff] %vm573, %v4262
      %4295 = vst.msk [vmem:[#allocation3 + $0x10] sm:$0xff] %vm573, %v4263
      %4296 = vst.msk [vmem:[#allocation3 + $0x18] sm:$0xff] %vm573, %v4264
      %4297 = vst.msk [vmem:[#allocation3 + $0x20] sm:$0xff] %vm573, %v4265
      %4298 = vst.msk [vmem:[#allocation3 + $0x28] sm:$0xff] %vm573, %v4266
      %4299 = vst.msk [vmem:[#allocation3 + $0x30] sm:$0xff] %vm573, %v4267
      %4300 = vst.msk [vmem:[#allocation3 + $0x38] sm:$0xff] %vm573, %v4268
      %4301 = vst.msk [vmem:[#allocation3 + $0x40] sm:$0xff] %vm573, %v4269
      %4302 = vst.msk [vmem:[#allocation3 + $0x48] sm:$0xff] %vm573, %v4270
      %4303 = vst.msk [vmem:[#allocation3 + $0x50] sm:$0xff] %vm573, %v4271
      %4304 = vst.msk [vmem:[#allocation3 + $0x58] sm:$0xff] %vm573, %v4272
      %4305 = vst.msk [vmem:[#allocation3 + $0x60] sm:$0xff] %vm573, %v4273
      %4306 = vst.msk [vmem:[#allocation3 + $0x68] sm:$0xff] %vm573, %v4274
      %4307 = vst.msk [vmem:[#allocation3 + $0x70] sm:$0xff] %vm573, %v4275
      %4308 = vst.msk [vmem:[#allocation3 + $0x78] sm:$0xff] %vm573, %v4276
      %4309 = vst.msk [vmem:[#allocation3 + $0x80] sm:$0xff] %vm573, %v4277
      %4310 = vst.msk [vmem:[#allocation3 + $0x88] sm:$0xff] %vm573, %v4278
      %4311 = vst.msk [vmem:[#allocation3 + $0x90] sm:$0xff] %vm573, %v4279
      %4312 = vst.msk [vmem:[#allocation3 + $0x98] sm:$0xff] %vm573, %v4280
      %4313 = vst.msk [vmem:[#allocation3 + $0xa0] sm:$0xff] %vm573, %v4281
      %4314 = vst.msk [vmem:[#allocation3 + $0xa8] sm:$0xff] %vm573, %v4282
      %4315 = vst.msk [vmem:[#allocation3 + $0xb0] sm:$0xff] %vm573, %v4283
      %4316 = vst.msk [vmem:[#allocation3 + $0xb8] sm:$0xff] %vm573, %v4284
      %4317 = vst.msk [vmem:[#allocation3 + $0xc0] sm:$0xff] %vm573, %v4285
      %4318 = vst.msk [vmem:[#allocation3 + $0xc8] sm:$0xff] %vm573, %v4286
      %4319 = vst.msk [vmem:[#allocation3 + $0xd0] sm:$0xff] %vm573, %v4287
      %4320 = vst.msk [vmem:[#allocation3 + $0xd8] sm:$0xff] %vm573, %v4288
      %4321 = vst.msk [vmem:[#allocation3 + $0xe0] sm:$0xff] %vm573, %v4289
      %4322 = vst.msk [vmem:[#allocation3 + $0xe8] sm:$0xff] %vm573, %v4290
      %4323 = vst.msk [vmem:[#allocation3 + $0xf0] sm:$0xff] %vm573, %v4291
      %4324 = vst.msk [vmem:[#allocation3 + $0xf8] sm:$0xff] %vm573, %v4292
      %v4325 = vld [vmem:[%s582 + $0x2] sm:$0xff]
      %v4326 = vld [vmem:[%s582 + $0xa] sm:$0xff]
      %v4327 = vld [vmem:[%s582 + $0x1a] sm:$0xff]
      %v4328 = vld [vmem:[%s582 + $0x22] sm:$0xff]
      %v4329 = vld [vmem:[%s582 + $0x32] sm:$0xff]
      %v4330 = vld [vmem:[%s582 + $0x3a] sm:$0xff]
      %v4331 = vld [vmem:[%s582 + $0x4a] sm:$0xff]
      %v4332 = vld [vmem:[%s582 + $0x52] sm:$0xff]
      %v4333 = vld [vmem:[%s582 + $0x62] sm:$0xff]
      %v4334 = vld [vmem:[%s582 + $0x6a] sm:$0xff]
      %v4335 = vld [vmem:[%s582 + $0x7a] sm:$0xff]
      %v4336 = vld [vmem:[%s582 + $0x82] sm:$0xff]
      %v4337 = vld [vmem:[%s582 + $0x92] sm:$0xff]
      %v4338 = vld [vmem:[%s582 + $0x9a] sm:$0xff]
      %v4339 = vld [vmem:[%s582 + $0xaa] sm:$0xff]
      %v4340 = vld [vmem:[%s582 + $0xb2] sm:$0xff]
      %v4341 = vld [vmem:[%s582 + $0xc2] sm:$0xff]
      %v4342 = vld [vmem:[%s582 + $0xca] sm:$0xff]
      %v4343 = vld [vmem:[%s582 + $0xda] sm:$0xff]
      %v4344 = vld [vmem:[%s582 + $0xe2] sm:$0xff]
      %v4345 = vld [vmem:[%s582 + $0xf2] sm:$0xff]
      %v4346 = vld [vmem:[%s582 + $0xfa] sm:$0xff]
      %v4347 = vld [vmem:[%s582 + $0x10a] sm:$0xff]
      %v4348 = vld [vmem:[%s582 + $0x112] sm:$0xff]
      %v4349 = vld [vmem:[%s582 + $0x122] sm:$0xff]
      %v4350 = vld [vmem:[%s582 + $0x12a] sm:$0xff]
      %v4351 = vld [vmem:[%s582 + $0x13a] sm:$0xff]
      %v4352 = vld [vmem:[%s582 + $0x142] sm:$0xff]
      %v4353 = vld [vmem:[%s582 + $0x152] sm:$0xff]
      %v4354 = vld [vmem:[%s582 + $0x15a] sm:$0xff]
      %v4355 = vld [vmem:[%s582 + $0x16a] sm:$0xff]
      %v4356 = vld [vmem:[%s582 + $0x172] sm:$0xff]
      %4389 = vrot.lane.b32.xlu0 %v4325, 8
      %v4390 = vpop.permute.xlu0 %4389
      %4391 = vrot.lane.b32.xlu0 %v4326, 8
      %v4392 = vpop.permute.xlu0 %4391
      %4393 = vrot.lane.b32.xlu0 %v4327, 8
      %v4394 = vpop.permute.xlu0 %4393
      %4395 = vrot.lane.b32.xlu0 %v4328, 8
      %v4396 = vpop.permute.xlu0 %4395
      %4397 = vrot.lane.b32.xlu0 %v4329, 8
      %v4398 = vpop.permute.xlu0 %4397
      %4399 = vrot.lane.b32.xlu0 %v4330, 8
      %v4400 = vpop.permute.xlu0 %4399
      %4401 = vrot.lane.b32.xlu0 %v4331, 8
      %v4402 = vpop.permute.xlu0 %4401
      %4403 = vrot.lane.b32.xlu0 %v4332, 8
      %v4404 = vpop.permute.xlu0 %4403
      %4405 = vrot.lane.b32.xlu0 %v4333, 8
      %v4406 = vpop.permute.xlu0 %4405
      %4407 = vrot.lane.b32.xlu0 %v4334, 8
      %v4408 = vpop.permute.xlu0 %4407
      %4409 = vrot.lane.b32.xlu0 %v4335, 8
      %v4410 = vpop.permute.xlu0 %4409
      %4411 = vrot.lane.b32.xlu0 %v4336, 8
      %v4412 = vpop.permute.xlu0 %4411
      %4413 = vrot.lane.b32.xlu0 %v4337, 8
      %v4414 = vpop.permute.xlu0 %4413
      %4415 = vrot.lane.b32.xlu0 %v4338, 8
      %v4416 = vpop.permute.xlu0 %4415
      %4417 = vrot.lane.b32.xlu0 %v4339, 8
      %v4418 = vpop.permute.xlu0 %4417
      %4419 = vrot.lane.b32.xlu0 %v4340, 8
      %v4420 = vpop.permute.xlu0 %4419
      %4421 = vrot.lane.b32.xlu0 %v4341, 8
      %v4422 = vpop.permute.xlu0 %4421
      %4423 = vrot.lane.b32.xlu0 %v4342, 8
      %v4424 = vpop.permute.xlu0 %4423
      %4425 = vrot.lane.b32.xlu0 %v4343, 8
      %v4426 = vpop.permute.xlu0 %4425
      %4427 = vrot.lane.b32.xlu0 %v4344, 8
      %v4428 = vpop.permute.xlu0 %4427
      %4429 = vrot.lane.b32.xlu0 %v4345, 8
      %v4430 = vpop.permute.xlu0 %4429
      %4431 = vrot.lane.b32.xlu0 %v4346, 8
      %v4432 = vpop.permute.xlu0 %4431
      %4433 = vrot.lane.b32.xlu0 %v4347, 8
      %v4434 = vpop.permute.xlu0 %4433
      %4435 = vrot.lane.b32.xlu0 %v4348, 8
      %v4436 = vpop.permute.xlu0 %4435
      %4437 = vrot.lane.b32.xlu0 %v4349, 8
      %v4438 = vpop.permute.xlu0 %4437
      %4439 = vrot.lane.b32.xlu0 %v4350, 8
      %v4440 = vpop.permute.xlu0 %4439
      %4441 = vrot.lane.b32.xlu0 %v4351, 8
      %v4442 = vpop.permute.xlu0 %4441
      %4443 = vrot.lane.b32.xlu0 %v4352, 8
      %v4444 = vpop.permute.xlu0 %4443
      %4445 = vrot.lane.b32.xlu0 %v4353, 8
      %v4446 = vpop.permute.xlu0 %4445
      %4447 = vrot.lane.b32.xlu0 %v4354, 8
      %v4448 = vpop.permute.xlu0 %4447
      %4449 = vrot.lane.b32.xlu0 %v4355, 8
      %v4450 = vpop.permute.xlu0 %4449
      %4451 = vrot.lane.b32.xlu0 %v4356, 8
      %v4452 = vpop.permute.xlu0 %4451
      %4485 = vst.msk [vmem:[#allocation3] sm:$0xff] %vm872, %v4390
      %4486 = vst.msk [vmem:[#allocation3 + $0x8] sm:$0xff] %vm872, %v4392
      %4487 = vst.msk [vmem:[#allocation3 + $0x10] sm:$0xff] %vm872, %v4394
      %4488 = vst.msk [vmem:[#allocation3 + $0x18] sm:$0xff] %vm872, %v4396
      %4489 = vst.msk [vmem:[#allocation3 + $0x20] sm:$0xff] %vm872, %v4398
      %4490 = vst.msk [vmem:[#allocation3 + $0x28] sm:$0xff] %vm872, %v4400
      %4491 = vst.msk [vmem:[#allocation3 + $0x30] sm:$0xff] %vm872, %v4402
      %4492 = vst.msk [vmem:[#allocation3 + $0x38] sm:$0xff] %vm872, %v4404
      %4493 = vst.msk [vmem:[#allocation3 + $0x40] sm:$0xff] %vm872, %v4406
      %4494 = vst.msk [vmem:[#allocation3 + $0x48] sm:$0xff] %vm872, %v4408
      %4495 = vst.msk [vmem:[#allocation3 + $0x50] sm:$0xff] %vm872, %v4410
      %4496 = vst.msk [vmem:[#allocation3 + $0x58] sm:$0xff] %vm872, %v4412
      %4497 = vst.msk [vmem:[#allocation3 + $0x60] sm:$0xff] %vm872, %v4414
      %4498 = vst.msk [vmem:[#allocation3 + $0x68] sm:$0xff] %vm872, %v4416
      %4499 = vst.msk [vmem:[#allocation3 + $0x70] sm:$0xff] %vm872, %v4418
      %4500 = vst.msk [vmem:[#allocation3 + $0x78] sm:$0xff] %vm872, %v4420
      %4501 = vst.msk [vmem:[#allocation3 + $0x80] sm:$0xff] %vm872, %v4422
      %4502 = vst.msk [vmem:[#allocation3 + $0x88] sm:$0xff] %vm872, %v4424
      %4503 = vst.msk [vmem:[#allocation3 + $0x90] sm:$0xff] %vm872, %v4426
      %4504 = vst.msk [vmem:[#allocation3 + $0x98] sm:$0xff] %vm872, %v4428
      %4505 = vst.msk [vmem:[#allocation3 + $0xa0] sm:$0xff] %vm872, %v4430
      %4506 = vst.msk [vmem:[#allocation3 + $0xa8] sm:$0xff] %vm872, %v4432
      %4507 = vst.msk [vmem:[#allocation3 + $0xb0] sm:$0xff] %vm872, %v4434
      %4508 = vst.msk [vmem:[#allocation3 + $0xb8] sm:$0xff] %vm872, %v4436
      %4509 = vst.msk [vmem:[#allocation3 + $0xc0] sm:$0xff] %vm872, %v4438
      %4510 = vst.msk [vmem:[#allocation3 + $0xc8] sm:$0xff] %vm872, %v4440
      %4511 = vst.msk [vmem:[#allocation3 + $0xd0] sm:$0xff] %vm872, %v4442
      %4512 = vst.msk [vmem:[#allocation3 + $0xd8] sm:$0xff] %vm872, %v4444
      %4513 = vst.msk [vmem:[#allocation3 + $0xe0] sm:$0xff] %vm872, %v4446
      %4514 = vst.msk [vmem:[#allocation3 + $0xe8] sm:$0xff] %vm872, %v4448
      %4515 = vst.msk [vmem:[#allocation3 + $0xf0] sm:$0xff] %vm872, %v4450
      %4516 = vst.msk [vmem:[#allocation3 + $0xf8] sm:$0xff] %vm872, %v4452
      %v4517 = vld [vmem:[%s3313 + $0x1] sm:$0xff]
      %v4518 = vld [vmem:[%s3313 + $0x9] sm:$0xff]
      %v4519 = vld [vmem:[%s3313 + $0x19] sm:$0xff]
      %v4520 = vld [vmem:[%s3313 + $0x21] sm:$0xff]
      %v4521 = vld [vmem:[%s3313 + $0x31] sm:$0xff]
      %v4522 = vld [vmem:[%s3313 + $0x39] sm:$0xff]
      %v4523 = vld [vmem:[%s3313 + $0x49] sm:$0xff]
      %v4524 = vld [vmem:[%s3313 + $0x51] sm:$0xff]
      %v4525 = vld [vmem:[%s3313 + $0x61] sm:$0xff]
      %v4526 = vld [vmem:[%s3313 + $0x69] sm:$0xff]
      %v4527 = vld [vmem:[%s3313 + $0x79] sm:$0xff]
      %v4528 = vld [vmem:[%s3313 + $0x81] sm:$0xff]
      %v4529 = vld [vmem:[%s3313 + $0x91] sm:$0xff]
      %v4530 = vld [vmem:[%s3313 + $0x99] sm:$0xff]
      %v4531 = vld [vmem:[%s3313 + $0xa9] sm:$0xff]
      %v4532 = vld [vmem:[%s3313 + $0xb1] sm:$0xff]
      %v4533 = vld [vmem:[%s3313 + $0xc1] sm:$0xff]
      %v4534 = vld [vmem:[%s3313 + $0xc9] sm:$0xff]
      %v4535 = vld [vmem:[%s3313 + $0xd9] sm:$0xff]
      %v4536 = vld [vmem:[%s3313 + $0xe1] sm:$0xff]
      %v4537 = vld [vmem:[%s3313 + $0xf1] sm:$0xff]
      %v4538 = vld [vmem:[%s3313 + $0xf9] sm:$0xff]
      %v4539 = vld [vmem:[%s3313 + $0x109] sm:$0xff]
      %v4540 = vld [vmem:[%s3313 + $0x111] sm:$0xff]
      %v4541 = vld [vmem:[%s3313 + $0x121] sm:$0xff]
      %v4542 = vld [vmem:[%s3313 + $0x129] sm:$0xff]
      %v4543 = vld [vmem:[%s3313 + $0x139] sm:$0xff]
      %v4544 = vld [vmem:[%s3313 + $0x141] sm:$0xff]
      %v4545 = vld [vmem:[%s3313 + $0x151] sm:$0xff]
      %v4546 = vld [vmem:[%s3313 + $0x159] sm:$0xff]
      %v4547 = vld [vmem:[%s3313 + $0x169] sm:$0xff]
      %v4548 = vld [vmem:[%s3313 + $0x171] sm:$0xff]
      %4581 = vrot.lane.b32.xlu0 %v4517, 16
      %v4582 = vpop.permute.xlu0 %4581
      %4583 = vrot.lane.b32.xlu0 %v4518, 16
      %v4584 = vpop.permute.xlu0 %4583
      %4585 = vrot.lane.b32.xlu0 %v4519, 16
      %v4586 = vpop.permute.xlu0 %4585
      %4587 = vrot.lane.b32.xlu0 %v4520, 16
      %v4588 = vpop.permute.xlu0 %4587
      %4589 = vrot.lane.b32.xlu0 %v4521, 16
      %v4590 = vpop.permute.xlu0 %4589
      %4591 = vrot.lane.b32.xlu0 %v4522, 16
      %v4592 = vpop.permute.xlu0 %4591
      %4593 = vrot.lane.b32.xlu0 %v4523, 16
      %v4594 = vpop.permute.xlu0 %4593
      %4595 = vrot.lane.b32.xlu0 %v4524, 16
      %v4596 = vpop.permute.xlu0 %4595
      %4597 = vrot.lane.b32.xlu0 %v4525, 16
      %v4598 = vpop.permute.xlu0 %4597
      %4599 = vrot.lane.b32.xlu0 %v4526, 16
      %v4600 = vpop.permute.xlu0 %4599
      %4601 = vrot.lane.b32.xlu0 %v4527, 16
      %v4602 = vpop.permute.xlu0 %4601
      %4603 = vrot.lane.b32.xlu0 %v4528, 16
      %v4604 = vpop.permute.xlu0 %4603
      %4605 = vrot.lane.b32.xlu0 %v4529, 16
      %v4606 = vpop.permute.xlu0 %4605
      %4607 = vrot.lane.b32.xlu0 %v4530, 16
      %v4608 = vpop.permute.xlu0 %4607
      %4609 = vrot.lane.b32.xlu0 %v4531, 16
      %v4610 = vpop.permute.xlu0 %4609
      %4611 = vrot.lane.b32.xlu0 %v4532, 16
      %v4612 = vpop.permute.xlu0 %4611
      %4613 = vrot.lane.b32.xlu0 %v4533, 16
      %v4614 = vpop.permute.xlu0 %4613
      %4615 = vrot.lane.b32.xlu0 %v4534, 16
      %v4616 = vpop.permute.xlu0 %4615
      %4617 = vrot.lane.b32.xlu0 %v4535, 16
      %v4618 = vpop.permute.xlu0 %4617
      %4619 = vrot.lane.b32.xlu0 %v4536, 16
      %v4620 = vpop.permute.xlu0 %4619
      %4621 = vrot.lane.b32.xlu0 %v4537, 16
      %v4622 = vpop.permute.xlu0 %4621
      %4623 = vrot.lane.b32.xlu0 %v4538, 16
      %v4624 = vpop.permute.xlu0 %4623
      %4625 = vrot.lane.b32.xlu0 %v4539, 16
      %v4626 = vpop.permute.xlu0 %4625
      %4627 = vrot.lane.b32.xlu0 %v4540, 16
      %v4628 = vpop.permute.xlu0 %4627
      %4629 = vrot.lane.b32.xlu0 %v4541, 16
      %v4630 = vpop.permute.xlu0 %4629
      %4631 = vrot.lane.b32.xlu0 %v4542, 16
      %v4632 = vpop.permute.xlu0 %4631
      %4633 = vrot.lane.b32.xlu0 %v4543, 16
      %v4634 = vpop.permute.xlu0 %4633
      %4635 = vrot.lane.b32.xlu0 %v4544, 16
      %v4636 = vpop.permute.xlu0 %4635
      %4637 = vrot.lane.b32.xlu0 %v4545, 16
      %v4638 = vpop.permute.xlu0 %4637
      %4639 = vrot.lane.b32.xlu0 %v4546, 16
      %v4640 = vpop.permute.xlu0 %4639
      %4641 = vrot.lane.b32.xlu0 %v4547, 16
      %v4642 = vpop.permute.xlu0 %4641
      %4643 = vrot.lane.b32.xlu0 %v4548, 16
      %v4644 = vpop.permute.xlu0 %4643
      %4677 = vst.msk [vmem:[#allocation3] sm:$0xff] %vm1065, %v4582
      %4678 = vst.msk [vmem:[#allocation3 + $0x8] sm:$0xff] %vm1065, %v4584
      %4679 = vst.msk [vmem:[#allocation3 + $0x10] sm:$0xff] %vm1065, %v4586
      %4680 = vst.msk [vmem:[#allocation3 + $0x18] sm:$0xff] %vm1065, %v4588
      %4681 = vst.msk [vmem:[#allocation3 + $0x20] sm:$0xff] %vm1065, %v4590
      %4682 = vst.msk [vmem:[#allocation3 + $0x28] sm:$0xff] %vm1065, %v4592
      %4683 = vst.msk [vmem:[#allocation3 + $0x30] sm:$0xff] %vm1065, %v4594
      %4684 = vst.msk [vmem:[#allocation3 + $0x38] sm:$0xff] %vm1065, %v4596
      %4685 = vst.msk [vmem:[#allocation3 + $0x40] sm:$0xff] %vm1065, %v4598
      %4686 = vst.msk [vmem:[#allocation3 + $0x48] sm:$0xff] %vm1065, %v4600
      %4687 = vst.msk [vmem:[#allocation3 + $0x50] sm:$0xff] %vm1065, %v4602
      %4688 = vst.msk [vmem:[#allocation3 + $0x58] sm:$0xff] %vm1065, %v4604
      %4689 = vst.msk [vmem:[#allocation3 + $0x60] sm:$0xff] %vm1065, %v4606
      %4690 = vst.msk [vmem:[#allocation3 + $0x68] sm:$0xff] %vm1065, %v4608
      %4691 = vst.msk [vmem:[#allocation3 + $0x70] sm:$0xff] %vm1065, %v4610
      %4692 = vst.msk [vmem:[#allocation3 + $0x78] sm:$0xff] %vm1065, %v4612
      %4693 = vst.msk [vmem:[#allocation3 + $0x80] sm:$0xff] %vm1065, %v4614
      %4694 = vst.msk [vmem:[#allocation3 + $0x88] sm:$0xff] %vm1065, %v4616
      %4695 = vst.msk [vmem:[#allocation3 + $0x90] sm:$0xff] %vm1065, %v4618
      %4696 = vst.msk [vmem:[#allocation3 + $0x98] sm:$0xff] %vm1065, %v4620
      %4697 = vst.msk [vmem:[#allocation3 + $0xa0] sm:$0xff] %vm1065, %v4622
      %4698 = vst.msk [vmem:[#allocation3 + $0xa8] sm:$0xff] %vm1065, %v4624
      %4699 = vst.msk [vmem:[#allocation3 + $0xb0] sm:$0xff] %vm1065, %v4626
      %4700 = vst.msk [vmem:[#allocation3 + $0xb8] sm:$0xff] %vm1065, %v4628
      %4701 = vst.msk [vmem:[#allocation3 + $0xc0] sm:$0xff] %vm1065, %v4630
      %4702 = vst.msk [vmem:[#allocation3 + $0xc8] sm:$0xff] %vm1065, %v4632
      %4703 = vst.msk [vmem:[#allocation3 + $0xd0] sm:$0xff] %vm1065, %v4634
      %4704 = vst.msk [vmem:[#allocation3 + $0xd8] sm:$0xff] %vm1065, %v4636
      %4705 = vst.msk [vmem:[#allocation3 + $0xe0] sm:$0xff] %vm1065, %v4638
      %4706 = vst.msk [vmem:[#allocation3 + $0xe8] sm:$0xff] %vm1065, %v4640
      %4707 = vst.msk [vmem:[#allocation3 + $0xf0] sm:$0xff] %vm1065, %v4642
      %4708 = vst.msk [vmem:[#allocation3 + $0xf8] sm:$0xff] %vm1065, %v4644
      %v4709 = vld [vmem:[%s3313 + $0x2] sm:$0xff]
      %v4710 = vld [vmem:[%s3313 + $0xa] sm:$0xff]
      %v4711 = vld [vmem:[%s3313 + $0x1a] sm:$0xff]
      %v4712 = vld [vmem:[%s3313 + $0x22] sm:$0xff]
      %v4713 = vld [vmem:[%s3313 + $0x32] sm:$0xff]
      %v4714 = vld [vmem:[%s3313 + $0x3a] sm:$0xff]
      %v4715 = vld [vmem:[%s3313 + $0x4a] sm:$0xff]
      %v4716 = vld [vmem:[%s3313 + $0x52] sm:$0xff]
      %v4717 = vld [vmem:[%s3313 + $0x62] sm:$0xff]
      %v4718 = vld [vmem:[%s3313 + $0x6a] sm:$0xff]
      %v4719 = vld [vmem:[%s3313 + $0x7a] sm:$0xff]
      %v4720 = vld [vmem:[%s3313 + $0x82] sm:$0xff]
      %v4721 = vld [vmem:[%s3313 + $0x92] sm:$0xff]
      %v4722 = vld [vmem:[%s3313 + $0x9a] sm:$0xff]
      %v4723 = vld [vmem:[%s3313 + $0xaa] sm:$0xff]
      %v4724 = vld [vmem:[%s3313 + $0xb2] sm:$0xff]
      %v4725 = vld [vmem:[%s3313 + $0xc2] sm:$0xff]
      %v4726 = vld [vmem:[%s3313 + $0xca] sm:$0xff]
      %v4727 = vld [vmem:[%s3313 + $0xda] sm:$0xff]
      %v4728 = vld [vmem:[%s3313 + $0xe2] sm:$0xff]
      %v4729 = vld [vmem:[%s3313 + $0xf2] sm:$0xff]
      %v4730 = vld [vmem:[%s3313 + $0xfa] sm:$0xff]
      %v4731 = vld [vmem:[%s3313 + $0x10a] sm:$0xff]
      %v4732 = vld [vmem:[%s3313 + $0x112] sm:$0xff]
      %v4733 = vld [vmem:[%s3313 + $0x122] sm:$0xff]
      %v4734 = vld [vmem:[%s3313 + $0x12a] sm:$0xff]
      %v4735 = vld [vmem:[%s3313 + $0x13a] sm:$0xff]
      %v4736 = vld [vmem:[%s3313 + $0x142] sm:$0xff]
      %v4737 = vld [vmem:[%s3313 + $0x152] sm:$0xff]
      %v4738 = vld [vmem:[%s3313 + $0x15a] sm:$0xff]
      %v4739 = vld [vmem:[%s3313 + $0x16a] sm:$0xff]
      %v4740 = vld [vmem:[%s3313 + $0x172] sm:$0xff]
      %4773 = vrot.lane.b32.xlu0 %v4709, 24
      %v4774 = vpop.permute.xlu0 %4773
      %4775 = vrot.lane.b32.xlu0 %v4710, 24
      %v4776 = vpop.permute.xlu0 %4775
      %4777 = vrot.lane.b32.xlu0 %v4711, 24
      %v4778 = vpop.permute.xlu0 %4777
      %4779 = vrot.lane.b32.xlu0 %v4712, 24
      %v4780 = vpop.permute.xlu0 %4779
      %4781 = vrot.lane.b32.xlu0 %v4713, 24
      %v4782 = vpop.permute.xlu0 %4781
      %4783 = vrot.lane.b32.xlu0 %v4714, 24
      %v4784 = vpop.permute.xlu0 %4783
      %4785 = vrot.lane.b32.xlu0 %v4715, 24
      %v4786 = vpop.permute.xlu0 %4785
      %4787 = vrot.lane.b32.xlu0 %v4716, 24
      %v4788 = vpop.permute.xlu0 %4787
      %4789 = vrot.lane.b32.xlu0 %v4717, 24
      %v4790 = vpop.permute.xlu0 %4789
      %4791 = vrot.lane.b32.xlu0 %v4718, 24
      %v4792 = vpop.permute.xlu0 %4791
      %4793 = vrot.lane.b32.xlu0 %v4719, 24
      %v4794 = vpop.permute.xlu0 %4793
      %4795 = vrot.lane.b32.xlu0 %v4720, 24
      %v4796 = vpop.permute.xlu0 %4795
      %4797 = vrot.lane.b32.xlu0 %v4721, 24
      %v4798 = vpop.permute.xlu0 %4797
      %4799 = vrot.lane.b32.xlu0 %v4722, 24
      %v4800 = vpop.permute.xlu0 %4799
      %4801 = vrot.lane.b32.xlu0 %v4723, 24
      %v4802 = vpop.permute.xlu0 %4801
      %4803 = vrot.lane.b32.xlu0 %v4724, 24
      %v4804 = vpop.permute.xlu0 %4803
      %4805 = vrot.lane.b32.xlu0 %v4725, 24
      %v4806 = vpop.permute.xlu0 %4805
      %4807 = vrot.lane.b32.xlu0 %v4726, 24
      %v4808 = vpop.permute.xlu0 %4807
      %4809 = vrot.lane.b32.xlu0 %v4727, 24
      %v4810 = vpop.permute.xlu0 %4809
      %4811 = vrot.lane.b32.xlu0 %v4728, 24
      %v4812 = vpop.permute.xlu0 %4811
      %4813 = vrot.lane.b32.xlu0 %v4729, 24
      %v4814 = vpop.permute.xlu0 %4813
      %4815 = vrot.lane.b32.xlu0 %v4730, 24
      %v4816 = vpop.permute.xlu0 %4815
      %4817 = vrot.lane.b32.xlu0 %v4731, 24
      %v4818 = vpop.permute.xlu0 %4817
      %4819 = vrot.lane.b32.xlu0 %v4732, 24
      %v4820 = vpop.permute.xlu0 %4819
      %4821 = vrot.lane.b32.xlu0 %v4733, 24
      %v4822 = vpop.permute.xlu0 %4821
      %4823 = vrot.lane.b32.xlu0 %v4734, 24
      %v4824 = vpop.permute.xlu0 %4823
      %4825 = vrot.lane.b32.xlu0 %v4735, 24
      %v4826 = vpop.permute.xlu0 %4825
      %4827 = vrot.lane.b32.xlu0 %v4736, 24
      %v4828 = vpop.permute.xlu0 %4827
      %4829 = vrot.lane.b32.xlu0 %v4737, 24
      %v4830 = vpop.permute.xlu0 %4829
      %4831 = vrot.lane.b32.xlu0 %v4738, 24
      %v4832 = vpop.permute.xlu0 %4831
      %4833 = vrot.lane.b32.xlu0 %v4739, 24
      %v4834 = vpop.permute.xlu0 %4833
      %4835 = vrot.lane.b32.xlu0 %v4740, 24
      %v4836 = vpop.permute.xlu0 %4835
      %4869 = vst.msk [vmem:[#allocation3] sm:$0xff] %vm1258, %v4774
      %4870 = vst.msk [vmem:[#allocation3 + $0x8] sm:$0xff] %vm1258, %v4776
      %4871 = vst.msk [vmem:[#allocation3 + $0x10] sm:$0xff] %vm1258, %v4778
      %4872 = vst.msk [vmem:[#allocation3 + $0x18] sm:$0xff] %vm1258, %v4780
      %4873 = vst.msk [vmem:[#allocation3 + $0x20] sm:$0xff] %vm1258, %v4782
      %4874 = vst.msk [vmem:[#allocation3 + $0x28] sm:$0xff] %vm1258, %v4784
      %4875 = vst.msk [vmem:[#allocation3 + $0x30] sm:$0xff] %vm1258, %v4786
      %4876 = vst.msk [vmem:[#allocation3 + $0x38] sm:$0xff] %vm1258, %v4788
      %4877 = vst.msk [vmem:[#allocation3 + $0x40] sm:$0xff] %vm1258, %v4790
      %4878 = vst.msk [vmem:[#allocation3 + $0x48] sm:$0xff] %vm1258, %v4792
      %4879 = vst.msk [vmem:[#allocation3 + $0x50] sm:$0xff] %vm1258, %v4794
      %4880 = vst.msk [vmem:[#allocation3 + $0x58] sm:$0xff] %vm1258, %v4796
      %4881 = vst.msk [vmem:[#allocation3 + $0x60] sm:$0xff] %vm1258, %v4798
      %4882 = vst.msk [vmem:[#allocation3 + $0x68] sm:$0xff] %vm1258, %v4800
      %4883 = vst.msk [vmem:[#allocation3 + $0x70] sm:$0xff] %vm1258, %v4802
      %4884 = vst.msk [vmem:[#allocation3 + $0x78] sm:$0xff] %vm1258, %v4804
      %4885 = vst.msk [vmem:[#allocation3 + $0x80] sm:$0xff] %vm1258, %v4806
      %4886 = vst.msk [vmem:[#allocation3 + $0x88] sm:$0xff] %vm1258, %v4808
      %4887 = vst.msk [vmem:[#allocation3 + $0x90] sm:$0xff] %vm1258, %v4810
      %4888 = vst.msk [vmem:[#allocation3 + $0x98] sm:$0xff] %vm1258, %v4812
      %4889 = vst.msk [vmem:[#allocation3 + $0xa0] sm:$0xff] %vm1258, %v4814
      %4890 = vst.msk [vmem:[#allocation3 + $0xa8] sm:$0xff] %vm1258, %v4816
      %4891 = vst.msk [vmem:[#allocation3 + $0xb0] sm:$0xff] %vm1258, %v4818
      %4892 = vst.msk [vmem:[#allocation3 + $0xb8] sm:$0xff] %vm1258, %v4820
      %4893 = vst.msk [vmem:[#allocation3 + $0xc0] sm:$0xff] %vm1258, %v4822
      %4894 = vst.msk [vmem:[#allocation3 + $0xc8] sm:$0xff] %vm1258, %v4824
      %4895 = vst.msk [vmem:[#allocation3 + $0xd0] sm:$0xff] %vm1258, %v4826
      %4896 = vst.msk [vmem:[#allocation3 + $0xd8] sm:$0xff] %vm1258, %v4828
      %4897 = vst.msk [vmem:[#allocation3 + $0xe0] sm:$0xff] %vm1258, %v4830
      %4898 = vst.msk [vmem:[#allocation3 + $0xe8] sm:$0xff] %vm1258, %v4832
      %4899 = vst.msk [vmem:[#allocation3 + $0xf0] sm:$0xff] %vm1258, %v4834
      %4900 = vst.msk [vmem:[#allocation3 + $0xf8] sm:$0xff] %vm1258, %v4836
      %v4901 = vld [vmem:[#allocation3] sm:$0xff]
      %v4902 = vld [vmem:[#allocation3 + $0x8] sm:$0xff]
      %v4903 = vld [vmem:[#allocation3 + $0x10] sm:$0xff]
      %v4904 = vld [vmem:[#allocation3 + $0x18] sm:$0xff]
      %v4905 = vld [vmem:[#allocation3 + $0x20] sm:$0xff]
      %v4906 = vld [vmem:[#allocation3 + $0x28] sm:$0xff]
      %v4907 = vld [vmem:[#allocation3 + $0x30] sm:$0xff]
      %v4908 = vld [vmem:[#allocation3 + $0x38] sm:$0xff]
      %v4909 = vld [vmem:[#allocation3 + $0x40] sm:$0xff]
      %v4910 = vld [vmem:[#allocation3 + $0x48] sm:$0xff]
      %v4911 = vld [vmem:[#allocation3 + $0x50] sm:$0xff]
      %v4912 = vld [vmem:[#allocation3 + $0x58] sm:$0xff]
      %v4913 = vld [vmem:[#allocation3 + $0x60] sm:$0xff]
      %v4914 = vld [vmem:[#allocation3 + $0x68] sm:$0xff]
      %v4915 = vld [vmem:[#allocation3 + $0x70] sm:$0xff]
      %v4916 = vld [vmem:[#allocation3 + $0x78] sm:$0xff]
      %v4917 = vld [vmem:[#allocation3 + $0x80] sm:$0xff]
      %v4918 = vld [vmem:[#allocation3 + $0x88] sm:$0xff]
      %v4919 = vld [vmem:[#allocation3 + $0x90] sm:$0xff]
      %v4920 = vld [vmem:[#allocation3 + $0x98] sm:$0xff]
      %v4921 = vld [vmem:[#allocation3 + $0xa0] sm:$0xff]
      %v4922 = vld [vmem:[#allocation3 + $0xa8] sm:$0xff]
      %v4923 = vld [vmem:[#allocation3 + $0xb0] sm:$0xff]
      %v4924 = vld [vmem:[#allocation3 + $0xb8] sm:$0xff]
      %v4925 = vld [vmem:[#allocation3 + $0xc0] sm:$0xff]
      %v4926 = vld [vmem:[#allocation3 + $0xc8] sm:$0xff]
      %v4927 = vld [vmem:[#allocation3 + $0xd0] sm:$0xff]
      %v4928 = vld [vmem:[#allocation3 + $0xd8] sm:$0xff]
      %v4929 = vld [vmem:[#allocation3 + $0xe0] sm:$0xff]
      %v4930 = vld [vmem:[#allocation3 + $0xe8] sm:$0xff]
      %v4931 = vld [vmem:[#allocation3 + $0xf0] sm:$0xff]
      %v4932 = vld [vmem:[#allocation3 + $0xf8] sm:$0xff]
      %s4933 = scalar_lea.vmem %s3, 96
      %v4934 = vld [vmem:[%s4933] sm:$0xff]
      %v4935 = vld [vmem:[%s4933 + $0x8] sm:$0xff]
      %v4936 = vld [vmem:[%s4933 + $0x10] sm:$0xff]
      %v4937 = vld [vmem:[%s4933 + $0x18] sm:$0xff]
      %v4939 = vsel %vm1327, %v4901, 0
      %v4942 = vsel %vm1327, %v4902, 0
      %v4945 = vsel %vm1327, %v4903, 0
      %v4948 = vsel %vm1327, %v4904, 0
      %v4951 = vsel %vm1327, %v4905, 0
      %v4954 = vsel %vm1327, %v4906, 0
      %v4957 = vsel %vm1327, %v4907, 0
      %v4960 = vsel %vm1327, %v4908, 0
      %v4963 = vsel %vm1327, %v4909, 0
      %v4966 = vsel %vm1327, %v4910, 0
      %v4969 = vsel %vm1327, %v4911, 0
      %v4972 = vsel %vm1327, %v4912, 0
      %v4975 = vsel %vm1327, %v4913, 0
      %v4978 = vsel %vm1327, %v4914, 0
      %v4981 = vsel %vm1327, %v4915, 0
      %v4984 = vsel %vm1327, %v4916, 0
      %v4987 = vsel %vm1327, %v4917, 0
      %v4990 = vsel %vm1327, %v4918, 0
      %v4993 = vsel %vm1327, %v4919, 0
      %v4996 = vsel %vm1327, %v4920, 0
      %v4999 = vsel %vm1327, %v4921, 0
      %v5002 = vsel %vm1327, %v4922, 0
      %v5005 = vsel %vm1327, %v4923, 0
      %v5008 = vsel %vm1327, %v4924, 0
      %v5011 = vsel %vm1327, %v4925, 0
      %v5014 = vsel %vm1327, %v4926, 0
      %v5017 = vsel %vm1327, %v4927, 0
      %v5020 = vsel %vm1327, %v4928, 0
      %v5023 = vsel %vm1327, %v4929, 0
      %v5026 = vsel %vm1327, %v4930, 0
      %v5029 = vsel %vm1327, %v4931, 0
      %v5032 = vsel %vm1327, %v4932, 0
      %5034 = vmatprep.subr.mxu0 0.0
      %5035 = vmatpush1.msra.mxu0 0.0
      %5036 = vmatprep.subr.mxu0 0.0
      %5037 = vmatpush1.msra.mxu0 0.0
      %5038 = vmatprep.subr.mxu0 0.0
      %5039 = vmatpush1.msra.mxu0 0.0
      %5040 = vmatprep.subr.mxu0 0.0
      %5041 = vmatpush1.msra.mxu0 0.0
      %5042 = vmatprep.subr.mxu0 0.0
      %5043 = vmatpush1.msra.mxu0 0.0
      %5044 = vmatprep.subr.mxu0 0.0
      %5045 = vmatpush1.msra.mxu0 0.0
      %5046 = vmatprep.subr.mxu0 0.0
      %5047 = vmatpush1.msra.mxu0 0.0
      %5048 = vmatprep.subr.mxu0 0.0
      %5049 = vmatpush1.msra.mxu0 0.0
      %5050 = vmatprep.subr.mxu0 0.0
      %5051 = vmatpush1.msra.mxu0 0.0
      %5052 = vmatprep.subr.mxu0 0.0
      %5053 = vmatpush1.msra.mxu0 0.0
      %5054 = vmatprep.subr.mxu0 0.0
      %5055 = vmatpush1.msra.mxu0 0.0
      %5056 = vmatprep.subr.mxu0 0.0
      %5057 = vmatpush1.msra.mxu0 0.0
      %5058 = vmatprep.subr.mxu0 0.0
      %5059 = vmatpush1.msra.mxu0 %v4937
      %5060 = vmatprep.subr.mxu0 0.0
      %5061 = vmatpush1.msra.mxu0 %v4936
      %5062 = vmatprep.subr.mxu0 0.0
      %5063 = vmatpush1.msra.mxu0 %v4935
      %5064 = vmatprep.subr.mxu0 0.0
      %5065 = vmatpush1.msra.mxu0 %v4934
      %5066 = vmatprep.subr.mxu0 0.0
      %5067 = vmatpush2.msra.mxu0 0.0
      %5068 = vmatprep.subr.mxu0 0.0
      %5069 = vmatpush2.msra.mxu0 0.0
      %5070 = vmatprep.subr.mxu0 0.0
      %5071 = vmatpush2.msra.mxu0 0.0
      %5072 = vmatprep.subr.mxu0 0.0
      %5073 = vmatpush2.msra.mxu0 0.0
      %5074 = vmatprep.subr.mxu0 0.0
      %5075 = vmatpush2.msra.mxu0 0.0
      %5076 = vmatprep.subr.mxu0 0.0
      %5077 = vmatpush2.msra.mxu0 0.0
      %5078 = vmatprep.subr.mxu0 0.0
      %5079 = vmatpush2.msra.mxu0 0.0
      %5080 = vmatprep.subr.mxu0 0.0
      %5081 = vmatpush2.msra.mxu0 0.0
      %5082 = vmatprep.subr.mxu0 0.0
      %5083 = vmatpush2.msra.mxu0 0.0
      %5084 = vmatprep.subr.mxu0 0.0
      %5085 = vmatpush2.msra.mxu0 0.0
      %5086 = vmatprep.subr.mxu0 0.0
      %5087 = vmatpush2.msra.mxu0 0.0
      %5088 = vmatprep.subr.mxu0 0.0
      %5089 = vmatpush2.msra.mxu0 0.0
      %5090 = vmatprep.subr.mxu0 0.0
      %5091 = vmatpush2.msra.mxu0 0.0
      %5092 = vmatprep.subr.mxu0 0.0
      %5093 = vmatpush2.msra.mxu0 0.0
      %5094 = vmatprep.subr.mxu0 0.0
      %5095 = vmatpush2.msra.mxu0 0.0
      %5096 = vmatprep.subr.mxu0 0.0
      %5097 = vmatpush2.msra.mxu0 0.0
      %5098 = vmatprep.mubr.f32.mxu0 0.0
      %5099 = vmatmul.mubr.f32.gmra.mxu0 %v4939
      %v5100 = vpop.f32.mrf.mxu0
      %v5101 = vadd.f32 0.0, %v5100
      %v5102 = vpop.f32.mrf.mxu0
      %5103 = vmatprep.mubr.f32.mxu0 0.0
      %5104 = vmatmul.mubr.f32.gmra.mxu0 %v4942
      %v5105 = vpop.f32.mrf.mxu0
      %v5106 = vadd.f32 0.0, %v5105
      %v5107 = vpop.f32.mrf.mxu0
      %5108 = vmatprep.mubr.f32.mxu0 0.0
      %5109 = vmatmul.mubr.f32.gmra.mxu0 %v4945
      %v5110 = vpop.f32.mrf.mxu0
      %v5111 = vadd.f32 0.0, %v5110
      %v5112 = vpop.f32.mrf.mxu0
      %5113 = vmatprep.mubr.f32.mxu0 0.0
      %5114 = vmatmul.mubr.f32.gmra.mxu0 %v4948
      %v5115 = vpop.f32.mrf.mxu0
      %v5116 = vadd.f32 0.0, %v5115
      %v5117 = vpop.f32.mrf.mxu0
      %5118 = vmatprep.mubr.f32.mxu0 0.0
      %5119 = vmatmul.mubr.f32.gmra.mxu0 %v4951
      %v5120 = vpop.f32.mrf.mxu0
      %v5121 = vadd.f32 0.0, %v5120
      %v5122 = vpop.f32.mrf.mxu0
      %5123 = vmatprep.mubr.f32.mxu0 0.0
      %5124 = vmatmul.mubr.f32.gmra.mxu0 %v4954
      %v5125 = vpop.f32.mrf.mxu0
      %v5126 = vadd.f32 0.0, %v5125
      %v5127 = vpop.f32.mrf.mxu0
      %5128 = vmatprep.mubr.f32.mxu0 0.0
      %5129 = vmatmul.mubr.f32.gmra.mxu0 %v4957
      %v5130 = vpop.f32.mrf.mxu0
      %v5131 = vadd.f32 0.0, %v5130
      %v5132 = vpop.f32.mrf.mxu0
      %5133 = vmatprep.mubr.f32.mxu0 0.0
      %5134 = vmatmul.mubr.f32.gmra.mxu0 %v4960
      %v5135 = vpop.f32.mrf.mxu0
      %v5136 = vadd.f32 0.0, %v5135
      %v5137 = vpop.f32.mrf.mxu0
      %5138 = vmatprep.mubr.f32.mxu0 0.0
      %5139 = vmatmul.mubr.f32.gmra.mxu0 %v4963
      %v5140 = vpop.f32.mrf.mxu0
      %v5141 = vadd.f32 0.0, %v5140
      %v5142 = vpop.f32.mrf.mxu0
      %5143 = vmatprep.mubr.f32.mxu0 0.0
      %5144 = vmatmul.mubr.f32.gmra.mxu0 %v4966
      %v5145 = vpop.f32.mrf.mxu0
      %v5146 = vadd.f32 0.0, %v5145
      %v5147 = vpop.f32.mrf.mxu0
      %5148 = vmatprep.mubr.f32.mxu0 0.0
      %5149 = vmatmul.mubr.f32.gmra.mxu0 %v4969
      %v5150 = vpop.f32.mrf.mxu0
      %v5151 = vadd.f32 0.0, %v5150
      %v5152 = vpop.f32.mrf.mxu0
      %5153 = vmatprep.mubr.f32.mxu0 0.0
      %5154 = vmatmul.mubr.f32.gmra.mxu0 %v4972
      %v5155 = vpop.f32.mrf.mxu0
      %v5156 = vadd.f32 0.0, %v5155
      %v5157 = vpop.f32.mrf.mxu0
      %5158 = vmatprep.mubr.f32.mxu0 0.0
      %5159 = vmatmul.mubr.f32.gmra.mxu0 %v4975
      %v5160 = vpop.f32.mrf.mxu0
      %v5161 = vadd.f32 0.0, %v5160
      %v5162 = vpop.f32.mrf.mxu0
      %5163 = vmatprep.mubr.f32.mxu0 0.0
      %5164 = vmatmul.mubr.f32.gmra.mxu0 %v4978
      %v5165 = vpop.f32.mrf.mxu0
      %v5166 = vadd.f32 0.0, %v5165
      %v5167 = vpop.f32.mrf.mxu0
      %5168 = vmatprep.mubr.f32.mxu0 0.0
      %5169 = vmatmul.mubr.f32.gmra.mxu0 %v4981
      %v5170 = vpop.f32.mrf.mxu0
      %v5171 = vadd.f32 0.0, %v5170
      %v5172 = vpop.f32.mrf.mxu0
      %5173 = vmatprep.mubr.f32.mxu0 0.0
      %5174 = vmatmul.mubr.f32.gmra.mxu0 %v4984
      %v5175 = vpop.f32.mrf.mxu0
      %v5176 = vadd.f32 0.0, %v5175
      %v5177 = vpop.f32.mrf.mxu0
      %5178 = vmatprep.mubr.f32.mxu0 0.0
      %5179 = vmatmul.mubr.f32.gmra.mxu0 %v4987
      %v5180 = vpop.f32.mrf.mxu0
      %v5181 = vadd.f32 0.0, %v5180
      %v5182 = vpop.f32.mrf.mxu0
      %5183 = vmatprep.mubr.f32.mxu0 0.0
      %5184 = vmatmul.mubr.f32.gmra.mxu0 %v4990
      %v5185 = vpop.f32.mrf.mxu0
      %v5186 = vadd.f32 0.0, %v5185
      %v5187 = vpop.f32.mrf.mxu0
      %5188 = vmatprep.mubr.f32.mxu0 0.0
      %5189 = vmatmul.mubr.f32.gmra.mxu0 %v4993
      %v5190 = vpop.f32.mrf.mxu0
      %v5191 = vadd.f32 0.0, %v5190
      %v5192 = vpop.f32.mrf.mxu0
      %5193 = vmatprep.mubr.f32.mxu0 0.0
      %5194 = vmatmul.mubr.f32.gmra.mxu0 %v4996
      %v5195 = vpop.f32.mrf.mxu0
      %v5196 = vadd.f32 0.0, %v5195
      %v5197 = vpop.f32.mrf.mxu0
      %5198 = vmatprep.mubr.f32.mxu0 0.0
      %5199 = vmatmul.mubr.f32.gmra.mxu0 %v4999
      %v5200 = vpop.f32.mrf.mxu0
      %v5201 = vadd.f32 0.0, %v5200
      %v5202 = vpop.f32.mrf.mxu0
      %5203 = vmatprep.mubr.f32.mxu0 0.0
      %5204 = vmatmul.mubr.f32.gmra.mxu0 %v5002
      %v5205 = vpop.f32.mrf.mxu0
      %v5206 = vadd.f32 0.0, %v5205
      %v5207 = vpop.f32.mrf.mxu0
      %5208 = vmatprep.mubr.f32.mxu0 0.0
      %5209 = vmatmul.mubr.f32.gmra.mxu0 %v5005
      %v5210 = vpop.f32.mrf.mxu0
      %v5211 = vadd.f32 0.0, %v5210
      %v5212 = vpop.f32.mrf.mxu0
      %5213 = vmatprep.mubr.f32.mxu0 0.0
      %5214 = vmatmul.mubr.f32.gmra.mxu0 %v5008
      %v5215 = vpop.f32.mrf.mxu0
      %v5216 = vadd.f32 0.0, %v5215
      %v5217 = vpop.f32.mrf.mxu0
      %5218 = vmatprep.mubr.f32.mxu0 0.0
      %5219 = vmatmul.mubr.f32.gmra.mxu0 %v5011
      %v5220 = vpop.f32.mrf.mxu0
      %v5221 = vadd.f32 0.0, %v5220
      %v5222 = vpop.f32.mrf.mxu0
      %5223 = vmatprep.mubr.f32.mxu0 0.0
      %5224 = vmatmul.mubr.f32.gmra.mxu0 %v5014
      %v5225 = vpop.f32.mrf.mxu0
      %v5226 = vadd.f32 0.0, %v5225
      %v5227 = vpop.f32.mrf.mxu0
      %5228 = vmatprep.mubr.f32.mxu0 0.0
      %5229 = vmatmul.mubr.f32.gmra.mxu0 %v5017
      %v5230 = vpop.f32.mrf.mxu0
      %v5231 = vadd.f32 0.0, %v5230
      %v5232 = vpop.f32.mrf.mxu0
      %5233 = vmatprep.mubr.f32.mxu0 0.0
      %5234 = vmatmul.mubr.f32.gmra.mxu0 %v5020
      %v5235 = vpop.f32.mrf.mxu0
      %v5236 = vadd.f32 0.0, %v5235
      %v5237 = vpop.f32.mrf.mxu0
      %5238 = vmatprep.mubr.f32.mxu0 0.0
      %5239 = vmatmul.mubr.f32.gmra.mxu0 %v5023
      %v5240 = vpop.f32.mrf.mxu0
      %v5241 = vadd.f32 0.0, %v5240
      %v5242 = vpop.f32.mrf.mxu0
      %5243 = vmatprep.mubr.f32.mxu0 0.0
      %5244 = vmatmul.mubr.f32.gmra.mxu0 %v5026
      %v5245 = vpop.f32.mrf.mxu0
      %v5246 = vadd.f32 0.0, %v5245
      %v5247 = vpop.f32.mrf.mxu0
      %5248 = vmatprep.mubr.f32.mxu0 0.0
      %5249 = vmatmul.mubr.f32.gmra.mxu0 %v5029
      %v5250 = vpop.f32.mrf.mxu0
      %v5251 = vadd.f32 0.0, %v5250
      %v5252 = vpop.f32.mrf.mxu0
      %5253 = vmatprep.mubr.f32.mxu0 0.0
      %5254 = vmatmul.mubr.f32.gmra.mxu0 %v5032
      %v5255 = vpop.f32.mrf.mxu0
      %v5256 = vadd.f32 0.0, %v5255
      %v5257 = vpop.f32.mrf.mxu0
      %5258 = vdwg.mxu0
      %s5259 = scalar_lea.vmem %s233, 768
      %5260 = vst.msk [vmem:[%s5259] sm:$0xff] %vm1649, %v5101
      %5261 = vst.msk [vmem:[%s5259 + $0x8] sm:$0xff] %vm1649, %v5106
      %5262 = vst.msk [vmem:[%s5259 + $0x10] sm:$0xff] %vm1649, %v5111
      %5263 = vst.msk [vmem:[%s5259 + $0x18] sm:$0xff] %vm1649, %v5116
      %5264 = vst.msk [vmem:[%s5259 + $0x20] sm:$0xff] %vm1649, %v5121
      %5265 = vst.msk [vmem:[%s5259 + $0x28] sm:$0xff] %vm1649, %v5126
      %5266 = vst.msk [vmem:[%s5259 + $0x30] sm:$0xff] %vm1649, %v5131
      %5267 = vst.msk [vmem:[%s5259 + $0x38] sm:$0xff] %vm1649, %v5136
      %5268 = vst.msk [vmem:[%s5259 + $0x40] sm:$0xff] %vm1649, %v5141
      %5269 = vst.msk [vmem:[%s5259 + $0x48] sm:$0xff] %vm1649, %v5146
      %5270 = vst.msk [vmem:[%s5259 + $0x50] sm:$0xff] %vm1649, %v5151
      %5271 = vst.msk [vmem:[%s5259 + $0x58] sm:$0xff] %vm1649, %v5156
      %5272 = vst.msk [vmem:[%s5259 + $0x60] sm:$0xff] %vm1649, %v5161
      %5273 = vst.msk [vmem:[%s5259 + $0x68] sm:$0xff] %vm1649, %v5166
      %5274 = vst.msk [vmem:[%s5259 + $0x70] sm:$0xff] %vm1649, %v5171
      %5275 = vst.msk [vmem:[%s5259 + $0x78] sm:$0xff] %vm1649, %v5176
      %5276 = vst.msk [vmem:[%s5259 + $0x80] sm:$0xff] %vm1649, %v5181
      %5277 = vst.msk [vmem:[%s5259 + $0x88] sm:$0xff] %vm1649, %v5186
      %5278 = vst.msk [vmem:[%s5259 + $0x90] sm:$0xff] %vm1649, %v5191
      %5279 = vst.msk [vmem:[%s5259 + $0x98] sm:$0xff] %vm1649, %v5196
      %5280 = vst.msk [vmem:[%s5259 + $0xa0] sm:$0xff] %vm1649, %v5201
      %5281 = vst.msk [vmem:[%s5259 + $0xa8] sm:$0xff] %vm1649, %v5206
      %5282 = vst.msk [vmem:[%s5259 + $0xb0] sm:$0xff] %vm1649, %v5211
      %5283 = vst.msk [vmem:[%s5259 + $0xb8] sm:$0xff] %vm1649, %v5216
      %5284 = vst.msk [vmem:[%s5259 + $0xc0] sm:$0xff] %vm1649, %v5221
      %5285 = vst.msk [vmem:[%s5259 + $0xc8] sm:$0xff] %vm1649, %v5226
      %5286 = vst.msk [vmem:[%s5259 + $0xd0] sm:$0xff] %vm1649, %v5231
      %5287 = vst.msk [vmem:[%s5259 + $0xd8] sm:$0xff] %vm1649, %v5236
      %5288 = vst.msk [vmem:[%s5259 + $0xe0] sm:$0xff] %vm1649, %v5241
      %5289 = vst.msk [vmem:[%s5259 + $0xe8] sm:$0xff] %vm1649, %v5246
      %5290 = vst.msk [vmem:[%s5259 + $0xf0] sm:$0xff] %vm1649, %v5251
      %5291 = vst.msk [vmem:[%s5259 + $0xf8] sm:$0xff] %vm1649, %v5256
      %v5292 = vsel %vm1649, %v5101, 0.0
      %v5293 = vsel %vm1649, %v5106, 0.0
      %v5294 = vadd.f32 %v5292, %v5293
      %v5295 = vsel %vm1649, %v5111, 0.0
      %v5296 = vadd.f32 %v5294, %v5295
      %v5297 = vsel %vm1649, %v5116, 0.0
      %v5298 = vadd.f32 %v5296, %v5297
      %v5299 = vsel %vm1649, %v5121, 0.0
      %v5300 = vadd.f32 %v5298, %v5299
      %v5301 = vsel %vm1649, %v5126, 0.0
      %v5302 = vadd.f32 %v5300, %v5301
      %v5303 = vsel %vm1649, %v5131, 0.0
      %v5304 = vadd.f32 %v5302, %v5303
      %v5305 = vsel %vm1649, %v5136, 0.0
      %v5306 = vadd.f32 %v5304, %v5305
      %v5307 = vsel %vm1649, %v5141, 0.0
      %v5308 = vadd.f32 %v5306, %v5307
      %v5309 = vsel %vm1649, %v5146, 0.0
      %v5310 = vadd.f32 %v5308, %v5309
      %v5311 = vsel %vm1649, %v5151, 0.0
      %v5312 = vadd.f32 %v5310, %v5311
      %v5313 = vsel %vm1649, %v5156, 0.0
      %v5314 = vadd.f32 %v5312, %v5313
      %v5315 = vsel %vm1649, %v5161, 0.0
      %v5316 = vadd.f32 %v5314, %v5315
      %v5317 = vsel %vm1649, %v5166, 0.0
      %v5318 = vadd.f32 %v5316, %v5317
      %v5319 = vsel %vm1649, %v5171, 0.0
      %v5320 = vadd.f32 %v5318, %v5319
      %v5321 = vsel %vm1649, %v5176, 0.0
      %v5322 = vadd.f32 %v5320, %v5321
      %v5323 = vsel %vm1649, %v5181, 0.0
      %v5324 = vadd.f32 %v5322, %v5323
      %v5325 = vsel %vm1649, %v5186, 0.0
      %v5326 = vadd.f32 %v5324, %v5325
      %v5327 = vsel %vm1649, %v5191, 0.0
      %v5328 = vadd.f32 %v5326, %v5327
      %v5329 = vsel %vm1649, %v5196, 0.0
      %v5330 = vadd.f32 %v5328, %v5329
      %v5331 = vsel %vm1649, %v5201, 0.0
      %v5332 = vadd.f32 %v5330, %v5331
      %v5333 = vsel %vm1649, %v5206, 0.0
      %v5334 = vadd.f32 %v5332, %v5333
      %v5335 = vsel %vm1649, %v5211, 0.0
      %v5336 = vadd.f32 %v5334, %v5335
      %v5337 = vsel %vm1649, %v5216, 0.0
      %v5338 = vadd.f32 %v5336, %v5337
      %v5339 = vsel %vm1649, %v5221, 0.0
      %v5340 = vadd.f32 %v5338, %v5339
      %v5341 = vsel %vm1649, %v5226, 0.0
      %v5342 = vadd.f32 %v5340, %v5341
      %v5343 = vsel %vm1649, %v5231, 0.0
      %v5344 = vadd.f32 %v5342, %v5343
      %v5345 = vsel %vm1649, %v5236, 0.0
      %v5346 = vadd.f32 %v5344, %v5345
      %v5347 = vsel %vm1649, %v5241, 0.0
      %v5348 = vadd.f32 %v5346, %v5347
      %v5349 = vsel %vm1649, %v5246, 0.0
      %v5350 = vadd.f32 %v5348, %v5349
      %v5351 = vsel %vm1649, %v5251, 0.0
      %v5352 = vadd.f32 %v5350, %v5351
      %v5353 = vsel %vm1649, %v5256, 0.0
      %v5354 = vadd.f32 %v5352, %v5353
      %v5355 = vrot.slane %v5354, 4
      %v5356 = vadd.f32 %v5354, %v5355
      %v5357 = vrot.slane %v5356, 2
      %v5358 = vadd.f32 %v5356, %v5357
      %v5359 = vrot.slane %v5358, 1
      %v5360 = vadd.f32 %v5358, %v5359
      %v5361 = vadd.f32 %v4158, %v5360
      %v5362 = vmul.f32 %v5101, %v5101
      %v5363 = vmul.f32 %v5106, %v5106
      %v5364 = vmul.f32 %v5111, %v5111
      %v5365 = vmul.f32 %v5116, %v5116
      %v5366 = vmul.f32 %v5121, %v5121
      %v5367 = vmul.f32 %v5126, %v5126
      %v5368 = vmul.f32 %v5131, %v5131
      %v5369 = vmul.f32 %v5136, %v5136
      %v5370 = vmul.f32 %v5141, %v5141
      %v5371 = vmul.f32 %v5146, %v5146
      %v5372 = vmul.f32 %v5151, %v5151
      %v5373 = vmul.f32 %v5156, %v5156
      %v5374 = vmul.f32 %v5161, %v5161
      %v5375 = vmul.f32 %v5166, %v5166
      %v5376 = vmul.f32 %v5171, %v5171
      %v5377 = vmul.f32 %v5176, %v5176
      %v5378 = vmul.f32 %v5181, %v5181
      %v5379 = vmul.f32 %v5186, %v5186
      %v5380 = vmul.f32 %v5191, %v5191
      %v5381 = vmul.f32 %v5196, %v5196
      %v5382 = vmul.f32 %v5201, %v5201
      %v5383 = vmul.f32 %v5206, %v5206
      %v5384 = vmul.f32 %v5211, %v5211
      %v5385 = vmul.f32 %v5216, %v5216
      %v5386 = vmul.f32 %v5221, %v5221
      %v5387 = vmul.f32 %v5226, %v5226
      %v5388 = vmul.f32 %v5231, %v5231
      %v5389 = vmul.f32 %v5236, %v5236
      %v5390 = vmul.f32 %v5241, %v5241
      %v5391 = vmul.f32 %v5246, %v5246
      %v5392 = vmul.f32 %v5251, %v5251
      %v5393 = vmul.f32 %v5256, %v5256
      %v5394 = vsel %vm1649, %v5362, 0.0
      %v5395 = vsel %vm1649, %v5363, 0.0
      %v5396 = vadd.f32 %v5394, %v5395
      %v5397 = vsel %vm1649, %v5364, 0.0
      %v5398 = vadd.f32 %v5396, %v5397
      %v5399 = vsel %vm1649, %v5365, 0.0
      %v5400 = vadd.f32 %v5398, %v5399
      %v5401 = vsel %vm1649, %v5366, 0.0
      %v5402 = vadd.f32 %v5400, %v5401
      %v5403 = vsel %vm1649, %v5367, 0.0
      %v5404 = vadd.f32 %v5402, %v5403
      %v5405 = vsel %vm1649, %v5368, 0.0
      %v5406 = vadd.f32 %v5404, %v5405
      %v5407 = vsel %vm1649, %v5369, 0.0
      %v5408 = vadd.f32 %v5406, %v5407
      %v5409 = vsel %vm1649, %v5370, 0.0
      %v5410 = vadd.f32 %v5408, %v5409
      %v5411 = vsel %vm1649, %v5371, 0.0
      %v5412 = vadd.f32 %v5410, %v5411
      %v5413 = vsel %vm1649, %v5372, 0.0
      %v5414 = vadd.f32 %v5412, %v5413
      %v5415 = vsel %vm1649, %v5373, 0.0
      %v5416 = vadd.f32 %v5414, %v5415
      %v5417 = vsel %vm1649, %v5374, 0.0
      %v5418 = vadd.f32 %v5416, %v5417
      %v5419 = vsel %vm1649, %v5375, 0.0
      %v5420 = vadd.f32 %v5418, %v5419
      %v5421 = vsel %vm1649, %v5376, 0.0
      %v5422 = vadd.f32 %v5420, %v5421
      %v5423 = vsel %vm1649, %v5377, 0.0
      %v5424 = vadd.f32 %v5422, %v5423
      %v5425 = vsel %vm1649, %v5378, 0.0
      %v5426 = vadd.f32 %v5424, %v5425
      %v5427 = vsel %vm1649, %v5379, 0.0
      %v5428 = vadd.f32 %v5426, %v5427
      %v5429 = vsel %vm1649, %v5380, 0.0
      %v5430 = vadd.f32 %v5428, %v5429
      %v5431 = vsel %vm1649, %v5381, 0.0
      %v5432 = vadd.f32 %v5430, %v5431
      %v5433 = vsel %vm1649, %v5382, 0.0
      %v5434 = vadd.f32 %v5432, %v5433
      %v5435 = vsel %vm1649, %v5383, 0.0
      %v5436 = vadd.f32 %v5434, %v5435
      %v5437 = vsel %vm1649, %v5384, 0.0
      %v5438 = vadd.f32 %v5436, %v5437
      %v5439 = vsel %vm1649, %v5385, 0.0
      %v5440 = vadd.f32 %v5438, %v5439
      %v5441 = vsel %vm1649, %v5386, 0.0
      %v5442 = vadd.f32 %v5440, %v5441
      %v5443 = vsel %vm1649, %v5387, 0.0
      %v5444 = vadd.f32 %v5442, %v5443
      %v5445 = vsel %vm1649, %v5388, 0.0
      %v5446 = vadd.f32 %v5444, %v5445
      %v5447 = vsel %vm1649, %v5389, 0.0
      %v5448 = vadd.f32 %v5446, %v5447
      %v5449 = vsel %vm1649, %v5390, 0.0
      %v5450 = vadd.f32 %v5448, %v5449
      %v5451 = vsel %vm1649, %v5391, 0.0
      %v5452 = vadd.f32 %v5450, %v5451
      %v5453 = vsel %vm1649, %v5392, 0.0
      %v5454 = vadd.f32 %v5452, %v5453
      %v5455 = vsel %vm1649, %v5393, 0.0
      %v5456 = vadd.f32 %v5454, %v5455
      %v5457 = vrot.slane %v5456, 4
      %v5458 = vadd.f32 %v5456, %v5457
      %v5459 = vrot.slane %v5458, 2
      %v5460 = vadd.f32 %v5458, %v5459
      %v5461 = vrot.slane %v5460, 1
      %v5462 = vadd.f32 %v5460, %v5461
      %v5463 = vadd.f32 %v4260, %v5462
      %vm5464 = vcmask 122880
      %5465 = vst.msk [vmem:[%s238] sm:$0x1] %vm5464, %v5361
      %5466 = vst.msk [vmem:[%s238 + $0x1] sm:$0x1] %vm5464, %v5463
      %s5467 = smul.u32 4, %s17
      %p5468 = scmp.lt.s32.totalorder %s5467, 7
      %s5469 = scalar_select %p5468, %s5467, 7
      %s5470 = smul.addr %s5469, 32
      %s5471 = smul.addr %s5470, 8
      %s5472 = scalar_lea.vmem %s4, %s5471
      %p5473 = scmp.lt.s32.totalorder %s17, 1
      %s5474 = scalar_select %p5473, %s17, 1
      %s5475 = smul.addr %s5474, 2
      %s5476 = scalar_lea.vmem %s5, %s5475
      // Predicated region
      $region37: #{_lambda_.4} parent=35 // pred_check
        %p5477 = pneg %p124
      $region38: #{_lambda_.4} parent=35 // pred_check_branch
        %5479 = sbr.rel (%p5477) target = $region40
      $region39: #{_lambda_.4} parent=35 // pred_region
        %s5480 = smul.u32 4, %s17
      $region40: #{_lambda_.4} parent=35 // pred_fallthru
        _
      // Predicated region
      $region41: #{_lambda_.4} parent=35 // pred_check
        %p5481 = pneg %p150
      $region42: #{_lambda_.4} parent=35 // pred_check_branch
        %5483 = sbr.rel (%p5481) target = $region44
      $region43: #{_lambda_.4} parent=35 // pred_region
        _
      $region44: #{_lambda_.4} parent=35 // pred_fallthru
        _
    $region36: #{_lambda_.4} parent=5 // pred_fallthru
      _
    %p5484 = scmp.le.s32.totalorder 2, %s12
    // Predicated region
    $region45: #{_lambda_.4} parent=5 // pred_check
      %p5485 = pneg %p5484
    $region46: #{_lambda_.4} parent=5 // pred_check_branch
      %5487 = sbr.rel (%p5485) target = $region48
    $region47: #{_lambda_.4} parent=5 // pred_region
      %s5488 = ssub.s32 %s12, 2
      // Predicated region
      $region49: #{_lambda_.4} parent=47 // pred_check
        %p5489 = pneg %p130
      $region50: #{_lambda_.4} parent=47 // pred_check_branch
        %5491 = sbr.rel (%p5489) target = $region52
      $region51: #{_lambda_.4} parent=47 // pred_region
        %s5492 = smul.u32 4, %s18
        %p5493 = scmp.lt.s32.totalorder %s5492, 7
        %s5494 = scalar_select %p5493, %s5492, 7
        %s5495 = smul.addr %s5494, 32
        %s5496 = smul.addr %s5495, 8
        %s5497 = scalar_lea.vmem %s4, %s5496
      $region52: #{_lambda_.4} parent=47 // pred_fallthru
        _
      // Predicated region
      $region53: #{_lambda_.4} parent=47 // pred_check
        %p5498 = pneg %p156
      $region54: #{_lambda_.4} parent=47 // pred_check_branch
        %5500 = sbr.rel (%p5498) target = $region56
      $region55: #{_lambda_.4} parent=47 // pred_region
        %p5501 = scmp.lt.s32.totalorder %s18, 1
        %s5502 = scalar_select %p5501, %s18, 1
        %s5503 = smul.addr %s5502, 2
        %s5504 = scalar_lea.vmem %s5, %s5503
      $region56: #{_lambda_.4} parent=47 // pred_fallthru
        _
    $region48: #{_lambda_.4} parent=5 // pred_fallthru
      _
  $region6: #{_lambda_.4} parent=0 // loop_footer
    %s16 = sadd.s32 1, %s12
  $region7: #{_lambda_.4} parent=0 // loop_footer_branch
    %11 = sbr.rel target = $region3
  $region8: #{_lambda_.4} parent=0 // loop_exit
    _

</llo_original>
